<compile_context>
chip_gen: v7x
topology: tpu7x:2x2x1
jax: 0.10.0
libtpu: 0.0.40
codegen_flags: <defaults>
</compile_context>

<pallas_src>
import functools

import numpy as np

import jax
import jax.numpy as jnp
from jax.experimental import pallas as pl
from jax.experimental.pallas import tpu as pltpu

# ----------------------------- configuration -------------------------------
IMG_C = 4            # input image channels
IMG_H = 16
IMG_W = 16           # must be a power of two (lane-fold reduction in RoI pool)
FEAT_C = 16          # extractor output channels
RPN_MID = 16         # rpn 3x3 conv channels
N_ANCHOR = 3         # anchors per feature location
ANCHOR_SIZES = (2.0, 4.0, 8.0)
N_ROIS = 16          # number of proposals kept (rois)
POOL = 2             # RoI pool output size (POOL x POOL)
HIDDEN = 32          # head fc hidden size
N_CLASS = 3          # head.n_class (incl. background)
FEAT_STRIDE = 1.0    # 16x16 image -> 16x16 feature map

SLAB = IMG_W * N_ANCHOR          # 48: lanes per planar component slab
W_C = IMG_W * FEAT_C             # 256: feature-map lane width (w*C + c)
HEAD_PAD = 128                   # lane-dense padded width for head outputs
BBOX_CLIP = float(np.log(1000.0 / 16.0))


# ====================== fully fused Faster R-CNN kernel =====================
def _faster_rcnn_kernel(xcat_ref, t_ext_ref, b_ext_ref, t_rpn_ref, b_rpn_ref,
                        d_head_ref, b_head_ref, anc_ref, xw_ref,
                        fc1_w_ref, fc1_b_ref, wh_ref, bh_ref,
                        out_ref, rois_ref, hp_ref, *, img_h, img_w):
    """extractor conv -> rpn conv -> 1x1 heads -> decode -> top-16 -> RoI pool
    -> fc head, all in VMEM.  Feature maps live in a [H, W*C] lane-dense
    layout (row = image row, lane = w*C + c)."""

    # --- extractor 3x3 conv + ReLU: single fused-K matmul (K = 3*(W+2)*Cin) ---
    h2d = jnp.maximum(
        jnp.dot(xcat_ref[...].astype(jnp.bfloat16), t_ext_ref[...],
                preferred_element_type=jnp.float32) + b_ext_ref[...], 0.0)   # [H, W*FEAT_C]

    # --- RPN 3x3 conv + ReLU: fused-K LHS built in a lane-aligned scratch ----
    # hp lanes [dy*W_C : (dy+1)*W_C] hold the dy row-shifted feature map
    # (row halo only; the dx halo is folded into zero columns of t_rpn).
    hp_ref[pl.ds(0, 1), pl.ds(0, W_C)] = jnp.zeros((1, W_C), jnp.float32)
    hp_ref[pl.ds(1, IMG_H - 1), pl.ds(0, W_C)] = h2d[:IMG_H - 1, :]
    hp_ref[pl.ds(0, IMG_H), pl.ds(W_C, W_C)] = h2d
    hp_ref[pl.ds(0, IMG_H - 1), pl.ds(2 * W_C, W_C)] = h2d[1:, :]
    hp_ref[pl.ds(IMG_H - 1, 1), pl.ds(2 * W_C, W_C)] = jnp.zeros((1, W_C), jnp.float32)

    mid = jnp.maximum(
        jnp.dot(hp_ref[...].astype(jnp.bfloat16), t_rpn_ref[...],
                preferred_element_type=jnp.float32) + b_rpn_ref[...], 0.0)   # [H, W*RPN_MID]

    # --- fused 1x1 loc + score heads (block-diagonal weights, component-planar
    #     output lanes: [dy|dx|dh|dw|bg|fg] slabs of width SLAB) ---------------
    ho = jnp.dot(mid.astype(jnp.bfloat16), d_head_ref[...],
                 preferred_element_type=jnp.float32) + b_head_ref[...]       # [H, 6*SLAB]
    t_dy = ho[:, 0 * SLAB:1 * SLAB]
    t_dx = ho[:, 1 * SLAB:2 * SLAB]
    t_dh = ho[:, 2 * SLAB:3 * SLAB]
    t_dw = ho[:, 3 * SLAB:4 * SLAB]
    bg = ho[:, 4 * SLAB:5 * SLAB]
    fg = ho[:, 5 * SLAB:6 * SLAB]

    # --- anchor decode (loc2bbox) + clip ------------------------------------
    anc = anc_ref[...]
    cx = anc[0:1, :]                                          # [1, SLAB] anchor centers x
    sz = anc[1:2, :]                                          # [1, SLAB] anchor size
    cy = (jax.lax.broadcasted_iota(jnp.int32, (IMG_H, 1), 0).astype(jnp.float32)
          + 0.5) * FEAT_STRIDE                                # [H, 1] anchor centers y
    dh = jnp.minimum(t_dh, BBOX_CLIP)                         # clamp like reference loc2bbox
    dw = jnp.minimum(t_dw, BBOX_CLIP)
    ncy = t_dy * sz + cy
    ncx = t_dx * sz + cx
    nh = jnp.exp(dh) * sz
    nw = jnp.exp(dw) * sz
    y1 = jnp.clip(ncy - 0.5 * nh, 0.0, img_h)
    x1 = jnp.clip(ncx - 0.5 * nw, 0.0, img_w)
    y2 = jnp.clip(ncy + 0.5 * nh, 0.0, img_h)
    x2 = jnp.clip(ncx + 0.5 * nw, 0.0, img_w)
    # fg-bg logit is monotone in the softmax fg probability -> same top-k set,
    # no exp / overflow needed for selection.
    score = fg - bg                                           # [H, SLAB]

    # --- top-N_ROIS proposal selection (iterative argmax, lowest-index ties) --
    ridx = jax.lax.broadcasted_iota(jnp.int32, (IMG_H, SLAB), 0)
    lidx = jax.lax.broadcasted_iota(jnp.int32, (IMG_H, SLAB), 1)
    idxf = (ridx * SLAB + lidx).astype(jnp.float32)

    def _amax(v):
        return jnp.max(jnp.max(v, axis=1, keepdims=True), axis=0, keepdims=True)

    def _amin(v):
        return jnp.min(jnp.min(v, axis=1, keepdims=True), axis=0, keepdims=True)

    def _asum(v):
        return jnp.sum(jnp.sum(v, axis=1, keepdims=True), axis=0, keepdims=True)

    for r in range(N_ROIS):
        m = _amax(score)
        win = _amin(jnp.where(score >= m, idxf, 1e9))
        sel = idxf == win                                     # exactly one True
        rois_ref[pl.ds(r, 1), pl.ds(0, 1)] = _asum(jnp.where(sel, y1, 0.0))
        rois_ref[pl.ds(r, 1), pl.ds(1, 1)] = _asum(jnp.where(sel, x1, 0.0))
        rois_ref[pl.ds(r, 1), pl.ds(2, 1)] = _asum(jnp.where(sel, y2, 0.0))
        rois_ref[pl.ds(r, 1), pl.ds(3, 1)] = _asum(jnp.where(sel, x2, 0.0))
        score = jnp.where(sel, -1e9, score)

    # --- RoI max pool, vectorized over all RoIs ------------------------------
    rois = rois_ref[...]                                      # [R, 4]
    ry1 = rois[:, 0:1]
    rx1 = rois[:, 1:2]
    ry2 = rois[:, 2:3]
    rx2 = rois[:, 3:4]
    inv_pool = 1.0 / float(POOL)
    binh = (ry2 - ry1) * inv_pool                             # [R, 1]
    binw = (rx2 - rx1) * inv_pool
    ygrid = (jax.lax.broadcasted_iota(jnp.int32, (1, IMG_H), 1).astype(jnp.float32)
             + 0.5) * FEAT_STRIDE                             # [1, H]
    xw = xw_ref[...]                                          # [1, W*C]: x center per lane

    # per bin-row i: masked max over feature rows, batched over all RoIs
    rowmaxes = []
    for i in range(POOL):
        by0 = ry1 + i * binh
        by1 = ry1 + (i + 1) * binh
        my = (ygrid >= by0) & (ygrid <= by1)                  # [R, H]
        acc = jnp.zeros((N_ROIS, W_C), jnp.float32)
        for y in range(IMG_H):
            # features are post-ReLU (>= 0): 0 fill == "-inf then clamp to 0"
            acc = jnp.maximum(acc, jnp.where(my[:, y:y + 1], h2d[y:y + 1, :], 0.0))
        rowmaxes.append(acc)                                  # [R, W*C]

    # per bin column j: lane mask, then ONE batched W->C lane-fold over all bins
    cands = []
    for i in range(POOL):
        for j in range(POOL):
            bx0 = rx1 + j * binw
            bx1 = rx1 + (j + 1) * binw
            mx = (xw >= bx0) & (xw <= bx1)                    # [R, W*C]
            cands.append(jnp.where(mx, rowmaxes[i], 0.0))
    red = jnp.concatenate(cands, axis=0)                      # [POOL*POOL*R, W*C]
    width = W_C
    while width > FEAT_C:
        width //= 2
        red = jnp.maximum(red[:, :width], red[:, width:])     # -> [POOL*POOL*R, C]

    # --- fc1 + fused loc/score heads -----------------------------------------
    fc1a = jnp.zeros((N_ROIS, HEAD_PAD), jnp.float32)
    for b in range(POOL * POOL):
        fc1a += jnp.dot(red[b * N_ROIS:(b + 1) * N_ROIS, :].astype(jnp.bfloat16),
                        fc1_w_ref[pl.ds(b * FEAT_C, FEAT_C), :],
                        preferred_element_type=jnp.float32)
    fc1 = jnp.maximum(fc1a + fc1_b_ref[...], 0.0)             # [R, HEAD_PAD]
    out_ref[...] = jnp.dot(fc1.astype(jnp.bfloat16), wh_ref[...],
                           preferred_element_type=jnp.float32) + bh_ref[...]


def fused_faster_rcnn(xcat, params, img_h, img_w):
    kernel = functools.partial(_faster_rcnn_kernel, img_h=img_h, img_w=img_w)
    return pl.pallas_call(
        kernel,
        out_shape=(
            jax.ShapeDtypeStruct((N_ROIS, HEAD_PAD), jnp.float32),   # locs | scores
            jax.ShapeDtypeStruct((N_ROIS, 4), jnp.float32),          # rois
        ),
        grid=(1,),
        in_specs=[
            pl.BlockSpec((IMG_H, 3 * (IMG_W + 2) * IMG_C), lambda i: (0, 0)),
            pl.BlockSpec((3 * (IMG_W + 2) * IMG_C, IMG_W * FEAT_C), lambda i: (0, 0)),
            pl.BlockSpec((1, IMG_W * FEAT_C), lambda i: (0, 0)),
            pl.BlockSpec((3 * IMG_W * FEAT_C, IMG_W * RPN_MID), lambda i: (0, 0)),
            pl.BlockSpec((1, IMG_W * RPN_MID), lambda i: (0, 0)),
            pl.BlockSpec((IMG_W * RPN_MID, 6 * SLAB), lambda i: (0, 0)),
            pl.BlockSpec((1, 6 * SLAB), lambda i: (0, 0)),
            pl.BlockSpec((2, SLAB), lambda i: (0, 0)),
            pl.BlockSpec((1, IMG_W * FEAT_C), lambda i: (0, 0)),
            pl.BlockSpec((POOL * POOL * FEAT_C, HEAD_PAD), lambda i: (0, 0)),
            pl.BlockSpec((1, HEAD_PAD), lambda i: (0, 0)),
            pl.BlockSpec((HEAD_PAD, HEAD_PAD), lambda i: (0, 0)),
            pl.BlockSpec((1, HEAD_PAD), lambda i: (0, 0)),
        ],
        out_specs=(
            pl.BlockSpec((N_ROIS, HEAD_PAD), lambda i: (0, 0)),
            pl.BlockSpec((N_ROIS, 4), lambda i: (0, 0)),
        ),
        scratch_shapes=[pltpu.VMEM((IMG_H, 3 * W_C), jnp.float32)],
        compiler_params=pltpu.CompilerParams(dimension_semantics=("arbitrary",)),
    )(xcat, params["t_ext"], params["b_ext"], params["t_rpn"], params["b_rpn"],
      params["d_head"], params["b_head"], params["anc"], params["xw"],
      params["fc1_w"], params["fc1_b"], params["wh"], params["bh"])


# ----------------------------- parameter init ------------------------------
def _toeplitz_ext(w4, width, cin, cout):
    """Extractor conv weights, dy taps stacked along K (LHS has the padded
    lane width).  Shape: [3*(width+2)*cin, width*cout]."""
    t = np.zeros((3 * (width + 2) * cin, width * cout), np.float32)
    for dy in range(3):
        base = dy * (width + 2) * cin
        for dx in range(3):
            for w in range(width):
                t[base + (w + dx) * cin: base + (w + dx + 1) * cin,
                  w * cout:(w + 1) * cout] = w4[dy, dx]
    return t


def _toeplitz_rpn(w4, width, cin, cout):
    """RPN conv weights, dy taps stacked along K and built against the
    UNPADDED lane width (dx halo handled by zero columns), so the feature copy
    into the scratch is lane-0 aligned.  Shape: [3*width*cin, width*cout]."""
    t = np.zeros((3 * width * cin, width * cout), np.float32)
    for dy in range(3):
        base = dy * width * cin
        for dx in range(3):
            for w in range(width):
                wi = w + dx - 1
                if 0 <= wi < width:
                    t[base + wi * cin: base + (wi + 1) * cin,
                      w * cout:(w + 1) * cout] = w4[dy, dx]
    return t


def _blockdiag_heads(loc_w, loc_b, sc_w, sc_b, width, cmid, a_n):
    """1x1 loc+score heads as one block-diagonal matrix, component-planar lanes.

    output lane = slab*width*a_n + w*a_n + a,  slabs = [dy, dx, dh, dw, bg, fg]."""
    sw = width * a_n
    D = np.zeros((width * cmid, 6 * sw), np.float32)
    b = np.zeros((1, 6 * sw), np.float32)
    for w in range(width):
        for a in range(a_n):
            for comp in range(4):
                D[w * cmid:(w + 1) * cmid, comp * sw + w * a_n + a] = loc_w[:, a * 4 + comp]
                b[0, comp * sw + w * a_n + a] = loc_b[a * 4 + comp]
            for s in range(2):
                D[w * cmid:(w + 1) * cmid, (4 + s) * sw + w * a_n + a] = sc_w[:, a * 2 + s]
                b[0, (4 + s) * sw + w * a_n + a] = sc_b[a * 2 + s]
    return D, b


def init_params(key):
    def rnd(k, shape, std=0.05):
        return np.asarray(jax.random.normal(k, shape, jnp.float32)) * std

    keys = jax.random.split(key, 14)
    ext_w = rnd(keys[0], (3, 3, IMG_C, FEAT_C));       ext_b = rnd(keys[1], (FEAT_C,), 0.01)
    rpn_w = rnd(keys[2], (3, 3, FEAT_C, RPN_MID));     rpn_b = rnd(keys[3], (RPN_MID,), 0.01)
    loc_w = rnd(keys[4], (RPN_MID, N_ANCHOR * 4));     loc_b = rnd(keys[5], (N_ANCHOR * 4,), 0.01)
    sc_w = rnd(keys[6], (RPN_MID, N_ANCHOR * 2));      sc_b = rnd(keys[7], (N_ANCHOR * 2,), 0.01)
    fc1_w = rnd(keys[8], (POOL * POOL * FEAT_C, HIDDEN)); fc1_b = rnd(keys[9], (HIDDEN,), 0.01)
    hl_w = rnd(keys[10], (HIDDEN, N_CLASS * 4));       hl_b = rnd(keys[11], (N_CLASS * 4,), 0.01)
    hs_w = rnd(keys[12], (HIDDEN, N_CLASS));           hs_b = rnd(keys[13], (N_CLASS,), 0.01)

    # fused-K Toeplitz conv weights (init-time, free at runtime)
    t_ext = _toeplitz_ext(ext_w, IMG_W, IMG_C, FEAT_C)
    t_rpn = _toeplitz_rpn(rpn_w, IMG_W, FEAT_C, RPN_MID)
    b_ext_t = np.tile(ext_b, IMG_W)[None, :]
    b_rpn_t = np.tile(rpn_b, IMG_W)[None, :]
    d_head, b_head = _blockdiag_heads(loc_w, loc_b, sc_w, sc_b, IMG_W, RPN_MID, N_ANCHOR)

    # anchor constants (centers x, size) in planar lane order w*N_ANCHOR + a
    anc = np.zeros((2, SLAB), np.float32)
    for w in range(IMG_W):
        for a in range(N_ANCHOR):
            anc[0, w * N_ANCHOR + a] = (w + 0.5) * FEAT_STRIDE
            anc[1, w * N_ANCHOR + a] = ANCHOR_SIZES[a]

    # x coordinate per (w, c) lane for RoI pooling
    xw = (np.repeat(np.arange(IMG_W, dtype=np.float32) + 0.5, FEAT_C))[None, :] * FEAT_STRIDE

    # head weights, zero padded to lane-dense 128-wide outputs; loc|score fused
    fc1_w_p = np.zeros((POOL * POOL * FEAT_C, HEAD_PAD), np.float32)
    fc1_w_p[:, :HIDDEN] = fc1_w
    fc1_b_p = np.zeros((1, HEAD_PAD), np.float32)
    fc1_b_p[0, :HIDDEN] = fc1_b
    wh_p = np.zeros((HEAD_PAD, HEAD_PAD), np.float32)
    wh_p[:HIDDEN, :N_CLASS * 4] = hl_w
    wh_p[:HIDDEN, N_CLASS * 4:N_CLASS * 4 + N_CLASS] = hs_w
    bh_p = np.zeros((1, HEAD_PAD), np.float32)
    bh_p[0, :N_CLASS * 4] = hl_b
    bh_p[0, N_CLASS * 4:N_CLASS * 4 + N_CLASS] = hs_b

    return {
        "t_ext": jnp.asarray(t_ext, jnp.bfloat16),
        "b_ext": jnp.asarray(b_ext_t, jnp.float32),
        "t_rpn": jnp.asarray(t_rpn, jnp.bfloat16),
        "b_rpn": jnp.asarray(b_rpn_t, jnp.float32),
        "d_head": jnp.asarray(d_head, jnp.bfloat16),
        "b_head": jnp.asarray(b_head, jnp.float32),
        "anc": jnp.asarray(anc, jnp.float32),
        "xw": jnp.asarray(xw, jnp.float32),
        "fc1_w": jnp.asarray(fc1_w_p, jnp.bfloat16),
        "fc1_b": jnp.asarray(fc1_b_p, jnp.float32),
        "wh": jnp.asarray(wh_p, jnp.bfloat16),
        "bh": jnp.asarray(bh_p, jnp.float32),
    }


# ------------------------------ forward pass -------------------------------
def faster_rcnn_forward(x_nchw, params, scale=1.0):
    """Mirrors FasterRCNN.forward: returns (roi_locs, roi_scores, rois)."""
    del scale  # TODO(synk): scale only affects ProposalCreator min-size filtering (omitted)
    assert x_nchw.shape == (1, IMG_C, IMG_H, IMG_W)
    assert IMG_W & (IMG_W - 1) == 0  # lane-fold reduction assumes power-of-two W
    img_h = float(x_nchw.shape[2])
    img_w = float(x_nchw.shape[3])

    # NCHW -> padded [H+2, (W+2)*C] slab -> fused-K conv LHS [H, 3*(W+2)*C]
    # (tiny one-time XLA layout plumbing; keeps the kernel free of unaligned
    # in-kernel concatenation for the first conv).
    x_hwc = jnp.transpose(x_nchw[0], (1, 2, 0)).astype(jnp.float32)
    xp2 = jnp.pad(x_hwc, ((1, 1), (1, 1), (0, 0))).reshape(IMG_H + 2, (IMG_W + 2) * IMG_C)
    xcat = jnp.concatenate([xp2[0:IMG_H], xp2[1:IMG_H + 1], xp2[2:IMG_H + 2]], axis=1)

    head_out, rois = fused_faster_rcnn(xcat, params, img_h, img_w)
    roi_locs = head_out[:, :N_CLASS * 4]
    roi_scores = head_out[:, N_CLASS * 4:N_CLASS * 4 + N_CLASS]
    return roi_locs, roi_scores, rois


# --------------------------------- main -------------------------------------
if __name__ == "__main__":
    key = jax.random.PRNGKey(0)
    k_img, k_params = jax.random.split(key)
    x = jax.random.normal(k_img, (1, IMG_C, IMG_H, IMG_W), jnp.float32)
    params = init_params(k_params)

    fwd = jax.jit(faster_rcnn_forward)
    roi_locs, roi_scores, rois = fwd(x, params)
    jax.block_until_ready((roi_locs, roi_scores, rois))

    assert roi_locs.shape == (N_ROIS, N_CLASS * 4)
    assert roi_scores.shape == (N_ROIS, N_CLASS)
    assert rois.shape == (N_ROIS, 4)
    print("KERNEL_OK")
</pallas_src>

<mosaic_0001>
module attributes {stable_mosaic.version = 11 : i64} {
  func.func @_faster_rcnn_kernel(%arg0: i32, %arg1: memref<16x216xf32, #tpu.memory_space<vmem>>, %arg2: memref<216x256xbf16, #tpu.memory_space<vmem>>, %arg3: memref<1x256xf32, #tpu.memory_space<vmem>>, %arg4: memref<768x256xbf16, #tpu.memory_space<vmem>>, %arg5: memref<1x256xf32, #tpu.memory_space<vmem>>, %arg6: memref<256x288xbf16, #tpu.memory_space<vmem>>, %arg7: memref<1x288xf32, #tpu.memory_space<vmem>>, %arg8: memref<2x48xf32, #tpu.memory_space<vmem>>, %arg9: memref<1x256xf32, #tpu.memory_space<vmem>>, %arg10: memref<64x128xbf16, #tpu.memory_space<vmem>>, %arg11: memref<1x128xf32, #tpu.memory_space<vmem>>, %arg12: memref<128x128xbf16, #tpu.memory_space<vmem>>, %arg13: memref<1x128xf32, #tpu.memory_space<vmem>>, %arg14: memref<16x128xf32, #tpu.memory_space<vmem>>, %arg15: memref<16x4xf32, #tpu.memory_space<vmem>>, %arg16: memref<16x768xf32, #tpu.memory_space<vmem>>) attributes {dimension_semantics = [#tpu.dimension_semantics<arbitrary>], iteration_bounds = array<i64: 1>, scalar_prefetch = 0 : i64, scratch_operands = 1 : i64, tpu.core_type = #tpu.core_type<tc>, window_params = [{pipeline_mode = #tpu.pipeline_mode<synchronous>, transform_indices = @transform_0, window_bounds = array<i64: 16, 216>}, {pipeline_mode = #tpu.pipeline_mode<synchronous>, transform_indices = @transform_1, window_bounds = array<i64: 216, 256>}, {pipeline_mode = #tpu.pipeline_mode<synchronous>, transform_indices = @transform_2, window_bounds = array<i64: 1, 256>}, {pipeline_mode = #tpu.pipeline_mode<synchronous>, transform_indices = @transform_3, window_bounds = array<i64: 768, 256>}, {pipeline_mode = #tpu.pipeline_mode<synchronous>, transform_indices = @transform_4, window_bounds = array<i64: 1, 256>}, {pipeline_mode = #tpu.pipeline_mode<synchronous>, transform_indices = @transform_5, window_bounds = array<i64: 256, 288>}, {pipeline_mode = #tpu.pipeline_mode<synchronous>, transform_indices = @transform_6, window_bounds = array<i64: 1, 288>}, {pipeline_mode = #tpu.pipeline_mode<synchronous>, transform_indices = @transform_7, window_bounds = array<i64: 2, 48>}, {pipeline_mode = #tpu.pipeline_mode<synchronous>, transform_indices = @transform_8, window_bounds = array<i64: 1, 256>}, {pipeline_mode = #tpu.pipeline_mode<synchronous>, transform_indices = @transform_9, window_bounds = array<i64: 64, 128>}, {pipeline_mode = #tpu.pipeline_mode<synchronous>, transform_indices = @transform_10, window_bounds = array<i64: 1, 128>}, {pipeline_mode = #tpu.pipeline_mode<synchronous>, transform_indices = @transform_11, window_bounds = array<i64: 128, 128>}, {pipeline_mode = #tpu.pipeline_mode<synchronous>, transform_indices = @transform_12, window_bounds = array<i64: 1, 128>}, {pipeline_mode = #tpu.pipeline_mode<synchronous>, transform_indices = @transform_13, window_bounds = array<i64: 16, 128>}, {pipeline_mode = #tpu.pipeline_mode<synchronous>, transform_indices = @transform_14, window_bounds = array<i64: 16, 4>}]} {
    %c0 = arith.constant 0 : index
    %c0_0 = arith.constant 0 : index
    %0 = vector.load %arg1[%c0, %c0_0] : memref<16x216xf32, #tpu.memory_space<vmem>>, vector<16x216xf32>
    %1 = arith.truncf %0 : vector<16x216xf32> to vector<16x216xbf16>
    %c0_1 = arith.constant 0 : index
    %c0_2 = arith.constant 0 : index
    %2 = vector.load %arg2[%c0_1, %c0_2] : memref<216x256xbf16, #tpu.memory_space<vmem>>, vector<216x256xbf16>
    %cst = arith.constant dense<0.000000e+00> : vector<16x256xf32>
    %3 = tpu.matmul %1, %2, %cst {dimension_numbers = #tpu.dot_dimension_numbers<[1], [0], [0], [1], [0, 0, 1, 1], [], []>} : vector<16x216xbf16>, vector<216x256xbf16>, vector<16x256xf32> -> vector<16x256xf32>
    %c0_3 = arith.constant 0 : index
    %c0_4 = arith.constant 0 : index
    %4 = vector.load %arg3[%c0_3, %c0_4] : memref<1x256xf32, #tpu.memory_space<vmem>>, vector<1x256xf32>
    %5 = vector.broadcast %4 : vector<1x256xf32> to vector<16x256xf32>
    %6 = arith.addf %3, %5 : vector<16x256xf32>
    %cst_5 = arith.constant 0.000000e+00 : f32
    %7 = vector.broadcast %cst_5 : f32 to vector<16x256xf32>
    %8 = arith.maximumf %6, %7 : vector<16x256xf32>
    %cst_6 = arith.constant 0.000000e+00 : f32
    %9 = vector.broadcast %cst_6 : f32 to vector<1x256xf32>
    %c0_7 = arith.constant 0 : index
    %c0_8 = arith.constant 0 : index
    %10 = vector.load %arg16[%c0_7, %c0_8] : memref<16x768xf32, #tpu.memory_space<vmem>>, vector<1x256xf32>
    tpu.vector_store %arg16[%c0_7, %c0_8], %9 {strides = array<i32>} : memref<16x768xf32, #tpu.memory_space<vmem>>, vector<1x256xf32>,
    %11 = vector.extract_strided_slice %8 {offsets = [0, 0], sizes = [15, 256], strides = [1, 1]} : vector<16x256xf32> to vector<15x256xf32>
    %c1 = arith.constant 1 : index
    %c0_9 = arith.constant 0 : index
    %12 = vector.load %arg16[%c1, %c0_9] : memref<16x768xf32, #tpu.memory_space<vmem>>, vector<15x256xf32>
    tpu.vector_store %arg16[%c1, %c0_9], %11 {strides = array<i32>} : memref<16x768xf32, #tpu.memory_space<vmem>>, vector<15x256xf32>,
    %c0_10 = arith.constant 0 : index
    %c256 = arith.constant 256 : index
    %13 = vector.load %arg16[%c0_10, %c256] : memref<16x768xf32, #tpu.memory_space<vmem>>, vector<16x256xf32>
    tpu.vector_store %arg16[%c0_10, %c256], %8 {strides = array<i32>} : memref<16x768xf32, #tpu.memory_space<vmem>>, vector<16x256xf32>,
    %14 = vector.extract_strided_slice %8 {offsets = [1, 0], sizes = [15, 256], strides = [1, 1]} : vector<16x256xf32> to vector<15x256xf32>
    %c0_11 = arith.constant 0 : index
    %c512 = arith.constant 512 : index
    %15 = vector.load %arg16[%c0_11, %c512] : memref<16x768xf32, #tpu.memory_space<vmem>>, vector<15x256xf32>
    tpu.vector_store %arg16[%c0_11, %c512], %14 {strides = array<i32>} : memref<16x768xf32, #tpu.memory_space<vmem>>, vector<15x256xf32>,
    %cst_12 = arith.constant 0.000000e+00 : f32
    %16 = vector.broadcast %cst_12 : f32 to vector<1x256xf32>
    %c15 = arith.constant 15 : index
    %c512_13 = arith.constant 512 : index
    %17 = vector.load %arg16[%c15, %c512_13] : memref<16x768xf32, #tpu.memory_space<vmem>>, vector<1x256xf32>
    tpu.vector_store %arg16[%c15, %c512_13], %16 {strides = array<i32>} : memref<16x768xf32, #tpu.memory_space<vmem>>, vector<1x256xf32>,
    %c0_14 = arith.constant 0 : index
    %c0_15 = arith.constant 0 : index
    %18 = vector.load %arg16[%c0_14, %c0_15] : memref<16x768xf32, #tpu.memory_space<vmem>>, vector<16x768xf32>
    %19 = arith.truncf %18 : vector<16x768xf32> to vector<16x768xbf16>
    %c0_16 = arith.constant 0 : index
    %c0_17 = arith.constant 0 : index
    %20 = vector.load %arg4[%c0_16, %c0_17] : memref<768x256xbf16, #tpu.memory_space<vmem>>, vector<768x256xbf16>
    %cst_18 = arith.constant dense<0.000000e+00> : vector<16x256xf32>
    %21 = tpu.matmul %19, %20, %cst_18 {dimension_numbers = #tpu.dot_dimension_numbers<[1], [0], [0], [1], [0, 0, 1, 1], [], []>} : vector<16x768xbf16>, vector<768x256xbf16>, vector<16x256xf32> -> vector<16x256xf32>
    %c0_19 = arith.constant 0 : index
    %c0_20 = arith.constant 0 : index
    %22 = vector.load %arg5[%c0_19, %c0_20] : memref<1x256xf32, #tpu.memory_space<vmem>>, vector<1x256xf32>
    %23 = vector.broadcast %22 : vector<1x256xf32> to vector<16x256xf32>
    %24 = arith.addf %21, %23 : vector<16x256xf32>
    %cst_21 = arith.constant 0.000000e+00 : f32
    %25 = vector.broadcast %cst_21 : f32 to vector<16x256xf32>
    %26 = arith.maximumf %24, %25 : vector<16x256xf32>
    %27 = arith.truncf %26 : vector<16x256xf32> to vector<16x256xbf16>
    %c0_22 = arith.constant 0 : index
    %c0_23 = arith.constant 0 : index
    %28 = vector.load %arg6[%c0_22, %c0_23] : memref<256x288xbf16, #tpu.memory_space<vmem>>, vector<256x288xbf16>
    %cst_24 = arith.constant dense<0.000000e+00> : vector<16x288xf32>
    %29 = tpu.matmul %27, %28, %cst_24 {dimension_numbers = #tpu.dot_dimension_numbers<[1], [0], [0], [1], [0, 0, 1, 1], [], []>} : vector<16x256xbf16>, vector<256x288xbf16>, vector<16x288xf32> -> vector<16x288xf32>
    %c0_25 = arith.constant 0 : index
    %c0_26 = arith.constant 0 : index
    %30 = vector.load %arg7[%c0_25, %c0_26] : memref<1x288xf32, #tpu.memory_space<vmem>>, vector<1x288xf32>
    %31 = vector.broadcast %30 : vector<1x288xf32> to vector<16x288xf32>
    %32 = arith.addf %29, %31 : vector<16x288xf32>
    %33 = vector.extract_strided_slice %32 {offsets = [0, 0], sizes = [16, 48], strides = [1, 1]} : vector<16x288xf32> to vector<16x48xf32>
    %34 = vector.extract_strided_slice %32 {offsets = [0, 48], sizes = [16, 48], strides = [1, 1]} : vector<16x288xf32> to vector<16x48xf32>
    %35 = vector.extract_strided_slice %32 {offsets = [0, 96], sizes = [16, 48], strides = [1, 1]} : vector<16x288xf32> to vector<16x48xf32>
    %36 = vector.extract_strided_slice %32 {offsets = [0, 144], sizes = [16, 48], strides = [1, 1]} : vector<16x288xf32> to vector<16x48xf32>
    %37 = vector.extract_strided_slice %32 {offsets = [0, 192], sizes = [16, 48], strides = [1, 1]} : vector<16x288xf32> to vector<16x48xf32>
    %38 = vector.extract_strided_slice %32 {offsets = [0, 240], sizes = [16, 48], strides = [1, 1]} : vector<16x288xf32> to vector<16x48xf32>
    %c0_27 = arith.constant 0 : index
    %c0_28 = arith.constant 0 : index
    %39 = vector.load %arg8[%c0_27, %c0_28] : memref<2x48xf32, #tpu.memory_space<vmem>>, vector<2x48xf32>
    %40 = vector.extract_strided_slice %39 {offsets = [0, 0], sizes = [1, 48], strides = [1, 1]} : vector<2x48xf32> to vector<1x48xf32>
    %41 = vector.extract_strided_slice %39 {offsets = [1, 0], sizes = [1, 48], strides = [1, 1]} : vector<2x48xf32> to vector<1x48xf32>
    %42 = tpu.iota {dimensions = array<i32: 0>} : vector<16x1xi32>
    %43 = arith.sitofp %42 : vector<16x1xi32> to vector<16x1xf32>
    %cst_29 = arith.constant 5.000000e-01 : f32
    %44 = vector.broadcast %cst_29 : f32 to vector<16x1xf32>
    %45 = arith.addf %43, %44 : vector<16x1xf32>
    %cst_30 = arith.constant 1.000000e+00 : f32
    %46 = vector.broadcast %cst_30 : f32 to vector<16x1xf32>
    %47 = arith.mulf %45, %46 : vector<16x1xf32>
    %cst_31 = arith.constant 4.13516665 : f32
    %48 = vector.broadcast %cst_31 : f32 to vector<16x48xf32>
    %49 = arith.minimumf %35, %48 : vector<16x48xf32>
    %cst_32 = arith.constant 4.13516665 : f32
    %50 = vector.broadcast %cst_32 : f32 to vector<16x48xf32>
    %51 = arith.minimumf %36, %50 : vector<16x48xf32>
    %52 = vector.broadcast %41 : vector<1x48xf32> to vector<16x48xf32>
    %53 = arith.mulf %33, %52 : vector<16x48xf32>
    %54 = vector.broadcast %47 : vector<16x1xf32> to vector<16x48xf32>
    %55 = arith.addf %53, %54 : vector<16x48xf32>
    %56 = vector.broadcast %41 : vector<1x48xf32> to vector<16x48xf32>
    %57 = arith.mulf %34, %56 : vector<16x48xf32>
    %58 = vector.broadcast %40 : vector<1x48xf32> to vector<16x48xf32>
    %59 = arith.addf %57, %58 : vector<16x48xf32>
    %60 = math.exp %49 : vector<16x48xf32>
    %61 = vector.broadcast %41 : vector<1x48xf32> to vector<16x48xf32>
    %62 = arith.mulf %60, %61 : vector<16x48xf32>
    %63 = math.exp %51 : vector<16x48xf32>
    %64 = vector.broadcast %41 : vector<1x48xf32> to vector<16x48xf32>
    %65 = arith.mulf %63, %64 : vector<16x48xf32>
    %cst_33 = arith.constant 5.000000e-01 : f32
    %66 = vector.broadcast %cst_33 : f32 to vector<16x48xf32>
    %67 = arith.mulf %66, %62 : vector<16x48xf32>
    %68 = arith.subf %55, %67 : vector<16x48xf32>
    %cst_34 = arith.constant 0.000000e+00 : f32
    %cst_35 = arith.constant 1.600000e+01 : f32
    %69 = vector.broadcast %cst_34 : f32 to vector<16x48xf32>
    %70 = arith.maximumf %69, %68 : vector<16x48xf32>
    %71 = vector.broadcast %cst_35 : f32 to vector<16x48xf32>
    %72 = arith.minimumf %71, %70 : vector<16x48xf32>
    %cst_36 = arith.constant 5.000000e-01 : f32
    %73 = vector.broadcast %cst_36 : f32 to vector<16x48xf32>
    %74 = arith.mulf %73, %65 : vector<16x48xf32>
    %75 = arith.subf %59, %74 : vector<16x48xf32>
    %cst_37 = arith.constant 0.000000e+00 : f32
    %cst_38 = arith.constant 1.600000e+01 : f32
    %76 = vector.broadcast %cst_37 : f32 to vector<16x48xf32>
    %77 = arith.maximumf %76, %75 : vector<16x48xf32>
    %78 = vector.broadcast %cst_38 : f32 to vector<16x48xf32>
    %79 = arith.minimumf %78, %77 : vector<16x48xf32>
    %cst_39 = arith.constant 5.000000e-01 : f32
    %80 = vector.broadcast %cst_39 : f32 to vector<16x48xf32>
    %81 = arith.mulf %80, %62 : vector<16x48xf32>
    %82 = arith.addf %55, %81 : vector<16x48xf32>
    %cst_40 = arith.constant 0.000000e+00 : f32
    %cst_41 = arith.constant 1.600000e+01 : f32
    %83 = vector.broadcast %cst_40 : f32 to vector<16x48xf32>
    %84 = arith.maximumf %83, %82 : vector<16x48xf32>
    %85 = vector.broadcast %cst_41 : f32 to vector<16x48xf32>
    %86 = arith.minimumf %85, %84 : vector<16x48xf32>
    %cst_42 = arith.constant 5.000000e-01 : f32
    %87 = vector.broadcast %cst_42 : f32 to vector<16x48xf32>
    %88 = arith.mulf %87, %65 : vector<16x48xf32>
    %89 = arith.addf %59, %88 : vector<16x48xf32>
    %cst_43 = arith.constant 0.000000e+00 : f32
    %cst_44 = arith.constant 1.600000e+01 : f32
    %90 = vector.broadcast %cst_43 : f32 to vector<16x48xf32>
    %91 = arith.maximumf %90, %89 : vector<16x48xf32>
    %92 = vector.broadcast %cst_44 : f32 to vector<16x48xf32>
    %93 = arith.minimumf %92, %91 : vector<16x48xf32>
    %94 = arith.subf %38, %37 : vector<16x48xf32>
    %95 = tpu.iota {dimensions = array<i32: 0>} : vector<16x48xi32>
    %96 = tpu.iota {dimensions = array<i32: 1>} : vector<16x48xi32>
    %c48_i32 = arith.constant 48 : i32
    %97 = vector.broadcast %c48_i32 : i32 to vector<16x48xi32>
    %98 = arith.muli %95, %97 : vector<16x48xi32>
    %99 = arith.addi %98, %96 : vector<16x48xi32>
    %100 = arith.sitofp %99 : vector<16x48xi32> to vector<16x48xf32>
    %cst_45 = arith.constant dense<0xFF800000> : vector<16xf32>
    %101 = vector.multi_reduction <maximumf>, %94, %cst_45 [1] : vector<16x48xf32> to vector<16xf32>
    %102 = vector.shape_cast %101 : vector<16xf32> to vector<16x1xf32>
    %cst_46 = arith.constant dense<0xFF800000> : vector<1xf32>
    %103 = vector.multi_reduction <maximumf>, %102, %cst_46 [0] : vector<16x1xf32> to vector<1xf32>
    %104 = vector.shape_cast %103 : vector<1xf32> to vector<1x1xf32>
    %105 = vector.broadcast %104 : vector<1x1xf32> to vector<16x48xf32>
    %106 = arith.cmpf oge, %94, %105 : vector<16x48xf32>
    %cst_47 = arith.constant 1.000000e+09 : f32
    %107 = vector.broadcast %cst_47 : f32 to vector<16x48xf32>
    %108 = arith.select %106, %100, %107 : vector<16x48xi1>, vector<16x48xf32>
    %cst_48 = arith.constant dense<0x7F800000> : vector<16xf32>
    %109 = vector.multi_reduction <minimumf>, %108, %cst_48 [1] : vector<16x48xf32> to vector<16xf32>
    %110 = vector.shape_cast %109 : vector<16xf32> to vector<16x1xf32>
    %cst_49 = arith.constant dense<0x7F800000> : vector<1xf32>
    %111 = vector.multi_reduction <minimumf>, %110, %cst_49 [0] : vector<16x1xf32> to vector<1xf32>
    %112 = vector.shape_cast %111 : vector<1xf32> to vector<1x1xf32>
    %113 = vector.broadcast %112 : vector<1x1xf32> to vector<16x48xf32>
    %114 = arith.cmpf oeq, %100, %113 : vector<16x48xf32>
    %cst_50 = arith.constant 0.000000e+00 : f32
    %115 = vector.broadcast %cst_50 : f32 to vector<16x48xf32>
    %116 = arith.select %114, %72, %115 : vector<16x48xi1>, vector<16x48xf32>
    %cst_51 = arith.constant dense<0.000000e+00> : vector<16xf32>
    %117 = vector.multi_reduction <add>, %116, %cst_51 [1] : vector<16x48xf32> to vector<16xf32>
    %118 = vector.shape_cast %117 : vector<16xf32> to vector<16x1xf32>
    %cst_52 = arith.constant dense<0.000000e+00> : vector<1xf32>
    %119 = vector.multi_reduction <add>, %118, %cst_52 [0] : vector<16x1xf32> to vector<1xf32>
    %120 = vector.shape_cast %119 : vector<1xf32> to vector<1x1xf32>
    %c0_53 = arith.constant 0 : index
    %c0_54 = arith.constant 0 : index
    %121 = vector.load %arg15[%c0_53, %c0_54] : memref<16x4xf32, #tpu.memory_space<vmem>>, vector<1x1xf32>
    tpu.vector_store %arg15[%c0_53, %c0_54], %120 {strides = array<i32>} : memref<16x4xf32, #tpu.memory_space<vmem>>, vector<1x1xf32>,
    %cst_55 = arith.constant 0.000000e+00 : f32
    %122 = vector.broadcast %cst_55 : f32 to vector<16x48xf32>
    %123 = arith.select %114, %79, %122 : vector<16x48xi1>, vector<16x48xf32>
    %cst_56 = arith.constant dense<0.000000e+00> : vector<16xf32>
    %124 = vector.multi_reduction <add>, %123, %cst_56 [1] : vector<16x48xf32> to vector<16xf32>
    %125 = vector.shape_cast %124 : vector<16xf32> to vector<16x1xf32>
    %cst_57 = arith.constant dense<0.000000e+00> : vector<1xf32>
    %126 = vector.multi_reduction <add>, %125, %cst_57 [0] : vector<16x1xf32> to vector<1xf32>
    %127 = vector.shape_cast %126 : vector<1xf32> to vector<1x1xf32>
    %c0_58 = arith.constant 0 : index
    %c1_59 = arith.constant 1 : index
    %128 = vector.load %arg15[%c0_58, %c1_59] : memref<16x4xf32, #tpu.memory_space<vmem>>, vector<1x1xf32>
    tpu.vector_store %arg15[%c0_58, %c1_59], %127 {strides = array<i32>} : memref<16x4xf32, #tpu.memory_space<vmem>>, vector<1x1xf32>,
    %cst_60 = arith.constant 0.000000e+00 : f32
    %129 = vector.broadcast %cst_60 : f32 to vector<16x48xf32>
    %130 = arith.select %114, %86, %129 : vector<16x48xi1>, vector<16x48xf32>
    %cst_61 = arith.constant dense<0.000000e+00> : vector<16xf32>
    %131 = vector.multi_reduction <add>, %130, %cst_61 [1] : vector<16x48xf32> to vector<16xf32>
    %132 = vector.shape_cast %131 : vector<16xf32> to vector<16x1xf32>
    %cst_62 = arith.constant dense<0.000000e+00> : vector<1xf32>
    %133 = vector.multi_reduction <add>, %132, %cst_62 [0] : vector<16x1xf32> to vector<1xf32>
    %134 = vector.shape_cast %133 : vector<1xf32> to vector<1x1xf32>
    %c0_63 = arith.constant 0 : index
    %c2 = arith.constant 2 : index
    %135 = vector.load %arg15[%c0_63, %c2] : memref<16x4xf32, #tpu.memory_space<vmem>>, vector<1x1xf32>
    tpu.vector_store %arg15[%c0_63, %c2], %134 {strides = array<i32>} : memref<16x4xf32, #tpu.memory_space<vmem>>, vector<1x1xf32>,
    %cst_64 = arith.constant 0.000000e+00 : f32
    %136 = vector.broadcast %cst_64 : f32 to vector<16x48xf32>
    %137 = arith.select %114, %93, %136 : vector<16x48xi1>, vector<16x48xf32>
    %cst_65 = arith.constant dense<0.000000e+00> : vector<16xf32>
    %138 = vector.multi_reduction <add>, %137, %cst_65 [1] : vector<16x48xf32> to vector<16xf32>
    %139 = vector.shape_cast %138 : vector<16xf32> to vector<16x1xf32>
    %cst_66 = arith.constant dense<0.000000e+00> : vector<1xf32>
    %140 = vector.multi_reduction <add>, %139, %cst_66 [0] : vector<16x1xf32> to vector<1xf32>
    %141 = vector.shape_cast %140 : vector<1xf32> to vector<1x1xf32>
    %c0_67 = arith.constant 0 : index
    %c3 = arith.constant 3 : index
    %142 = vector.load %arg15[%c0_67, %c3] : memref<16x4xf32, #tpu.memory_space<vmem>>, vector<1x1xf32>
    tpu.vector_store %arg15[%c0_67, %c3], %141 {strides = array<i32>} : memref<16x4xf32, #tpu.memory_space<vmem>>, vector<1x1xf32>,
    %cst_68 = arith.constant -1.000000e+09 : f32
    %143 = vector.broadcast %cst_68 : f32 to vector<16x48xf32>
    %144 = arith.select %114, %143, %94 : vector<16x48xi1>, vector<16x48xf32>
    %cst_69 = arith.constant dense<0xFF800000> : vector<16xf32>
    %145 = vector.multi_reduction <maximumf>, %144, %cst_69 [1] : vector<16x48xf32> to vector<16xf32>
    %146 = vector.shape_cast %145 : vector<16xf32> to vector<16x1xf32>
    %cst_70 = arith.constant dense<0xFF800000> : vector<1xf32>
    %147 = vector.multi_reduction <maximumf>, %146, %cst_70 [0] : vector<16x1xf32> to vector<1xf32>
    %148 = vector.shape_cast %147 : vector<1xf32> to vector<1x1xf32>
    %149 = vector.broadcast %148 : vector<1x1xf32> to vector<16x48xf32>
    %150 = arith.cmpf oge, %144, %149 : vector<16x48xf32>
    %cst_71 = arith.constant 1.000000e+09 : f32
    %151 = vector.broadcast %cst_71 : f32 to vector<16x48xf32>
    %152 = arith.select %150, %100, %151 : vector<16x48xi1>, vector<16x48xf32>
    %cst_72 = arith.constant dense<0x7F800000> : vector<16xf32>
    %153 = vector.multi_reduction <minimumf>, %152, %cst_72 [1] : vector<16x48xf32> to vector<16xf32>
    %154 = vector.shape_cast %153 : vector<16xf32> to vector<16x1xf32>
    %cst_73 = arith.constant dense<0x7F800000> : vector<1xf32>
    %155 = vector.multi_reduction <minimumf>, %154, %cst_73 [0] : vector<16x1xf32> to vector<1xf32>
    %156 = vector.shape_cast %155 : vector<1xf32> to vector<1x1xf32>
    %157 = vector.broadcast %156 : vector<1x1xf32> to vector<16x48xf32>
    %158 = arith.cmpf oeq, %100, %157 : vector<16x48xf32>
    %cst_74 = arith.constant 0.000000e+00 : f32
    %159 = vector.broadcast %cst_74 : f32 to vector<16x48xf32>
    %160 = arith.select %158, %72, %159 : vector<16x48xi1>, vector<16x48xf32>
    %cst_75 = arith.constant dense<0.000000e+00> : vector<16xf32>
    %161 = vector.multi_reduction <add>, %160, %cst_75 [1] : vector<16x48xf32> to vector<16xf32>
    %162 = vector.shape_cast %161 : vector<16xf32> to vector<16x1xf32>
    %cst_76 = arith.constant dense<0.000000e+00> : vector<1xf32>
    %163 = vector.multi_reduction <add>, %162, %cst_76 [0] : vector<16x1xf32> to vector<1xf32>
    %164 = vector.shape_cast %163 : vector<1xf32> to vector<1x1xf32>
    %c1_77 = arith.constant 1 : index
    %c0_78 = arith.constant 0 : index
    %165 = vector.load %arg15[%c1_77, %c0_78] : memref<16x4xf32, #tpu.memory_space<vmem>>, vector<1x1xf32>
    tpu.vector_store %arg15[%c1_77, %c0_78], %164 {strides = array<i32>} : memref<16x4xf32, #tpu.memory_space<vmem>>, vector<1x1xf32>,
    %cst_79 = arith.constant 0.000000e+00 : f32
    %166 = vector.broadcast %cst_79 : f32 to vector<16x48xf32>
    %167 = arith.select %158, %79, %166 : vector<16x48xi1>, vector<16x48xf32>
    %cst_80 = arith.constant dense<0.000000e+00> : vector<16xf32>
    %168 = vector.multi_reduction <add>, %167, %cst_80 [1] : vector<16x48xf32> to vector<16xf32>
    %169 = vector.shape_cast %168 : vector<16xf32> to vector<16x1xf32>
    %cst_81 = arith.constant dense<0.000000e+00> : vector<1xf32>
    %170 = vector.multi_reduction <add>, %169, %cst_81 [0] : vector<16x1xf32> to vector<1xf32>
    %171 = vector.shape_cast %170 : vector<1xf32> to vector<1x1xf32>
    %c1_82 = arith.constant 1 : index
    %c1_83 = arith.constant 1 : index
    %172 = vector.load %arg15[%c1_82, %c1_83] : memref<16x4xf32, #tpu.memory_space<vmem>>, vector<1x1xf32>
    tpu.vector_store %arg15[%c1_82, %c1_83], %171 {strides = array<i32>} : memref<16x4xf32, #tpu.memory_space<vmem>>, vector<1x1xf32>,
    %cst_84 = arith.constant 0.000000e+00 : f32
    %173 = vector.broadcast %cst_84 : f32 to vector<16x48xf32>
    %174 = arith.select %158, %86, %173 : vector<16x48xi1>, vector<16x48xf32>
    %cst_85 = arith.constant dense<0.000000e+00> : vector<16xf32>
    %175 = vector.multi_reduction <add>, %174, %cst_85 [1] : vector<16x48xf32> to vector<16xf32>
    %176 = vector.shape_cast %175 : vector<16xf32> to vector<16x1xf32>
    %cst_86 = arith.constant dense<0.000000e+00> : vector<1xf32>
    %177 = vector.multi_reduction <add>, %176, %cst_86 [0] : vector<16x1xf32> to vector<1xf32>
    %178 = vector.shape_cast %177 : vector<1xf32> to vector<1x1xf32>
    %c1_87 = arith.constant 1 : index
    %c2_88 = arith.constant 2 : index
    %179 = vector.load %arg15[%c1_87, %c2_88] : memref<16x4xf32, #tpu.memory_space<vmem>>, vector<1x1xf32>
    tpu.vector_store %arg15[%c1_87, %c2_88], %178 {strides = array<i32>} : memref<16x4xf32, #tpu.memory_space<vmem>>, vector<1x1xf32>,
    %cst_89 = arith.constant 0.000000e+00 : f32
    %180 = vector.broadcast %cst_89 : f32 to vector<16x48xf32>
    %181 = arith.select %158, %93, %180 : vector<16x48xi1>, vector<16x48xf32>
    %cst_90 = arith.constant dense<0.000000e+00> : vector<16xf32>
    %182 = vector.multi_reduction <add>, %181, %cst_90 [1] : vector<16x48xf32> to vector<16xf32>
    %183 = vector.shape_cast %182 : vector<16xf32> to vector<16x1xf32>
    %cst_91 = arith.constant dense<0.000000e+00> : vector<1xf32>
    %184 = vector.multi_reduction <add>, %183, %cst_91 [0] : vector<16x1xf32> to vector<1xf32>
    %185 = vector.shape_cast %184 : vector<1xf32> to vector<1x1xf32>
    %c1_92 = arith.constant 1 : index
    %c3_93 = arith.constant 3 : index
    %186 = vector.load %arg15[%c1_92, %c3_93] : memref<16x4xf32, #tpu.memory_space<vmem>>, vector<1x1xf32>
    tpu.vector_store %arg15[%c1_92, %c3_93], %185 {strides = array<i32>} : memref<16x4xf32, #tpu.memory_space<vmem>>, vector<1x1xf32>,
    %cst_94 = arith.constant -1.000000e+09 : f32
    %187 = vector.broadcast %cst_94 : f32 to vector<16x48xf32>
    %188 = arith.select %158, %187, %144 : vector<16x48xi1>, vector<16x48xf32>
    %cst_95 = arith.constant dense<0xFF800000> : vector<16xf32>
    %189 = vector.multi_reduction <maximumf>, %188, %cst_95 [1] : vector<16x48xf32> to vector<16xf32>
    %190 = vector.shape_cast %189 : vector<16xf32> to vector<16x1xf32>
    %cst_96 = arith.constant dense<0xFF800000> : vector<1xf32>
    %191 = vector.multi_reduction <maximumf>, %190, %cst_96 [0] : vector<16x1xf32> to vector<1xf32>
    %192 = vector.shape_cast %191 : vector<1xf32> to vector<1x1xf32>
    %193 = vector.broadcast %192 : vector<1x1xf32> to vector<16x48xf32>
    %194 = arith.cmpf oge, %188, %193 : vector<16x48xf32>
    %cst_97 = arith.constant 1.000000e+09 : f32
    %195 = vector.broadcast %cst_97 : f32 to vector<16x48xf32>
    %196 = arith.select %194, %100, %195 : vector<16x48xi1>, vector<16x48xf32>
    %cst_98 = arith.constant dense<0x7F800000> : vector<16xf32>
    %197 = vector.multi_reduction <minimumf>, %196, %cst_98 [1] : vector<16x48xf32> to vector<16xf32>
    %198 = vector.shape_cast %197 : vector<16xf32> to vector<16x1xf32>
    %cst_99 = arith.constant dense<0x7F800000> : vector<1xf32>
    %199 = vector.multi_reduction <minimumf>, %198, %cst_99 [0] : vector<16x1xf32> to vector<1xf32>
    %200 = vector.shape_cast %199 : vector<1xf32> to vector<1x1xf32>
    %201 = vector.broadcast %200 : vector<1x1xf32> to vector<16x48xf32>
    %202 = arith.cmpf oeq, %100, %201 : vector<16x48xf32>
    %cst_100 = arith.constant 0.000000e+00 : f32
    %203 = vector.broadcast %cst_100 : f32 to vector<16x48xf32>
    %204 = arith.select %202, %72, %203 : vector<16x48xi1>, vector<16x48xf32>
    %cst_101 = arith.constant dense<0.000000e+00> : vector<16xf32>
    %205 = vector.multi_reduction <add>, %204, %cst_101 [1] : vector<16x48xf32> to vector<16xf32>
    %206 = vector.shape_cast %205 : vector<16xf32> to vector<16x1xf32>
    %cst_102 = arith.constant dense<0.000000e+00> : vector<1xf32>
    %207 = vector.multi_reduction <add>, %206, %cst_102 [0] : vector<16x1xf32> to vector<1xf32>
    %208 = vector.shape_cast %207 : vector<1xf32> to vector<1x1xf32>
    %c2_103 = arith.constant 2 : index
    %c0_104 = arith.constant 0 : index
    %209 = vector.load %arg15[%c2_103, %c0_104] : memref<16x4xf32, #tpu.memory_space<vmem>>, vector<1x1xf32>
    tpu.vector_store %arg15[%c2_103, %c0_104], %208 {strides = array<i32>} : memref<16x4xf32, #tpu.memory_space<vmem>>, vector<1x1xf32>,
    %cst_105 = arith.constant 0.000000e+00 : f32
    %210 = vector.broadcast %cst_105 : f32 to vector<16x48xf32>
    %211 = arith.select %202, %79, %210 : vector<16x48xi1>, vector<16x48xf32>
    %cst_106 = arith.constant dense<0.000000e+00> : vector<16xf32>
    %212 = vector.multi_reduction <add>, %211, %cst_106 [1] : vector<16x48xf32> to vector<16xf32>
    %213 = vector.shape_cast %212 : vector<16xf32> to vector<16x1xf32>
    %cst_107 = arith.constant dense<0.000000e+00> : vector<1xf32>
    %214 = vector.multi_reduction <add>, %213, %cst_107 [0] : vector<16x1xf32> to vector<1xf32>
    %215 = vector.shape_cast %214 : vector<1xf32> to vector<1x1xf32>
    %c2_108 = arith.constant 2 : index
    %c1_109 = arith.constant 1 : index
    %216 = vector.load %arg15[%c2_108, %c1_109] : memref<16x4xf32, #tpu.memory_space<vmem>>, vector<1x1xf32>
    tpu.vector_store %arg15[%c2_108, %c1_109], %215 {strides = array<i32>} : memref<16x4xf32, #tpu.memory_space<vmem>>, vector<1x1xf32>,
    %cst_110 = arith.constant 0.000000e+00 : f32
    %217 = vector.broadcast %cst_110 : f32 to vector<16x48xf32>
    %218 = arith.select %202, %86, %217 : vector<16x48xi1>, vector<16x48xf32>
    %cst_111 = arith.constant dense<0.000000e+00> : vector<16xf32>
    %219 = vector.multi_reduction <add>, %218, %cst_111 [1] : vector<16x48xf32> to vector<16xf32>
    %220 = vector.shape_cast %219 : vector<16xf32> to vector<16x1xf32>
    %cst_112 = arith.constant dense<0.000000e+00> : vector<1xf32>
    %221 = vector.multi_reduction <add>, %220, %cst_112 [0] : vector<16x1xf32> to vector<1xf32>
    %222 = vector.shape_cast %221 : vector<1xf32> to vector<1x1xf32>
    %c2_113 = arith.constant 2 : index
    %c2_114 = arith.constant 2 : index
    %223 = vector.load %arg15[%c2_113, %c2_114] : memref<16x4xf32, #tpu.memory_space<vmem>>, vector<1x1xf32>
    tpu.vector_store %arg15[%c2_113, %c2_114], %222 {strides = array<i32>} : memref<16x4xf32, #tpu.memory_space<vmem>>, vector<1x1xf32>,
    %cst_115 = arith.constant 0.000000e+00 : f32
    %224 = vector.broadcast %cst_115 : f32 to vector<16x48xf32>
    %225 = arith.select %202, %93, %224 : vector<16x48xi1>, vector<16x48xf32>
    %cst_116 = arith.constant dense<0.000000e+00> : vector<16xf32>
    %226 = vector.multi_reduction <add>, %225, %cst_116 [1] : vector<16x48xf32> to vector<16xf32>
    %227 = vector.shape_cast %226 : vector<16xf32> to vector<16x1xf32>
    %cst_117 = arith.constant dense<0.000000e+00> : vector<1xf32>
    %228 = vector.multi_reduction <add>, %227, %cst_117 [0] : vector<16x1xf32> to vector<1xf32>
    %229 = vector.shape_cast %228 : vector<1xf32> to vector<1x1xf32>
    %c2_118 = arith.constant 2 : index
    %c3_119 = arith.constant 3 : index
    %230 = vector.load %arg15[%c2_118, %c3_119] : memref<16x4xf32, #tpu.memory_space<vmem>>, vector<1x1xf32>
    tpu.vector_store %arg15[%c2_118, %c3_119], %229 {strides = array<i32>} : memref<16x4xf32, #tpu.memory_space<vmem>>, vector<1x1xf32>,
    %cst_120 = arith.constant -1.000000e+09 : f32
    %231 = vector.broadcast %cst_120 : f32 to vector<16x48xf32>
    %232 = arith.select %202, %231, %188 : vector<16x48xi1>, vector<16x48xf32>
    %cst_121 = arith.constant dense<0xFF800000> : vector<16xf32>
    %233 = vector.multi_reduction <maximumf>, %232, %cst_121 [1] : vector<16x48xf32> to vector<16xf32>
    %234 = vector.shape_cast %233 : vector<16xf32> to vector<16x1xf32>
    %cst_122 = arith.constant dense<0xFF800000> : vector<1xf32>
    %235 = vector.multi_reduction <maximumf>, %234, %cst_122 [0] : vector<16x1xf32> to vector<1xf32>
    %236 = vector.shape_cast %235 : vector<1xf32> to vector<1x1xf32>
    %237 = vector.broadcast %236 : vector<1x1xf32> to vector<16x48xf32>
    %238 = arith.cmpf oge, %232, %237 : vector<16x48xf32>
    %cst_123 = arith.constant 1.000000e+09 : f32
    %239 = vector.broadcast %cst_123 : f32 to vector<16x48xf32>
    %240 = arith.select %238, %100, %239 : vector<16x48xi1>, vector<16x48xf32>
    %cst_124 = arith.constant dense<0x7F800000> : vector<16xf32>
    %241 = vector.multi_reduction <minimumf>, %240, %cst_124 [1] : vector<16x48xf32> to vector<16xf32>
    %242 = vector.shape_cast %241 : vector<16xf32> to vector<16x1xf32>
    %cst_125 = arith.constant dense<0x7F800000> : vector<1xf32>
    %243 = vector.multi_reduction <minimumf>, %242, %cst_125 [0] : vector<16x1xf32> to vector<1xf32>
    %244 = vector.shape_cast %243 : vector<1xf32> to vector<1x1xf32>
    %245 = vector.broadcast %244 : vector<1x1xf32> to vector<16x48xf32>
    %246 = arith.cmpf oeq, %100, %245 : vector<16x48xf32>
    %cst_126 = arith.constant 0.000000e+00 : f32
    %247 = vector.broadcast %cst_126 : f32 to vector<16x48xf32>
    %248 = arith.select %246, %72, %247 : vector<16x48xi1>, vector<16x48xf32>
    %cst_127 = arith.constant dense<0.000000e+00> : vector<16xf32>
    %249 = vector.multi_reduction <add>, %248, %cst_127 [1] : vector<16x48xf32> to vector<16xf32>
    %250 = vector.shape_cast %249 : vector<16xf32> to vector<16x1xf32>
    %cst_128 = arith.constant dense<0.000000e+00> : vector<1xf32>
    %251 = vector.multi_reduction <add>, %250, %cst_128 [0] : vector<16x1xf32> to vector<1xf32>
    %252 = vector.shape_cast %251 : vector<1xf32> to vector<1x1xf32>
    %c3_129 = arith.constant 3 : index
    %c0_130 = arith.constant 0 : index
    %253 = vector.load %arg15[%c3_129, %c0_130] : memref<16x4xf32, #tpu.memory_space<vmem>>, vector<1x1xf32>
    tpu.vector_store %arg15[%c3_129, %c0_130], %252 {strides = array<i32>} : memref<16x4xf32, #tpu.memory_space<vmem>>, vector<1x1xf32>,
    %cst_131 = arith.constant 0.000000e+00 : f32
    %254 = vector.broadcast %cst_131 : f32 to vector<16x48xf32>
    %255 = arith.select %246, %79, %254 : vector<16x48xi1>, vector<16x48xf32>
    %cst_132 = arith.constant dense<0.000000e+00> : vector<16xf32>
    %256 = vector.multi_reduction <add>, %255, %cst_132 [1] : vector<16x48xf32> to vector<16xf32>
    %257 = vector.shape_cast %256 : vector<16xf32> to vector<16x1xf32>
    %cst_133 = arith.constant dense<0.000000e+00> : vector<1xf32>
    %258 = vector.multi_reduction <add>, %257, %cst_133 [0] : vector<16x1xf32> to vector<1xf32>
    %259 = vector.shape_cast %258 : vector<1xf32> to vector<1x1xf32>
    %c3_134 = arith.constant 3 : index
    %c1_135 = arith.constant 1 : index
    %260 = vector.load %arg15[%c3_134, %c1_135] : memref<16x4xf32, #tpu.memory_space<vmem>>, vector<1x1xf32>
    tpu.vector_store %arg15[%c3_134, %c1_135], %259 {strides = array<i32>} : memref<16x4xf32, #tpu.memory_space<vmem>>, vector<1x1xf32>,
    %cst_136 = arith.constant 0.000000e+00 : f32
    %261 = vector.broadcast %cst_136 : f32 to vector<16x48xf32>
    %262 = arith.select %246, %86, %261 : vector<16x48xi1>, vector<16x48xf32>
    %cst_137 = arith.constant dense<0.000000e+00> : vector<16xf32>
    %263 = vector.multi_reduction <add>, %262, %cst_137 [1] : vector<16x48xf32> to vector<16xf32>
    %264 = vector.shape_cast %263 : vector<16xf32> to vector<16x1xf32>
    %cst_138 = arith.constant dense<0.000000e+00> : vector<1xf32>
    %265 = vector.multi_reduction <add>, %264, %cst_138 [0] : vector<16x1xf32> to vector<1xf32>
    %266 = vector.shape_cast %265 : vector<1xf32> to vector<1x1xf32>
    %c3_139 = arith.constant 3 : index
    %c2_140 = arith.constant 2 : index
    %267 = vector.load %arg15[%c3_139, %c2_140] : memref<16x4xf32, #tpu.memory_space<vmem>>, vector<1x1xf32>
    tpu.vector_store %arg15[%c3_139, %c2_140], %266 {strides = array<i32>} : memref<16x4xf32, #tpu.memory_space<vmem>>, vector<1x1xf32>,
    %cst_141 = arith.constant 0.000000e+00 : f32
    %268 = vector.broadcast %cst_141 : f32 to vector<16x48xf32>
    %269 = arith.select %246, %93, %268 : vector<16x48xi1>, vector<16x48xf32>
    %cst_142 = arith.constant dense<0.000000e+00> : vector<16xf32>
    %270 = vector.multi_reduction <add>, %269, %cst_142 [1] : vector<16x48xf32> to vector<16xf32>
    %271 = vector.shape_cast %270 : vector<16xf32> to vector<16x1xf32>
    %cst_143 = arith.constant dense<0.000000e+00> : vector<1xf32>
    %272 = vector.multi_reduction <add>, %271, %cst_143 [0] : vector<16x1xf32> to vector<1xf32>
    %273 = vector.shape_cast %272 : vector<1xf32> to vector<1x1xf32>
    %c3_144 = arith.constant 3 : index
    %c3_145 = arith.constant 3 : index
    %274 = vector.load %arg15[%c3_144, %c3_145] : memref<16x4xf32, #tpu.memory_space<vmem>>, vector<1x1xf32>
    tpu.vector_store %arg15[%c3_144, %c3_145], %273 {strides = array<i32>} : memref<16x4xf32, #tpu.memory_space<vmem>>, vector<1x1xf32>,
    %cst_146 = arith.constant -1.000000e+09 : f32
    %275 = vector.broadcast %cst_146 : f32 to vector<16x48xf32>
    %276 = arith.select %246, %275, %232 : vector<16x48xi1>, vector<16x48xf32>
    %cst_147 = arith.constant dense<0xFF800000> : vector<16xf32>
    %277 = vector.multi_reduction <maximumf>, %276, %cst_147 [1] : vector<16x48xf32> to vector<16xf32>
    %278 = vector.shape_cast %277 : vector<16xf32> to vector<16x1xf32>
    %cst_148 = arith.constant dense<0xFF800000> : vector<1xf32>
    %279 = vector.multi_reduction <maximumf>, %278, %cst_148 [0] : vector<16x1xf32> to vector<1xf32>
    %280 = vector.shape_cast %279 : vector<1xf32> to vector<1x1xf32>
    %281 = vector.broadcast %280 : vector<1x1xf32> to vector<16x48xf32>
    %282 = arith.cmpf oge, %276, %281 : vector<16x48xf32>
    %cst_149 = arith.constant 1.000000e+09 : f32
    %283 = vector.broadcast %cst_149 : f32 to vector<16x48xf32>
    %284 = arith.select %282, %100, %283 : vector<16x48xi1>, vector<16x48xf32>
    %cst_150 = arith.constant dense<0x7F800000> : vector<16xf32>
    %285 = vector.multi_reduction <minimumf>, %284, %cst_150 [1] : vector<16x48xf32> to vector<16xf32>
    %286 = vector.shape_cast %285 : vector<16xf32> to vector<16x1xf32>
    %cst_151 = arith.constant dense<0x7F800000> : vector<1xf32>
    %287 = vector.multi_reduction <minimumf>, %286, %cst_151 [0] : vector<16x1xf32> to vector<1xf32>
    %288 = vector.shape_cast %287 : vector<1xf32> to vector<1x1xf32>
    %289 = vector.broadcast %288 : vector<1x1xf32> to vector<16x48xf32>
    %290 = arith.cmpf oeq, %100, %289 : vector<16x48xf32>
    %cst_152 = arith.constant 0.000000e+00 : f32
    %291 = vector.broadcast %cst_152 : f32 to vector<16x48xf32>
    %292 = arith.select %290, %72, %291 : vector<16x48xi1>, vector<16x48xf32>
    %cst_153 = arith.constant dense<0.000000e+00> : vector<16xf32>
    %293 = vector.multi_reduction <add>, %292, %cst_153 [1] : vector<16x48xf32> to vector<16xf32>
    %294 = vector.shape_cast %293 : vector<16xf32> to vector<16x1xf32>
    %cst_154 = arith.constant dense<0.000000e+00> : vector<1xf32>
    %295 = vector.multi_reduction <add>, %294, %cst_154 [0] : vector<16x1xf32> to vector<1xf32>
    %296 = vector.shape_cast %295 : vector<1xf32> to vector<1x1xf32>
    %c4 = arith.constant 4 : index
    %c0_155 = arith.constant 0 : index
    %297 = vector.load %arg15[%c4, %c0_155] : memref<16x4xf32, #tpu.memory_space<vmem>>, vector<1x1xf32>
    tpu.vector_store %arg15[%c4, %c0_155], %296 {strides = array<i32>} : memref<16x4xf32, #tpu.memory_space<vmem>>, vector<1x1xf32>,
    %cst_156 = arith.constant 0.000000e+00 : f32
    %298 = vector.broadcast %cst_156 : f32 to vector<16x48xf32>
    %299 = arith.select %290, %79, %298 : vector<16x48xi1>, vector<16x48xf32>
    %cst_157 = arith.constant dense<0.000000e+00> : vector<16xf32>
    %300 = vector.multi_reduction <add>, %299, %cst_157 [1] : vector<16x48xf32> to vector<16xf32>
    %301 = vector.shape_cast %300 : vector<16xf32> to vector<16x1xf32>
    %cst_158 = arith.constant dense<0.000000e+00> : vector<1xf32>
    %302 = vector.multi_reduction <add>, %301, %cst_158 [0] : vector<16x1xf32> to vector<1xf32>
    %303 = vector.shape_cast %302 : vector<1xf32> to vector<1x1xf32>
    %c4_159 = arith.constant 4 : index
    %c1_160 = arith.constant 1 : index
    %304 = vector.load %arg15[%c4_159, %c1_160] : memref<16x4xf32, #tpu.memory_space<vmem>>, vector<1x1xf32>
    tpu.vector_store %arg15[%c4_159, %c1_160], %303 {strides = array<i32>} : memref<16x4xf32, #tpu.memory_space<vmem>>, vector<1x1xf32>,
    %cst_161 = arith.constant 0.000000e+00 : f32
    %305 = vector.broadcast %cst_161 : f32 to vector<16x48xf32>
    %306 = arith.select %290, %86, %305 : vector<16x48xi1>, vector<16x48xf32>
    %cst_162 = arith.constant dense<0.000000e+00> : vector<16xf32>
    %307 = vector.multi_reduction <add>, %306, %cst_162 [1] : vector<16x48xf32> to vector<16xf32>
    %308 = vector.shape_cast %307 : vector<16xf32> to vector<16x1xf32>
    %cst_163 = arith.constant dense<0.000000e+00> : vector<1xf32>
    %309 = vector.multi_reduction <add>, %308, %cst_163 [0] : vector<16x1xf32> to vector<1xf32>
    %310 = vector.shape_cast %309 : vector<1xf32> to vector<1x1xf32>
    %c4_164 = arith.constant 4 : index
    %c2_165 = arith.constant 2 : index
    %311 = vector.load %arg15[%c4_164, %c2_165] : memref<16x4xf32, #tpu.memory_space<vmem>>, vector<1x1xf32>
    tpu.vector_store %arg15[%c4_164, %c2_165], %310 {strides = array<i32>} : memref<16x4xf32, #tpu.memory_space<vmem>>, vector<1x1xf32>,
    %cst_166 = arith.constant 0.000000e+00 : f32
    %312 = vector.broadcast %cst_166 : f32 to vector<16x48xf32>
    %313 = arith.select %290, %93, %312 : vector<16x48xi1>, vector<16x48xf32>
    %cst_167 = arith.constant dense<0.000000e+00> : vector<16xf32>
    %314 = vector.multi_reduction <add>, %313, %cst_167 [1] : vector<16x48xf32> to vector<16xf32>
    %315 = vector.shape_cast %314 : vector<16xf32> to vector<16x1xf32>
    %cst_168 = arith.constant dense<0.000000e+00> : vector<1xf32>
    %316 = vector.multi_reduction <add>, %315, %cst_168 [0] : vector<16x1xf32> to vector<1xf32>
    %317 = vector.shape_cast %316 : vector<1xf32> to vector<1x1xf32>
    %c4_169 = arith.constant 4 : index
    %c3_170 = arith.constant 3 : index
    %318 = vector.load %arg15[%c4_169, %c3_170] : memref<16x4xf32, #tpu.memory_space<vmem>>, vector<1x1xf32>
    tpu.vector_store %arg15[%c4_169, %c3_170], %317 {strides = array<i32>} : memref<16x4xf32, #tpu.memory_space<vmem>>, vector<1x1xf32>,
    %cst_171 = arith.constant -1.000000e+09 : f32
    %319 = vector.broadcast %cst_171 : f32 to vector<16x48xf32>
    %320 = arith.select %290, %319, %276 : vector<16x48xi1>, vector<16x48xf32>
    %cst_172 = arith.constant dense<0xFF800000> : vector<16xf32>
    %321 = vector.multi_reduction <maximumf>, %320, %cst_172 [1] : vector<16x48xf32> to vector<16xf32>
    %322 = vector.shape_cast %321 : vector<16xf32> to vector<16x1xf32>
    %cst_173 = arith.constant dense<0xFF800000> : vector<1xf32>
    %323 = vector.multi_reduction <maximumf>, %322, %cst_173 [0] : vector<16x1xf32> to vector<1xf32>
    %324 = vector.shape_cast %323 : vector<1xf32> to vector<1x1xf32>
    %325 = vector.broadcast %324 : vector<1x1xf32> to vector<16x48xf32>
    %326 = arith.cmpf oge, %320, %325 : vector<16x48xf32>
    %cst_174 = arith.constant 1.000000e+09 : f32
    %327 = vector.broadcast %cst_174 : f32 to vector<16x48xf32>
    %328 = arith.select %326, %100, %327 : vector<16x48xi1>, vector<16x48xf32>
    %cst_175 = arith.constant dense<0x7F800000> : vector<16xf32>
    %329 = vector.multi_reduction <minimumf>, %328, %cst_175 [1] : vector<16x48xf32> to vector<16xf32>
    %330 = vector.shape_cast %329 : vector<16xf32> to vector<16x1xf32>
    %cst_176 = arith.constant dense<0x7F800000> : vector<1xf32>
    %331 = vector.multi_reduction <minimumf>, %330, %cst_176 [0] : vector<16x1xf32> to vector<1xf32>
    %332 = vector.shape_cast %331 : vector<1xf32> to vector<1x1xf32>
    %333 = vector.broadcast %332 : vector<1x1xf32> to vector<16x48xf32>
    %334 = arith.cmpf oeq, %100, %333 : vector<16x48xf32>
    %cst_177 = arith.constant 0.000000e+00 : f32
    %335 = vector.broadcast %cst_177 : f32 to vector<16x48xf32>
    %336 = arith.select %334, %72, %335 : vector<16x48xi1>, vector<16x48xf32>
    %cst_178 = arith.constant dense<0.000000e+00> : vector<16xf32>
    %337 = vector.multi_reduction <add>, %336, %cst_178 [1] : vector<16x48xf32> to vector<16xf32>
    %338 = vector.shape_cast %337 : vector<16xf32> to vector<16x1xf32>
    %cst_179 = arith.constant dense<0.000000e+00> : vector<1xf32>
    %339 = vector.multi_reduction <add>, %338, %cst_179 [0] : vector<16x1xf32> to vector<1xf32>
    %340 = vector.shape_cast %339 : vector<1xf32> to vector<1x1xf32>
    %c5 = arith.constant 5 : index
    %c0_180 = arith.constant 0 : index
    %341 = vector.load %arg15[%c5, %c0_180] : memref<16x4xf32, #tpu.memory_space<vmem>>, vector<1x1xf32>
    tpu.vector_store %arg15[%c5, %c0_180], %340 {strides = array<i32>} : memref<16x4xf32, #tpu.memory_space<vmem>>, vector<1x1xf32>,
    %cst_181 = arith.constant 0.000000e+00 : f32
    %342 = vector.broadcast %cst_181 : f32 to vector<16x48xf32>
    %343 = arith.select %334, %79, %342 : vector<16x48xi1>, vector<16x48xf32>
    %cst_182 = arith.constant dense<0.000000e+00> : vector<16xf32>
    %344 = vector.multi_reduction <add>, %343, %cst_182 [1] : vector<16x48xf32> to vector<16xf32>
    %345 = vector.shape_cast %344 : vector<16xf32> to vector<16x1xf32>
    %cst_183 = arith.constant dense<0.000000e+00> : vector<1xf32>
    %346 = vector.multi_reduction <add>, %345, %cst_183 [0] : vector<16x1xf32> to vector<1xf32>
    %347 = vector.shape_cast %346 : vector<1xf32> to vector<1x1xf32>
    %c5_184 = arith.constant 5 : index
    %c1_185 = arith.constant 1 : index
    %348 = vector.load %arg15[%c5_184, %c1_185] : memref<16x4xf32, #tpu.memory_space<vmem>>, vector<1x1xf32>
    tpu.vector_store %arg15[%c5_184, %c1_185], %347 {strides = array<i32>} : memref<16x4xf32, #tpu.memory_space<vmem>>, vector<1x1xf32>,
    %cst_186 = arith.constant 0.000000e+00 : f32
    %349 = vector.broadcast %cst_186 : f32 to vector<16x48xf32>
    %350 = arith.select %334, %86, %349 : vector<16x48xi1>, vector<16x48xf32>
    %cst_187 = arith.constant dense<0.000000e+00> : vector<16xf32>
    %351 = vector.multi_reduction <add>, %350, %cst_187 [1] : vector<16x48xf32> to vector<16xf32>
    %352 = vector.shape_cast %351 : vector<16xf32> to vector<16x1xf32>
    %cst_188 = arith.constant dense<0.000000e+00> : vector<1xf32>
    %353 = vector.multi_reduction <add>, %352, %cst_188 [0] : vector<16x1xf32> to vector<1xf32>
    %354 = vector.shape_cast %353 : vector<1xf32> to vector<1x1xf32>
    %c5_189 = arith.constant 5 : index
    %c2_190 = arith.constant 2 : index
    %355 = vector.load %arg15[%c5_189, %c2_190] : memref<16x4xf32, #tpu.memory_space<vmem>>, vector<1x1xf32>
    tpu.vector_store %arg15[%c5_189, %c2_190], %354 {strides = array<i32>} : memref<16x4xf32, #tpu.memory_space<vmem>>, vector<1x1xf32>,
    %cst_191 = arith.constant 0.000000e+00 : f32
    %356 = vector.broadcast %cst_191 : f32 to vector<16x48xf32>
    %357 = arith.select %334, %93, %356 : vector<16x48xi1>, vector<16x48xf32>
    %cst_192 = arith.constant dense<0.000000e+00> : vector<16xf32>
    %358 = vector.multi_reduction <add>, %357, %cst_192 [1] : vector<16x48xf32> to vector<16xf32>
    %359 = vector.shape_cast %358 : vector<16xf32> to vector<16x1xf32>
    %cst_193 = arith.constant dense<0.000000e+00> : vector<1xf32>
    %360 = vector.multi_reduction <add>, %359, %cst_193 [0] : vector<16x1xf32> to vector<1xf32>
    %361 = vector.shape_cast %360 : vector<1xf32> to vector<1x1xf32>
    %c5_194 = arith.constant 5 : index
    %c3_195 = arith.constant 3 : index
    %362 = vector.load %arg15[%c5_194, %c3_195] : memref<16x4xf32, #tpu.memory_space<vmem>>, vector<1x1xf32>
    tpu.vector_store %arg15[%c5_194, %c3_195], %361 {strides = array<i32>} : memref<16x4xf32, #tpu.memory_space<vmem>>, vector<1x1xf32>,
    %cst_196 = arith.constant -1.000000e+09 : f32
    %363 = vector.broadcast %cst_196 : f32 to vector<16x48xf32>
    %364 = arith.select %334, %363, %320 : vector<16x48xi1>, vector<16x48xf32>
    %cst_197 = arith.constant dense<0xFF800000> : vector<16xf32>
    %365 = vector.multi_reduction <maximumf>, %364, %cst_197 [1] : vector<16x48xf32> to vector<16xf32>
    %366 = vector.shape_cast %365 : vector<16xf32> to vector<16x1xf32>
    %cst_198 = arith.constant dense<0xFF800000> : vector<1xf32>
    %367 = vector.multi_reduction <maximumf>, %366, %cst_198 [0] : vector<16x1xf32> to vector<1xf32>
    %368 = vector.shape_cast %367 : vector<1xf32> to vector<1x1xf32>
    %369 = vector.broadcast %368 : vector<1x1xf32> to vector<16x48xf32>
    %370 = arith.cmpf oge, %364, %369 : vector<16x48xf32>
    %cst_199 = arith.constant 1.000000e+09 : f32
    %371 = vector.broadcast %cst_199 : f32 to vector<16x48xf32>
    %372 = arith.select %370, %100, %371 : vector<16x48xi1>, vector<16x48xf32>
    %cst_200 = arith.constant dense<0x7F800000> : vector<16xf32>
    %373 = vector.multi_reduction <minimumf>, %372, %cst_200 [1] : vector<16x48xf32> to vector<16xf32>
    %374 = vector.shape_cast %373 : vector<16xf32> to vector<16x1xf32>
    %cst_201 = arith.constant dense<0x7F800000> : vector<1xf32>
    %375 = vector.multi_reduction <minimumf>, %374, %cst_201 [0] : vector<16x1xf32> to vector<1xf32>
    %376 = vector.shape_cast %375 : vector<1xf32> to vector<1x1xf32>
    %377 = vector.broadcast %376 : vector<1x1xf32> to vector<16x48xf32>
    %378 = arith.cmpf oeq, %100, %377 : vector<16x48xf32>
    %cst_202 = arith.constant 0.000000e+00 : f32
    %379 = vector.broadcast %cst_202 : f32 to vector<16x48xf32>
    %380 = arith.select %378, %72, %379 : vector<16x48xi1>, vector<16x48xf32>
    %cst_203 = arith.constant dense<0.000000e+00> : vector<16xf32>
    %381 = vector.multi_reduction <add>, %380, %cst_203 [1] : vector<16x48xf32> to vector<16xf32>
    %382 = vector.shape_cast %381 : vector<16xf32> to vector<16x1xf32>
    %cst_204 = arith.constant dense<0.000000e+00> : vector<1xf32>
    %383 = vector.multi_reduction <add>, %382, %cst_204 [0] : vector<16x1xf32> to vector<1xf32>
    %384 = vector.shape_cast %383 : vector<1xf32> to vector<1x1xf32>
    %c6 = arith.constant 6 : index
    %c0_205 = arith.constant 0 : index
    %385 = vector.load %arg15[%c6, %c0_205] : memref<16x4xf32, #tpu.memory_space<vmem>>, vector<1x1xf32>
    tpu.vector_store %arg15[%c6, %c0_205], %384 {strides = array<i32>} : memref<16x4xf32, #tpu.memory_space<vmem>>, vector<1x1xf32>,
    %cst_206 = arith.constant 0.000000e+00 : f32
    %386 = vector.broadcast %cst_206 : f32 to vector<16x48xf32>
    %387 = arith.select %378, %79, %386 : vector<16x48xi1>, vector<16x48xf32>
    %cst_207 = arith.constant dense<0.000000e+00> : vector<16xf32>
    %388 = vector.multi_reduction <add>, %387, %cst_207 [1] : vector<16x48xf32> to vector<16xf32>
    %389 = vector.shape_cast %388 : vector<16xf32> to vector<16x1xf32>
    %cst_208 = arith.constant dense<0.000000e+00> : vector<1xf32>
    %390 = vector.multi_reduction <add>, %389, %cst_208 [0] : vector<16x1xf32> to vector<1xf32>
    %391 = vector.shape_cast %390 : vector<1xf32> to vector<1x1xf32>
    %c6_209 = arith.constant 6 : index
    %c1_210 = arith.constant 1 : index
    %392 = vector.load %arg15[%c6_209, %c1_210] : memref<16x4xf32, #tpu.memory_space<vmem>>, vector<1x1xf32>
    tpu.vector_store %arg15[%c6_209, %c1_210], %391 {strides = array<i32>} : memref<16x4xf32, #tpu.memory_space<vmem>>, vector<1x1xf32>,
    %cst_211 = arith.constant 0.000000e+00 : f32
    %393 = vector.broadcast %cst_211 : f32 to vector<16x48xf32>
    %394 = arith.select %378, %86, %393 : vector<16x48xi1>, vector<16x48xf32>
    %cst_212 = arith.constant dense<0.000000e+00> : vector<16xf32>
    %395 = vector.multi_reduction <add>, %394, %cst_212 [1] : vector<16x48xf32> to vector<16xf32>
    %396 = vector.shape_cast %395 : vector<16xf32> to vector<16x1xf32>
    %cst_213 = arith.constant dense<0.000000e+00> : vector<1xf32>
    %397 = vector.multi_reduction <add>, %396, %cst_213 [0] : vector<16x1xf32> to vector<1xf32>
    %398 = vector.shape_cast %397 : vector<1xf32> to vector<1x1xf32>
    %c6_214 = arith.constant 6 : index
    %c2_215 = arith.constant 2 : index
    %399 = vector.load %arg15[%c6_214, %c2_215] : memref<16x4xf32, #tpu.memory_space<vmem>>, vector<1x1xf32>
    tpu.vector_store %arg15[%c6_214, %c2_215], %398 {strides = array<i32>} : memref<16x4xf32, #tpu.memory_space<vmem>>, vector<1x1xf32>,
    %cst_216 = arith.constant 0.000000e+00 : f32
    %400 = vector.broadcast %cst_216 : f32 to vector<16x48xf32>
    %401 = arith.select %378, %93, %400 : vector<16x48xi1>, vector<16x48xf32>
    %cst_217 = arith.constant dense<0.000000e+00> : vector<16xf32>
    %402 = vector.multi_reduction <add>, %401, %cst_217 [1] : vector<16x48xf32> to vector<16xf32>
    %403 = vector.shape_cast %402 : vector<16xf32> to vector<16x1xf32>
    %cst_218 = arith.constant dense<0.000000e+00> : vector<1xf32>
    %404 = vector.multi_reduction <add>, %403, %cst_218 [0] : vector<16x1xf32> to vector<1xf32>
    %405 = vector.shape_cast %404 : vector<1xf32> to vector<1x1xf32>
    %c6_219 = arith.constant 6 : index
    %c3_220 = arith.constant 3 : index
    %406 = vector.load %arg15[%c6_219, %c3_220] : memref<16x4xf32, #tpu.memory_space<vmem>>, vector<1x1xf32>
    tpu.vector_store %arg15[%c6_219, %c3_220], %405 {strides = array<i32>} : memref<16x4xf32, #tpu.memory_space<vmem>>, vector<1x1xf32>,
    %cst_221 = arith.constant -1.000000e+09 : f32
    %407 = vector.broadcast %cst_221 : f32 to vector<16x48xf32>
    %408 = arith.select %378, %407, %364 : vector<16x48xi1>, vector<16x48xf32>
    %cst_222 = arith.constant dense<0xFF800000> : vector<16xf32>
    %409 = vector.multi_reduction <maximumf>, %408, %cst_222 [1] : vector<16x48xf32> to vector<16xf32>
    %410 = vector.shape_cast %409 : vector<16xf32> to vector<16x1xf32>
    %cst_223 = arith.constant dense<0xFF800000> : vector<1xf32>
    %411 = vector.multi_reduction <maximumf>, %410, %cst_223 [0] : vector<16x1xf32> to vector<1xf32>
    %412 = vector.shape_cast %411 : vector<1xf32> to vector<1x1xf32>
    %413 = vector.broadcast %412 : vector<1x1xf32> to vector<16x48xf32>
    %414 = arith.cmpf oge, %408, %413 : vector<16x48xf32>
    %cst_224 = arith.constant 1.000000e+09 : f32
    %415 = vector.broadcast %cst_224 : f32 to vector<16x48xf32>
    %416 = arith.select %414, %100, %415 : vector<16x48xi1>, vector<16x48xf32>
    %cst_225 = arith.constant dense<0x7F800000> : vector<16xf32>
    %417 = vector.multi_reduction <minimumf>, %416, %cst_225 [1] : vector<16x48xf32> to vector<16xf32>
    %418 = vector.shape_cast %417 : vector<16xf32> to vector<16x1xf32>
    %cst_226 = arith.constant dense<0x7F800000> : vector<1xf32>
    %419 = vector.multi_reduction <minimumf>, %418, %cst_226 [0] : vector<16x1xf32> to vector<1xf32>
    %420 = vector.shape_cast %419 : vector<1xf32> to vector<1x1xf32>
    %421 = vector.broadcast %420 : vector<1x1xf32> to vector<16x48xf32>
    %422 = arith.cmpf oeq, %100, %421 : vector<16x48xf32>
    %cst_227 = arith.constant 0.000000e+00 : f32
    %423 = vector.broadcast %cst_227 : f32 to vector<16x48xf32>
    %424 = arith.select %422, %72, %423 : vector<16x48xi1>, vector<16x48xf32>
    %cst_228 = arith.constant dense<0.000000e+00> : vector<16xf32>
    %425 = vector.multi_reduction <add>, %424, %cst_228 [1] : vector<16x48xf32> to vector<16xf32>
    %426 = vector.shape_cast %425 : vector<16xf32> to vector<16x1xf32>
    %cst_229 = arith.constant dense<0.000000e+00> : vector<1xf32>
    %427 = vector.multi_reduction <add>, %426, %cst_229 [0] : vector<16x1xf32> to vector<1xf32>
    %428 = vector.shape_cast %427 : vector<1xf32> to vector<1x1xf32>
    %c7 = arith.constant 7 : index
    %c0_230 = arith.constant 0 : index
    %429 = vector.load %arg15[%c7, %c0_230] : memref<16x4xf32, #tpu.memory_space<vmem>>, vector<1x1xf32>
    tpu.vector_store %arg15[%c7, %c0_230], %428 {strides = array<i32>} : memref<16x4xf32, #tpu.memory_space<vmem>>, vector<1x1xf32>,
    %cst_231 = arith.constant 0.000000e+00 : f32
    %430 = vector.broadcast %cst_231 : f32 to vector<16x48xf32>
    %431 = arith.select %422, %79, %430 : vector<16x48xi1>, vector<16x48xf32>
    %cst_232 = arith.constant dense<0.000000e+00> : vector<16xf32>
    %432 = vector.multi_reduction <add>, %431, %cst_232 [1] : vector<16x48xf32> to vector<16xf32>
    %433 = vector.shape_cast %432 : vector<16xf32> to vector<16x1xf32>
    %cst_233 = arith.constant dense<0.000000e+00> : vector<1xf32>
    %434 = vector.multi_reduction <add>, %433, %cst_233 [0] : vector<16x1xf32> to vector<1xf32>
    %435 = vector.shape_cast %434 : vector<1xf32> to vector<1x1xf32>
    %c7_234 = arith.constant 7 : index
    %c1_235 = arith.constant 1 : index
    %436 = vector.load %arg15[%c7_234, %c1_235] : memref<16x4xf32, #tpu.memory_space<vmem>>, vector<1x1xf32>
    tpu.vector_store %arg15[%c7_234, %c1_235], %435 {strides = array<i32>} : memref<16x4xf32, #tpu.memory_space<vmem>>, vector<1x1xf32>,
    %cst_236 = arith.constant 0.000000e+00 : f32
    %437 = vector.broadcast %cst_236 : f32 to vector<16x48xf32>
    %438 = arith.select %422, %86, %437 : vector<16x48xi1>, vector<16x48xf32>
    %cst_237 = arith.constant dense<0.000000e+00> : vector<16xf32>
    %439 = vector.multi_reduction <add>, %438, %cst_237 [1] : vector<16x48xf32> to vector<16xf32>
    %440 = vector.shape_cast %439 : vector<16xf32> to vector<16x1xf32>
    %cst_238 = arith.constant dense<0.000000e+00> : vector<1xf32>
    %441 = vector.multi_reduction <add>, %440, %cst_238 [0] : vector<16x1xf32> to vector<1xf32>
    %442 = vector.shape_cast %441 : vector<1xf32> to vector<1x1xf32>
    %c7_239 = arith.constant 7 : index
    %c2_240 = arith.constant 2 : index
    %443 = vector.load %arg15[%c7_239, %c2_240] : memref<16x4xf32, #tpu.memory_space<vmem>>, vector<1x1xf32>
    tpu.vector_store %arg15[%c7_239, %c2_240], %442 {strides = array<i32>} : memref<16x4xf32, #tpu.memory_space<vmem>>, vector<1x1xf32>,
    %cst_241 = arith.constant 0.000000e+00 : f32
    %444 = vector.broadcast %cst_241 : f32 to vector<16x48xf32>
    %445 = arith.select %422, %93, %444 : vector<16x48xi1>, vector<16x48xf32>
    %cst_242 = arith.constant dense<0.000000e+00> : vector<16xf32>
    %446 = vector.multi_reduction <add>, %445, %cst_242 [1] : vector<16x48xf32> to vector<16xf32>
    %447 = vector.shape_cast %446 : vector<16xf32> to vector<16x1xf32>
    %cst_243 = arith.constant dense<0.000000e+00> : vector<1xf32>
    %448 = vector.multi_reduction <add>, %447, %cst_243 [0] : vector<16x1xf32> to vector<1xf32>
    %449 = vector.shape_cast %448 : vector<1xf32> to vector<1x1xf32>
    %c7_244 = arith.constant 7 : index
    %c3_245 = arith.constant 3 : index
    %450 = vector.load %arg15[%c7_244, %c3_245] : memref<16x4xf32, #tpu.memory_space<vmem>>, vector<1x1xf32>
    tpu.vector_store %arg15[%c7_244, %c3_245], %449 {strides = array<i32>} : memref<16x4xf32, #tpu.memory_space<vmem>>, vector<1x1xf32>,
    %cst_246 = arith.constant -1.000000e+09 : f32
    %451 = vector.broadcast %cst_246 : f32 to vector<16x48xf32>
    %452 = arith.select %422, %451, %408 : vector<16x48xi1>, vector<16x48xf32>
    %cst_247 = arith.constant dense<0xFF800000> : vector<16xf32>
    %453 = vector.multi_reduction <maximumf>, %452, %cst_247 [1] : vector<16x48xf32> to vector<16xf32>
    %454 = vector.shape_cast %453 : vector<16xf32> to vector<16x1xf32>
    %cst_248 = arith.constant dense<0xFF800000> : vector<1xf32>
    %455 = vector.multi_reduction <maximumf>, %454, %cst_248 [0] : vector<16x1xf32> to vector<1xf32>
    %456 = vector.shape_cast %455 : vector<1xf32> to vector<1x1xf32>
    %457 = vector.broadcast %456 : vector<1x1xf32> to vector<16x48xf32>
    %458 = arith.cmpf oge, %452, %457 : vector<16x48xf32>
    %cst_249 = arith.constant 1.000000e+09 : f32
    %459 = vector.broadcast %cst_249 : f32 to vector<16x48xf32>
    %460 = arith.select %458, %100, %459 : vector<16x48xi1>, vector<16x48xf32>
    %cst_250 = arith.constant dense<0x7F800000> : vector<16xf32>
    %461 = vector.multi_reduction <minimumf>, %460, %cst_250 [1] : vector<16x48xf32> to vector<16xf32>
    %462 = vector.shape_cast %461 : vector<16xf32> to vector<16x1xf32>
    %cst_251 = arith.constant dense<0x7F800000> : vector<1xf32>
    %463 = vector.multi_reduction <minimumf>, %462, %cst_251 [0] : vector<16x1xf32> to vector<1xf32>
    %464 = vector.shape_cast %463 : vector<1xf32> to vector<1x1xf32>
    %465 = vector.broadcast %464 : vector<1x1xf32> to vector<16x48xf32>
    %466 = arith.cmpf oeq, %100, %465 : vector<16x48xf32>
    %cst_252 = arith.constant 0.000000e+00 : f32
    %467 = vector.broadcast %cst_252 : f32 to vector<16x48xf32>
    %468 = arith.select %466, %72, %467 : vector<16x48xi1>, vector<16x48xf32>
    %cst_253 = arith.constant dense<0.000000e+00> : vector<16xf32>
    %469 = vector.multi_reduction <add>, %468, %cst_253 [1] : vector<16x48xf32> to vector<16xf32>
    %470 = vector.shape_cast %469 : vector<16xf32> to vector<16x1xf32>
    %cst_254 = arith.constant dense<0.000000e+00> : vector<1xf32>
    %471 = vector.multi_reduction <add>, %470, %cst_254 [0] : vector<16x1xf32> to vector<1xf32>
    %472 = vector.shape_cast %471 : vector<1xf32> to vector<1x1xf32>
    %c8 = arith.constant 8 : index
    %c0_255 = arith.constant 0 : index
    %473 = vector.load %arg15[%c8, %c0_255] : memref<16x4xf32, #tpu.memory_space<vmem>>, vector<1x1xf32>
    tpu.vector_store %arg15[%c8, %c0_255], %472 {strides = array<i32>} : memref<16x4xf32, #tpu.memory_space<vmem>>, vector<1x1xf32>,
    %cst_256 = arith.constant 0.000000e+00 : f32
    %474 = vector.broadcast %cst_256 : f32 to vector<16x48xf32>
    %475 = arith.select %466, %79, %474 : vector<16x48xi1>, vector<16x48xf32>
    %cst_257 = arith.constant dense<0.000000e+00> : vector<16xf32>
    %476 = vector.multi_reduction <add>, %475, %cst_257 [1] : vector<16x48xf32> to vector<16xf32>
    %477 = vector.shape_cast %476 : vector<16xf32> to vector<16x1xf32>
    %cst_258 = arith.constant dense<0.000000e+00> : vector<1xf32>
    %478 = vector.multi_reduction <add>, %477, %cst_258 [0] : vector<16x1xf32> to vector<1xf32>
    %479 = vector.shape_cast %478 : vector<1xf32> to vector<1x1xf32>
    %c8_259 = arith.constant 8 : index
    %c1_260 = arith.constant 1 : index
    %480 = vector.load %arg15[%c8_259, %c1_260] : memref<16x4xf32, #tpu.memory_space<vmem>>, vector<1x1xf32>
    tpu.vector_store %arg15[%c8_259, %c1_260], %479 {strides = array<i32>} : memref<16x4xf32, #tpu.memory_space<vmem>>, vector<1x1xf32>,
    %cst_261 = arith.constant 0.000000e+00 : f32
    %481 = vector.broadcast %cst_261 : f32 to vector<16x48xf32>
    %482 = arith.select %466, %86, %481 : vector<16x48xi1>, vector<16x48xf32>
    %cst_262 = arith.constant dense<0.000000e+00> : vector<16xf32>
    %483 = vector.multi_reduction <add>, %482, %cst_262 [1] : vector<16x48xf32> to vector<16xf32>
    %484 = vector.shape_cast %483 : vector<16xf32> to vector<16x1xf32>
    %cst_263 = arith.constant dense<0.000000e+00> : vector<1xf32>
    %485 = vector.multi_reduction <add>, %484, %cst_263 [0] : vector<16x1xf32> to vector<1xf32>
    %486 = vector.shape_cast %485 : vector<1xf32> to vector<1x1xf32>
    %c8_264 = arith.constant 8 : index
    %c2_265 = arith.constant 2 : index
    %487 = vector.load %arg15[%c8_264, %c2_265] : memref<16x4xf32, #tpu.memory_space<vmem>>, vector<1x1xf32>
    tpu.vector_store %arg15[%c8_264, %c2_265], %486 {strides = array<i32>} : memref<16x4xf32, #tpu.memory_space<vmem>>, vector<1x1xf32>,
    %cst_266 = arith.constant 0.000000e+00 : f32
    %488 = vector.broadcast %cst_266 : f32 to vector<16x48xf32>
    %489 = arith.select %466, %93, %488 : vector<16x48xi1>, vector<16x48xf32>
    %cst_267 = arith.constant dense<0.000000e+00> : vector<16xf32>
    %490 = vector.multi_reduction <add>, %489, %cst_267 [1] : vector<16x48xf32> to vector<16xf32>
    %491 = vector.shape_cast %490 : vector<16xf32> to vector<16x1xf32>
    %cst_268 = arith.constant dense<0.000000e+00> : vector<1xf32>
    %492 = vector.multi_reduction <add>, %491, %cst_268 [0] : vector<16x1xf32> to vector<1xf32>
    %493 = vector.shape_cast %492 : vector<1xf32> to vector<1x1xf32>
    %c8_269 = arith.constant 8 : index
    %c3_270 = arith.constant 3 : index
    %494 = vector.load %arg15[%c8_269, %c3_270] : memref<16x4xf32, #tpu.memory_space<vmem>>, vector<1x1xf32>
    tpu.vector_store %arg15[%c8_269, %c3_270], %493 {strides = array<i32>} : memref<16x4xf32, #tpu.memory_space<vmem>>, vector<1x1xf32>,
    %cst_271 = arith.constant -1.000000e+09 : f32
    %495 = vector.broadcast %cst_271 : f32 to vector<16x48xf32>
    %496 = arith.select %466, %495, %452 : vector<16x48xi1>, vector<16x48xf32>
    %cst_272 = arith.constant dense<0xFF800000> : vector<16xf32>
    %497 = vector.multi_reduction <maximumf>, %496, %cst_272 [1] : vector<16x48xf32> to vector<16xf32>
    %498 = vector.shape_cast %497 : vector<16xf32> to vector<16x1xf32>
    %cst_273 = arith.constant dense<0xFF800000> : vector<1xf32>
    %499 = vector.multi_reduction <maximumf>, %498, %cst_273 [0] : vector<16x1xf32> to vector<1xf32>
    %500 = vector.shape_cast %499 : vector<1xf32> to vector<1x1xf32>
    %501 = vector.broadcast %500 : vector<1x1xf32> to vector<16x48xf32>
    %502 = arith.cmpf oge, %496, %501 : vector<16x48xf32>
    %cst_274 = arith.constant 1.000000e+09 : f32
    %503 = vector.broadcast %cst_274 : f32 to vector<16x48xf32>
    %504 = arith.select %502, %100, %503 : vector<16x48xi1>, vector<16x48xf32>
    %cst_275 = arith.constant dense<0x7F800000> : vector<16xf32>
    %505 = vector.multi_reduction <minimumf>, %504, %cst_275 [1] : vector<16x48xf32> to vector<16xf32>
    %506 = vector.shape_cast %505 : vector<16xf32> to vector<16x1xf32>
    %cst_276 = arith.constant dense<0x7F800000> : vector<1xf32>
    %507 = vector.multi_reduction <minimumf>, %506, %cst_276 [0] : vector<16x1xf32> to vector<1xf32>
    %508 = vector.shape_cast %507 : vector<1xf32> to vector<1x1xf32>
    %509 = vector.broadcast %508 : vector<1x1xf32> to vector<16x48xf32>
    %510 = arith.cmpf oeq, %100, %509 : vector<16x48xf32>
    %cst_277 = arith.constant 0.000000e+00 : f32
    %511 = vector.broadcast %cst_277 : f32 to vector<16x48xf32>
    %512 = arith.select %510, %72, %511 : vector<16x48xi1>, vector<16x48xf32>
    %cst_278 = arith.constant dense<0.000000e+00> : vector<16xf32>
    %513 = vector.multi_reduction <add>, %512, %cst_278 [1] : vector<16x48xf32> to vector<16xf32>
    %514 = vector.shape_cast %513 : vector<16xf32> to vector<16x1xf32>
    %cst_279 = arith.constant dense<0.000000e+00> : vector<1xf32>
    %515 = vector.multi_reduction <add>, %514, %cst_279 [0] : vector<16x1xf32> to vector<1xf32>
    %516 = vector.shape_cast %515 : vector<1xf32> to vector<1x1xf32>
    %c9 = arith.constant 9 : index
    %c0_280 = arith.constant 0 : index
    %517 = vector.load %arg15[%c9, %c0_280] : memref<16x4xf32, #tpu.memory_space<vmem>>, vector<1x1xf32>
    tpu.vector_store %arg15[%c9, %c0_280], %516 {strides = array<i32>} : memref<16x4xf32, #tpu.memory_space<vmem>>, vector<1x1xf32>,
    %cst_281 = arith.constant 0.000000e+00 : f32
    %518 = vector.broadcast %cst_281 : f32 to vector<16x48xf32>
    %519 = arith.select %510, %79, %518 : vector<16x48xi1>, vector<16x48xf32>
    %cst_282 = arith.constant dense<0.000000e+00> : vector<16xf32>
    %520 = vector.multi_reduction <add>, %519, %cst_282 [1] : vector<16x48xf32> to vector<16xf32>
    %521 = vector.shape_cast %520 : vector<16xf32> to vector<16x1xf32>
    %cst_283 = arith.constant dense<0.000000e+00> : vector<1xf32>
    %522 = vector.multi_reduction <add>, %521, %cst_283 [0] : vector<16x1xf32> to vector<1xf32>
    %523 = vector.shape_cast %522 : vector<1xf32> to vector<1x1xf32>
    %c9_284 = arith.constant 9 : index
    %c1_285 = arith.constant 1 : index
    %524 = vector.load %arg15[%c9_284, %c1_285] : memref<16x4xf32, #tpu.memory_space<vmem>>, vector<1x1xf32>
    tpu.vector_store %arg15[%c9_284, %c1_285], %523 {strides = array<i32>} : memref<16x4xf32, #tpu.memory_space<vmem>>, vector<1x1xf32>,
    %cst_286 = arith.constant 0.000000e+00 : f32
    %525 = vector.broadcast %cst_286 : f32 to vector<16x48xf32>
    %526 = arith.select %510, %86, %525 : vector<16x48xi1>, vector<16x48xf32>
    %cst_287 = arith.constant dense<0.000000e+00> : vector<16xf32>
    %527 = vector.multi_reduction <add>, %526, %cst_287 [1] : vector<16x48xf32> to vector<16xf32>
    %528 = vector.shape_cast %527 : vector<16xf32> to vector<16x1xf32>
    %cst_288 = arith.constant dense<0.000000e+00> : vector<1xf32>
    %529 = vector.multi_reduction <add>, %528, %cst_288 [0] : vector<16x1xf32> to vector<1xf32>
    %530 = vector.shape_cast %529 : vector<1xf32> to vector<1x1xf32>
    %c9_289 = arith.constant 9 : index
    %c2_290 = arith.constant 2 : index
    %531 = vector.load %arg15[%c9_289, %c2_290] : memref<16x4xf32, #tpu.memory_space<vmem>>, vector<1x1xf32>
    tpu.vector_store %arg15[%c9_289, %c2_290], %530 {strides = array<i32>} : memref<16x4xf32, #tpu.memory_space<vmem>>, vector<1x1xf32>,
    %cst_291 = arith.constant 0.000000e+00 : f32
    %532 = vector.broadcast %cst_291 : f32 to vector<16x48xf32>
    %533 = arith.select %510, %93, %532 : vector<16x48xi1>, vector<16x48xf32>
    %cst_292 = arith.constant dense<0.000000e+00> : vector<16xf32>
    %534 = vector.multi_reduction <add>, %533, %cst_292 [1] : vector<16x48xf32> to vector<16xf32>
    %535 = vector.shape_cast %534 : vector<16xf32> to vector<16x1xf32>
    %cst_293 = arith.constant dense<0.000000e+00> : vector<1xf32>
    %536 = vector.multi_reduction <add>, %535, %cst_293 [0] : vector<16x1xf32> to vector<1xf32>
    %537 = vector.shape_cast %536 : vector<1xf32> to vector<1x1xf32>
    %c9_294 = arith.constant 9 : index
    %c3_295 = arith.constant 3 : index
    %538 = vector.load %arg15[%c9_294, %c3_295] : memref<16x4xf32, #tpu.memory_space<vmem>>, vector<1x1xf32>
    tpu.vector_store %arg15[%c9_294, %c3_295], %537 {strides = array<i32>} : memref<16x4xf32, #tpu.memory_space<vmem>>, vector<1x1xf32>,
    %cst_296 = arith.constant -1.000000e+09 : f32
    %539 = vector.broadcast %cst_296 : f32 to vector<16x48xf32>
    %540 = arith.select %510, %539, %496 : vector<16x48xi1>, vector<16x48xf32>
    %cst_297 = arith.constant dense<0xFF800000> : vector<16xf32>
    %541 = vector.multi_reduction <maximumf>, %540, %cst_297 [1] : vector<16x48xf32> to vector<16xf32>
    %542 = vector.shape_cast %541 : vector<16xf32> to vector<16x1xf32>
    %cst_298 = arith.constant dense<0xFF800000> : vector<1xf32>
    %543 = vector.multi_reduction <maximumf>, %542, %cst_298 [0] : vector<16x1xf32> to vector<1xf32>
    %544 = vector.shape_cast %543 : vector<1xf32> to vector<1x1xf32>
    %545 = vector.broadcast %544 : vector<1x1xf32> to vector<16x48xf32>
    %546 = arith.cmpf oge, %540, %545 : vector<16x48xf32>
    %cst_299 = arith.constant 1.000000e+09 : f32
    %547 = vector.broadcast %cst_299 : f32 to vector<16x48xf32>
    %548 = arith.select %546, %100, %547 : vector<16x48xi1>, vector<16x48xf32>
    %cst_300 = arith.constant dense<0x7F800000> : vector<16xf32>
    %549 = vector.multi_reduction <minimumf>, %548, %cst_300 [1] : vector<16x48xf32> to vector<16xf32>
    %550 = vector.shape_cast %549 : vector<16xf32> to vector<16x1xf32>
    %cst_301 = arith.constant dense<0x7F800000> : vector<1xf32>
    %551 = vector.multi_reduction <minimumf>, %550, %cst_301 [0] : vector<16x1xf32> to vector<1xf32>
    %552 = vector.shape_cast %551 : vector<1xf32> to vector<1x1xf32>
    %553 = vector.broadcast %552 : vector<1x1xf32> to vector<16x48xf32>
    %554 = arith.cmpf oeq, %100, %553 : vector<16x48xf32>
    %cst_302 = arith.constant 0.000000e+00 : f32
    %555 = vector.broadcast %cst_302 : f32 to vector<16x48xf32>
    %556 = arith.select %554, %72, %555 : vector<16x48xi1>, vector<16x48xf32>
    %cst_303 = arith.constant dense<0.000000e+00> : vector<16xf32>
    %557 = vector.multi_reduction <add>, %556, %cst_303 [1] : vector<16x48xf32> to vector<16xf32>
    %558 = vector.shape_cast %557 : vector<16xf32> to vector<16x1xf32>
    %cst_304 = arith.constant dense<0.000000e+00> : vector<1xf32>
    %559 = vector.multi_reduction <add>, %558, %cst_304 [0] : vector<16x1xf32> to vector<1xf32>
    %560 = vector.shape_cast %559 : vector<1xf32> to vector<1x1xf32>
    %c10 = arith.constant 10 : index
    %c0_305 = arith.constant 0 : index
    %561 = vector.load %arg15[%c10, %c0_305] : memref<16x4xf32, #tpu.memory_space<vmem>>, vector<1x1xf32>
    tpu.vector_store %arg15[%c10, %c0_305], %560 {strides = array<i32>} : memref<16x4xf32, #tpu.memory_space<vmem>>, vector<1x1xf32>,
    %cst_306 = arith.constant 0.000000e+00 : f32
    %562 = vector.broadcast %cst_306 : f32 to vector<16x48xf32>
    %563 = arith.select %554, %79, %562 : vector<16x48xi1>, vector<16x48xf32>
    %cst_307 = arith.constant dense<0.000000e+00> : vector<16xf32>
    %564 = vector.multi_reduction <add>, %563, %cst_307 [1] : vector<16x48xf32> to vector<16xf32>
    %565 = vector.shape_cast %564 : vector<16xf32> to vector<16x1xf32>
    %cst_308 = arith.constant dense<0.000000e+00> : vector<1xf32>
    %566 = vector.multi_reduction <add>, %565, %cst_308 [0] : vector<16x1xf32> to vector<1xf32>
    %567 = vector.shape_cast %566 : vector<1xf32> to vector<1x1xf32>
    %c10_309 = arith.constant 10 : index
    %c1_310 = arith.constant 1 : index
    %568 = vector.load %arg15[%c10_309, %c1_310] : memref<16x4xf32, #tpu.memory_space<vmem>>, vector<1x1xf32>
    tpu.vector_store %arg15[%c10_309, %c1_310], %567 {strides = array<i32>} : memref<16x4xf32, #tpu.memory_space<vmem>>, vector<1x1xf32>,
    %cst_311 = arith.constant 0.000000e+00 : f32
    %569 = vector.broadcast %cst_311 : f32 to vector<16x48xf32>
    %570 = arith.select %554, %86, %569 : vector<16x48xi1>, vector<16x48xf32>
    %cst_312 = arith.constant dense<0.000000e+00> : vector<16xf32>
    %571 = vector.multi_reduction <add>, %570, %cst_312 [1] : vector<16x48xf32> to vector<16xf32>
    %572 = vector.shape_cast %571 : vector<16xf32> to vector<16x1xf32>
    %cst_313 = arith.constant dense<0.000000e+00> : vector<1xf32>
    %573 = vector.multi_reduction <add>, %572, %cst_313 [0] : vector<16x1xf32> to vector<1xf32>
    %574 = vector.shape_cast %573 : vector<1xf32> to vector<1x1xf32>
    %c10_314 = arith.constant 10 : index
    %c2_315 = arith.constant 2 : index
    %575 = vector.load %arg15[%c10_314, %c2_315] : memref<16x4xf32, #tpu.memory_space<vmem>>, vector<1x1xf32>
    tpu.vector_store %arg15[%c10_314, %c2_315], %574 {strides = array<i32>} : memref<16x4xf32, #tpu.memory_space<vmem>>, vector<1x1xf32>,
    %cst_316 = arith.constant 0.000000e+00 : f32
    %576 = vector.broadcast %cst_316 : f32 to vector<16x48xf32>
    %577 = arith.select %554, %93, %576 : vector<16x48xi1>, vector<16x48xf32>
    %cst_317 = arith.constant dense<0.000000e+00> : vector<16xf32>
    %578 = vector.multi_reduction <add>, %577, %cst_317 [1] : vector<16x48xf32> to vector<16xf32>
    %579 = vector.shape_cast %578 : vector<16xf32> to vector<16x1xf32>
    %cst_318 = arith.constant dense<0.000000e+00> : vector<1xf32>
    %580 = vector.multi_reduction <add>, %579, %cst_318 [0] : vector<16x1xf32> to vector<1xf32>
    %581 = vector.shape_cast %580 : vector<1xf32> to vector<1x1xf32>
    %c10_319 = arith.constant 10 : index
    %c3_320 = arith.constant 3 : index
    %582 = vector.load %arg15[%c10_319, %c3_320] : memref<16x4xf32, #tpu.memory_space<vmem>>, vector<1x1xf32>
    tpu.vector_store %arg15[%c10_319, %c3_320], %581 {strides = array<i32>} : memref<16x4xf32, #tpu.memory_space<vmem>>, vector<1x1xf32>,
    %cst_321 = arith.constant -1.000000e+09 : f32
    %583 = vector.broadcast %cst_321 : f32 to vector<16x48xf32>
    %584 = arith.select %554, %583, %540 : vector<16x48xi1>, vector<16x48xf32>
    %cst_322 = arith.constant dense<0xFF800000> : vector<16xf32>
    %585 = vector.multi_reduction <maximumf>, %584, %cst_322 [1] : vector<16x48xf32> to vector<16xf32>
    %586 = vector.shape_cast %585 : vector<16xf32> to vector<16x1xf32>
    %cst_323 = arith.constant dense<0xFF800000> : vector<1xf32>
    %587 = vector.multi_reduction <maximumf>, %586, %cst_323 [0] : vector<16x1xf32> to vector<1xf32>
    %588 = vector.shape_cast %587 : vector<1xf32> to vector<1x1xf32>
    %589 = vector.broadcast %588 : vector<1x1xf32> to vector<16x48xf32>
    %590 = arith.cmpf oge, %584, %589 : vector<16x48xf32>
    %cst_324 = arith.constant 1.000000e+09 : f32
    %591 = vector.broadcast %cst_324 : f32 to vector<16x48xf32>
    %592 = arith.select %590, %100, %591 : vector<16x48xi1>, vector<16x48xf32>
    %cst_325 = arith.constant dense<0x7F800000> : vector<16xf32>
    %593 = vector.multi_reduction <minimumf>, %592, %cst_325 [1] : vector<16x48xf32> to vector<16xf32>
    %594 = vector.shape_cast %593 : vector<16xf32> to vector<16x1xf32>
    %cst_326 = arith.constant dense<0x7F800000> : vector<1xf32>
    %595 = vector.multi_reduction <minimumf>, %594, %cst_326 [0] : vector<16x1xf32> to vector<1xf32>
    %596 = vector.shape_cast %595 : vector<1xf32> to vector<1x1xf32>
    %597 = vector.broadcast %596 : vector<1x1xf32> to vector<16x48xf32>
    %598 = arith.cmpf oeq, %100, %597 : vector<16x48xf32>
    %cst_327 = arith.constant 0.000000e+00 : f32
    %599 = vector.broadcast %cst_327 : f32 to vector<16x48xf32>
    %600 = arith.select %598, %72, %599 : vector<16x48xi1>, vector<16x48xf32>
    %cst_328 = arith.constant dense<0.000000e+00> : vector<16xf32>
    %601 = vector.multi_reduction <add>, %600, %cst_328 [1] : vector<16x48xf32> to vector<16xf32>
    %602 = vector.shape_cast %601 : vector<16xf32> to vector<16x1xf32>
    %cst_329 = arith.constant dense<0.000000e+00> : vector<1xf32>
    %603 = vector.multi_reduction <add>, %602, %cst_329 [0] : vector<16x1xf32> to vector<1xf32>
    %604 = vector.shape_cast %603 : vector<1xf32> to vector<1x1xf32>
    %c11 = arith.constant 11 : index
    %c0_330 = arith.constant 0 : index
    %605 = vector.load %arg15[%c11, %c0_330] : memref<16x4xf32, #tpu.memory_space<vmem>>, vector<1x1xf32>
    tpu.vector_store %arg15[%c11, %c0_330], %604 {strides = array<i32>} : memref<16x4xf32, #tpu.memory_space<vmem>>, vector<1x1xf32>,
    %cst_331 = arith.constant 0.000000e+00 : f32
    %606 = vector.broadcast %cst_331 : f32 to vector<16x48xf32>
    %607 = arith.select %598, %79, %606 : vector<16x48xi1>, vector<16x48xf32>
    %cst_332 = arith.constant dense<0.000000e+00> : vector<16xf32>
    %608 = vector.multi_reduction <add>, %607, %cst_332 [1] : vector<16x48xf32> to vector<16xf32>
    %609 = vector.shape_cast %608 : vector<16xf32> to vector<16x1xf32>
    %cst_333 = arith.constant dense<0.000000e+00> : vector<1xf32>
    %610 = vector.multi_reduction <add>, %609, %cst_333 [0] : vector<16x1xf32> to vector<1xf32>
    %611 = vector.shape_cast %610 : vector<1xf32> to vector<1x1xf32>
    %c11_334 = arith.constant 11 : index
    %c1_335 = arith.constant 1 : index
    %612 = vector.load %arg15[%c11_334, %c1_335] : memref<16x4xf32, #tpu.memory_space<vmem>>, vector<1x1xf32>
    tpu.vector_store %arg15[%c11_334, %c1_335], %611 {strides = array<i32>} : memref<16x4xf32, #tpu.memory_space<vmem>>, vector<1x1xf32>,
    %cst_336 = arith.constant 0.000000e+00 : f32
    %613 = vector.broadcast %cst_336 : f32 to vector<16x48xf32>
    %614 = arith.select %598, %86, %613 : vector<16x48xi1>, vector<16x48xf32>
    %cst_337 = arith.constant dense<0.000000e+00> : vector<16xf32>
    %615 = vector.multi_reduction <add>, %614, %cst_337 [1] : vector<16x48xf32> to vector<16xf32>
    %616 = vector.shape_cast %615 : vector<16xf32> to vector<16x1xf32>
    %cst_338 = arith.constant dense<0.000000e+00> : vector<1xf32>
    %617 = vector.multi_reduction <add>, %616, %cst_338 [0] : vector<16x1xf32> to vector<1xf32>
    %618 = vector.shape_cast %617 : vector<1xf32> to vector<1x1xf32>
    %c11_339 = arith.constant 11 : index
    %c2_340 = arith.constant 2 : index
    %619 = vector.load %arg15[%c11_339, %c2_340] : memref<16x4xf32, #tpu.memory_space<vmem>>, vector<1x1xf32>
    tpu.vector_store %arg15[%c11_339, %c2_340], %618 {strides = array<i32>} : memref<16x4xf32, #tpu.memory_space<vmem>>, vector<1x1xf32>,
    %cst_341 = arith.constant 0.000000e+00 : f32
    %620 = vector.broadcast %cst_341 : f32 to vector<16x48xf32>
    %621 = arith.select %598, %93, %620 : vector<16x48xi1>, vector<16x48xf32>
    %cst_342 = arith.constant dense<0.000000e+00> : vector<16xf32>
    %622 = vector.multi_reduction <add>, %621, %cst_342 [1] : vector<16x48xf32> to vector<16xf32>
    %623 = vector.shape_cast %622 : vector<16xf32> to vector<16x1xf32>
    %cst_343 = arith.constant dense<0.000000e+00> : vector<1xf32>
    %624 = vector.multi_reduction <add>, %623, %cst_343 [0] : vector<16x1xf32> to vector<1xf32>
    %625 = vector.shape_cast %624 : vector<1xf32> to vector<1x1xf32>
    %c11_344 = arith.constant 11 : index
    %c3_345 = arith.constant 3 : index
    %626 = vector.load %arg15[%c11_344, %c3_345] : memref<16x4xf32, #tpu.memory_space<vmem>>, vector<1x1xf32>
    tpu.vector_store %arg15[%c11_344, %c3_345], %625 {strides = array<i32>} : memref<16x4xf32, #tpu.memory_space<vmem>>, vector<1x1xf32>,
    %cst_346 = arith.constant -1.000000e+09 : f32
    %627 = vector.broadcast %cst_346 : f32 to vector<16x48xf32>
    %628 = arith.select %598, %627, %584 : vector<16x48xi1>, vector<16x48xf32>
    %cst_347 = arith.constant dense<0xFF800000> : vector<16xf32>
    %629 = vector.multi_reduction <maximumf>, %628, %cst_347 [1] : vector<16x48xf32> to vector<16xf32>
    %630 = vector.shape_cast %629 : vector<16xf32> to vector<16x1xf32>
    %cst_348 = arith.constant dense<0xFF800000> : vector<1xf32>
    %631 = vector.multi_reduction <maximumf>, %630, %cst_348 [0] : vector<16x1xf32> to vector<1xf32>
    %632 = vector.shape_cast %631 : vector<1xf32> to vector<1x1xf32>
    %633 = vector.broadcast %632 : vector<1x1xf32> to vector<16x48xf32>
    %634 = arith.cmpf oge, %628, %633 : vector<16x48xf32>
    %cst_349 = arith.constant 1.000000e+09 : f32
    %635 = vector.broadcast %cst_349 : f32 to vector<16x48xf32>
    %636 = arith.select %634, %100, %635 : vector<16x48xi1>, vector<16x48xf32>
    %cst_350 = arith.constant dense<0x7F800000> : vector<16xf32>
    %637 = vector.multi_reduction <minimumf>, %636, %cst_350 [1] : vector<16x48xf32> to vector<16xf32>
    %638 = vector.shape_cast %637 : vector<16xf32> to vector<16x1xf32>
    %cst_351 = arith.constant dense<0x7F800000> : vector<1xf32>
    %639 = vector.multi_reduction <minimumf>, %638, %cst_351 [0] : vector<16x1xf32> to vector<1xf32>
    %640 = vector.shape_cast %639 : vector<1xf32> to vector<1x1xf32>
    %641 = vector.broadcast %640 : vector<1x1xf32> to vector<16x48xf32>
    %642 = arith.cmpf oeq, %100, %641 : vector<16x48xf32>
    %cst_352 = arith.constant 0.000000e+00 : f32
    %643 = vector.broadcast %cst_352 : f32 to vector<16x48xf32>
    %644 = arith.select %642, %72, %643 : vector<16x48xi1>, vector<16x48xf32>
    %cst_353 = arith.constant dense<0.000000e+00> : vector<16xf32>
    %645 = vector.multi_reduction <add>, %644, %cst_353 [1] : vector<16x48xf32> to vector<16xf32>
    %646 = vector.shape_cast %645 : vector<16xf32> to vector<16x1xf32>
    %cst_354 = arith.constant dense<0.000000e+00> : vector<1xf32>
    %647 = vector.multi_reduction <add>, %646, %cst_354 [0] : vector<16x1xf32> to vector<1xf32>
    %648 = vector.shape_cast %647 : vector<1xf32> to vector<1x1xf32>
    %c12 = arith.constant 12 : index
    %c0_355 = arith.constant 0 : index
    %649 = vector.load %arg15[%c12, %c0_355] : memref<16x4xf32, #tpu.memory_space<vmem>>, vector<1x1xf32>
    tpu.vector_store %arg15[%c12, %c0_355], %648 {strides = array<i32>} : memref<16x4xf32, #tpu.memory_space<vmem>>, vector<1x1xf32>,
    %cst_356 = arith.constant 0.000000e+00 : f32
    %650 = vector.broadcast %cst_356 : f32 to vector<16x48xf32>
    %651 = arith.select %642, %79, %650 : vector<16x48xi1>, vector<16x48xf32>
    %cst_357 = arith.constant dense<0.000000e+00> : vector<16xf32>
    %652 = vector.multi_reduction <add>, %651, %cst_357 [1] : vector<16x48xf32> to vector<16xf32>
    %653 = vector.shape_cast %652 : vector<16xf32> to vector<16x1xf32>
    %cst_358 = arith.constant dense<0.000000e+00> : vector<1xf32>
    %654 = vector.multi_reduction <add>, %653, %cst_358 [0] : vector<16x1xf32> to vector<1xf32>
    %655 = vector.shape_cast %654 : vector<1xf32> to vector<1x1xf32>
    %c12_359 = arith.constant 12 : index
    %c1_360 = arith.constant 1 : index
    %656 = vector.load %arg15[%c12_359, %c1_360] : memref<16x4xf32, #tpu.memory_space<vmem>>, vector<1x1xf32>
    tpu.vector_store %arg15[%c12_359, %c1_360], %655 {strides = array<i32>} : memref<16x4xf32, #tpu.memory_space<vmem>>, vector<1x1xf32>,
    %cst_361 = arith.constant 0.000000e+00 : f32
    %657 = vector.broadcast %cst_361 : f32 to vector<16x48xf32>
    %658 = arith.select %642, %86, %657 : vector<16x48xi1>, vector<16x48xf32>
    %cst_362 = arith.constant dense<0.000000e+00> : vector<16xf32>
    %659 = vector.multi_reduction <add>, %658, %cst_362 [1] : vector<16x48xf32> to vector<16xf32>
    %660 = vector.shape_cast %659 : vector<16xf32> to vector<16x1xf32>
    %cst_363 = arith.constant dense<0.000000e+00> : vector<1xf32>
    %661 = vector.multi_reduction <add>, %660, %cst_363 [0] : vector<16x1xf32> to vector<1xf32>
    %662 = vector.shape_cast %661 : vector<1xf32> to vector<1x1xf32>
    %c12_364 = arith.constant 12 : index
    %c2_365 = arith.constant 2 : index
    %663 = vector.load %arg15[%c12_364, %c2_365] : memref<16x4xf32, #tpu.memory_space<vmem>>, vector<1x1xf32>
    tpu.vector_store %arg15[%c12_364, %c2_365], %662 {strides = array<i32>} : memref<16x4xf32, #tpu.memory_space<vmem>>, vector<1x1xf32>,
    %cst_366 = arith.constant 0.000000e+00 : f32
    %664 = vector.broadcast %cst_366 : f32 to vector<16x48xf32>
    %665 = arith.select %642, %93, %664 : vector<16x48xi1>, vector<16x48xf32>
    %cst_367 = arith.constant dense<0.000000e+00> : vector<16xf32>
    %666 = vector.multi_reduction <add>, %665, %cst_367 [1] : vector<16x48xf32> to vector<16xf32>
    %667 = vector.shape_cast %666 : vector<16xf32> to vector<16x1xf32>
    %cst_368 = arith.constant dense<0.000000e+00> : vector<1xf32>
    %668 = vector.multi_reduction <add>, %667, %cst_368 [0] : vector<16x1xf32> to vector<1xf32>
    %669 = vector.shape_cast %668 : vector<1xf32> to vector<1x1xf32>
    %c12_369 = arith.constant 12 : index
    %c3_370 = arith.constant 3 : index
    %670 = vector.load %arg15[%c12_369, %c3_370] : memref<16x4xf32, #tpu.memory_space<vmem>>, vector<1x1xf32>
    tpu.vector_store %arg15[%c12_369, %c3_370], %669 {strides = array<i32>} : memref<16x4xf32, #tpu.memory_space<vmem>>, vector<1x1xf32>,
    %cst_371 = arith.constant -1.000000e+09 : f32
    %671 = vector.broadcast %cst_371 : f32 to vector<16x48xf32>
    %672 = arith.select %642, %671, %628 : vector<16x48xi1>, vector<16x48xf32>
    %cst_372 = arith.constant dense<0xFF800000> : vector<16xf32>
    %673 = vector.multi_reduction <maximumf>, %672, %cst_372 [1] : vector<16x48xf32> to vector<16xf32>
    %674 = vector.shape_cast %673 : vector<16xf32> to vector<16x1xf32>
    %cst_373 = arith.constant dense<0xFF800000> : vector<1xf32>
    %675 = vector.multi_reduction <maximumf>, %674, %cst_373 [0] : vector<16x1xf32> to vector<1xf32>
    %676 = vector.shape_cast %675 : vector<1xf32> to vector<1x1xf32>
    %677 = vector.broadcast %676 : vector<1x1xf32> to vector<16x48xf32>
    %678 = arith.cmpf oge, %672, %677 : vector<16x48xf32>
    %cst_374 = arith.constant 1.000000e+09 : f32
    %679 = vector.broadcast %cst_374 : f32 to vector<16x48xf32>
    %680 = arith.select %678, %100, %679 : vector<16x48xi1>, vector<16x48xf32>
    %cst_375 = arith.constant dense<0x7F800000> : vector<16xf32>
    %681 = vector.multi_reduction <minimumf>, %680, %cst_375 [1] : vector<16x48xf32> to vector<16xf32>
    %682 = vector.shape_cast %681 : vector<16xf32> to vector<16x1xf32>
    %cst_376 = arith.constant dense<0x7F800000> : vector<1xf32>
    %683 = vector.multi_reduction <minimumf>, %682, %cst_376 [0] : vector<16x1xf32> to vector<1xf32>
    %684 = vector.shape_cast %683 : vector<1xf32> to vector<1x1xf32>
    %685 = vector.broadcast %684 : vector<1x1xf32> to vector<16x48xf32>
    %686 = arith.cmpf oeq, %100, %685 : vector<16x48xf32>
    %cst_377 = arith.constant 0.000000e+00 : f32
    %687 = vector.broadcast %cst_377 : f32 to vector<16x48xf32>
    %688 = arith.select %686, %72, %687 : vector<16x48xi1>, vector<16x48xf32>
    %cst_378 = arith.constant dense<0.000000e+00> : vector<16xf32>
    %689 = vector.multi_reduction <add>, %688, %cst_378 [1] : vector<16x48xf32> to vector<16xf32>
    %690 = vector.shape_cast %689 : vector<16xf32> to vector<16x1xf32>
    %cst_379 = arith.constant dense<0.000000e+00> : vector<1xf32>
    %691 = vector.multi_reduction <add>, %690, %cst_379 [0] : vector<16x1xf32> to vector<1xf32>
    %692 = vector.shape_cast %691 : vector<1xf32> to vector<1x1xf32>
    %c13 = arith.constant 13 : index
    %c0_380 = arith.constant 0 : index
    %693 = vector.load %arg15[%c13, %c0_380] : memref<16x4xf32, #tpu.memory_space<vmem>>, vector<1x1xf32>
    tpu.vector_store %arg15[%c13, %c0_380], %692 {strides = array<i32>} : memref<16x4xf32, #tpu.memory_space<vmem>>, vector<1x1xf32>,
    %cst_381 = arith.constant 0.000000e+00 : f32
    %694 = vector.broadcast %cst_381 : f32 to vector<16x48xf32>
    %695 = arith.select %686, %79, %694 : vector<16x48xi1>, vector<16x48xf32>
    %cst_382 = arith.constant dense<0.000000e+00> : vector<16xf32>
    %696 = vector.multi_reduction <add>, %695, %cst_382 [1] : vector<16x48xf32> to vector<16xf32>
    %697 = vector.shape_cast %696 : vector<16xf32> to vector<16x1xf32>
    %cst_383 = arith.constant dense<0.000000e+00> : vector<1xf32>
    %698 = vector.multi_reduction <add>, %697, %cst_383 [0] : vector<16x1xf32> to vector<1xf32>
    %699 = vector.shape_cast %698 : vector<1xf32> to vector<1x1xf32>
    %c13_384 = arith.constant 13 : index
    %c1_385 = arith.constant 1 : index
    %700 = vector.load %arg15[%c13_384, %c1_385] : memref<16x4xf32, #tpu.memory_space<vmem>>, vector<1x1xf32>
    tpu.vector_store %arg15[%c13_384, %c1_385], %699 {strides = array<i32>} : memref<16x4xf32, #tpu.memory_space<vmem>>, vector<1x1xf32>,
    %cst_386 = arith.constant 0.000000e+00 : f32
    %701 = vector.broadcast %cst_386 : f32 to vector<16x48xf32>
    %702 = arith.select %686, %86, %701 : vector<16x48xi1>, vector<16x48xf32>
    %cst_387 = arith.constant dense<0.000000e+00> : vector<16xf32>
    %703 = vector.multi_reduction <add>, %702, %cst_387 [1] : vector<16x48xf32> to vector<16xf32>
    %704 = vector.shape_cast %703 : vector<16xf32> to vector<16x1xf32>
    %cst_388 = arith.constant dense<0.000000e+00> : vector<1xf32>
    %705 = vector.multi_reduction <add>, %704, %cst_388 [0] : vector<16x1xf32> to vector<1xf32>
    %706 = vector.shape_cast %705 : vector<1xf32> to vector<1x1xf32>
    %c13_389 = arith.constant 13 : index
    %c2_390 = arith.constant 2 : index
    %707 = vector.load %arg15[%c13_389, %c2_390] : memref<16x4xf32, #tpu.memory_space<vmem>>, vector<1x1xf32>
    tpu.vector_store %arg15[%c13_389, %c2_390], %706 {strides = array<i32>} : memref<16x4xf32, #tpu.memory_space<vmem>>, vector<1x1xf32>,
    %cst_391 = arith.constant 0.000000e+00 : f32
    %708 = vector.broadcast %cst_391 : f32 to vector<16x48xf32>
    %709 = arith.select %686, %93, %708 : vector<16x48xi1>, vector<16x48xf32>
    %cst_392 = arith.constant dense<0.000000e+00> : vector<16xf32>
    %710 = vector.multi_reduction <add>, %709, %cst_392 [1] : vector<16x48xf32> to vector<16xf32>
    %711 = vector.shape_cast %710 : vector<16xf32> to vector<16x1xf32>
    %cst_393 = arith.constant dense<0.000000e+00> : vector<1xf32>
    %712 = vector.multi_reduction <add>, %711, %cst_393 [0] : vector<16x1xf32> to vector<1xf32>
    %713 = vector.shape_cast %712 : vector<1xf32> to vector<1x1xf32>
    %c13_394 = arith.constant 13 : index
    %c3_395 = arith.constant 3 : index
    %714 = vector.load %arg15[%c13_394, %c3_395] : memref<16x4xf32, #tpu.memory_space<vmem>>, vector<1x1xf32>
    tpu.vector_store %arg15[%c13_394, %c3_395], %713 {strides = array<i32>} : memref<16x4xf32, #tpu.memory_space<vmem>>, vector<1x1xf32>,
    %cst_396 = arith.constant -1.000000e+09 : f32
    %715 = vector.broadcast %cst_396 : f32 to vector<16x48xf32>
    %716 = arith.select %686, %715, %672 : vector<16x48xi1>, vector<16x48xf32>
    %cst_397 = arith.constant dense<0xFF800000> : vector<16xf32>
    %717 = vector.multi_reduction <maximumf>, %716, %cst_397 [1] : vector<16x48xf32> to vector<16xf32>
    %718 = vector.shape_cast %717 : vector<16xf32> to vector<16x1xf32>
    %cst_398 = arith.constant dense<0xFF800000> : vector<1xf32>
    %719 = vector.multi_reduction <maximumf>, %718, %cst_398 [0] : vector<16x1xf32> to vector<1xf32>
    %720 = vector.shape_cast %719 : vector<1xf32> to vector<1x1xf32>
    %721 = vector.broadcast %720 : vector<1x1xf32> to vector<16x48xf32>
    %722 = arith.cmpf oge, %716, %721 : vector<16x48xf32>
    %cst_399 = arith.constant 1.000000e+09 : f32
    %723 = vector.broadcast %cst_399 : f32 to vector<16x48xf32>
    %724 = arith.select %722, %100, %723 : vector<16x48xi1>, vector<16x48xf32>
    %cst_400 = arith.constant dense<0x7F800000> : vector<16xf32>
    %725 = vector.multi_reduction <minimumf>, %724, %cst_400 [1] : vector<16x48xf32> to vector<16xf32>
    %726 = vector.shape_cast %725 : vector<16xf32> to vector<16x1xf32>
    %cst_401 = arith.constant dense<0x7F800000> : vector<1xf32>
    %727 = vector.multi_reduction <minimumf>, %726, %cst_401 [0] : vector<16x1xf32> to vector<1xf32>
    %728 = vector.shape_cast %727 : vector<1xf32> to vector<1x1xf32>
    %729 = vector.broadcast %728 : vector<1x1xf32> to vector<16x48xf32>
    %730 = arith.cmpf oeq, %100, %729 : vector<16x48xf32>
    %cst_402 = arith.constant 0.000000e+00 : f32
    %731 = vector.broadcast %cst_402 : f32 to vector<16x48xf32>
    %732 = arith.select %730, %72, %731 : vector<16x48xi1>, vector<16x48xf32>
    %cst_403 = arith.constant dense<0.000000e+00> : vector<16xf32>
    %733 = vector.multi_reduction <add>, %732, %cst_403 [1] : vector<16x48xf32> to vector<16xf32>
    %734 = vector.shape_cast %733 : vector<16xf32> to vector<16x1xf32>
    %cst_404 = arith.constant dense<0.000000e+00> : vector<1xf32>
    %735 = vector.multi_reduction <add>, %734, %cst_404 [0] : vector<16x1xf32> to vector<1xf32>
    %736 = vector.shape_cast %735 : vector<1xf32> to vector<1x1xf32>
    %c14 = arith.constant 14 : index
    %c0_405 = arith.constant 0 : index
    %737 = vector.load %arg15[%c14, %c0_405] : memref<16x4xf32, #tpu.memory_space<vmem>>, vector<1x1xf32>
    tpu.vector_store %arg15[%c14, %c0_405], %736 {strides = array<i32>} : memref<16x4xf32, #tpu.memory_space<vmem>>, vector<1x1xf32>,
    %cst_406 = arith.constant 0.000000e+00 : f32
    %738 = vector.broadcast %cst_406 : f32 to vector<16x48xf32>
    %739 = arith.select %730, %79, %738 : vector<16x48xi1>, vector<16x48xf32>
    %cst_407 = arith.constant dense<0.000000e+00> : vector<16xf32>
    %740 = vector.multi_reduction <add>, %739, %cst_407 [1] : vector<16x48xf32> to vector<16xf32>
    %741 = vector.shape_cast %740 : vector<16xf32> to vector<16x1xf32>
    %cst_408 = arith.constant dense<0.000000e+00> : vector<1xf32>
    %742 = vector.multi_reduction <add>, %741, %cst_408 [0] : vector<16x1xf32> to vector<1xf32>
    %743 = vector.shape_cast %742 : vector<1xf32> to vector<1x1xf32>
    %c14_409 = arith.constant 14 : index
    %c1_410 = arith.constant 1 : index
    %744 = vector.load %arg15[%c14_409, %c1_410] : memref<16x4xf32, #tpu.memory_space<vmem>>, vector<1x1xf32>
    tpu.vector_store %arg15[%c14_409, %c1_410], %743 {strides = array<i32>} : memref<16x4xf32, #tpu.memory_space<vmem>>, vector<1x1xf32>,
    %cst_411 = arith.constant 0.000000e+00 : f32
    %745 = vector.broadcast %cst_411 : f32 to vector<16x48xf32>
    %746 = arith.select %730, %86, %745 : vector<16x48xi1>, vector<16x48xf32>
    %cst_412 = arith.constant dense<0.000000e+00> : vector<16xf32>
    %747 = vector.multi_reduction <add>, %746, %cst_412 [1] : vector<16x48xf32> to vector<16xf32>
    %748 = vector.shape_cast %747 : vector<16xf32> to vector<16x1xf32>
    %cst_413 = arith.constant dense<0.000000e+00> : vector<1xf32>
    %749 = vector.multi_reduction <add>, %748, %cst_413 [0] : vector<16x1xf32> to vector<1xf32>
    %750 = vector.shape_cast %749 : vector<1xf32> to vector<1x1xf32>
    %c14_414 = arith.constant 14 : index
    %c2_415 = arith.constant 2 : index
    %751 = vector.load %arg15[%c14_414, %c2_415] : memref<16x4xf32, #tpu.memory_space<vmem>>, vector<1x1xf32>
    tpu.vector_store %arg15[%c14_414, %c2_415], %750 {strides = array<i32>} : memref<16x4xf32, #tpu.memory_space<vmem>>, vector<1x1xf32>,
    %cst_416 = arith.constant 0.000000e+00 : f32
    %752 = vector.broadcast %cst_416 : f32 to vector<16x48xf32>
    %753 = arith.select %730, %93, %752 : vector<16x48xi1>, vector<16x48xf32>
    %cst_417 = arith.constant dense<0.000000e+00> : vector<16xf32>
    %754 = vector.multi_reduction <add>, %753, %cst_417 [1] : vector<16x48xf32> to vector<16xf32>
    %755 = vector.shape_cast %754 : vector<16xf32> to vector<16x1xf32>
    %cst_418 = arith.constant dense<0.000000e+00> : vector<1xf32>
    %756 = vector.multi_reduction <add>, %755, %cst_418 [0] : vector<16x1xf32> to vector<1xf32>
    %757 = vector.shape_cast %756 : vector<1xf32> to vector<1x1xf32>
    %c14_419 = arith.constant 14 : index
    %c3_420 = arith.constant 3 : index
    %758 = vector.load %arg15[%c14_419, %c3_420] : memref<16x4xf32, #tpu.memory_space<vmem>>, vector<1x1xf32>
    tpu.vector_store %arg15[%c14_419, %c3_420], %757 {strides = array<i32>} : memref<16x4xf32, #tpu.memory_space<vmem>>, vector<1x1xf32>,
    %cst_421 = arith.constant -1.000000e+09 : f32
    %759 = vector.broadcast %cst_421 : f32 to vector<16x48xf32>
    %760 = arith.select %730, %759, %716 : vector<16x48xi1>, vector<16x48xf32>
    %cst_422 = arith.constant dense<0xFF800000> : vector<16xf32>
    %761 = vector.multi_reduction <maximumf>, %760, %cst_422 [1] : vector<16x48xf32> to vector<16xf32>
    %762 = vector.shape_cast %761 : vector<16xf32> to vector<16x1xf32>
    %cst_423 = arith.constant dense<0xFF800000> : vector<1xf32>
    %763 = vector.multi_reduction <maximumf>, %762, %cst_423 [0] : vector<16x1xf32> to vector<1xf32>
    %764 = vector.shape_cast %763 : vector<1xf32> to vector<1x1xf32>
    %765 = vector.broadcast %764 : vector<1x1xf32> to vector<16x48xf32>
    %766 = arith.cmpf oge, %760, %765 : vector<16x48xf32>
    %cst_424 = arith.constant 1.000000e+09 : f32
    %767 = vector.broadcast %cst_424 : f32 to vector<16x48xf32>
    %768 = arith.select %766, %100, %767 : vector<16x48xi1>, vector<16x48xf32>
    %cst_425 = arith.constant dense<0x7F800000> : vector<16xf32>
    %769 = vector.multi_reduction <minimumf>, %768, %cst_425 [1] : vector<16x48xf32> to vector<16xf32>
    %770 = vector.shape_cast %769 : vector<16xf32> to vector<16x1xf32>
    %cst_426 = arith.constant dense<0x7F800000> : vector<1xf32>
    %771 = vector.multi_reduction <minimumf>, %770, %cst_426 [0] : vector<16x1xf32> to vector<1xf32>
    %772 = vector.shape_cast %771 : vector<1xf32> to vector<1x1xf32>
    %773 = vector.broadcast %772 : vector<1x1xf32> to vector<16x48xf32>
    %774 = arith.cmpf oeq, %100, %773 : vector<16x48xf32>
    %cst_427 = arith.constant 0.000000e+00 : f32
    %775 = vector.broadcast %cst_427 : f32 to vector<16x48xf32>
    %776 = arith.select %774, %72, %775 : vector<16x48xi1>, vector<16x48xf32>
    %cst_428 = arith.constant dense<0.000000e+00> : vector<16xf32>
    %777 = vector.multi_reduction <add>, %776, %cst_428 [1] : vector<16x48xf32> to vector<16xf32>
    %778 = vector.shape_cast %777 : vector<16xf32> to vector<16x1xf32>
    %cst_429 = arith.constant dense<0.000000e+00> : vector<1xf32>
    %779 = vector.multi_reduction <add>, %778, %cst_429 [0] : vector<16x1xf32> to vector<1xf32>
    %780 = vector.shape_cast %779 : vector<1xf32> to vector<1x1xf32>
    %c15_430 = arith.constant 15 : index
    %c0_431 = arith.constant 0 : index
    %781 = vector.load %arg15[%c15_430, %c0_431] : memref<16x4xf32, #tpu.memory_space<vmem>>, vector<1x1xf32>
    tpu.vector_store %arg15[%c15_430, %c0_431], %780 {strides = array<i32>} : memref<16x4xf32, #tpu.memory_space<vmem>>, vector<1x1xf32>,
    %cst_432 = arith.constant 0.000000e+00 : f32
    %782 = vector.broadcast %cst_432 : f32 to vector<16x48xf32>
    %783 = arith.select %774, %79, %782 : vector<16x48xi1>, vector<16x48xf32>
    %cst_433 = arith.constant dense<0.000000e+00> : vector<16xf32>
    %784 = vector.multi_reduction <add>, %783, %cst_433 [1] : vector<16x48xf32> to vector<16xf32>
    %785 = vector.shape_cast %784 : vector<16xf32> to vector<16x1xf32>
    %cst_434 = arith.constant dense<0.000000e+00> : vector<1xf32>
    %786 = vector.multi_reduction <add>, %785, %cst_434 [0] : vector<16x1xf32> to vector<1xf32>
    %787 = vector.shape_cast %786 : vector<1xf32> to vector<1x1xf32>
    %c15_435 = arith.constant 15 : index
    %c1_436 = arith.constant 1 : index
    %788 = vector.load %arg15[%c15_435, %c1_436] : memref<16x4xf32, #tpu.memory_space<vmem>>, vector<1x1xf32>
    tpu.vector_store %arg15[%c15_435, %c1_436], %787 {strides = array<i32>} : memref<16x4xf32, #tpu.memory_space<vmem>>, vector<1x1xf32>,
    %cst_437 = arith.constant 0.000000e+00 : f32
    %789 = vector.broadcast %cst_437 : f32 to vector<16x48xf32>
    %790 = arith.select %774, %86, %789 : vector<16x48xi1>, vector<16x48xf32>
    %cst_438 = arith.constant dense<0.000000e+00> : vector<16xf32>
    %791 = vector.multi_reduction <add>, %790, %cst_438 [1] : vector<16x48xf32> to vector<16xf32>
    %792 = vector.shape_cast %791 : vector<16xf32> to vector<16x1xf32>
    %cst_439 = arith.constant dense<0.000000e+00> : vector<1xf32>
    %793 = vector.multi_reduction <add>, %792, %cst_439 [0] : vector<16x1xf32> to vector<1xf32>
    %794 = vector.shape_cast %793 : vector<1xf32> to vector<1x1xf32>
    %c15_440 = arith.constant 15 : index
    %c2_441 = arith.constant 2 : index
    %795 = vector.load %arg15[%c15_440, %c2_441] : memref<16x4xf32, #tpu.memory_space<vmem>>, vector<1x1xf32>
    tpu.vector_store %arg15[%c15_440, %c2_441], %794 {strides = array<i32>} : memref<16x4xf32, #tpu.memory_space<vmem>>, vector<1x1xf32>,
    %cst_442 = arith.constant 0.000000e+00 : f32
    %796 = vector.broadcast %cst_442 : f32 to vector<16x48xf32>
    %797 = arith.select %774, %93, %796 : vector<16x48xi1>, vector<16x48xf32>
    %cst_443 = arith.constant dense<0.000000e+00> : vector<16xf32>
    %798 = vector.multi_reduction <add>, %797, %cst_443 [1] : vector<16x48xf32> to vector<16xf32>
    %799 = vector.shape_cast %798 : vector<16xf32> to vector<16x1xf32>
    %cst_444 = arith.constant dense<0.000000e+00> : vector<1xf32>
    %800 = vector.multi_reduction <add>, %799, %cst_444 [0] : vector<16x1xf32> to vector<1xf32>
    %801 = vector.shape_cast %800 : vector<1xf32> to vector<1x1xf32>
    %c15_445 = arith.constant 15 : index
    %c3_446 = arith.constant 3 : index
    %802 = vector.load %arg15[%c15_445, %c3_446] : memref<16x4xf32, #tpu.memory_space<vmem>>, vector<1x1xf32>
    tpu.vector_store %arg15[%c15_445, %c3_446], %801 {strides = array<i32>} : memref<16x4xf32, #tpu.memory_space<vmem>>, vector<1x1xf32>,
    %c0_447 = arith.constant 0 : index
    %c0_448 = arith.constant 0 : index
    %803 = vector.load %arg15[%c0_447, %c0_448] : memref<16x4xf32, #tpu.memory_space<vmem>>, vector<16x4xf32>
    %804 = vector.extract_strided_slice %803 {offsets = [0, 0], sizes = [16, 1], strides = [1, 1]} : vector<16x4xf32> to vector<16x1xf32>
    %805 = vector.extract_strided_slice %803 {offsets = [0, 1], sizes = [16, 1], strides = [1, 1]} : vector<16x4xf32> to vector<16x1xf32>
    %806 = vector.extract_strided_slice %803 {offsets = [0, 2], sizes = [16, 1], strides = [1, 1]} : vector<16x4xf32> to vector<16x1xf32>
    %807 = vector.extract_strided_slice %803 {offsets = [0, 3], sizes = [16, 1], strides = [1, 1]} : vector<16x4xf32> to vector<16x1xf32>
    %808 = arith.subf %806, %804 : vector<16x1xf32>
    %cst_449 = arith.constant 5.000000e-01 : f32
    %809 = vector.broadcast %cst_449 : f32 to vector<16x1xf32>
    %810 = arith.mulf %808, %809 : vector<16x1xf32>
    %811 = arith.subf %807, %805 : vector<16x1xf32>
    %cst_450 = arith.constant 5.000000e-01 : f32
    %812 = vector.broadcast %cst_450 : f32 to vector<16x1xf32>
    %813 = arith.mulf %811, %812 : vector<16x1xf32>
    %814 = tpu.iota {dimensions = array<i32: 1>} : vector<1x16xi32>
    %815 = arith.sitofp %814 : vector<1x16xi32> to vector<1x16xf32>
    %cst_451 = arith.constant 5.000000e-01 : f32
    %816 = vector.broadcast %cst_451 : f32 to vector<1x16xf32>
    %817 = arith.addf %815, %816 : vector<1x16xf32>
    %cst_452 = arith.constant 1.000000e+00 : f32
    %818 = vector.broadcast %cst_452 : f32 to vector<1x16xf32>
    %819 = arith.mulf %817, %818 : vector<1x16xf32>
    %c0_453 = arith.constant 0 : index
    %c0_454 = arith.constant 0 : index
    %820 = vector.load %arg9[%c0_453, %c0_454] : memref<1x256xf32, #tpu.memory_space<vmem>>, vector<1x256xf32>
    %cst_455 = arith.constant 0.000000e+00 : f32
    %821 = vector.broadcast %cst_455 : f32 to vector<16x1xf32>
    %822 = arith.mulf %821, %810 : vector<16x1xf32>
    %823 = arith.addf %804, %822 : vector<16x1xf32>
    %cst_456 = arith.constant 1.000000e+00 : f32
    %824 = vector.broadcast %cst_456 : f32 to vector<16x1xf32>
    %825 = arith.mulf %824, %810 : vector<16x1xf32>
    %826 = arith.addf %804, %825 : vector<16x1xf32>
    %827 = vector.broadcast %819 : vector<1x16xf32> to vector<16x16xf32>
    %828 = vector.broadcast %823 : vector<16x1xf32> to vector<16x16xf32>
    %829 = arith.cmpf oge, %827, %828 : vector<16x16xf32>
    %830 = vector.broadcast %819 : vector<1x16xf32> to vector<16x16xf32>
    %831 = vector.broadcast %826 : vector<16x1xf32> to vector<16x16xf32>
    %832 = arith.cmpf ole, %830, %831 : vector<16x16xf32>
    %833 = arith.andi %829, %832 : vector<16x16xi1>
    %cst_457 = arith.constant 0.000000e+00 : f32
    %834 = vector.broadcast %cst_457 : f32 to vector<16x256xf32>
    %835 = vector.extract_strided_slice %833 {offsets = [0, 0], sizes = [16, 1], strides = [1, 1]} : vector<16x16xi1> to vector<16x1xi1>
    %836 = vector.extract_strided_slice %8 {offsets = [0, 0], sizes = [1, 256], strides = [1, 1]} : vector<16x256xf32> to vector<1x256xf32>
    %cst_458 = arith.constant 0.000000e+00 : f32
    %837 = vector.shape_cast %835 : vector<16x1xi1> to vector<16x1xi1>
    %838 = vector.broadcast %837 : vector<16x1xi1> to vector<16x256xi1>
    %839 = vector.shape_cast %836 : vector<1x256xf32> to vector<1x256xf32>
    %840 = vector.broadcast %839 : vector<1x256xf32> to vector<16x256xf32>
    %841 = vector.broadcast %cst_458 : f32 to vector<16x256xf32>
    %842 = arith.select %838, %840, %841 : vector<16x256xi1>, vector<16x256xf32>
    %843 = arith.maximumf %834, %842 : vector<16x256xf32>
    %844 = vector.extract_strided_slice %833 {offsets = [0, 1], sizes = [16, 1], strides = [1, 1]} : vector<16x16xi1> to vector<16x1xi1>
    %845 = vector.extract_strided_slice %8 {offsets = [1, 0], sizes = [1, 256], strides = [1, 1]} : vector<16x256xf32> to vector<1x256xf32>
    %cst_459 = arith.constant 0.000000e+00 : f32
    %846 = vector.shape_cast %844 : vector<16x1xi1> to vector<16x1xi1>
    %847 = vector.broadcast %846 : vector<16x1xi1> to vector<16x256xi1>
    %848 = vector.shape_cast %845 : vector<1x256xf32> to vector<1x256xf32>
    %849 = vector.broadcast %848 : vector<1x256xf32> to vector<16x256xf32>
    %850 = vector.broadcast %cst_459 : f32 to vector<16x256xf32>
    %851 = arith.select %847, %849, %850 : vector<16x256xi1>, vector<16x256xf32>
    %852 = arith.maximumf %843, %851 : vector<16x256xf32>
    %853 = vector.extract_strided_slice %833 {offsets = [0, 2], sizes = [16, 1], strides = [1, 1]} : vector<16x16xi1> to vector<16x1xi1>
    %854 = vector.extract_strided_slice %8 {offsets = [2, 0], sizes = [1, 256], strides = [1, 1]} : vector<16x256xf32> to vector<1x256xf32>
    %cst_460 = arith.constant 0.000000e+00 : f32
    %855 = vector.shape_cast %853 : vector<16x1xi1> to vector<16x1xi1>
    %856 = vector.broadcast %855 : vector<16x1xi1> to vector<16x256xi1>
    %857 = vector.shape_cast %854 : vector<1x256xf32> to vector<1x256xf32>
    %858 = vector.broadcast %857 : vector<1x256xf32> to vector<16x256xf32>
    %859 = vector.broadcast %cst_460 : f32 to vector<16x256xf32>
    %860 = arith.select %856, %858, %859 : vector<16x256xi1>, vector<16x256xf32>
    %861 = arith.maximumf %852, %860 : vector<16x256xf32>
    %862 = vector.extract_strided_slice %833 {offsets = [0, 3], sizes = [16, 1], strides = [1, 1]} : vector<16x16xi1> to vector<16x1xi1>
    %863 = vector.extract_strided_slice %8 {offsets = [3, 0], sizes = [1, 256], strides = [1, 1]} : vector<16x256xf32> to vector<1x256xf32>
    %cst_461 = arith.constant 0.000000e+00 : f32
    %864 = vector.shape_cast %862 : vector<16x1xi1> to vector<16x1xi1>
    %865 = vector.broadcast %864 : vector<16x1xi1> to vector<16x256xi1>
    %866 = vector.shape_cast %863 : vector<1x256xf32> to vector<1x256xf32>
    %867 = vector.broadcast %866 : vector<1x256xf32> to vector<16x256xf32>
    %868 = vector.broadcast %cst_461 : f32 to vector<16x256xf32>
    %869 = arith.select %865, %867, %868 : vector<16x256xi1>, vector<16x256xf32>
    %870 = arith.maximumf %861, %869 : vector<16x256xf32>
    %871 = vector.extract_strided_slice %833 {offsets = [0, 4], sizes = [16, 1], strides = [1, 1]} : vector<16x16xi1> to vector<16x1xi1>
    %872 = vector.extract_strided_slice %8 {offsets = [4, 0], sizes = [1, 256], strides = [1, 1]} : vector<16x256xf32> to vector<1x256xf32>
    %cst_462 = arith.constant 0.000000e+00 : f32
    %873 = vector.shape_cast %871 : vector<16x1xi1> to vector<16x1xi1>
    %874 = vector.broadcast %873 : vector<16x1xi1> to vector<16x256xi1>
    %875 = vector.shape_cast %872 : vector<1x256xf32> to vector<1x256xf32>
    %876 = vector.broadcast %875 : vector<1x256xf32> to vector<16x256xf32>
    %877 = vector.broadcast %cst_462 : f32 to vector<16x256xf32>
    %878 = arith.select %874, %876, %877 : vector<16x256xi1>, vector<16x256xf32>
    %879 = arith.maximumf %870, %878 : vector<16x256xf32>
    %880 = vector.extract_strided_slice %833 {offsets = [0, 5], sizes = [16, 1], strides = [1, 1]} : vector<16x16xi1> to vector<16x1xi1>
    %881 = vector.extract_strided_slice %8 {offsets = [5, 0], sizes = [1, 256], strides = [1, 1]} : vector<16x256xf32> to vector<1x256xf32>
    %cst_463 = arith.constant 0.000000e+00 : f32
    %882 = vector.shape_cast %880 : vector<16x1xi1> to vector<16x1xi1>
    %883 = vector.broadcast %882 : vector<16x1xi1> to vector<16x256xi1>
    %884 = vector.shape_cast %881 : vector<1x256xf32> to vector<1x256xf32>
    %885 = vector.broadcast %884 : vector<1x256xf32> to vector<16x256xf32>
    %886 = vector.broadcast %cst_463 : f32 to vector<16x256xf32>
    %887 = arith.select %883, %885, %886 : vector<16x256xi1>, vector<16x256xf32>
    %888 = arith.maximumf %879, %887 : vector<16x256xf32>
    %889 = vector.extract_strided_slice %833 {offsets = [0, 6], sizes = [16, 1], strides = [1, 1]} : vector<16x16xi1> to vector<16x1xi1>
    %890 = vector.extract_strided_slice %8 {offsets = [6, 0], sizes = [1, 256], strides = [1, 1]} : vector<16x256xf32> to vector<1x256xf32>
    %cst_464 = arith.constant 0.000000e+00 : f32
    %891 = vector.shape_cast %889 : vector<16x1xi1> to vector<16x1xi1>
    %892 = vector.broadcast %891 : vector<16x1xi1> to vector<16x256xi1>
    %893 = vector.shape_cast %890 : vector<1x256xf32> to vector<1x256xf32>
    %894 = vector.broadcast %893 : vector<1x256xf32> to vector<16x256xf32>
    %895 = vector.broadcast %cst_464 : f32 to vector<16x256xf32>
    %896 = arith.select %892, %894, %895 : vector<16x256xi1>, vector<16x256xf32>
    %897 = arith.maximumf %888, %896 : vector<16x256xf32>
    %898 = vector.extract_strided_slice %833 {offsets = [0, 7], sizes = [16, 1], strides = [1, 1]} : vector<16x16xi1> to vector<16x1xi1>
    %899 = vector.extract_strided_slice %8 {offsets = [7, 0], sizes = [1, 256], strides = [1, 1]} : vector<16x256xf32> to vector<1x256xf32>
    %cst_465 = arith.constant 0.000000e+00 : f32
    %900 = vector.shape_cast %898 : vector<16x1xi1> to vector<16x1xi1>
    %901 = vector.broadcast %900 : vector<16x1xi1> to vector<16x256xi1>
    %902 = vector.shape_cast %899 : vector<1x256xf32> to vector<1x256xf32>
    %903 = vector.broadcast %902 : vector<1x256xf32> to vector<16x256xf32>
    %904 = vector.broadcast %cst_465 : f32 to vector<16x256xf32>
    %905 = arith.select %901, %903, %904 : vector<16x256xi1>, vector<16x256xf32>
    %906 = arith.maximumf %897, %905 : vector<16x256xf32>
    %907 = vector.extract_strided_slice %833 {offsets = [0, 8], sizes = [16, 1], strides = [1, 1]} : vector<16x16xi1> to vector<16x1xi1>
    %908 = vector.extract_strided_slice %8 {offsets = [8, 0], sizes = [1, 256], strides = [1, 1]} : vector<16x256xf32> to vector<1x256xf32>
    %cst_466 = arith.constant 0.000000e+00 : f32
    %909 = vector.shape_cast %907 : vector<16x1xi1> to vector<16x1xi1>
    %910 = vector.broadcast %909 : vector<16x1xi1> to vector<16x256xi1>
    %911 = vector.shape_cast %908 : vector<1x256xf32> to vector<1x256xf32>
    %912 = vector.broadcast %911 : vector<1x256xf32> to vector<16x256xf32>
    %913 = vector.broadcast %cst_466 : f32 to vector<16x256xf32>
    %914 = arith.select %910, %912, %913 : vector<16x256xi1>, vector<16x256xf32>
    %915 = arith.maximumf %906, %914 : vector<16x256xf32>
    %916 = vector.extract_strided_slice %833 {offsets = [0, 9], sizes = [16, 1], strides = [1, 1]} : vector<16x16xi1> to vector<16x1xi1>
    %917 = vector.extract_strided_slice %8 {offsets = [9, 0], sizes = [1, 256], strides = [1, 1]} : vector<16x256xf32> to vector<1x256xf32>
    %cst_467 = arith.constant 0.000000e+00 : f32
    %918 = vector.shape_cast %916 : vector<16x1xi1> to vector<16x1xi1>
    %919 = vector.broadcast %918 : vector<16x1xi1> to vector<16x256xi1>
    %920 = vector.shape_cast %917 : vector<1x256xf32> to vector<1x256xf32>
    %921 = vector.broadcast %920 : vector<1x256xf32> to vector<16x256xf32>
    %922 = vector.broadcast %cst_467 : f32 to vector<16x256xf32>
    %923 = arith.select %919, %921, %922 : vector<16x256xi1>, vector<16x256xf32>
    %924 = arith.maximumf %915, %923 : vector<16x256xf32>
    %925 = vector.extract_strided_slice %833 {offsets = [0, 10], sizes = [16, 1], strides = [1, 1]} : vector<16x16xi1> to vector<16x1xi1>
    %926 = vector.extract_strided_slice %8 {offsets = [10, 0], sizes = [1, 256], strides = [1, 1]} : vector<16x256xf32> to vector<1x256xf32>
    %cst_468 = arith.constant 0.000000e+00 : f32
    %927 = vector.shape_cast %925 : vector<16x1xi1> to vector<16x1xi1>
    %928 = vector.broadcast %927 : vector<16x1xi1> to vector<16x256xi1>
    %929 = vector.shape_cast %926 : vector<1x256xf32> to vector<1x256xf32>
    %930 = vector.broadcast %929 : vector<1x256xf32> to vector<16x256xf32>
    %931 = vector.broadcast %cst_468 : f32 to vector<16x256xf32>
    %932 = arith.select %928, %930, %931 : vector<16x256xi1>, vector<16x256xf32>
    %933 = arith.maximumf %924, %932 : vector<16x256xf32>
    %934 = vector.extract_strided_slice %833 {offsets = [0, 11], sizes = [16, 1], strides = [1, 1]} : vector<16x16xi1> to vector<16x1xi1>
    %935 = vector.extract_strided_slice %8 {offsets = [11, 0], sizes = [1, 256], strides = [1, 1]} : vector<16x256xf32> to vector<1x256xf32>
    %cst_469 = arith.constant 0.000000e+00 : f32
    %936 = vector.shape_cast %934 : vector<16x1xi1> to vector<16x1xi1>
    %937 = vector.broadcast %936 : vector<16x1xi1> to vector<16x256xi1>
    %938 = vector.shape_cast %935 : vector<1x256xf32> to vector<1x256xf32>
    %939 = vector.broadcast %938 : vector<1x256xf32> to vector<16x256xf32>
    %940 = vector.broadcast %cst_469 : f32 to vector<16x256xf32>
    %941 = arith.select %937, %939, %940 : vector<16x256xi1>, vector<16x256xf32>
    %942 = arith.maximumf %933, %941 : vector<16x256xf32>
    %943 = vector.extract_strided_slice %833 {offsets = [0, 12], sizes = [16, 1], strides = [1, 1]} : vector<16x16xi1> to vector<16x1xi1>
    %944 = vector.extract_strided_slice %8 {offsets = [12, 0], sizes = [1, 256], strides = [1, 1]} : vector<16x256xf32> to vector<1x256xf32>
    %cst_470 = arith.constant 0.000000e+00 : f32
    %945 = vector.shape_cast %943 : vector<16x1xi1> to vector<16x1xi1>
    %946 = vector.broadcast %945 : vector<16x1xi1> to vector<16x256xi1>
    %947 = vector.shape_cast %944 : vector<1x256xf32> to vector<1x256xf32>
    %948 = vector.broadcast %947 : vector<1x256xf32> to vector<16x256xf32>
    %949 = vector.broadcast %cst_470 : f32 to vector<16x256xf32>
    %950 = arith.select %946, %948, %949 : vector<16x256xi1>, vector<16x256xf32>
    %951 = arith.maximumf %942, %950 : vector<16x256xf32>
    %952 = vector.extract_strided_slice %833 {offsets = [0, 13], sizes = [16, 1], strides = [1, 1]} : vector<16x16xi1> to vector<16x1xi1>
    %953 = vector.extract_strided_slice %8 {offsets = [13, 0], sizes = [1, 256], strides = [1, 1]} : vector<16x256xf32> to vector<1x256xf32>
    %cst_471 = arith.constant 0.000000e+00 : f32
    %954 = vector.shape_cast %952 : vector<16x1xi1> to vector<16x1xi1>
    %955 = vector.broadcast %954 : vector<16x1xi1> to vector<16x256xi1>
    %956 = vector.shape_cast %953 : vector<1x256xf32> to vector<1x256xf32>
    %957 = vector.broadcast %956 : vector<1x256xf32> to vector<16x256xf32>
    %958 = vector.broadcast %cst_471 : f32 to vector<16x256xf32>
    %959 = arith.select %955, %957, %958 : vector<16x256xi1>, vector<16x256xf32>
    %960 = arith.maximumf %951, %959 : vector<16x256xf32>
    %961 = vector.extract_strided_slice %833 {offsets = [0, 14], sizes = [16, 1], strides = [1, 1]} : vector<16x16xi1> to vector<16x1xi1>
    %962 = vector.extract_strided_slice %8 {offsets = [14, 0], sizes = [1, 256], strides = [1, 1]} : vector<16x256xf32> to vector<1x256xf32>
    %cst_472 = arith.constant 0.000000e+00 : f32
    %963 = vector.shape_cast %961 : vector<16x1xi1> to vector<16x1xi1>
    %964 = vector.broadcast %963 : vector<16x1xi1> to vector<16x256xi1>
    %965 = vector.shape_cast %962 : vector<1x256xf32> to vector<1x256xf32>
    %966 = vector.broadcast %965 : vector<1x256xf32> to vector<16x256xf32>
    %967 = vector.broadcast %cst_472 : f32 to vector<16x256xf32>
    %968 = arith.select %964, %966, %967 : vector<16x256xi1>, vector<16x256xf32>
    %969 = arith.maximumf %960, %968 : vector<16x256xf32>
    %970 = vector.extract_strided_slice %833 {offsets = [0, 15], sizes = [16, 1], strides = [1, 1]} : vector<16x16xi1> to vector<16x1xi1>
    %971 = vector.extract_strided_slice %8 {offsets = [15, 0], sizes = [1, 256], strides = [1, 1]} : vector<16x256xf32> to vector<1x256xf32>
    %cst_473 = arith.constant 0.000000e+00 : f32
    %972 = vector.shape_cast %970 : vector<16x1xi1> to vector<16x1xi1>
    %973 = vector.broadcast %972 : vector<16x1xi1> to vector<16x256xi1>
    %974 = vector.shape_cast %971 : vector<1x256xf32> to vector<1x256xf32>
    %975 = vector.broadcast %974 : vector<1x256xf32> to vector<16x256xf32>
    %976 = vector.broadcast %cst_473 : f32 to vector<16x256xf32>
    %977 = arith.select %973, %975, %976 : vector<16x256xi1>, vector<16x256xf32>
    %978 = arith.maximumf %969, %977 : vector<16x256xf32>
    %cst_474 = arith.constant 1.000000e+00 : f32
    %979 = vector.broadcast %cst_474 : f32 to vector<16x1xf32>
    %980 = arith.mulf %979, %810 : vector<16x1xf32>
    %981 = arith.addf %804, %980 : vector<16x1xf32>
    %cst_475 = arith.constant 2.000000e+00 : f32
    %982 = vector.broadcast %cst_475 : f32 to vector<16x1xf32>
    %983 = arith.mulf %982, %810 : vector<16x1xf32>
    %984 = arith.addf %804, %983 : vector<16x1xf32>
    %985 = vector.broadcast %819 : vector<1x16xf32> to vector<16x16xf32>
    %986 = vector.broadcast %981 : vector<16x1xf32> to vector<16x16xf32>
    %987 = arith.cmpf oge, %985, %986 : vector<16x16xf32>
    %988 = vector.broadcast %819 : vector<1x16xf32> to vector<16x16xf32>
    %989 = vector.broadcast %984 : vector<16x1xf32> to vector<16x16xf32>
    %990 = arith.cmpf ole, %988, %989 : vector<16x16xf32>
    %991 = arith.andi %987, %990 : vector<16x16xi1>
    %cst_476 = arith.constant 0.000000e+00 : f32
    %992 = vector.broadcast %cst_476 : f32 to vector<16x256xf32>
    %993 = vector.extract_strided_slice %991 {offsets = [0, 0], sizes = [16, 1], strides = [1, 1]} : vector<16x16xi1> to vector<16x1xi1>
    %994 = vector.extract_strided_slice %8 {offsets = [0, 0], sizes = [1, 256], strides = [1, 1]} : vector<16x256xf32> to vector<1x256xf32>
    %cst_477 = arith.constant 0.000000e+00 : f32
    %995 = vector.shape_cast %993 : vector<16x1xi1> to vector<16x1xi1>
    %996 = vector.broadcast %995 : vector<16x1xi1> to vector<16x256xi1>
    %997 = vector.shape_cast %994 : vector<1x256xf32> to vector<1x256xf32>
    %998 = vector.broadcast %997 : vector<1x256xf32> to vector<16x256xf32>
    %999 = vector.broadcast %cst_477 : f32 to vector<16x256xf32>
    %1000 = arith.select %996, %998, %999 : vector<16x256xi1>, vector<16x256xf32>
    %1001 = arith.maximumf %992, %1000 : vector<16x256xf32>
    %1002 = vector.extract_strided_slice %991 {offsets = [0, 1], sizes = [16, 1], strides = [1, 1]} : vector<16x16xi1> to vector<16x1xi1>
    %1003 = vector.extract_strided_slice %8 {offsets = [1, 0], sizes = [1, 256], strides = [1, 1]} : vector<16x256xf32> to vector<1x256xf32>
    %cst_478 = arith.constant 0.000000e+00 : f32
    %1004 = vector.shape_cast %1002 : vector<16x1xi1> to vector<16x1xi1>
    %1005 = vector.broadcast %1004 : vector<16x1xi1> to vector<16x256xi1>
    %1006 = vector.shape_cast %1003 : vector<1x256xf32> to vector<1x256xf32>
    %1007 = vector.broadcast %1006 : vector<1x256xf32> to vector<16x256xf32>
    %1008 = vector.broadcast %cst_478 : f32 to vector<16x256xf32>
    %1009 = arith.select %1005, %1007, %1008 : vector<16x256xi1>, vector<16x256xf32>
    %1010 = arith.maximumf %1001, %1009 : vector<16x256xf32>
    %1011 = vector.extract_strided_slice %991 {offsets = [0, 2], sizes = [16, 1], strides = [1, 1]} : vector<16x16xi1> to vector<16x1xi1>
    %1012 = vector.extract_strided_slice %8 {offsets = [2, 0], sizes = [1, 256], strides = [1, 1]} : vector<16x256xf32> to vector<1x256xf32>
    %cst_479 = arith.constant 0.000000e+00 : f32
    %1013 = vector.shape_cast %1011 : vector<16x1xi1> to vector<16x1xi1>
    %1014 = vector.broadcast %1013 : vector<16x1xi1> to vector<16x256xi1>
    %1015 = vector.shape_cast %1012 : vector<1x256xf32> to vector<1x256xf32>
    %1016 = vector.broadcast %1015 : vector<1x256xf32> to vector<16x256xf32>
    %1017 = vector.broadcast %cst_479 : f32 to vector<16x256xf32>
    %1018 = arith.select %1014, %1016, %1017 : vector<16x256xi1>, vector<16x256xf32>
    %1019 = arith.maximumf %1010, %1018 : vector<16x256xf32>
    %1020 = vector.extract_strided_slice %991 {offsets = [0, 3], sizes = [16, 1], strides = [1, 1]} : vector<16x16xi1> to vector<16x1xi1>
    %1021 = vector.extract_strided_slice %8 {offsets = [3, 0], sizes = [1, 256], strides = [1, 1]} : vector<16x256xf32> to vector<1x256xf32>
    %cst_480 = arith.constant 0.000000e+00 : f32
    %1022 = vector.shape_cast %1020 : vector<16x1xi1> to vector<16x1xi1>
    %1023 = vector.broadcast %1022 : vector<16x1xi1> to vector<16x256xi1>
    %1024 = vector.shape_cast %1021 : vector<1x256xf32> to vector<1x256xf32>
    %1025 = vector.broadcast %1024 : vector<1x256xf32> to vector<16x256xf32>
    %1026 = vector.broadcast %cst_480 : f32 to vector<16x256xf32>
    %1027 = arith.select %1023, %1025, %1026 : vector<16x256xi1>, vector<16x256xf32>
    %1028 = arith.maximumf %1019, %1027 : vector<16x256xf32>
    %1029 = vector.extract_strided_slice %991 {offsets = [0, 4], sizes = [16, 1], strides = [1, 1]} : vector<16x16xi1> to vector<16x1xi1>
    %1030 = vector.extract_strided_slice %8 {offsets = [4, 0], sizes = [1, 256], strides = [1, 1]} : vector<16x256xf32> to vector<1x256xf32>
    %cst_481 = arith.constant 0.000000e+00 : f32
    %1031 = vector.shape_cast %1029 : vector<16x1xi1> to vector<16x1xi1>
    %1032 = vector.broadcast %1031 : vector<16x1xi1> to vector<16x256xi1>
    %1033 = vector.shape_cast %1030 : vector<1x256xf32> to vector<1x256xf32>
    %1034 = vector.broadcast %1033 : vector<1x256xf32> to vector<16x256xf32>
    %1035 = vector.broadcast %cst_481 : f32 to vector<16x256xf32>
    %1036 = arith.select %1032, %1034, %1035 : vector<16x256xi1>, vector<16x256xf32>
    %1037 = arith.maximumf %1028, %1036 : vector<16x256xf32>
    %1038 = vector.extract_strided_slice %991 {offsets = [0, 5], sizes = [16, 1], strides = [1, 1]} : vector<16x16xi1> to vector<16x1xi1>
    %1039 = vector.extract_strided_slice %8 {offsets = [5, 0], sizes = [1, 256], strides = [1, 1]} : vector<16x256xf32> to vector<1x256xf32>
    %cst_482 = arith.constant 0.000000e+00 : f32
    %1040 = vector.shape_cast %1038 : vector<16x1xi1> to vector<16x1xi1>
    %1041 = vector.broadcast %1040 : vector<16x1xi1> to vector<16x256xi1>
    %1042 = vector.shape_cast %1039 : vector<1x256xf32> to vector<1x256xf32>
    %1043 = vector.broadcast %1042 : vector<1x256xf32> to vector<16x256xf32>
    %1044 = vector.broadcast %cst_482 : f32 to vector<16x256xf32>
    %1045 = arith.select %1041, %1043, %1044 : vector<16x256xi1>, vector<16x256xf32>
    %1046 = arith.maximumf %1037, %1045 : vector<16x256xf32>
    %1047 = vector.extract_strided_slice %991 {offsets = [0, 6], sizes = [16, 1], strides = [1, 1]} : vector<16x16xi1> to vector<16x1xi1>
    %1048 = vector.extract_strided_slice %8 {offsets = [6, 0], sizes = [1, 256], strides = [1, 1]} : vector<16x256xf32> to vector<1x256xf32>
    %cst_483 = arith.constant 0.000000e+00 : f32
    %1049 = vector.shape_cast %1047 : vector<16x1xi1> to vector<16x1xi1>
    %1050 = vector.broadcast %1049 : vector<16x1xi1> to vector<16x256xi1>
    %1051 = vector.shape_cast %1048 : vector<1x256xf32> to vector<1x256xf32>
    %1052 = vector.broadcast %1051 : vector<1x256xf32> to vector<16x256xf32>
    %1053 = vector.broadcast %cst_483 : f32 to vector<16x256xf32>
    %1054 = arith.select %1050, %1052, %1053 : vector<16x256xi1>, vector<16x256xf32>
    %1055 = arith.maximumf %1046, %1054 : vector<16x256xf32>
    %1056 = vector.extract_strided_slice %991 {offsets = [0, 7], sizes = [16, 1], strides = [1, 1]} : vector<16x16xi1> to vector<16x1xi1>
    %1057 = vector.extract_strided_slice %8 {offsets = [7, 0], sizes = [1, 256], strides = [1, 1]} : vector<16x256xf32> to vector<1x256xf32>
    %cst_484 = arith.constant 0.000000e+00 : f32
    %1058 = vector.shape_cast %1056 : vector<16x1xi1> to vector<16x1xi1>
    %1059 = vector.broadcast %1058 : vector<16x1xi1> to vector<16x256xi1>
    %1060 = vector.shape_cast %1057 : vector<1x256xf32> to vector<1x256xf32>
    %1061 = vector.broadcast %1060 : vector<1x256xf32> to vector<16x256xf32>
    %1062 = vector.broadcast %cst_484 : f32 to vector<16x256xf32>
    %1063 = arith.select %1059, %1061, %1062 : vector<16x256xi1>, vector<16x256xf32>
    %1064 = arith.maximumf %1055, %1063 : vector<16x256xf32>
    %1065 = vector.extract_strided_slice %991 {offsets = [0, 8], sizes = [16, 1], strides = [1, 1]} : vector<16x16xi1> to vector<16x1xi1>
    %1066 = vector.extract_strided_slice %8 {offsets = [8, 0], sizes = [1, 256], strides = [1, 1]} : vector<16x256xf32> to vector<1x256xf32>
    %cst_485 = arith.constant 0.000000e+00 : f32
    %1067 = vector.shape_cast %1065 : vector<16x1xi1> to vector<16x1xi1>
    %1068 = vector.broadcast %1067 : vector<16x1xi1> to vector<16x256xi1>
    %1069 = vector.shape_cast %1066 : vector<1x256xf32> to vector<1x256xf32>
    %1070 = vector.broadcast %1069 : vector<1x256xf32> to vector<16x256xf32>
    %1071 = vector.broadcast %cst_485 : f32 to vector<16x256xf32>
    %1072 = arith.select %1068, %1070, %1071 : vector<16x256xi1>, vector<16x256xf32>
    %1073 = arith.maximumf %1064, %1072 : vector<16x256xf32>
    %1074 = vector.extract_strided_slice %991 {offsets = [0, 9], sizes = [16, 1], strides = [1, 1]} : vector<16x16xi1> to vector<16x1xi1>
    %1075 = vector.extract_strided_slice %8 {offsets = [9, 0], sizes = [1, 256], strides = [1, 1]} : vector<16x256xf32> to vector<1x256xf32>
    %cst_486 = arith.constant 0.000000e+00 : f32
    %1076 = vector.shape_cast %1074 : vector<16x1xi1> to vector<16x1xi1>
    %1077 = vector.broadcast %1076 : vector<16x1xi1> to vector<16x256xi1>
    %1078 = vector.shape_cast %1075 : vector<1x256xf32> to vector<1x256xf32>
    %1079 = vector.broadcast %1078 : vector<1x256xf32> to vector<16x256xf32>
    %1080 = vector.broadcast %cst_486 : f32 to vector<16x256xf32>
    %1081 = arith.select %1077, %1079, %1080 : vector<16x256xi1>, vector<16x256xf32>
    %1082 = arith.maximumf %1073, %1081 : vector<16x256xf32>
    %1083 = vector.extract_strided_slice %991 {offsets = [0, 10], sizes = [16, 1], strides = [1, 1]} : vector<16x16xi1> to vector<16x1xi1>
    %1084 = vector.extract_strided_slice %8 {offsets = [10, 0], sizes = [1, 256], strides = [1, 1]} : vector<16x256xf32> to vector<1x256xf32>
    %cst_487 = arith.constant 0.000000e+00 : f32
    %1085 = vector.shape_cast %1083 : vector<16x1xi1> to vector<16x1xi1>
    %1086 = vector.broadcast %1085 : vector<16x1xi1> to vector<16x256xi1>
    %1087 = vector.shape_cast %1084 : vector<1x256xf32> to vector<1x256xf32>
    %1088 = vector.broadcast %1087 : vector<1x256xf32> to vector<16x256xf32>
    %1089 = vector.broadcast %cst_487 : f32 to vector<16x256xf32>
    %1090 = arith.select %1086, %1088, %1089 : vector<16x256xi1>, vector<16x256xf32>
    %1091 = arith.maximumf %1082, %1090 : vector<16x256xf32>
    %1092 = vector.extract_strided_slice %991 {offsets = [0, 11], sizes = [16, 1], strides = [1, 1]} : vector<16x16xi1> to vector<16x1xi1>
    %1093 = vector.extract_strided_slice %8 {offsets = [11, 0], sizes = [1, 256], strides = [1, 1]} : vector<16x256xf32> to vector<1x256xf32>
    %cst_488 = arith.constant 0.000000e+00 : f32
    %1094 = vector.shape_cast %1092 : vector<16x1xi1> to vector<16x1xi1>
    %1095 = vector.broadcast %1094 : vector<16x1xi1> to vector<16x256xi1>
    %1096 = vector.shape_cast %1093 : vector<1x256xf32> to vector<1x256xf32>
    %1097 = vector.broadcast %1096 : vector<1x256xf32> to vector<16x256xf32>
    %1098 = vector.broadcast %cst_488 : f32 to vector<16x256xf32>
    %1099 = arith.select %1095, %1097, %1098 : vector<16x256xi1>, vector<16x256xf32>
    %1100 = arith.maximumf %1091, %1099 : vector<16x256xf32>
    %1101 = vector.extract_strided_slice %991 {offsets = [0, 12], sizes = [16, 1], strides = [1, 1]} : vector<16x16xi1> to vector<16x1xi1>
    %1102 = vector.extract_strided_slice %8 {offsets = [12, 0], sizes = [1, 256], strides = [1, 1]} : vector<16x256xf32> to vector<1x256xf32>
    %cst_489 = arith.constant 0.000000e+00 : f32
    %1103 = vector.shape_cast %1101 : vector<16x1xi1> to vector<16x1xi1>
    %1104 = vector.broadcast %1103 : vector<16x1xi1> to vector<16x256xi1>
    %1105 = vector.shape_cast %1102 : vector<1x256xf32> to vector<1x256xf32>
    %1106 = vector.broadcast %1105 : vector<1x256xf32> to vector<16x256xf32>
    %1107 = vector.broadcast %cst_489 : f32 to vector<16x256xf32>
    %1108 = arith.select %1104, %1106, %1107 : vector<16x256xi1>, vector<16x256xf32>
    %1109 = arith.maximumf %1100, %1108 : vector<16x256xf32>
    %1110 = vector.extract_strided_slice %991 {offsets = [0, 13], sizes = [16, 1], strides = [1, 1]} : vector<16x16xi1> to vector<16x1xi1>
    %1111 = vector.extract_strided_slice %8 {offsets = [13, 0], sizes = [1, 256], strides = [1, 1]} : vector<16x256xf32> to vector<1x256xf32>
    %cst_490 = arith.constant 0.000000e+00 : f32
    %1112 = vector.shape_cast %1110 : vector<16x1xi1> to vector<16x1xi1>
    %1113 = vector.broadcast %1112 : vector<16x1xi1> to vector<16x256xi1>
    %1114 = vector.shape_cast %1111 : vector<1x256xf32> to vector<1x256xf32>
    %1115 = vector.broadcast %1114 : vector<1x256xf32> to vector<16x256xf32>
    %1116 = vector.broadcast %cst_490 : f32 to vector<16x256xf32>
    %1117 = arith.select %1113, %1115, %1116 : vector<16x256xi1>, vector<16x256xf32>
    %1118 = arith.maximumf %1109, %1117 : vector<16x256xf32>
    %1119 = vector.extract_strided_slice %991 {offsets = [0, 14], sizes = [16, 1], strides = [1, 1]} : vector<16x16xi1> to vector<16x1xi1>
    %1120 = vector.extract_strided_slice %8 {offsets = [14, 0], sizes = [1, 256], strides = [1, 1]} : vector<16x256xf32> to vector<1x256xf32>
    %cst_491 = arith.constant 0.000000e+00 : f32
    %1121 = vector.shape_cast %1119 : vector<16x1xi1> to vector<16x1xi1>
    %1122 = vector.broadcast %1121 : vector<16x1xi1> to vector<16x256xi1>
    %1123 = vector.shape_cast %1120 : vector<1x256xf32> to vector<1x256xf32>
    %1124 = vector.broadcast %1123 : vector<1x256xf32> to vector<16x256xf32>
    %1125 = vector.broadcast %cst_491 : f32 to vector<16x256xf32>
    %1126 = arith.select %1122, %1124, %1125 : vector<16x256xi1>, vector<16x256xf32>
    %1127 = arith.maximumf %1118, %1126 : vector<16x256xf32>
    %1128 = vector.extract_strided_slice %991 {offsets = [0, 15], sizes = [16, 1], strides = [1, 1]} : vector<16x16xi1> to vector<16x1xi1>
    %1129 = vector.extract_strided_slice %8 {offsets = [15, 0], sizes = [1, 256], strides = [1, 1]} : vector<16x256xf32> to vector<1x256xf32>
    %cst_492 = arith.constant 0.000000e+00 : f32
    %1130 = vector.shape_cast %1128 : vector<16x1xi1> to vector<16x1xi1>
    %1131 = vector.broadcast %1130 : vector<16x1xi1> to vector<16x256xi1>
    %1132 = vector.shape_cast %1129 : vector<1x256xf32> to vector<1x256xf32>
    %1133 = vector.broadcast %1132 : vector<1x256xf32> to vector<16x256xf32>
    %1134 = vector.broadcast %cst_492 : f32 to vector<16x256xf32>
    %1135 = arith.select %1131, %1133, %1134 : vector<16x256xi1>, vector<16x256xf32>
    %1136 = arith.maximumf %1127, %1135 : vector<16x256xf32>
    %cst_493 = arith.constant 0.000000e+00 : f32
    %1137 = vector.broadcast %cst_493 : f32 to vector<16x1xf32>
    %1138 = arith.mulf %1137, %813 : vector<16x1xf32>
    %1139 = arith.addf %805, %1138 : vector<16x1xf32>
    %cst_494 = arith.constant 1.000000e+00 : f32
    %1140 = vector.broadcast %cst_494 : f32 to vector<16x1xf32>
    %1141 = arith.mulf %1140, %813 : vector<16x1xf32>
    %1142 = arith.addf %805, %1141 : vector<16x1xf32>
    %1143 = vector.broadcast %820 : vector<1x256xf32> to vector<16x256xf32>
    %1144 = vector.broadcast %1139 : vector<16x1xf32> to vector<16x256xf32>
    %1145 = arith.cmpf oge, %1143, %1144 : vector<16x256xf32>
    %1146 = vector.broadcast %820 : vector<1x256xf32> to vector<16x256xf32>
    %1147 = vector.broadcast %1142 : vector<16x1xf32> to vector<16x256xf32>
    %1148 = arith.cmpf ole, %1146, %1147 : vector<16x256xf32>
    %1149 = arith.andi %1145, %1148 : vector<16x256xi1>
    %cst_495 = arith.constant 0.000000e+00 : f32
    %1150 = vector.broadcast %cst_495 : f32 to vector<16x256xf32>
    %1151 = arith.select %1149, %978, %1150 : vector<16x256xi1>, vector<16x256xf32>
    %cst_496 = arith.constant 1.000000e+00 : f32
    %1152 = vector.broadcast %cst_496 : f32 to vector<16x1xf32>
    %1153 = arith.mulf %1152, %813 : vector<16x1xf32>
    %1154 = arith.addf %805, %1153 : vector<16x1xf32>
    %cst_497 = arith.constant 2.000000e+00 : f32
    %1155 = vector.broadcast %cst_497 : f32 to vector<16x1xf32>
    %1156 = arith.mulf %1155, %813 : vector<16x1xf32>
    %1157 = arith.addf %805, %1156 : vector<16x1xf32>
    %1158 = vector.broadcast %820 : vector<1x256xf32> to vector<16x256xf32>
    %1159 = vector.broadcast %1154 : vector<16x1xf32> to vector<16x256xf32>
    %1160 = arith.cmpf oge, %1158, %1159 : vector<16x256xf32>
    %1161 = vector.broadcast %820 : vector<1x256xf32> to vector<16x256xf32>
    %1162 = vector.broadcast %1157 : vector<16x1xf32> to vector<16x256xf32>
    %1163 = arith.cmpf ole, %1161, %1162 : vector<16x256xf32>
    %1164 = arith.andi %1160, %1163 : vector<16x256xi1>
    %cst_498 = arith.constant 0.000000e+00 : f32
    %1165 = vector.broadcast %cst_498 : f32 to vector<16x256xf32>
    %1166 = arith.select %1164, %978, %1165 : vector<16x256xi1>, vector<16x256xf32>
    %cst_499 = arith.constant 0.000000e+00 : f32
    %1167 = vector.broadcast %cst_499 : f32 to vector<16x1xf32>
    %1168 = arith.mulf %1167, %813 : vector<16x1xf32>
    %1169 = arith.addf %805, %1168 : vector<16x1xf32>
    %cst_500 = arith.constant 1.000000e+00 : f32
    %1170 = vector.broadcast %cst_500 : f32 to vector<16x1xf32>
    %1171 = arith.mulf %1170, %813 : vector<16x1xf32>
    %1172 = arith.addf %805, %1171 : vector<16x1xf32>
    %1173 = vector.broadcast %820 : vector<1x256xf32> to vector<16x256xf32>
    %1174 = vector.broadcast %1169 : vector<16x1xf32> to vector<16x256xf32>
    %1175 = arith.cmpf oge, %1173, %1174 : vector<16x256xf32>
    %1176 = vector.broadcast %820 : vector<1x256xf32> to vector<16x256xf32>
    %1177 = vector.broadcast %1172 : vector<16x1xf32> to vector<16x256xf32>
    %1178 = arith.cmpf ole, %1176, %1177 : vector<16x256xf32>
    %1179 = arith.andi %1175, %1178 : vector<16x256xi1>
    %cst_501 = arith.constant 0.000000e+00 : f32
    %1180 = vector.broadcast %cst_501 : f32 to vector<16x256xf32>
    %1181 = arith.select %1179, %1136, %1180 : vector<16x256xi1>, vector<16x256xf32>
    %cst_502 = arith.constant 1.000000e+00 : f32
    %1182 = vector.broadcast %cst_502 : f32 to vector<16x1xf32>
    %1183 = arith.mulf %1182, %813 : vector<16x1xf32>
    %1184 = arith.addf %805, %1183 : vector<16x1xf32>
    %cst_503 = arith.constant 2.000000e+00 : f32
    %1185 = vector.broadcast %cst_503 : f32 to vector<16x1xf32>
    %1186 = arith.mulf %1185, %813 : vector<16x1xf32>
    %1187 = arith.addf %805, %1186 : vector<16x1xf32>
    %1188 = vector.broadcast %820 : vector<1x256xf32> to vector<16x256xf32>
    %1189 = vector.broadcast %1184 : vector<16x1xf32> to vector<16x256xf32>
    %1190 = arith.cmpf oge, %1188, %1189 : vector<16x256xf32>
    %1191 = vector.broadcast %820 : vector<1x256xf32> to vector<16x256xf32>
    %1192 = vector.broadcast %1187 : vector<16x1xf32> to vector<16x256xf32>
    %1193 = arith.cmpf ole, %1191, %1192 : vector<16x256xf32>
    %1194 = arith.andi %1190, %1193 : vector<16x256xi1>
    %cst_504 = arith.constant 0.000000e+00 : f32
    %1195 = vector.broadcast %cst_504 : f32 to vector<16x256xf32>
    %1196 = arith.select %1194, %1136, %1195 : vector<16x256xi1>, vector<16x256xf32>
    %1197 = tpu.concatenate %1151, %1166, %1181, %1196 in 0 : vector<16x256xf32>, vector<16x256xf32>, vector<16x256xf32>, vector<16x256xf32> -> vector<64x256xf32>
    %1198 = vector.extract_strided_slice %1197 {offsets = [0, 0], sizes = [64, 128], strides = [1, 1]} : vector<64x256xf32> to vector<64x128xf32>
    %1199 = vector.extract_strided_slice %1197 {offsets = [0, 128], sizes = [64, 128], strides = [1, 1]} : vector<64x256xf32> to vector<64x128xf32>
    %1200 = arith.maximumf %1198, %1199 : vector<64x128xf32>
    %1201 = vector.extract_strided_slice %1200 {offsets = [0, 0], sizes = [64, 64], strides = [1, 1]} : vector<64x128xf32> to vector<64x64xf32>
    %1202 = vector.extract_strided_slice %1200 {offsets = [0, 64], sizes = [64, 64], strides = [1, 1]} : vector<64x128xf32> to vector<64x64xf32>
    %1203 = arith.maximumf %1201, %1202 : vector<64x64xf32>
    %1204 = vector.extract_strided_slice %1203 {offsets = [0, 0], sizes = [64, 32], strides = [1, 1]} : vector<64x64xf32> to vector<64x32xf32>
    %1205 = vector.extract_strided_slice %1203 {offsets = [0, 32], sizes = [64, 32], strides = [1, 1]} : vector<64x64xf32> to vector<64x32xf32>
    %1206 = arith.maximumf %1204, %1205 : vector<64x32xf32>
    %1207 = vector.extract_strided_slice %1206 {offsets = [0, 0], sizes = [64, 16], strides = [1, 1]} : vector<64x32xf32> to vector<64x16xf32>
    %1208 = vector.extract_strided_slice %1206 {offsets = [0, 16], sizes = [64, 16], strides = [1, 1]} : vector<64x32xf32> to vector<64x16xf32>
    %1209 = arith.maximumf %1207, %1208 : vector<64x16xf32>
    %cst_505 = arith.constant 0.000000e+00 : f32
    %1210 = vector.broadcast %cst_505 : f32 to vector<16x128xf32>
    %1211 = vector.extract_strided_slice %1209 {offsets = [0, 0], sizes = [16, 16], strides = [1, 1]} : vector<64x16xf32> to vector<16x16xf32>
    %1212 = arith.truncf %1211 : vector<16x16xf32> to vector<16x16xbf16>
    %c0_506 = arith.constant 0 : index
    %c0_507 = arith.constant 0 : index
    %1213 = vector.load %arg10[%c0_506, %c0_507] : memref<64x128xbf16, #tpu.memory_space<vmem>>, vector<16x128xbf16>
    %cst_508 = arith.constant dense<0.000000e+00> : vector<16x128xf32>
    %1214 = tpu.matmul %1212, %1213, %cst_508 {dimension_numbers = #tpu.dot_dimension_numbers<[1], [0], [0], [1], [0, 0, 1, 1], [], []>} : vector<16x16xbf16>, vector<16x128xbf16>, vector<16x128xf32> -> vector<16x128xf32>
    %1215 = arith.addf %1210, %1214 : vector<16x128xf32>
    %1216 = vector.extract_strided_slice %1209 {offsets = [16, 0], sizes = [16, 16], strides = [1, 1]} : vector<64x16xf32> to vector<16x16xf32>
    %1217 = arith.truncf %1216 : vector<16x16xf32> to vector<16x16xbf16>
    %c16 = arith.constant 16 : index
    %c0_509 = arith.constant 0 : index
    %1218 = vector.load %arg10[%c16, %c0_509] : memref<64x128xbf16, #tpu.memory_space<vmem>>, vector<16x128xbf16>
    %cst_510 = arith.constant dense<0.000000e+00> : vector<16x128xf32>
    %1219 = tpu.matmul %1217, %1218, %cst_510 {dimension_numbers = #tpu.dot_dimension_numbers<[1], [0], [0], [1], [0, 0, 1, 1], [], []>} : vector<16x16xbf16>, vector<16x128xbf16>, vector<16x128xf32> -> vector<16x128xf32>
    %1220 = arith.addf %1215, %1219 : vector<16x128xf32>
    %1221 = vector.extract_strided_slice %1209 {offsets = [32, 0], sizes = [16, 16], strides = [1, 1]} : vector<64x16xf32> to vector<16x16xf32>
    %1222 = arith.truncf %1221 : vector<16x16xf32> to vector<16x16xbf16>
    %c32 = arith.constant 32 : index
    %c0_511 = arith.constant 0 : index
    %1223 = vector.load %arg10[%c32, %c0_511] : memref<64x128xbf16, #tpu.memory_space<vmem>>, vector<16x128xbf16>
    %cst_512 = arith.constant dense<0.000000e+00> : vector<16x128xf32>
    %1224 = tpu.matmul %1222, %1223, %cst_512 {dimension_numbers = #tpu.dot_dimension_numbers<[1], [0], [0], [1], [0, 0, 1, 1], [], []>} : vector<16x16xbf16>, vector<16x128xbf16>, vector<16x128xf32> -> vector<16x128xf32>
    %1225 = arith.addf %1220, %1224 : vector<16x128xf32>
    %1226 = vector.extract_strided_slice %1209 {offsets = [48, 0], sizes = [16, 16], strides = [1, 1]} : vector<64x16xf32> to vector<16x16xf32>
    %1227 = arith.truncf %1226 : vector<16x16xf32> to vector<16x16xbf16>
    %c48 = arith.constant 48 : index
    %c0_513 = arith.constant 0 : index
    %1228 = vector.load %arg10[%c48, %c0_513] : memref<64x128xbf16, #tpu.memory_space<vmem>>, vector<16x128xbf16>
    %cst_514 = arith.constant dense<0.000000e+00> : vector<16x128xf32>
    %1229 = tpu.matmul %1227, %1228, %cst_514 {dimension_numbers = #tpu.dot_dimension_numbers<[1], [0], [0], [1], [0, 0, 1, 1], [], []>} : vector<16x16xbf16>, vector<16x128xbf16>, vector<16x128xf32> -> vector<16x128xf32>
    %1230 = arith.addf %1225, %1229 : vector<16x128xf32>
    %c0_515 = arith.constant 0 : index
    %c0_516 = arith.constant 0 : index
    %1231 = vector.load %arg11[%c0_515, %c0_516] : memref<1x128xf32, #tpu.memory_space<vmem>>, vector<1x128xf32>
    %1232 = vector.broadcast %1231 : vector<1x128xf32> to vector<16x128xf32>
    %1233 = arith.addf %1230, %1232 : vector<16x128xf32>
    %cst_517 = arith.constant 0.000000e+00 : f32
    %1234 = vector.broadcast %cst_517 : f32 to vector<16x128xf32>
    %1235 = arith.maximumf %1233, %1234 : vector<16x128xf32>
    %1236 = arith.truncf %1235 : vector<16x128xf32> to vector<16x128xbf16>
    %c0_518 = arith.constant 0 : index
    %c0_519 = arith.constant 0 : index
    %1237 = vector.load %arg12[%c0_518, %c0_519] : memref<128x128xbf16, #tpu.memory_space<vmem>>, vector<128x128xbf16>
    %cst_520 = arith.constant dense<0.000000e+00> : vector<16x128xf32>
    %1238 = tpu.matmul %1236, %1237, %cst_520 {dimension_numbers = #tpu.dot_dimension_numbers<[1], [0], [0], [1], [0, 0, 1, 1], [], []>} : vector<16x128xbf16>, vector<128x128xbf16>, vector<16x128xf32> -> vector<16x128xf32>
    %c0_521 = arith.constant 0 : index
    %c0_522 = arith.constant 0 : index
    %1239 = vector.load %arg13[%c0_521, %c0_522] : memref<1x128xf32, #tpu.memory_space<vmem>>, vector<1x128xf32>
    %1240 = vector.broadcast %1239 : vector<1x128xf32> to vector<16x128xf32>
    %1241 = arith.addf %1238, %1240 : vector<16x128xf32>
    %c0_523 = arith.constant 0 : index
    %c0_524 = arith.constant 0 : index
    %1242 = vector.load %arg14[%c0_523, %c0_524] : memref<16x128xf32, #tpu.memory_space<vmem>>, vector<16x128xf32>
    tpu.vector_store %arg14[%c0_523, %c0_524], %1241 {strides = array<i32>} : memref<16x128xf32, #tpu.memory_space<vmem>>, vector<16x128xf32>,
    return
  }
  func.func @transform_0(%arg0: i32) -> (i32, i32) {
    %c0_i32 = arith.constant 0 : i32
    %c0_i32_0 = arith.constant 0 : i32
    %c0_i32_1 = arith.constant 0 : i32
    return %c0_i32, %c0_i32_0 : i32, i32
  }
  func.func @transform_1(%arg0: i32) -> (i32, i32) {
    %c0_i32 = arith.constant 0 : i32
    %c0_i32_0 = arith.constant 0 : i32
    %c0_i32_1 = arith.constant 0 : i32
    return %c0_i32, %c0_i32_0 : i32, i32
  }
  func.func @transform_2(%arg0: i32) -> (i32, i32) {
    %c0_i32 = arith.constant 0 : i32
    %c0_i32_0 = arith.constant 0 : i32
    %c0_i32_1 = arith.constant 0 : i32
    return %c0_i32, %c0_i32_0 : i32, i32
  }
  func.func @transform_3(%arg0: i32) -> (i32, i32) {
    %c0_i32 = arith.constant 0 : i32
    %c0_i32_0 = arith.constant 0 : i32
    %c0_i32_1 = arith.constant 0 : i32
    return %c0_i32, %c0_i32_0 : i32, i32
  }
  func.func @transform_4(%arg0: i32) -> (i32, i32) {
    %c0_i32 = arith.constant 0 : i32
    %c0_i32_0 = arith.constant 0 : i32
    %c0_i32_1 = arith.constant 0 : i32
    return %c0_i32, %c0_i32_0 : i32, i32
  }
  func.func @transform_5(%arg0: i32) -> (i32, i32) {
    %c0_i32 = arith.constant 0 : i32
    %c0_i32_0 = arith.constant 0 : i32
    %c0_i32_1 = arith.constant 0 : i32
    return %c0_i32, %c0_i32_0 : i32, i32
  }
  func.func @transform_6(%arg0: i32) -> (i32, i32) {
    %c0_i32 = arith.constant 0 : i32
    %c0_i32_0 = arith.constant 0 : i32
    %c0_i32_1 = arith.constant 0 : i32
    return %c0_i32, %c0_i32_0 : i32, i32
  }
  func.func @transform_7(%arg0: i32) -> (i32, i32) {
    %c0_i32 = arith.constant 0 : i32
    %c0_i32_0 = arith.constant 0 : i32
    %c0_i32_1 = arith.constant 0 : i32
    return %c0_i32, %c0_i32_0 : i32, i32
  }
  func.func @transform_8(%arg0: i32) -> (i32, i32) {
    %c0_i32 = arith.constant 0 : i32
    %c0_i32_0 = arith.constant 0 : i32
    %c0_i32_1 = arith.constant 0 : i32
    return %c0_i32, %c0_i32_0 : i32, i32
  }
  func.func @transform_9(%arg0: i32) -> (i32, i32) {
    %c0_i32 = arith.constant 0 : i32
    %c0_i32_0 = arith.constant 0 : i32
    %c0_i32_1 = arith.constant 0 : i32
    return %c0_i32, %c0_i32_0 : i32, i32
  }
  func.func @transform_10(%arg0: i32) -> (i32, i32) {
    %c0_i32 = arith.constant 0 : i32
    %c0_i32_0 = arith.constant 0 : i32
    %c0_i32_1 = arith.constant 0 : i32
    return %c0_i32, %c0_i32_0 : i32, i32
  }
  func.func @transform_11(%arg0: i32) -> (i32, i32) {
    %c0_i32 = arith.constant 0 : i32
    %c0_i32_0 = arith.constant 0 : i32
    %c0_i32_1 = arith.constant 0 : i32
    return %c0_i32, %c0_i32_0 : i32, i32
  }
  func.func @transform_12(%arg0: i32) -> (i32, i32) {
    %c0_i32 = arith.constant 0 : i32
    %c0_i32_0 = arith.constant 0 : i32
    %c0_i32_1 = arith.constant 0 : i32
    return %c0_i32, %c0_i32_0 : i32, i32
  }
  func.func @transform_13(%arg0: i32) -> (i32, i32) {
    %c0_i32 = arith.constant 0 : i32
    %c0_i32_0 = arith.constant 0 : i32
    %c0_i32_1 = arith.constant 0 : i32
    return %c0_i32, %c0_i32_0 : i32, i32
  }
  func.func @transform_14(%arg0: i32) -> (i32, i32) {
    %c0_i32 = arith.constant 0 : i32
    %c0_i32_0 = arith.constant 0 : i32
    %c0_i32_1 = arith.constant 0 : i32
    return %c0_i32, %c0_i32_0 : i32, i32
  }
}

</mosaic_0001>

<llo_original>
// kernel: faster_rcnn_forward.1
$region0: #{faster_rcnn_forward.1}
  #allocation0 [shape = 'u32[]', space=smem, size = 0x4, offset = 0x4, fixed_abs, tag = 'smem constant byte address 0x4 - core index']
  #allocation1 [shape = 'u32[144,128]{1,0:T(1,128)}', space=vmem, size = 0x12000, scoped, tag = 'internal scratch']
  #allocation2 [shape = 'f32[16,768]{1,0:T(8,128)}', space=vmem, size = 0xc000, scoped, tag = 'scratch operand']
  %s0 = inlined_call_operand.vmem [shape: f32[16,216], index: 0, kind: input, shape index: {}]
  %s1 = inlined_call_operand.vmem [shape: bf16[216,256], index: 1, kind: input, shape index: {}]
  %s2 = inlined_call_operand.vmem [shape: f32[1,256], index: 2, kind: input, shape index: {}]
  %s3 = inlined_call_operand.vmem [shape: bf16[768,256], index: 3, kind: input, shape index: {}]
  %s4 = inlined_call_operand.vmem [shape: f32[1,256], index: 4, kind: input, shape index: {}]
  %s5 = inlined_call_operand.vmem [shape: bf16[256,288], index: 5, kind: input, shape index: {}]
  %s6 = inlined_call_operand.vmem [shape: f32[1,288], index: 6, kind: input, shape index: {}]
  %s7 = inlined_call_operand.vmem [shape: f32[2,48], index: 7, kind: input, shape index: {}]
  %s8 = inlined_call_operand.vmem [shape: f32[1,256], index: 8, kind: input, shape index: {}]
  %s9 = inlined_call_operand.vmem [shape: bf16[64,128], index: 9, kind: input, shape index: {}]
  %s10 = inlined_call_operand.vmem [shape: f32[1,128], index: 10, kind: input, shape index: {}]
  %s11 = inlined_call_operand.vmem [shape: bf16[128,128], index: 11, kind: input, shape index: {}]
  %s12 = inlined_call_operand.vmem [shape: f32[1,128], index: 12, kind: input, shape index: {}]
  %s13 = inlined_call_operand.vmem [shape: f32[16,128], index: 13, kind: output, shape index: {0}]
  %s14 = inlined_call_operand.vmem [shape: f32[16,4], index: 14, kind: output, shape index: {1}]
  %15 = xla_tuple %s13, %s14
  %s16 = sld [smem:[#allocation0]]
  $region70: #{faster_rcnn_forward.1} parent=0
    _
  %s18 = ssub.s32 1, %s16
  %s19 = scalar_select 0, %s18, %s16
  // Predicated region
  $region2: #{faster_rcnn_forward.1} parent=0 // pred_check
    _
  $region3: #{faster_rcnn_forward.1} parent=0 // pred_check_branch
    %21 = sbr.rel (0) target = $region5
  $region4: #{faster_rcnn_forward.1} parent=0 // pred_region
    _
  $region5: #{faster_rcnn_forward.1} parent=0 // pred_fallthru
    _
  // Predicated region
  $region6: #{faster_rcnn_forward.1} parent=0 // pred_check
    _
  $region7: #{faster_rcnn_forward.1} parent=0 // pred_check_branch
    %23 = sbr.rel (0) target = $region9
  $region8: #{faster_rcnn_forward.1} parent=0 // pred_region
    _
  $region9: #{faster_rcnn_forward.1} parent=0 // pred_fallthru
    _
  // Predicated region
  $region10: #{faster_rcnn_forward.1} parent=0 // pred_check
    _
  $region11: #{faster_rcnn_forward.1} parent=0 // pred_check_branch
    %25 = sbr.rel (0) target = $region13
  $region12: #{faster_rcnn_forward.1} parent=0 // pred_region
    _
  $region13: #{faster_rcnn_forward.1} parent=0 // pred_fallthru
    _
  // Predicated region
  $region14: #{faster_rcnn_forward.1} parent=0 // pred_check
    _
  $region15: #{faster_rcnn_forward.1} parent=0 // pred_check_branch
    %27 = sbr.rel (0) target = $region17
  $region16: #{faster_rcnn_forward.1} parent=0 // pred_region
    _
  $region17: #{faster_rcnn_forward.1} parent=0 // pred_fallthru
    _
  // Predicated region
  $region18: #{faster_rcnn_forward.1} parent=0 // pred_check
    _
  $region19: #{faster_rcnn_forward.1} parent=0 // pred_check_branch
    %29 = sbr.rel (0) target = $region21
  $region20: #{faster_rcnn_forward.1} parent=0 // pred_region
    _
  $region21: #{faster_rcnn_forward.1} parent=0 // pred_fallthru
    _
  // Predicated region
  $region22: #{faster_rcnn_forward.1} parent=0 // pred_check
    _
  $region23: #{faster_rcnn_forward.1} parent=0 // pred_check_branch
    %31 = sbr.rel (0) target = $region25
  $region24: #{faster_rcnn_forward.1} parent=0 // pred_region
    _
  $region25: #{faster_rcnn_forward.1} parent=0 // pred_fallthru
    _
  // Predicated region
  $region26: #{faster_rcnn_forward.1} parent=0 // pred_check
    _
  $region27: #{faster_rcnn_forward.1} parent=0 // pred_check_branch
    %33 = sbr.rel (0) target = $region29
  $region28: #{faster_rcnn_forward.1} parent=0 // pred_region
    _
  $region29: #{faster_rcnn_forward.1} parent=0 // pred_fallthru
    _
  // Predicated region
  $region30: #{faster_rcnn_forward.1} parent=0 // pred_check
    _
  $region31: #{faster_rcnn_forward.1} parent=0 // pred_check_branch
    %35 = sbr.rel (0) target = $region33
  $region32: #{faster_rcnn_forward.1} parent=0 // pred_region
    _
  $region33: #{faster_rcnn_forward.1} parent=0 // pred_fallthru
    _
  // Predicated region
  $region34: #{faster_rcnn_forward.1} parent=0 // pred_check
    _
  $region35: #{faster_rcnn_forward.1} parent=0 // pred_check_branch
    %37 = sbr.rel (0) target = $region37
  $region36: #{faster_rcnn_forward.1} parent=0 // pred_region
    _
  $region37: #{faster_rcnn_forward.1} parent=0 // pred_fallthru
    _
  // Predicated region
  $region38: #{faster_rcnn_forward.1} parent=0 // pred_check
    _
  $region39: #{faster_rcnn_forward.1} parent=0 // pred_check_branch
    %39 = sbr.rel (0) target = $region41
  $region40: #{faster_rcnn_forward.1} parent=0 // pred_region
    _
  $region41: #{faster_rcnn_forward.1} parent=0 // pred_fallthru
    _
  // Predicated region
  $region42: #{faster_rcnn_forward.1} parent=0 // pred_check
    _
  $region43: #{faster_rcnn_forward.1} parent=0 // pred_check_branch
    %41 = sbr.rel (0) target = $region45
  $region44: #{faster_rcnn_forward.1} parent=0 // pred_region
    _
  $region45: #{faster_rcnn_forward.1} parent=0 // pred_fallthru
    _
  // Predicated region
  $region46: #{faster_rcnn_forward.1} parent=0 // pred_check
    _
  $region47: #{faster_rcnn_forward.1} parent=0 // pred_check_branch
    %43 = sbr.rel (0) target = $region49
  $region48: #{faster_rcnn_forward.1} parent=0 // pred_region
    _
  $region49: #{faster_rcnn_forward.1} parent=0 // pred_fallthru
    _
  // Predicated region
  $region50: #{faster_rcnn_forward.1} parent=0 // pred_check
    _
  $region51: #{faster_rcnn_forward.1} parent=0 // pred_check_branch
    %45 = sbr.rel (0) target = $region53
  $region52: #{faster_rcnn_forward.1} parent=0 // pred_region
    _
  $region53: #{faster_rcnn_forward.1} parent=0 // pred_fallthru
    _
  %v47 = vld [vmem:[%s0] sm:$0xff]
  %v48 = vld [vmem:[%s0 + $0x8] sm:$0xff]
  %v49 = vld [vmem:[%s0 + $0x10] sm:$0xff]
  %v50 = vld [vmem:[%s0 + $0x18] sm:$0xff]
  %v51 = vpack.c.bf16 %v49, %v47
  %v52 = vpack.c.bf16 %v50, %v48
  %v53 = vld [vmem:[%s1] sm:$0xff]
  %v54 = vld [vmem:[%s1 + $0x8] sm:$0xff]
  %v55 = vld [vmem:[%s1 + $0x10] sm:$0xff]
  %v56 = vld [vmem:[%s1 + $0x18] sm:$0xff]
  %v57 = vld [vmem:[%s1 + $0x20] sm:$0xff]
  %v58 = vld [vmem:[%s1 + $0x28] sm:$0xff]
  %v59 = vld [vmem:[%s1 + $0x30] sm:$0xff]
  %v60 = vld [vmem:[%s1 + $0x38] sm:$0xff]
  %v61 = vld [vmem:[%s1 + $0x40] sm:$0xff]
  %v62 = vld [vmem:[%s1 + $0x48] sm:$0xff]
  %v63 = vld [vmem:[%s1 + $0x50] sm:$0xff]
  %v64 = vld [vmem:[%s1 + $0x58] sm:$0xff]
  %v65 = vld [vmem:[%s1 + $0x60] sm:$0xff]
  %v66 = vld [vmem:[%s1 + $0x68] sm:$0xff]
  %v67 = vld [vmem:[%s1 + $0x70] sm:$0xff]
  %v68 = vld [vmem:[%s1 + $0x78] sm:$0xff]
  %v69 = vld [vmem:[%s1 + $0x80] sm:$0xff]
  %v70 = vld [vmem:[%s1 + $0x88] sm:$0xff]
  %v71 = vld [vmem:[%s1 + $0x90] sm:$0xff]
  %v72 = vld [vmem:[%s1 + $0x98] sm:$0xff]
  %v73 = vld [vmem:[%s1 + $0xa0] sm:$0xff]
  %v74 = vld [vmem:[%s1 + $0xa8] sm:$0xff]
  %v75 = vld [vmem:[%s1 + $0xb0] sm:$0xff]
  %v76 = vld [vmem:[%s1 + $0xb8] sm:$0xff]
  %v77 = vld [vmem:[%s1 + $0xc0] sm:$0xff]
  %v78 = vld [vmem:[%s1 + $0xc8] sm:$0xff]
  %v79 = vld [vmem:[%s1 + $0xd0] sm:$0xff]
  %v80 = vld [vmem:[%s2] sm:$0x3]
  %v82 = vlaneseq
  %v83 = vshrl.u32 %v82, 7
  %v84 = vsub.s32 0, %v83
  %v85 = vrot.slane %v80, %v84
  %v86 = vlaneseq
  %v87 = vshrl.u32 %v86, 7
  %v88 = vsub.s32 1, %v87
  %v89 = vrot.slane %v80, %v88
  %v119 = vunpack.c.l.b16 %v53
  %v120 = vunpack.c.h.b16 %v53
  %v121 = vunpack.c.l.b16 %v54
  %v122 = vunpack.c.h.b16 %v54
  %v123 = vunpack.c.l.b16 %v55
  %v124 = vunpack.c.h.b16 %v55
  %v125 = vunpack.c.l.b16 %v56
  %v126 = vunpack.c.h.b16 %v56
  %v127 = vunpack.c.l.b16 %v57
  %v128 = vunpack.c.h.b16 %v57
  %v129 = vunpack.c.l.b16 %v58
  %v130 = vunpack.c.h.b16 %v58
  %v131 = vunpack.c.l.b16 %v59
  %v132 = vunpack.c.h.b16 %v59
  %v133 = vunpack.c.l.b16 %v60
  %v134 = vunpack.c.h.b16 %v60
  %v135 = vunpack.c.l.b16 %v61
  %v136 = vunpack.c.h.b16 %v61
  %v137 = vunpack.c.l.b16 %v62
  %v138 = vunpack.c.h.b16 %v62
  %v139 = vunpack.c.l.b16 %v63
  %v140 = vunpack.c.h.b16 %v63
  %v141 = vunpack.c.l.b16 %v64
  %v142 = vunpack.c.h.b16 %v64
  %v143 = vunpack.c.l.b16 %v65
  %v144 = vunpack.c.h.b16 %v65
  %v145 = vunpack.c.l.b16 %v66
  %v146 = vunpack.c.h.b16 %v66
  %v147 = vunpack.c.l.b16 %v67
  %v148 = vunpack.c.h.b16 %v67
  %v149 = vunpack.c.l.b16 %v68
  %v150 = vunpack.c.h.b16 %v68
  %v151 = vunpack.c.l.b16 %v69
  %v152 = vunpack.c.h.b16 %v69
  %v153 = vunpack.c.l.b16 %v70
  %v154 = vunpack.c.h.b16 %v70
  %v155 = vunpack.c.l.b16 %v71
  %v156 = vunpack.c.h.b16 %v71
  %v157 = vunpack.c.l.b16 %v72
  %v158 = vunpack.c.h.b16 %v72
  %v159 = vunpack.c.l.b16 %v73
  %v160 = vunpack.c.h.b16 %v73
  %v161 = vunpack.c.l.b16 %v74
  %v162 = vunpack.c.h.b16 %v74
  %v163 = vunpack.c.l.b16 %v75
  %v164 = vunpack.c.h.b16 %v75
  %v165 = vunpack.c.l.b16 %v76
  %v166 = vunpack.c.h.b16 %v76
  %v167 = vunpack.c.l.b16 %v77
  %v168 = vunpack.c.h.b16 %v77
  %v169 = vunpack.c.l.b16 %v78
  %v170 = vunpack.c.h.b16 %v78
  %v171 = vunpack.c.l.b16 %v79
  %v172 = vunpack.c.h.b16 %v79
  %v173 = vpack.c.b16 %v121, %v119
  %v174 = vpack.c.b16 %v122, %v120
  %v175 = vpack.c.b16 %v125, %v123
  %v176 = vpack.c.b16 %v126, %v124
  %v177 = vpack.c.b16 %v129, %v127
  %v178 = vpack.c.b16 %v130, %v128
  %v179 = vpack.c.b16 %v133, %v131
  %v180 = vpack.c.b16 %v134, %v132
  %v181 = vpack.c.b16 %v137, %v135
  %v182 = vpack.c.b16 %v138, %v136
  %v183 = vpack.c.b16 %v141, %v139
  %v184 = vpack.c.b16 %v142, %v140
  %v185 = vpack.c.b16 %v145, %v143
  %v186 = vpack.c.b16 %v146, %v144
  %v187 = vpack.c.b16 %v149, %v147
  %v188 = vpack.c.b16 %v150, %v148
  %v189 = vpack.c.b16 %v153, %v151
  %v190 = vpack.c.b16 %v154, %v152
  %v191 = vpack.c.b16 %v157, %v155
  %v192 = vpack.c.b16 %v158, %v156
  %v193 = vpack.c.b16 %v161, %v159
  %v194 = vpack.c.b16 %v162, %v160
  %v195 = vpack.c.b16 %v165, %v163
  %v196 = vpack.c.b16 %v166, %v164
  %v197 = vpack.c.b16 %v169, %v167
  %v198 = vpack.c.b16 %v170, %v168
  %v199 = vpack.c.b16 %v171, %v171
  %v200 = vpack.c.b16 %v172, %v172
  %vm227 = vcmask 719872
  %v229 = vsel %vm227, %v52, 0
  %vm231 = vcmask 1043456
  %v233 = vsel %vm231, %v199, 0
  %v236 = vsel %vm231, %v200, 0
  %238 = vmatprep.subr.bf16.mxu0 %v174
  %239 = vmatpush1.bf16.msra.mxu0 %v173
  %240 = vmatprep.subr.bf16.mxu0 %v176
  %241 = vmatpush1.bf16.msra.mxu0 %v175
  %242 = vmatprep.subr.bf16.mxu0 %v178
  %243 = vmatpush1.bf16.msra.mxu0 %v177
  %244 = vmatprep.subr.bf16.mxu0 %v180
  %245 = vmatpush1.bf16.msra.mxu0 %v179
  %246 = vmatprep.subr.bf16.mxu0 %v182
  %247 = vmatpush1.bf16.msra.mxu0 %v181
  %248 = vmatprep.subr.bf16.mxu0 %v184
  %249 = vmatpush1.bf16.msra.mxu0 %v183
  %250 = vmatprep.subr.bf16.mxu0 %v186
  %251 = vmatpush1.bf16.msra.mxu0 %v185
  %252 = vmatprep.subr.bf16.mxu0 %v188
  %253 = vmatpush1.bf16.msra.mxu0 %v187
  %254 = vmatprep.subr.bf16.mxu0 %v190
  %255 = vmatpush1.bf16.msra.mxu0 %v189
  %256 = vmatprep.subr.bf16.mxu0 %v192
  %257 = vmatpush1.bf16.msra.mxu0 %v191
  %258 = vmatprep.subr.bf16.mxu0 %v194
  %259 = vmatpush1.bf16.msra.mxu0 %v193
  %260 = vmatprep.subr.bf16.mxu0 %v196
  %261 = vmatpush1.bf16.msra.mxu0 %v195
  %262 = vmatprep.subr.bf16.mxu0 %v198
  %263 = vmatpush1.bf16.msra.mxu0 %v197
  %264 = vmatprep.subr.bf16.mxu0 %v236
  %265 = vmatpush1.bf16.msra.mxu0 %v233
  %266 = vmatprep.subr.bf16.mxu0 0
  %267 = vmatpush1.bf16.msra.mxu0 0
  %268 = vmatprep.subr.bf16.mxu0 0
  %269 = vmatpush1.bf16.msra.mxu0 0
  %270 = vmatprep.mubr.bf16.mxu0 %v229
  %271 = vmatmul.mubr.bf16.gmra.mrb[0].mxu0 %v51
  %v272 = vpop.f32.mrb[0].mxu0
  %v273 = vadd.f32 %v85, %v272
  %v274 = vpop.f32.mrb[0].mxu0
  %v275 = vadd.f32 %v89, %v274
  %v276 = vpop.f32.mrb[0].mxu0
  %v277 = vadd.f32 %v85, %v276
  %v278 = vpop.f32.mrb[0].mxu0
  %v279 = vadd.f32 %v89, %v278
  %280 = vdwg.mxu0
  %v281 = vmax.f32 %v273, 0.0
  %v282 = vmax.f32 %v275, 0.0
  %v283 = vmax.f32 %v277, 0.0
  %v284 = vmax.f32 %v279, 0.0
  %v285 = vlaneseq
  %vm286 = vcmp.ge.s32.totalorder %v285, 0
  %vm287 = vcmp.lt.s32.totalorder %v285, 256
  %vm288 = vmand %vm286, %vm287
  %289 = vst.msk [vmem:[#allocation2] ss:$8 sm:$0x3] %vm288, 0.0
  %290 = vst.msk [vmem:[#allocation2] ss:$8 sm:$0x0] %vm288, 0.0
  %vm295 = vcmask 1040384
  %v296 = vrot.slane %v281, 7
  %v297 = vrot.slane %v282, 7
  %v298 = vrot.slane %v283, 7
  %v299 = vsel %vm295, %v296, %v298
  %v300 = vrot.slane %v284, 7
  %v301 = vsel %vm295, %v297, %v300
  %306 = vst [vmem:[#allocation2] sm:$0xfe] %v296
  %307 = vst [vmem:[#allocation2 + $0x8] sm:$0xfe] %v297
  %308 = vst [vmem:[#allocation2 + $0x30] sm:$0xff] %v299
  %309 = vst [vmem:[#allocation2 + $0x38] sm:$0xff] %v301
  %310 = vst [vmem:[#allocation2 + $0x10] sm:$0xff] %v281
  %311 = vst [vmem:[#allocation2 + $0x18] sm:$0xff] %v282
  %312 = vst [vmem:[#allocation2 + $0x40] sm:$0xff] %v283
  %313 = vst [vmem:[#allocation2 + $0x48] sm:$0xff] %v284
  %vm314 = vcmask 1046528
  %v315 = vrot.slane %v281, 1
  %v316 = vrot.slane %v283, 1
  %v317 = vsel %vm314, %v315, %v316
  %v318 = vrot.slane %v282, 1
  %v319 = vrot.slane %v284, 1
  %v320 = vsel %vm314, %v318, %v319
  %325 = vst [vmem:[#allocation2 + $0x20] sm:$0xff] %v317
  %326 = vst [vmem:[#allocation2 + $0x28] sm:$0xff] %v320
  %327 = vst [vmem:[#allocation2 + $0x50] sm:$0x7f] %v316
  %328 = vst [vmem:[#allocation2 + $0x58] sm:$0x7f] %v319
  %s329 = scalar_lea.vmem [#allocation2], 87
  %330 = vst.msk [vmem:[%s329] ss:$8 sm:$0x3] %vm288, 0.0
  %331 = vst.msk [vmem:[%s329] ss:$8 sm:$0x0] %vm288, 0.0
  %v332 = vld [vmem:[#allocation2] sm:$0xff]
  %v333 = vld [vmem:[#allocation2 + $0x8] sm:$0xff]
  %v334 = vld [vmem:[#allocation2 + $0x10] sm:$0xff]
  %v335 = vld [vmem:[#allocation2 + $0x18] sm:$0xff]
  %v336 = vld [vmem:[#allocation2 + $0x20] sm:$0xff]
  %v337 = vld [vmem:[#allocation2 + $0x28] sm:$0xff]
  %v338 = vld [vmem:[#allocation2 + $0x30] sm:$0xff]
  %v339 = vld [vmem:[#allocation2 + $0x38] sm:$0xff]
  %v340 = vld [vmem:[#allocation2 + $0x40] sm:$0xff]
  %v341 = vld [vmem:[#allocation2 + $0x48] sm:$0xff]
  %v342 = vld [vmem:[#allocation2 + $0x50] sm:$0xff]
  %v343 = vld [vmem:[#allocation2 + $0x58] sm:$0xff]
  %v344 = vpack.c.bf16 %v338, %v332
  %v345 = vpack.c.bf16 %v339, %v333
  %v346 = vpack.c.bf16 %v340, %v334
  %v347 = vpack.c.bf16 %v341, %v335
  %v348 = vpack.c.bf16 %v342, %v336
  %v349 = vpack.c.bf16 %v343, %v337
  %v350 = vld [vmem:[%s3] sm:$0xff]
  %v351 = vld [vmem:[%s3 + $0x8] sm:$0xff]
  %v352 = vld [vmem:[%s3 + $0x10] sm:$0xff]
  %v353 = vld [vmem:[%s3 + $0x18] sm:$0xff]
  %v354 = vld [vmem:[%s3 + $0x20] sm:$0xff]
  %v355 = vld [vmem:[%s3 + $0x28] sm:$0xff]
  %v356 = vld [vmem:[%s3 + $0x30] sm:$0xff]
  %v357 = vld [vmem:[%s3 + $0x38] sm:$0xff]
  %v358 = vld [vmem:[%s3 + $0x40] sm:$0xff]
  %v359 = vld [vmem:[%s3 + $0x48] sm:$0xff]
  %v360 = vld [vmem:[%s3 + $0x50] sm:$0xff]
  %v361 = vld [vmem:[%s3 + $0x58] sm:$0xff]
  %v362 = vld [vmem:[%s3 + $0x60] sm:$0xff]
  %v363 = vld [vmem:[%s3 + $0x68] sm:$0xff]
  %v364 = vld [vmem:[%s3 + $0x70] sm:$0xff]
  %v365 = vld [vmem:[%s3 + $0x78] sm:$0xff]
  %v366 = vld [vmem:[%s3 + $0x80] sm:$0xff]
  %v367 = vld [vmem:[%s3 + $0x88] sm:$0xff]
  %v368 = vld [vmem:[%s3 + $0x90] sm:$0xff]
  %v369 = vld [vmem:[%s3 + $0x98] sm:$0xff]
  %v370 = vld [vmem:[%s3 + $0xa0] sm:$0xff]
  %v371 = vld [vmem:[%s3 + $0xa8] sm:$0xff]
  %v372 = vld [vmem:[%s3 + $0xb0] sm:$0xff]
  %v373 = vld [vmem:[%s3 + $0xb8] sm:$0xff]
  %v374 = vld [vmem:[%s3 + $0xc0] sm:$0xff]
  %v375 = vld [vmem:[%s3 + $0xc8] sm:$0xff]
  %v376 = vld [vmem:[%s3 + $0xd0] sm:$0xff]
  %v377 = vld [vmem:[%s3 + $0xd8] sm:$0xff]
  %v378 = vld [vmem:[%s3 + $0xe0] sm:$0xff]
  %v379 = vld [vmem:[%s3 + $0xe8] sm:$0xff]
  %v380 = vld [vmem:[%s3 + $0xf0] sm:$0xff]
  %v381 = vld [vmem:[%s3 + $0xf8] sm:$0xff]
  %v382 = vld [vmem:[%s3 + $0x100] sm:$0xff]
  %v383 = vld [vmem:[%s3 + $0x108] sm:$0xff]
  %v384 = vld [vmem:[%s3 + $0x110] sm:$0xff]
  %v385 = vld [vmem:[%s3 + $0x118] sm:$0xff]
  %v386 = vld [vmem:[%s3 + $0x120] sm:$0xff]
  %v387 = vld [vmem:[%s3 + $0x128] sm:$0xff]
  %v388 = vld [vmem:[%s3 + $0x130] sm:$0xff]
  %v389 = vld [vmem:[%s3 + $0x138] sm:$0xff]
  %v390 = vld [vmem:[%s3 + $0x140] sm:$0xff]
  %v391 = vld [vmem:[%s3 + $0x148] sm:$0xff]
  %v392 = vld [vmem:[%s3 + $0x150] sm:$0xff]
  %v393 = vld [vmem:[%s3 + $0x158] sm:$0xff]
  %v394 = vld [vmem:[%s3 + $0x160] sm:$0xff]
  %v395 = vld [vmem:[%s3 + $0x168] sm:$0xff]
  %v396 = vld [vmem:[%s3 + $0x170] sm:$0xff]
  %v397 = vld [vmem:[%s3 + $0x178] sm:$0xff]
  %v398 = vld [vmem:[%s3 + $0x180] sm:$0xff]
  %v399 = vld [vmem:[%s3 + $0x188] sm:$0xff]
  %v400 = vld [vmem:[%s3 + $0x190] sm:$0xff]
  %v401 = vld [vmem:[%s3 + $0x198] sm:$0xff]
  %v402 = vld [vmem:[%s3 + $0x1a0] sm:$0xff]
  %v403 = vld [vmem:[%s3 + $0x1a8] sm:$0xff]
  %v404 = vld [vmem:[%s3 + $0x1b0] sm:$0xff]
  %v405 = vld [vmem:[%s3 + $0x1b8] sm:$0xff]
  %v406 = vld [vmem:[%s3 + $0x1c0] sm:$0xff]
  %v407 = vld [vmem:[%s3 + $0x1c8] sm:$0xff]
  %v408 = vld [vmem:[%s3 + $0x1d0] sm:$0xff]
  %v409 = vld [vmem:[%s3 + $0x1d8] sm:$0xff]
  %v410 = vld [vmem:[%s3 + $0x1e0] sm:$0xff]
  %v411 = vld [vmem:[%s3 + $0x1e8] sm:$0xff]
  %v412 = vld [vmem:[%s3 + $0x1f0] sm:$0xff]
  %v413 = vld [vmem:[%s3 + $0x1f8] sm:$0xff]
  %v414 = vld [vmem:[%s3 + $0x200] sm:$0xff]
  %v415 = vld [vmem:[%s3 + $0x208] sm:$0xff]
  %v416 = vld [vmem:[%s3 + $0x210] sm:$0xff]
  %v417 = vld [vmem:[%s3 + $0x218] sm:$0xff]
  %v418 = vld [vmem:[%s3 + $0x220] sm:$0xff]
  %v419 = vld [vmem:[%s3 + $0x228] sm:$0xff]
  %v420 = vld [vmem:[%s3 + $0x230] sm:$0xff]
  %v421 = vld [vmem:[%s3 + $0x238] sm:$0xff]
  %v422 = vld [vmem:[%s3 + $0x240] sm:$0xff]
  %v423 = vld [vmem:[%s3 + $0x248] sm:$0xff]
  %v424 = vld [vmem:[%s3 + $0x250] sm:$0xff]
  %v425 = vld [vmem:[%s3 + $0x258] sm:$0xff]
  %v426 = vld [vmem:[%s3 + $0x260] sm:$0xff]
  %v427 = vld [vmem:[%s3 + $0x268] sm:$0xff]
  %v428 = vld [vmem:[%s3 + $0x270] sm:$0xff]
  %v429 = vld [vmem:[%s3 + $0x278] sm:$0xff]
  %v430 = vld [vmem:[%s3 + $0x280] sm:$0xff]
  %v431 = vld [vmem:[%s3 + $0x288] sm:$0xff]
  %v432 = vld [vmem:[%s3 + $0x290] sm:$0xff]
  %v433 = vld [vmem:[%s3 + $0x298] sm:$0xff]
  %v434 = vld [vmem:[%s3 + $0x2a0] sm:$0xff]
  %v435 = vld [vmem:[%s3 + $0x2a8] sm:$0xff]
  %v436 = vld [vmem:[%s3 + $0x2b0] sm:$0xff]
  %v437 = vld [vmem:[%s3 + $0x2b8] sm:$0xff]
  %v438 = vld [vmem:[%s3 + $0x2c0] sm:$0xff]
  %v439 = vld [vmem:[%s3 + $0x2c8] sm:$0xff]
  %v440 = vld [vmem:[%s3 + $0x2d0] sm:$0xff]
  %v441 = vld [vmem:[%s3 + $0x2d8] sm:$0xff]
  %v442 = vld [vmem:[%s3 + $0x2e0] sm:$0xff]
  %v443 = vld [vmem:[%s3 + $0x2e8] sm:$0xff]
  %v444 = vld [vmem:[%s3 + $0x2f0] sm:$0xff]
  %v445 = vld [vmem:[%s3 + $0x2f8] sm:$0xff]
  %v446 = vld [vmem:[%s4] sm:$0x3]
  %v448 = vlaneseq
  %v449 = vshrl.u32 %v448, 7
  %v450 = vsub.s32 0, %v449
  %v451 = vrot.slane %v446, %v450
  %v452 = vlaneseq
  %v453 = vshrl.u32 %v452, 7
  %v454 = vsub.s32 1, %v453
  %v455 = vrot.slane %v446, %v454
  %v554 = vunpack.c.l.b16 %v350
  %v555 = vunpack.c.h.b16 %v350
  %v556 = vunpack.c.l.b16 %v351
  %v557 = vunpack.c.h.b16 %v351
  %v558 = vunpack.c.l.b16 %v352
  %v559 = vunpack.c.h.b16 %v352
  %v560 = vunpack.c.l.b16 %v353
  %v561 = vunpack.c.h.b16 %v353
  %v562 = vunpack.c.l.b16 %v354
  %v563 = vunpack.c.h.b16 %v354
  %v564 = vunpack.c.l.b16 %v355
  %v565 = vunpack.c.h.b16 %v355
  %v566 = vunpack.c.l.b16 %v356
  %v567 = vunpack.c.h.b16 %v356
  %v568 = vunpack.c.l.b16 %v357
  %v569 = vunpack.c.h.b16 %v357
  %v570 = vunpack.c.l.b16 %v358
  %v571 = vunpack.c.h.b16 %v358
  %v572 = vunpack.c.l.b16 %v359
  %v573 = vunpack.c.h.b16 %v359
  %v574 = vunpack.c.l.b16 %v360
  %v575 = vunpack.c.h.b16 %v360
  %v576 = vunpack.c.l.b16 %v361
  %v577 = vunpack.c.h.b16 %v361
  %v578 = vunpack.c.l.b16 %v362
  %v579 = vunpack.c.h.b16 %v362
  %v580 = vunpack.c.l.b16 %v363
  %v581 = vunpack.c.h.b16 %v363
  %v582 = vunpack.c.l.b16 %v364
  %v583 = vunpack.c.h.b16 %v364
  %v584 = vunpack.c.l.b16 %v365
  %v585 = vunpack.c.h.b16 %v365
  %v586 = vunpack.c.l.b16 %v366
  %v587 = vunpack.c.h.b16 %v366
  %v588 = vunpack.c.l.b16 %v367
  %v589 = vunpack.c.h.b16 %v367
  %v590 = vunpack.c.l.b16 %v368
  %v591 = vunpack.c.h.b16 %v368
  %v592 = vunpack.c.l.b16 %v369
  %v593 = vunpack.c.h.b16 %v369
  %v594 = vunpack.c.l.b16 %v370
  %v595 = vunpack.c.h.b16 %v370
  %v596 = vunpack.c.l.b16 %v371
  %v597 = vunpack.c.h.b16 %v371
  %v598 = vunpack.c.l.b16 %v372
  %v599 = vunpack.c.h.b16 %v372
  %v600 = vunpack.c.l.b16 %v373
  %v601 = vunpack.c.h.b16 %v373
  %v602 = vunpack.c.l.b16 %v374
  %v603 = vunpack.c.h.b16 %v374
  %v604 = vunpack.c.l.b16 %v375
  %v605 = vunpack.c.h.b16 %v375
  %v606 = vunpack.c.l.b16 %v376
  %v607 = vunpack.c.h.b16 %v376
  %v608 = vunpack.c.l.b16 %v377
  %v609 = vunpack.c.h.b16 %v377
  %v610 = vunpack.c.l.b16 %v378
  %v611 = vunpack.c.h.b16 %v378
  %v612 = vunpack.c.l.b16 %v379
  %v613 = vunpack.c.h.b16 %v379
  %v614 = vunpack.c.l.b16 %v380
  %v615 = vunpack.c.h.b16 %v380
  %v616 = vunpack.c.l.b16 %v381
  %v617 = vunpack.c.h.b16 %v381
  %v618 = vunpack.c.l.b16 %v382
  %v619 = vunpack.c.h.b16 %v382
  %v620 = vunpack.c.l.b16 %v383
  %v621 = vunpack.c.h.b16 %v383
  %v622 = vunpack.c.l.b16 %v384
  %v623 = vunpack.c.h.b16 %v384
  %v624 = vunpack.c.l.b16 %v385
  %v625 = vunpack.c.h.b16 %v385
  %v626 = vunpack.c.l.b16 %v386
  %v627 = vunpack.c.h.b16 %v386
  %v628 = vunpack.c.l.b16 %v387
  %v629 = vunpack.c.h.b16 %v387
  %v630 = vunpack.c.l.b16 %v388
  %v631 = vunpack.c.h.b16 %v388
  %v632 = vunpack.c.l.b16 %v389
  %v633 = vunpack.c.h.b16 %v389
  %v634 = vunpack.c.l.b16 %v390
  %v635 = vunpack.c.h.b16 %v390
  %v636 = vunpack.c.l.b16 %v391
  %v637 = vunpack.c.h.b16 %v391
  %v638 = vunpack.c.l.b16 %v392
  %v639 = vunpack.c.h.b16 %v392
  %v640 = vunpack.c.l.b16 %v393
  %v641 = vunpack.c.h.b16 %v393
  %v642 = vunpack.c.l.b16 %v394
  %v643 = vunpack.c.h.b16 %v394
  %v644 = vunpack.c.l.b16 %v395
  %v645 = vunpack.c.h.b16 %v395
  %v646 = vunpack.c.l.b16 %v396
  %v647 = vunpack.c.h.b16 %v396
  %v648 = vunpack.c.l.b16 %v397
  %v649 = vunpack.c.h.b16 %v397
  %v650 = vunpack.c.l.b16 %v398
  %v651 = vunpack.c.h.b16 %v398
  %v652 = vunpack.c.l.b16 %v399
  %v653 = vunpack.c.h.b16 %v399
  %v654 = vunpack.c.l.b16 %v400
  %v655 = vunpack.c.h.b16 %v400
  %v656 = vunpack.c.l.b16 %v401
  %v657 = vunpack.c.h.b16 %v401
  %v658 = vunpack.c.l.b16 %v402
  %v659 = vunpack.c.h.b16 %v402
  %v660 = vunpack.c.l.b16 %v403
  %v661 = vunpack.c.h.b16 %v403
  %v662 = vunpack.c.l.b16 %v404
  %v663 = vunpack.c.h.b16 %v404
  %v664 = vunpack.c.l.b16 %v405
  %v665 = vunpack.c.h.b16 %v405
  %v666 = vunpack.c.l.b16 %v406
  %v667 = vunpack.c.h.b16 %v406
  %v668 = vunpack.c.l.b16 %v407
  %v669 = vunpack.c.h.b16 %v407
  %v670 = vunpack.c.l.b16 %v408
  %v671 = vunpack.c.h.b16 %v408
  %v672 = vunpack.c.l.b16 %v409
  %v673 = vunpack.c.h.b16 %v409
  %v674 = vunpack.c.l.b16 %v410
  %v675 = vunpack.c.h.b16 %v410
  %v676 = vunpack.c.l.b16 %v411
  %v677 = vunpack.c.h.b16 %v411
  %v678 = vunpack.c.l.b16 %v412
  %v679 = vunpack.c.h.b16 %v412
  %v680 = vunpack.c.l.b16 %v413
  %v681 = vunpack.c.h.b16 %v413
  %v682 = vunpack.c.l.b16 %v414
  %v683 = vunpack.c.h.b16 %v414
  %v684 = vunpack.c.l.b16 %v415
  %v685 = vunpack.c.h.b16 %v415
  %v686 = vunpack.c.l.b16 %v416
  %v687 = vunpack.c.h.b16 %v416
  %v688 = vunpack.c.l.b16 %v417
  %v689 = vunpack.c.h.b16 %v417
  %v690 = vunpack.c.l.b16 %v418
  %v691 = vunpack.c.h.b16 %v418
  %v692 = vunpack.c.l.b16 %v419
  %v693 = vunpack.c.h.b16 %v419
  %v694 = vunpack.c.l.b16 %v420
  %v695 = vunpack.c.h.b16 %v420
  %v696 = vunpack.c.l.b16 %v421
  %v697 = vunpack.c.h.b16 %v421
  %v698 = vunpack.c.l.b16 %v422
  %v699 = vunpack.c.h.b16 %v422
  %v700 = vunpack.c.l.b16 %v423
  %v701 = vunpack.c.h.b16 %v423
  %v702 = vunpack.c.l.b16 %v424
  %v703 = vunpack.c.h.b16 %v424
  %v704 = vunpack.c.l.b16 %v425
  %v705 = vunpack.c.h.b16 %v425
  %v706 = vunpack.c.l.b16 %v426
  %v707 = vunpack.c.h.b16 %v426
  %v708 = vunpack.c.l.b16 %v427
  %v709 = vunpack.c.h.b16 %v427
  %v710 = vunpack.c.l.b16 %v428
  %v711 = vunpack.c.h.b16 %v428
  %v712 = vunpack.c.l.b16 %v429
  %v713 = vunpack.c.h.b16 %v429
  %v714 = vunpack.c.l.b16 %v430
  %v715 = vunpack.c.h.b16 %v430
  %v716 = vunpack.c.l.b16 %v431
  %v717 = vunpack.c.h.b16 %v431
  %v718 = vunpack.c.l.b16 %v432
  %v719 = vunpack.c.h.b16 %v432
  %v720 = vunpack.c.l.b16 %v433
  %v721 = vunpack.c.h.b16 %v433
  %v722 = vunpack.c.l.b16 %v434
  %v723 = vunpack.c.h.b16 %v434
  %v724 = vunpack.c.l.b16 %v435
  %v725 = vunpack.c.h.b16 %v435
  %v726 = vunpack.c.l.b16 %v436
  %v727 = vunpack.c.h.b16 %v436
  %v728 = vunpack.c.l.b16 %v437
  %v729 = vunpack.c.h.b16 %v437
  %v730 = vunpack.c.l.b16 %v438
  %v731 = vunpack.c.h.b16 %v438
  %v732 = vunpack.c.l.b16 %v439
  %v733 = vunpack.c.h.b16 %v439
  %v734 = vunpack.c.l.b16 %v440
  %v735 = vunpack.c.h.b16 %v440
  %v736 = vunpack.c.l.b16 %v441
  %v737 = vunpack.c.h.b16 %v441
  %v738 = vunpack.c.l.b16 %v442
  %v739 = vunpack.c.h.b16 %v442
  %v740 = vunpack.c.l.b16 %v443
  %v741 = vunpack.c.h.b16 %v443
  %v742 = vunpack.c.l.b16 %v444
  %v743 = vunpack.c.h.b16 %v444
  %v744 = vunpack.c.l.b16 %v445
  %v745 = vunpack.c.h.b16 %v445
  %v746 = vpack.c.b16 %v556, %v554
  %v747 = vpack.c.b16 %v557, %v555
  %v748 = vpack.c.b16 %v560, %v558
  %v749 = vpack.c.b16 %v561, %v559
  %v750 = vpack.c.b16 %v564, %v562
  %v751 = vpack.c.b16 %v565, %v563
  %v752 = vpack.c.b16 %v568, %v566
  %v753 = vpack.c.b16 %v569, %v567
  %v754 = vpack.c.b16 %v572, %v570
  %v755 = vpack.c.b16 %v573, %v571
  %v756 = vpack.c.b16 %v576, %v574
  %v757 = vpack.c.b16 %v577, %v575
  %v758 = vpack.c.b16 %v580, %v578
  %v759 = vpack.c.b16 %v581, %v579
  %v760 = vpack.c.b16 %v584, %v582
  %v761 = vpack.c.b16 %v585, %v583
  %v762 = vpack.c.b16 %v588, %v586
  %v763 = vpack.c.b16 %v589, %v587
  %v764 = vpack.c.b16 %v592, %v590
  %v765 = vpack.c.b16 %v593, %v591
  %v766 = vpack.c.b16 %v596, %v594
  %v767 = vpack.c.b16 %v597, %v595
  %v768 = vpack.c.b16 %v600, %v598
  %v769 = vpack.c.b16 %v601, %v599
  %v770 = vpack.c.b16 %v604, %v602
  %v771 = vpack.c.b16 %v605, %v603
  %v772 = vpack.c.b16 %v608, %v606
  %v773 = vpack.c.b16 %v609, %v607
  %v774 = vpack.c.b16 %v612, %v610
  %v775 = vpack.c.b16 %v613, %v611
  %v776 = vpack.c.b16 %v616, %v614
  %v777 = vpack.c.b16 %v617, %v615
  %v778 = vpack.c.b16 %v620, %v618
  %v779 = vpack.c.b16 %v621, %v619
  %v780 = vpack.c.b16 %v624, %v622
  %v781 = vpack.c.b16 %v625, %v623
  %v782 = vpack.c.b16 %v628, %v626
  %v783 = vpack.c.b16 %v629, %v627
  %v784 = vpack.c.b16 %v632, %v630
  %v785 = vpack.c.b16 %v633, %v631
  %v786 = vpack.c.b16 %v636, %v634
  %v787 = vpack.c.b16 %v637, %v635
  %v788 = vpack.c.b16 %v640, %v638
  %v789 = vpack.c.b16 %v641, %v639
  %v790 = vpack.c.b16 %v644, %v642
  %v791 = vpack.c.b16 %v645, %v643
  %v792 = vpack.c.b16 %v648, %v646
  %v793 = vpack.c.b16 %v649, %v647
  %v794 = vpack.c.b16 %v652, %v650
  %v795 = vpack.c.b16 %v653, %v651
  %v796 = vpack.c.b16 %v656, %v654
  %v797 = vpack.c.b16 %v657, %v655
  %v798 = vpack.c.b16 %v660, %v658
  %v799 = vpack.c.b16 %v661, %v659
  %v800 = vpack.c.b16 %v664, %v662
  %v801 = vpack.c.b16 %v665, %v663
  %v802 = vpack.c.b16 %v668, %v666
  %v803 = vpack.c.b16 %v669, %v667
  %v804 = vpack.c.b16 %v672, %v670
  %v805 = vpack.c.b16 %v673, %v671
  %v806 = vpack.c.b16 %v676, %v674
  %v807 = vpack.c.b16 %v677, %v675
  %v808 = vpack.c.b16 %v680, %v678
  %v809 = vpack.c.b16 %v681, %v679
  %v810 = vpack.c.b16 %v684, %v682
  %v811 = vpack.c.b16 %v685, %v683
  %v812 = vpack.c.b16 %v688, %v686
  %v813 = vpack.c.b16 %v689, %v687
  %v814 = vpack.c.b16 %v692, %v690
  %v815 = vpack.c.b16 %v693, %v691
  %v816 = vpack.c.b16 %v696, %v694
  %v817 = vpack.c.b16 %v697, %v695
  %v818 = vpack.c.b16 %v700, %v698
  %v819 = vpack.c.b16 %v701, %v699
  %v820 = vpack.c.b16 %v704, %v702
  %v821 = vpack.c.b16 %v705, %v703
  %v822 = vpack.c.b16 %v708, %v706
  %v823 = vpack.c.b16 %v709, %v707
  %v824 = vpack.c.b16 %v712, %v710
  %v825 = vpack.c.b16 %v713, %v711
  %v826 = vpack.c.b16 %v716, %v714
  %v827 = vpack.c.b16 %v717, %v715
  %v828 = vpack.c.b16 %v720, %v718
  %v829 = vpack.c.b16 %v721, %v719
  %v830 = vpack.c.b16 %v724, %v722
  %v831 = vpack.c.b16 %v725, %v723
  %v832 = vpack.c.b16 %v728, %v726
  %v833 = vpack.c.b16 %v729, %v727
  %v834 = vpack.c.b16 %v732, %v730
  %v835 = vpack.c.b16 %v733, %v731
  %v836 = vpack.c.b16 %v736, %v734
  %v837 = vpack.c.b16 %v737, %v735
  %v838 = vpack.c.b16 %v740, %v738
  %v839 = vpack.c.b16 %v741, %v739
  %v840 = vpack.c.b16 %v744, %v742
  %v841 = vpack.c.b16 %v745, %v743
  %938 = vmatprep.subr.bf16.mxu0 %v747
  %939 = vmatpush1.bf16.msra.mxu0 %v746
  %940 = vmatprep.subr.bf16.mxu0 %v749
  %941 = vmatpush1.bf16.msra.mxu0 %v748
  %942 = vmatprep.subr.bf16.mxu0 %v751
  %943 = vmatpush1.bf16.msra.mxu0 %v750
  %944 = vmatprep.subr.bf16.mxu0 %v753
  %945 = vmatpush1.bf16.msra.mxu0 %v752
  %946 = vmatprep.subr.bf16.mxu0 %v755
  %947 = vmatpush1.bf16.msra.mxu0 %v754
  %948 = vmatprep.subr.bf16.mxu0 %v757
  %949 = vmatpush1.bf16.msra.mxu0 %v756
  %950 = vmatprep.subr.bf16.mxu0 %v759
  %951 = vmatpush1.bf16.msra.mxu0 %v758
  %952 = vmatprep.subr.bf16.mxu0 %v761
  %953 = vmatpush1.bf16.msra.mxu0 %v760
  %954 = vmatprep.subr.bf16.mxu0 %v763
  %955 = vmatpush1.bf16.msra.mxu0 %v762
  %956 = vmatprep.subr.bf16.mxu0 %v765
  %957 = vmatpush1.bf16.msra.mxu0 %v764
  %958 = vmatprep.subr.bf16.mxu0 %v767
  %959 = vmatpush1.bf16.msra.mxu0 %v766
  %960 = vmatprep.subr.bf16.mxu0 %v769
  %961 = vmatpush1.bf16.msra.mxu0 %v768
  %962 = vmatprep.subr.bf16.mxu0 %v771
  %963 = vmatpush1.bf16.msra.mxu0 %v770
  %964 = vmatprep.subr.bf16.mxu0 %v773
  %965 = vmatpush1.bf16.msra.mxu0 %v772
  %966 = vmatprep.subr.bf16.mxu0 %v775
  %967 = vmatpush1.bf16.msra.mxu0 %v774
  %968 = vmatprep.subr.bf16.mxu0 %v777
  %969 = vmatpush1.bf16.msra.mxu0 %v776
  %970 = vmatprep.mubr.bf16.mxu0 %v345
  %971 = vmatmul.mubr.bf16.gmra.mrb[0].mxu0 %v344
  %v972 = vpop.f32.mrb[0].mxu0
  %v973 = vadd.f32 %v451, %v972
  %v974 = vpop.f32.mrb[0].mxu0
  %v975 = vadd.f32 %v455, %v974
  %v976 = vpop.f32.mrb[0].mxu0
  %v977 = vadd.f32 %v451, %v976
  %v978 = vpop.f32.mrb[0].mxu0
  %v979 = vadd.f32 %v455, %v978
  %980 = vdwg.mxu0
  %981 = vmatprep.subr.bf16.mxu0 %v779
  %982 = vmatpush1.bf16.msra.mxu0 %v778
  %983 = vmatprep.subr.bf16.mxu0 %v781
  %984 = vmatpush1.bf16.msra.mxu0 %v780
  %985 = vmatprep.subr.bf16.mxu0 %v783
  %986 = vmatpush1.bf16.msra.mxu0 %v782
  %987 = vmatprep.subr.bf16.mxu0 %v785
  %988 = vmatpush1.bf16.msra.mxu0 %v784
  %989 = vmatprep.subr.bf16.mxu0 %v787
  %990 = vmatpush1.bf16.msra.mxu0 %v786
  %991 = vmatprep.subr.bf16.mxu0 %v789
  %992 = vmatpush1.bf16.msra.mxu0 %v788
  %993 = vmatprep.subr.bf16.mxu0 %v791
  %994 = vmatpush1.bf16.msra.mxu0 %v790
  %995 = vmatprep.subr.bf16.mxu0 %v793
  %996 = vmatpush1.bf16.msra.mxu0 %v792
  %997 = vmatprep.subr.bf16.mxu0 %v795
  %998 = vmatpush1.bf16.msra.mxu0 %v794
  %999 = vmatprep.subr.bf16.mxu0 %v797
  %1000 = vmatpush1.bf16.msra.mxu0 %v796
  %1001 = vmatprep.subr.bf16.mxu0 %v799
  %1002 = vmatpush1.bf16.msra.mxu0 %v798
  %1003 = vmatprep.subr.bf16.mxu0 %v801
  %1004 = vmatpush1.bf16.msra.mxu0 %v800
  %1005 = vmatprep.subr.bf16.mxu0 %v803
  %1006 = vmatpush1.bf16.msra.mxu0 %v802
  %1007 = vmatprep.subr.bf16.mxu0 %v805
  %1008 = vmatpush1.bf16.msra.mxu0 %v804
  %1009 = vmatprep.subr.bf16.mxu0 %v807
  %1010 = vmatpush1.bf16.msra.mxu0 %v806
  %1011 = vmatprep.subr.bf16.mxu0 %v809
  %1012 = vmatpush1.bf16.msra.mxu0 %v808
  %1013 = vmatprep.mubr.bf16.mxu0 %v347
  %1014 = vmatmul.mubr.bf16.gmra.mrb[0].mxu0 %v346
  %v1015 = vpop.f32.mrb[0].mxu0
  %v1016 = vadd.f32 %v973, %v1015
  %v1017 = vpop.f32.mrb[0].mxu0
  %v1018 = vadd.f32 %v975, %v1017
  %v1019 = vpop.f32.mrb[0].mxu0
  %v1020 = vadd.f32 %v977, %v1019
  %v1021 = vpop.f32.mrb[0].mxu0
  %v1022 = vadd.f32 %v979, %v1021
  %1023 = vdwg.mxu0
  %1024 = vmatprep.subr.bf16.mxu0 %v811
  %1025 = vmatpush1.bf16.msra.mxu0 %v810
  %1026 = vmatprep.subr.bf16.mxu0 %v813
  %1027 = vmatpush1.bf16.msra.mxu0 %v812
  %1028 = vmatprep.subr.bf16.mxu0 %v815
  %1029 = vmatpush1.bf16.msra.mxu0 %v814
  %1030 = vmatprep.subr.bf16.mxu0 %v817
  %1031 = vmatpush1.bf16.msra.mxu0 %v816
  %1032 = vmatprep.subr.bf16.mxu0 %v819
  %1033 = vmatpush1.bf16.msra.mxu0 %v818
  %1034 = vmatprep.subr.bf16.mxu0 %v821
  %1035 = vmatpush1.bf16.msra.mxu0 %v820
  %1036 = vmatprep.subr.bf16.mxu0 %v823
  %1037 = vmatpush1.bf16.msra.mxu0 %v822
  %1038 = vmatprep.subr.bf16.mxu0 %v825
  %1039 = vmatpush1.bf16.msra.mxu0 %v824
  %1040 = vmatprep.subr.bf16.mxu0 %v827
  %1041 = vmatpush1.bf16.msra.mxu0 %v826
  %1042 = vmatprep.subr.bf16.mxu0 %v829
  %1043 = vmatpush1.bf16.msra.mxu0 %v828
  %1044 = vmatprep.subr.bf16.mxu0 %v831
  %1045 = vmatpush1.bf16.msra.mxu0 %v830
  %1046 = vmatprep.subr.bf16.mxu0 %v833
  %1047 = vmatpush1.bf16.msra.mxu0 %v832
  %1048 = vmatprep.subr.bf16.mxu0 %v835
  %1049 = vmatpush1.bf16.msra.mxu0 %v834
  %1050 = vmatprep.subr.bf16.mxu0 %v837
  %1051 = vmatpush1.bf16.msra.mxu0 %v836
  %1052 = vmatprep.subr.bf16.mxu0 %v839
  %1053 = vmatpush1.bf16.msra.mxu0 %v838
  %1054 = vmatprep.subr.bf16.mxu0 %v841
  %1055 = vmatpush1.bf16.msra.mxu0 %v840
  %1056 = vmatprep.mubr.bf16.mxu0 %v349
  %1057 = vmatmul.mubr.bf16.gmra.mrb[0].mxu0 %v348
  %v1058 = vpop.f32.mrb[0].mxu0
  %v1059 = vadd.f32 %v1016, %v1058
  %v1060 = vpop.f32.mrb[0].mxu0
  %v1061 = vadd.f32 %v1018, %v1060
  %v1062 = vpop.f32.mrb[0].mxu0
  %v1063 = vadd.f32 %v1020, %v1062
  %v1064 = vpop.f32.mrb[0].mxu0
  %v1065 = vadd.f32 %v1022, %v1064
  %1066 = vdwg.mxu0
  %v1067 = vmax.f32 %v1059, 0.0
  %v1068 = vmax.f32 %v1061, 0.0
  %v1069 = vmax.f32 %v1063, 0.0
  %v1070 = vmax.f32 %v1065, 0.0
  %v1071 = vpack.c.bf16 %v1069, %v1067
  %v1072 = vpack.c.bf16 %v1070, %v1068
  %v1073 = vld [vmem:[%s5] sm:$0xff]
  %v1074 = vld [vmem:[%s5 + $0x8] sm:$0xf]
  %v1075 = vld [vmem:[%s5 + $0xc] sm:$0xff]
  %v1076 = vld [vmem:[%s5 + $0x14] sm:$0xf]
  %v1077 = vld [vmem:[%s5 + $0x18] sm:$0xff]
  %v1078 = vld [vmem:[%s5 + $0x20] sm:$0xf]
  %v1079 = vld [vmem:[%s5 + $0x24] sm:$0xff]
  %v1080 = vld [vmem:[%s5 + $0x2c] sm:$0xf]
  %v1081 = vld [vmem:[%s5 + $0x30] sm:$0xff]
  %v1082 = vld [vmem:[%s5 + $0x38] sm:$0xf]
  %v1083 = vld [vmem:[%s5 + $0x3c] sm:$0xff]
  %v1084 = vld [vmem:[%s5 + $0x44] sm:$0xf]
  %v1085 = vld [vmem:[%s5 + $0x48] sm:$0xff]
  %v1086 = vld [vmem:[%s5 + $0x50] sm:$0xf]
  %v1087 = vld [vmem:[%s5 + $0x54] sm:$0xff]
  %v1088 = vld [vmem:[%s5 + $0x5c] sm:$0xf]
  %v1089 = vld [vmem:[%s5 + $0x60] sm:$0xff]
  %v1090 = vld [vmem:[%s5 + $0x68] sm:$0xf]
  %v1091 = vld [vmem:[%s5 + $0x6c] sm:$0xff]
  %v1092 = vld [vmem:[%s5 + $0x74] sm:$0xf]
  %v1093 = vld [vmem:[%s5 + $0x78] sm:$0xff]
  %v1094 = vld [vmem:[%s5 + $0x80] sm:$0xf]
  %v1095 = vld [vmem:[%s5 + $0x84] sm:$0xff]
  %v1096 = vld [vmem:[%s5 + $0x8c] sm:$0xf]
  %v1097 = vld [vmem:[%s5 + $0x90] sm:$0xff]
  %v1098 = vld [vmem:[%s5 + $0x98] sm:$0xf]
  %v1099 = vld [vmem:[%s5 + $0x9c] sm:$0xff]
  %v1100 = vld [vmem:[%s5 + $0xa4] sm:$0xf]
  %v1101 = vld [vmem:[%s5 + $0xa8] sm:$0xff]
  %v1102 = vld [vmem:[%s5 + $0xb0] sm:$0xf]
  %v1103 = vld [vmem:[%s5 + $0xb4] sm:$0xff]
  %v1104 = vld [vmem:[%s5 + $0xbc] sm:$0xf]
  %v1105 = vld [vmem:[%s5 + $0xc0] sm:$0xff]
  %v1106 = vld [vmem:[%s5 + $0xc8] sm:$0xf]
  %v1107 = vld [vmem:[%s5 + $0xcc] sm:$0xff]
  %v1108 = vld [vmem:[%s5 + $0xd4] sm:$0xf]
  %v1109 = vld [vmem:[%s5 + $0xd8] sm:$0xff]
  %v1110 = vld [vmem:[%s5 + $0xe0] sm:$0xf]
  %v1111 = vld [vmem:[%s5 + $0xe4] sm:$0xff]
  %v1112 = vld [vmem:[%s5 + $0xec] sm:$0xf]
  %v1113 = vld [vmem:[%s5 + $0xf0] sm:$0xff]
  %v1114 = vld [vmem:[%s5 + $0xf8] sm:$0xf]
  %v1115 = vld [vmem:[%s5 + $0xfc] sm:$0xff]
  %v1116 = vld [vmem:[%s5 + $0x104] sm:$0xf]
  %v1117 = vld [vmem:[%s5 + $0x108] sm:$0xff]
  %v1118 = vld [vmem:[%s5 + $0x110] sm:$0xf]
  %v1119 = vld [vmem:[%s5 + $0x114] sm:$0xff]
  %v1120 = vld [vmem:[%s5 + $0x11c] sm:$0xf]
  %v1121 = vld [vmem:[%s5 + $0x120] sm:$0xff]
  %v1122 = vld [vmem:[%s5 + $0x128] sm:$0xf]
  %v1123 = vld [vmem:[%s5 + $0x12c] sm:$0xff]
  %v1124 = vld [vmem:[%s5 + $0x134] sm:$0xf]
  %v1125 = vld [vmem:[%s5 + $0x138] sm:$0xff]
  %v1126 = vld [vmem:[%s5 + $0x140] sm:$0xf]
  %v1127 = vld [vmem:[%s5 + $0x144] sm:$0xff]
  %v1128 = vld [vmem:[%s5 + $0x14c] sm:$0xf]
  %v1129 = vld [vmem:[%s5 + $0x150] sm:$0xff]
  %v1130 = vld [vmem:[%s5 + $0x158] sm:$0xf]
  %v1131 = vld [vmem:[%s5 + $0x15c] sm:$0xff]
  %v1132 = vld [vmem:[%s5 + $0x164] sm:$0xf]
  %v1133 = vld [vmem:[%s5 + $0x168] sm:$0xff]
  %v1134 = vld [vmem:[%s5 + $0x170] sm:$0xf]
  %v1135 = vld [vmem:[%s5 + $0x174] sm:$0xff]
  %v1136 = vld [vmem:[%s5 + $0x17c] sm:$0xf]
  %v1137 = vld [vmem:[%s6] sm:$0x7]
  %v1139 = vlaneseq
  %v1140 = vshrl.u32 %v1139, 7
  %v1141 = vsub.s32 0, %v1140
  %v1142 = vrot.slane %v1137, %v1141
  %v1143 = vlaneseq
  %v1144 = vshrl.u32 %v1143, 7
  %v1145 = vsub.s32 1, %v1144
  %v1146 = vrot.slane %v1137, %v1145
  %v1147 = vlaneseq
  %v1148 = vshrl.u32 %v1147, 7
  %v1149 = vsub.s32 2, %v1148
  %v1150 = vrot.slane %v1137, %v1149
  %v1218 = vunpack.c.l.b16 %v1073
  %v1219 = vunpack.c.h.b16 %v1073
  %v1220 = vunpack.c.l.b16 %v1074
  %v1221 = vunpack.c.l.b16 %v1075
  %v1222 = vunpack.c.h.b16 %v1075
  %v1223 = vunpack.c.l.b16 %v1076
  %v1224 = vunpack.c.l.b16 %v1077
  %v1225 = vunpack.c.h.b16 %v1077
  %v1226 = vunpack.c.l.b16 %v1078
  %v1227 = vunpack.c.l.b16 %v1079
  %v1228 = vunpack.c.h.b16 %v1079
  %v1229 = vunpack.c.l.b16 %v1080
  %v1230 = vunpack.c.l.b16 %v1081
  %v1231 = vunpack.c.h.b16 %v1081
  %v1232 = vunpack.c.l.b16 %v1082
  %v1233 = vunpack.c.l.b16 %v1083
  %v1234 = vunpack.c.h.b16 %v1083
  %v1235 = vunpack.c.l.b16 %v1084
  %v1236 = vunpack.c.l.b16 %v1085
  %v1237 = vunpack.c.h.b16 %v1085
  %v1238 = vunpack.c.l.b16 %v1086
  %v1239 = vunpack.c.l.b16 %v1087
  %v1240 = vunpack.c.h.b16 %v1087
  %v1241 = vunpack.c.l.b16 %v1088
  %v1242 = vunpack.c.l.b16 %v1089
  %v1243 = vunpack.c.h.b16 %v1089
  %v1244 = vunpack.c.l.b16 %v1090
  %v1245 = vunpack.c.l.b16 %v1091
  %v1246 = vunpack.c.h.b16 %v1091
  %v1247 = vunpack.c.l.b16 %v1092
  %v1248 = vunpack.c.l.b16 %v1093
  %v1249 = vunpack.c.h.b16 %v1093
  %v1250 = vunpack.c.l.b16 %v1094
  %v1251 = vunpack.c.l.b16 %v1095
  %v1252 = vunpack.c.h.b16 %v1095
  %v1253 = vunpack.c.l.b16 %v1096
  %v1254 = vunpack.c.l.b16 %v1097
  %v1255 = vunpack.c.h.b16 %v1097
  %v1256 = vunpack.c.l.b16 %v1098
  %v1257 = vunpack.c.l.b16 %v1099
  %v1258 = vunpack.c.h.b16 %v1099
  %v1259 = vunpack.c.l.b16 %v1100
  %v1260 = vunpack.c.l.b16 %v1101
  %v1261 = vunpack.c.h.b16 %v1101
  %v1262 = vunpack.c.l.b16 %v1102
  %v1263 = vunpack.c.l.b16 %v1103
  %v1264 = vunpack.c.h.b16 %v1103
  %v1265 = vunpack.c.l.b16 %v1104
  %v1266 = vunpack.c.l.b16 %v1105
  %v1267 = vunpack.c.h.b16 %v1105
  %v1268 = vunpack.c.l.b16 %v1106
  %v1269 = vunpack.c.l.b16 %v1107
  %v1270 = vunpack.c.h.b16 %v1107
  %v1271 = vunpack.c.l.b16 %v1108
  %v1272 = vunpack.c.l.b16 %v1109
  %v1273 = vunpack.c.h.b16 %v1109
  %v1274 = vunpack.c.l.b16 %v1110
  %v1275 = vunpack.c.l.b16 %v1111
  %v1276 = vunpack.c.h.b16 %v1111
  %v1277 = vunpack.c.l.b16 %v1112
  %v1278 = vunpack.c.l.b16 %v1113
  %v1279 = vunpack.c.h.b16 %v1113
  %v1280 = vunpack.c.l.b16 %v1114
  %v1281 = vunpack.c.l.b16 %v1115
  %v1282 = vunpack.c.h.b16 %v1115
  %v1283 = vunpack.c.l.b16 %v1116
  %v1284 = vunpack.c.l.b16 %v1117
  %v1285 = vunpack.c.h.b16 %v1117
  %v1286 = vunpack.c.l.b16 %v1118
  %v1287 = vunpack.c.l.b16 %v1119
  %v1288 = vunpack.c.h.b16 %v1119
  %v1289 = vunpack.c.l.b16 %v1120
  %v1290 = vunpack.c.l.b16 %v1121
  %v1291 = vunpack.c.h.b16 %v1121
  %v1292 = vunpack.c.l.b16 %v1122
  %v1293 = vunpack.c.l.b16 %v1123
  %v1294 = vunpack.c.h.b16 %v1123
  %v1295 = vunpack.c.l.b16 %v1124
  %v1296 = vunpack.c.l.b16 %v1125
  %v1297 = vunpack.c.h.b16 %v1125
  %v1298 = vunpack.c.l.b16 %v1126
  %v1299 = vunpack.c.l.b16 %v1127
  %v1300 = vunpack.c.h.b16 %v1127
  %v1301 = vunpack.c.l.b16 %v1128
  %v1302 = vunpack.c.l.b16 %v1129
  %v1303 = vunpack.c.h.b16 %v1129
  %v1304 = vunpack.c.l.b16 %v1130
  %v1305 = vunpack.c.l.b16 %v1131
  %v1306 = vunpack.c.h.b16 %v1131
  %v1307 = vunpack.c.l.b16 %v1132
  %v1308 = vunpack.c.l.b16 %v1133
  %v1309 = vunpack.c.h.b16 %v1133
  %v1310 = vunpack.c.l.b16 %v1134
  %v1311 = vunpack.c.l.b16 %v1135
  %v1312 = vunpack.c.h.b16 %v1135
  %v1313 = vunpack.c.l.b16 %v1136
  %v1314 = vpack.c.b16 %v1221, %v1218
  %v1315 = vpack.c.b16 %v1222, %v1219
  %v1316 = vpack.c.b16 %v1223, %v1220
  %v1317 = vpack.c.b16 %v1227, %v1224
  %v1318 = vpack.c.b16 %v1228, %v1225
  %v1319 = vpack.c.b16 %v1229, %v1226
  %v1320 = vpack.c.b16 %v1233, %v1230
  %v1321 = vpack.c.b16 %v1234, %v1231
  %v1322 = vpack.c.b16 %v1235, %v1232
  %v1323 = vpack.c.b16 %v1239, %v1236
  %v1324 = vpack.c.b16 %v1240, %v1237
  %v1325 = vpack.c.b16 %v1241, %v1238
  %v1326 = vpack.c.b16 %v1245, %v1242
  %v1327 = vpack.c.b16 %v1246, %v1243
  %v1328 = vpack.c.b16 %v1247, %v1244
  %v1329 = vpack.c.b16 %v1251, %v1248
  %v1330 = vpack.c.b16 %v1252, %v1249
  %v1331 = vpack.c.b16 %v1253, %v1250
  %v1332 = vpack.c.b16 %v1257, %v1254
  %v1333 = vpack.c.b16 %v1258, %v1255
  %v1334 = vpack.c.b16 %v1259, %v1256
  %v1335 = vpack.c.b16 %v1263, %v1260
  %v1336 = vpack.c.b16 %v1264, %v1261
  %v1337 = vpack.c.b16 %v1265, %v1262
  %v1338 = vpack.c.b16 %v1269, %v1266
  %v1339 = vpack.c.b16 %v1270, %v1267
  %v1340 = vpack.c.b16 %v1271, %v1268
  %v1341 = vpack.c.b16 %v1275, %v1272
  %v1342 = vpack.c.b16 %v1276, %v1273
  %v1343 = vpack.c.b16 %v1277, %v1274
  %v1344 = vpack.c.b16 %v1281, %v1278
  %v1345 = vpack.c.b16 %v1282, %v1279
  %v1346 = vpack.c.b16 %v1283, %v1280
  %v1347 = vpack.c.b16 %v1287, %v1284
  %v1348 = vpack.c.b16 %v1288, %v1285
  %v1349 = vpack.c.b16 %v1289, %v1286
  %v1350 = vpack.c.b16 %v1293, %v1290
  %v1351 = vpack.c.b16 %v1294, %v1291
  %v1352 = vpack.c.b16 %v1295, %v1292
  %v1353 = vpack.c.b16 %v1299, %v1296
  %v1354 = vpack.c.b16 %v1300, %v1297
  %v1355 = vpack.c.b16 %v1301, %v1298
  %v1356 = vpack.c.b16 %v1305, %v1302
  %v1357 = vpack.c.b16 %v1306, %v1303
  %v1358 = vpack.c.b16 %v1307, %v1304
  %v1359 = vpack.c.b16 %v1311, %v1308
  %v1360 = vpack.c.b16 %v1312, %v1309
  %v1361 = vpack.c.b16 %v1313, %v1310
  %1410 = vmatprep.subr.bf16.mxu0 %v1315
  %1411 = vmatpush1.bf16.msra.mxu0 %v1314
  %1412 = vmatprep.subr.bf16.mxu0 %v1318
  %1413 = vmatpush1.bf16.msra.mxu0 %v1317
  %1414 = vmatprep.subr.bf16.mxu0 %v1321
  %1415 = vmatpush1.bf16.msra.mxu0 %v1320
  %1416 = vmatprep.subr.bf16.mxu0 %v1324
  %1417 = vmatpush1.bf16.msra.mxu0 %v1323
  %1418 = vmatprep.subr.bf16.mxu0 %v1327
  %1419 = vmatpush1.bf16.msra.mxu0 %v1326
  %1420 = vmatprep.subr.bf16.mxu0 %v1330
  %1421 = vmatpush1.bf16.msra.mxu0 %v1329
  %1422 = vmatprep.subr.bf16.mxu0 %v1333
  %1423 = vmatpush1.bf16.msra.mxu0 %v1332
  %1424 = vmatprep.subr.bf16.mxu0 %v1336
  %1425 = vmatpush1.bf16.msra.mxu0 %v1335
  %1426 = vmatprep.subr.bf16.mxu0 %v1339
  %1427 = vmatpush1.bf16.msra.mxu0 %v1338
  %1428 = vmatprep.subr.bf16.mxu0 %v1342
  %1429 = vmatpush1.bf16.msra.mxu0 %v1341
  %1430 = vmatprep.subr.bf16.mxu0 %v1345
  %1431 = vmatpush1.bf16.msra.mxu0 %v1344
  %1432 = vmatprep.subr.bf16.mxu0 %v1348
  %1433 = vmatpush1.bf16.msra.mxu0 %v1347
  %1434 = vmatprep.subr.bf16.mxu0 %v1351
  %1435 = vmatpush1.bf16.msra.mxu0 %v1350
  %1436 = vmatprep.subr.bf16.mxu0 %v1354
  %1437 = vmatpush1.bf16.msra.mxu0 %v1353
  %1438 = vmatprep.subr.bf16.mxu0 %v1357
  %1439 = vmatpush1.bf16.msra.mxu0 %v1356
  %1440 = vmatprep.subr.bf16.mxu0 %v1360
  %1441 = vmatpush1.bf16.msra.mxu0 %v1359
  %1442 = vmatprep.mubr.bf16.mxu0 %v1072
  %1443 = vmatmul.mubr.bf16.gmra.mrb[0].mxu0 %v1071
  %v1444 = vpop.f32.mrb[0].mxu0
  %v1445 = vadd.f32 %v1142, %v1444
  %v1446 = vpop.f32.mrb[0].mxu0
  %v1447 = vadd.f32 %v1146, %v1446
  %v1448 = vpop.f32.mrb[0].mxu0
  %v1449 = vadd.f32 %v1142, %v1448
  %v1450 = vpop.f32.mrb[0].mxu0
  %v1451 = vadd.f32 %v1146, %v1450
  %1452 = vdwg.mxu0
  %1453 = vmatprep.subr.bf16.mxu0 0
  %1454 = vmatpush1.bf16.msra.mxu0 %v1316
  %1455 = vmatprep.subr.bf16.mxu0 0
  %1456 = vmatpush1.bf16.msra.mxu0 %v1319
  %1457 = vmatprep.subr.bf16.mxu0 0
  %1458 = vmatpush1.bf16.msra.mxu0 %v1322
  %1459 = vmatprep.subr.bf16.mxu0 0
  %1460 = vmatpush1.bf16.msra.mxu0 %v1325
  %1461 = vmatprep.subr.bf16.mxu0 0
  %1462 = vmatpush1.bf16.msra.mxu0 %v1328
  %1463 = vmatprep.subr.bf16.mxu0 0
  %1464 = vmatpush1.bf16.msra.mxu0 %v1331
  %1465 = vmatprep.subr.bf16.mxu0 0
  %1466 = vmatpush1.bf16.msra.mxu0 %v1334
  %1467 = vmatprep.subr.bf16.mxu0 0
  %1468 = vmatpush1.bf16.msra.mxu0 %v1337
  %1469 = vmatprep.subr.bf16.mxu0 0
  %1470 = vmatpush1.bf16.msra.mxu0 %v1340
  %1471 = vmatprep.subr.bf16.mxu0 0
  %1472 = vmatpush1.bf16.msra.mxu0 %v1343
  %1473 = vmatprep.subr.bf16.mxu0 0
  %1474 = vmatpush1.bf16.msra.mxu0 %v1346
  %1475 = vmatprep.subr.bf16.mxu0 0
  %1476 = vmatpush1.bf16.msra.mxu0 %v1349
  %1477 = vmatprep.subr.bf16.mxu0 0
  %1478 = vmatpush1.bf16.msra.mxu0 %v1352
  %1479 = vmatprep.subr.bf16.mxu0 0
  %1480 = vmatpush1.bf16.msra.mxu0 %v1355
  %1481 = vmatprep.subr.bf16.mxu0 0
  %1482 = vmatpush1.bf16.msra.mxu0 %v1358
  %1483 = vmatprep.subr.bf16.mxu0 0
  %1484 = vmatpush1.bf16.msra.mxu0 %v1361
  %1485 = vmatprep.mubr.bf16.mxu0 %v1072
  %1486 = vmatmul.mubr.bf16.gmra.mrb[0].mxu0 %v1071
  %v1487 = vpop.f32.mrb[0].mxu0
  %v1488 = vadd.f32 %v1150, %v1487
  %v1489 = vpop.f32.mrb[0].mxu0
  %v1490 = vpop.f32.mrb[0].mxu0
  %v1491 = vadd.f32 %v1150, %v1490
  %v1492 = vpop.f32.mrb[0].mxu0
  %1493 = vdwg.mxu0
  %v1494 = vld [vmem:[%s7] sm:$0x3]
  %v1495 = vlaneseq
  %v1496 = vshrl.u32 %v1495, 7
  %v1497 = vadd.s32 %v1496, 8
  %v1498 = vcvt.s32.f32 %v1496
  %v1499 = vcvt.s32.f32 %v1497
  %v1500 = vadd.f32 %v1498, 0.5
  %v1501 = vadd.f32 %v1499, 0.5
  %v1502 = vmin.f32 %v1445, 4.1351666
  %v1503 = vmin.f32 %v1447, 4.1351666
  %v1504 = vmin.f32 %v1449, 4.1351666
  %v1505 = vmin.f32 %v1451, 4.1351666
  %v1506 = vlaneseq
  %v1507 = vshrl.u32 %v1506, 7
  %v1508 = vsub.s32 1, %v1507
  %v1509 = vrot.slane %v1494, %v1508
  %v1510 = vmul.f32 %v1445, %v1509
  %v1511 = vmul.f32 %v1449, %v1509
  %v1512 = vadd.f32 %v1510, %v1500
  %v1513 = vadd.f32 %v1511, %v1501
  %1515 = vrot.lane.b32.xlu0 %v1509, 48
  %v1516 = vpop.permute.xlu0 %1515
  %v1518 = vmul.f32 %v1445, %v1516
  %v1519 = vmul.f32 %v1449, %v1516
  %v1520 = vlaneseq
  %v1521 = vshrl.u32 %v1520, 7
  %v1522 = vsub.s32 0, %v1521
  %v1523 = vrot.slane %v1494, %v1522
  %1525 = vrot.lane.b32.xlu0 %v1523, 48
  %v1526 = vpop.permute.xlu0 %1525
  %v1528 = vadd.f32 %v1518, %v1526
  %v1529 = vadd.f32 %v1519, %v1526
  %v1530 = vmul.f32 %v1502, 1.442695
  %v1531 = vpow.pop %v1530
  %v1532 = vmul.f32 %v1503, 1.442695
  %v1533 = vpow.pop %v1532
  %v1534 = vmul.f32 %v1504, 1.442695
  %v1535 = vpow.pop %v1534
  %v1536 = vmul.f32 %v1505, 1.442695
  %v1537 = vpow.pop %v1536
  %1538 = vrot.lane.b32.xlu0 %v1509, 96
  %v1539 = vpop.permute.xlu0 %1538
  %v1541 = vmul.f32 %v1531, %v1539
  %v1542 = vmul.f32 %v1533, %v1539
  %v1543 = vmul.f32 %v1535, %v1539
  %v1544 = vmul.f32 %v1537, %v1539
  %1545 = vrot.lane.b32.xlu0 %v1509, 16
  %v1546 = vpop.permute.xlu0 %1545
  %v1548 = vmul.f32 %v1533, %v1546
  %v1549 = vmul.f32 %v1537, %v1546
  %v1550 = vmul.f32 %v1541, 0.5
  %v1551 = vmul.f32 %v1542, 0.5
  %v1552 = vmul.f32 %v1543, 0.5
  %v1553 = vmul.f32 %v1544, 0.5
  %1558 = vrot.lane.b32.xlu0 %v1550, 32
  %v1559 = vpop.permute.xlu0 %1558
  %1560 = vrot.lane.b32.xlu0 %v1551, 32
  %v1561 = vpop.permute.xlu0 %1560
  %1562 = vrot.lane.b32.xlu0 %v1552, 32
  %v1563 = vpop.permute.xlu0 %1562
  %1564 = vrot.lane.b32.xlu0 %v1553, 32
  %v1565 = vpop.permute.xlu0 %1564
  %vm1566 = vcmask 261120
  %v1567 = vsel %vm1566, %v1559, %v1561
  %v1568 = vsel %vm1566, %v1563, %v1565
  %v1571 = vsub.f32 %v1512, %v1567
  %v1572 = vsub.f32 %v1513, %v1568
  %v1573 = vmax.f32 %v1571, 0.0
  %v1574 = vmax.f32 %v1572, 0.0
  %v1575 = vmin.f32 %v1573, 16.0
  %v1576 = vmin.f32 %v1574, 16.0
  %v1577 = vmul.f32 %v1548, 0.5
  %v1578 = vmul.f32 %v1549, 0.5
  %1581 = vrot.lane.b32.xlu0 %v1577, 32
  %v1582 = vpop.permute.xlu0 %1581
  %1583 = vrot.lane.b32.xlu0 %v1578, 32
  %v1584 = vpop.permute.xlu0 %1583
  %v1587 = vsub.f32 %v1528, %v1582
  %v1588 = vsub.f32 %v1529, %v1584
  %v1589 = vmax.f32 %v1587, 0.0
  %v1590 = vmax.f32 %v1588, 0.0
  %v1591 = vmin.f32 %v1589, 16.0
  %v1592 = vmin.f32 %v1590, 16.0
  %v1593 = vadd.f32 %v1512, %v1567
  %v1594 = vadd.f32 %v1513, %v1568
  %v1595 = vmax.f32 %v1593, 0.0
  %v1596 = vmax.f32 %v1594, 0.0
  %v1597 = vmin.f32 %v1595, 16.0
  %v1598 = vmin.f32 %v1596, 16.0
  %v1599 = vadd.f32 %v1528, %v1582
  %v1600 = vadd.f32 %v1529, %v1584
  %v1601 = vmax.f32 %v1599, 0.0
  %v1602 = vmax.f32 %v1600, 0.0
  %v1603 = vmin.f32 %v1601, 16.0
  %v1604 = vmin.f32 %v1602, 16.0
  %1607 = vrot.lane.b32.xlu0 %v1447, 48
  %v1608 = vpop.permute.xlu0 %1607
  %1609 = vrot.lane.b32.xlu0 %v1451, 48
  %v1610 = vpop.permute.xlu0 %1609
  %v1613 = vsub.f32 %v1447, %v1608
  %v1614 = vsub.f32 %v1488, %v1608
  %v1615 = vsub.f32 %v1451, %v1610
  %v1616 = vsub.f32 %v1491, %v1610
  %v1617 = vlaneseq
  %v1618 = vand.u32 %v1617, 127
  %v1619 = vmul.u32 %v1496, 48
  %v1620 = vmul.u32 %v1497, 48
  %v1621 = vadd.s32 %v1619, %v1618
  %v1622 = vadd.s32 %v1620, %v1618
  %v1623 = vcvt.s32.f32 %v1621
  %v1624 = vcvt.s32.f32 %v1622
  %vm1625 = vcmask 1048448
  %v1626 = vsel %vm1625, %v1613, -inf
  %v1627 = vsel %vm1566, %v1614, -inf
  %v1628 = vmax.f32 %v1626, %v1627
  %1629 = vmax.xlane.f32.xlu0 %v1628
  %v1630 = vpop.xlane.xlu0 %1629
  %v1631 = vsel %vm1625, %v1615, -inf
  %v1632 = vsel %vm1566, %v1616, -inf
  %v1633 = vmax.f32 %v1631, %v1632
  %1634 = vmax.xlane.f32.xlu0 %v1633
  %v1635 = vpop.xlane.xlu0 %1634
  %v1636 = vmax.f32 %v1630, %v1635
  %v1637 = vrot.slane %v1636, 4
  %v1638 = vmax.f32 %v1636, %v1637
  %v1639 = vrot.slane %v1638, 2
  %v1640 = vmax.f32 %v1638, %v1639
  %v1641 = vrot.slane %v1640, 1
  %v1642 = vmax.f32 %v1640, %v1641
  %vm1643 = vcmp.ge.f32.partialorder %v1613, %v1642
  %vm1644 = vcmp.ge.f32.partialorder %v1614, %v1642
  %vm1645 = vcmp.ge.f32.partialorder %v1615, %v1642
  %vm1646 = vcmp.ge.f32.partialorder %v1616, %v1642
  %1649 = vrot.lane.b32.xlu0 %v1623, 112
  %v1650 = vpop.permute.xlu0 %1649
  %1651 = vrot.lane.b32.xlu0 %v1624, 112
  %v1652 = vpop.permute.xlu0 %1651
  %v1655 = vsel %vm1643, %v1650, 1e+09
  %v1656 = vsel %vm1644, %v1650, 1e+09
  %v1657 = vsel %vm1645, %v1652, 1e+09
  %v1658 = vsel %vm1646, %v1652, 1e+09
  %v1659 = vsel %vm1625, %v1655, inf
  %v1660 = vsel %vm1566, %v1656, inf
  %v1661 = vmin.f32 %v1659, %v1660
  %1662 = vmin.xlane.f32.xlu0 %v1661
  %v1663 = vpop.xlane.xlu0 %1662
  %v1664 = vsel %vm1625, %v1657, inf
  %v1665 = vsel %vm1566, %v1658, inf
  %v1666 = vmin.f32 %v1664, %v1665
  %1667 = vmin.xlane.f32.xlu0 %v1666
  %v1668 = vpop.xlane.xlu0 %1667
  %v1669 = vmin.f32 %v1663, %v1668
  %v1670 = vrot.slane %v1669, 4
  %v1671 = vmin.f32 %v1669, %v1670
  %v1672 = vrot.slane %v1671, 2
  %v1673 = vmin.f32 %v1671, %v1672
  %v1674 = vrot.slane %v1673, 1
  %v1675 = vmin.f32 %v1673, %v1674
  %vm1676 = vcmp.eq.f32.partialorder %v1623, %v1675
  %vm1677 = vcmp.eq.f32.partialorder %v1624, %v1675
  %v1678 = vsel %vm1676, %v1575, 0.0
  %v1679 = vsel %vm1677, %v1576, 0.0
  %vm1680 = vcmask 392192
  %v1681 = vsel %vm1680, %v1678, 0.0
  %1682 = vadd.xlane.f32.xlu0 %v1681
  %v1683 = vpop.xlane.xlu0 %1682
  %v1684 = vsel %vm1680, %v1679, 0.0
  %1685 = vadd.xlane.f32.xlu0 %v1684
  %v1686 = vpop.xlane.xlu0 %1685
  %v1687 = vadd.f32 %v1683, %v1686
  %v1688 = vrot.slane %v1687, 4
  %v1689 = vadd.f32 %v1687, %v1688
  %v1690 = vrot.slane %v1689, 2
  %v1691 = vadd.f32 %v1689, %v1690
  %v1692 = vrot.slane %v1691, 1
  %v1693 = vadd.f32 %v1691, %v1692
  %vm1694 = vcmask 0
  %1695 = vst.msk [vmem:[%s14] sm:$0x1] %vm1694, %v1693
  %1698 = vrot.lane.b32.xlu0 %v1591, 80
  %v1699 = vpop.permute.xlu0 %1698
  %1700 = vrot.lane.b32.xlu0 %v1592, 80
  %v1701 = vpop.permute.xlu0 %1700
  %v1704 = vsel %vm1676, %v1699, 0.0
  %v1705 = vsel %vm1677, %v1701, 0.0
  %v1706 = vsel %vm1680, %v1704, 0.0
  %1707 = vadd.xlane.f32.xlu0 %v1706
  %v1708 = vpop.xlane.xlu0 %1707
  %v1709 = vsel %vm1680, %v1705, 0.0
  %1710 = vadd.xlane.f32.xlu0 %v1709
  %v1711 = vpop.xlane.xlu0 %1710
  %v1712 = vadd.f32 %v1708, %v1711
  %v1713 = vrot.slane %v1712, 4
  %v1714 = vadd.f32 %v1712, %v1713
  %v1715 = vrot.slane %v1714, 2
  %v1716 = vadd.f32 %v1714, %v1715
  %v1717 = vrot.slane %v1716, 1
  %v1718 = vadd.f32 %v1716, %v1717
  %vm1719 = vcmask 8200
  %1720 = vst.msk [vmem:[%s14] sm:$0x1] %vm1719, %v1718
  %v1721 = vsel %vm1676, %v1597, 0.0
  %v1722 = vsel %vm1677, %v1598, 0.0
  %v1723 = vsel %vm1680, %v1721, 0.0
  %1724 = vadd.xlane.f32.xlu0 %v1723
  %v1725 = vpop.xlane.xlu0 %1724
  %v1726 = vsel %vm1680, %v1722, 0.0
  %1727 = vadd.xlane.f32.xlu0 %v1726
  %v1728 = vpop.xlane.xlu0 %1727
  %v1729 = vadd.f32 %v1725, %v1728
  %v1730 = vrot.slane %v1729, 4
  %v1731 = vadd.f32 %v1729, %v1730
  %v1732 = vrot.slane %v1731, 2
  %v1733 = vadd.f32 %v1731, %v1732
  %v1734 = vrot.slane %v1733, 1
  %v1735 = vadd.f32 %v1733, %v1734
  %vm1736 = vcmask 16400
  %1737 = vst.msk [vmem:[%s14] sm:$0x1] %vm1736, %v1735
  %1740 = vrot.lane.b32.xlu0 %v1603, 80
  %v1741 = vpop.permute.xlu0 %1740
  %1742 = vrot.lane.b32.xlu0 %v1604, 80
  %v1743 = vpop.permute.xlu0 %1742
  %v1746 = vsel %vm1676, %v1741, 0.0
  %v1747 = vsel %vm1677, %v1743, 0.0
  %v1748 = vsel %vm1680, %v1746, 0.0
  %1749 = vadd.xlane.f32.xlu0 %v1748
  %v1750 = vpop.xlane.xlu0 %1749
  %v1751 = vsel %vm1680, %v1747, 0.0
  %1752 = vadd.xlane.f32.xlu0 %v1751
  %v1753 = vpop.xlane.xlu0 %1752
  %v1754 = vadd.f32 %v1750, %v1753
  %v1755 = vrot.slane %v1754, 4
  %v1756 = vadd.f32 %v1754, %v1755
  %v1757 = vrot.slane %v1756, 2
  %v1758 = vadd.f32 %v1756, %v1757
  %v1759 = vrot.slane %v1758, 1
  %v1760 = vadd.f32 %v1758, %v1759
  %vm1761 = vcmask 24600
  %1762 = vst.msk [vmem:[%s14] sm:$0x1] %vm1761, %v1760
  %1767 = vrot.lane.b32.xlu0 %v1613, 16
  %v1768 = vpop.permute.xlu0 %1767
  %1769 = vrot.lane.b32.xlu0 %v1614, 16
  %v1770 = vpop.permute.xlu0 %1769
  %1771 = vrot.lane.b32.xlu0 %v1615, 16
  %v1772 = vpop.permute.xlu0 %1771
  %1773 = vrot.lane.b32.xlu0 %v1616, 16
  %v1774 = vpop.permute.xlu0 %1773
  %vm1775 = vcmask 130048
  %v1776 = vsel %vm1775, %v1768, %v1770
  %v1777 = vsel %vm1775, %v1772, %v1774
  %v1780 = vsel %vm1676, -1e+09, %v1776
  %v1781 = vsel %vm1677, -1e+09, %v1777
  %v1782 = vsel %vm1680, %v1780, -inf
  %1783 = vmax.xlane.f32.xlu0 %v1782
  %v1784 = vpop.xlane.xlu0 %1783
  %v1785 = vsel %vm1680, %v1781, -inf
  %1786 = vmax.xlane.f32.xlu0 %v1785
  %v1787 = vpop.xlane.xlu0 %1786
  %v1788 = vmax.f32 %v1784, %v1787
  %v1789 = vrot.slane %v1788, 4
  %v1790 = vmax.f32 %v1788, %v1789
  %v1791 = vrot.slane %v1790, 2
  %v1792 = vmax.f32 %v1790, %v1791
  %v1793 = vrot.slane %v1792, 1
  %v1794 = vmax.f32 %v1792, %v1793
  %vm1795 = vcmp.ge.f32.partialorder %v1780, %v1794
  %vm1796 = vcmp.ge.f32.partialorder %v1781, %v1794
  %v1797 = vsel %vm1795, %v1623, 1e+09
  %v1798 = vsel %vm1796, %v1624, 1e+09
  %v1799 = vsel %vm1680, %v1797, inf
  %1800 = vmin.xlane.f32.xlu0 %v1799
  %v1801 = vpop.xlane.xlu0 %1800
  %v1802 = vsel %vm1680, %v1798, inf
  %1803 = vmin.xlane.f32.xlu0 %v1802
  %v1804 = vpop.xlane.xlu0 %1803
  %v1805 = vmin.f32 %v1801, %v1804
  %v1806 = vrot.slane %v1805, 4
  %v1807 = vmin.f32 %v1805, %v1806
  %v1808 = vrot.slane %v1807, 2
  %v1809 = vmin.f32 %v1807, %v1808
  %v1810 = vrot.slane %v1809, 1
  %v1811 = vmin.f32 %v1809, %v1810
  %vm1812 = vcmp.eq.f32.partialorder %v1623, %v1811
  %vm1813 = vcmp.eq.f32.partialorder %v1624, %v1811
  %v1814 = vsel %vm1812, %v1575, 0.0
  %v1815 = vsel %vm1813, %v1576, 0.0
  %v1816 = vsel %vm1680, %v1814, 0.0
  %1817 = vadd.xlane.f32.xlu0 %v1816
  %v1818 = vpop.xlane.xlu0 %1817
  %v1819 = vsel %vm1680, %v1815, 0.0
  %1820 = vadd.xlane.f32.xlu0 %v1819
  %v1821 = vpop.xlane.xlu0 %1820
  %v1822 = vadd.f32 %v1818, %v1821
  %v1823 = vrot.slane %v1822, 4
  %v1824 = vadd.f32 %v1822, %v1823
  %v1825 = vrot.slane %v1824, 2
  %v1826 = vadd.f32 %v1824, %v1825
  %v1827 = vrot.slane %v1826, 1
  %v1828 = vadd.f32 %v1826, %v1827
  %1829 = vst.msk [vmem:[%s14 + $0x1] sm:$0x1] %vm1694, %v1828
  %v1830 = vsel %vm1812, %v1699, 0.0
  %v1831 = vsel %vm1813, %v1701, 0.0
  %v1832 = vsel %vm1680, %v1830, 0.0
  %1833 = vadd.xlane.f32.xlu0 %v1832
  %v1834 = vpop.xlane.xlu0 %1833
  %v1835 = vsel %vm1680, %v1831, 0.0
  %1836 = vadd.xlane.f32.xlu0 %v1835
  %v1837 = vpop.xlane.xlu0 %1836
  %v1838 = vadd.f32 %v1834, %v1837
  %v1839 = vrot.slane %v1838, 4
  %v1840 = vadd.f32 %v1838, %v1839
  %v1841 = vrot.slane %v1840, 2
  %v1842 = vadd.f32 %v1840, %v1841
  %v1843 = vrot.slane %v1842, 1
  %v1844 = vadd.f32 %v1842, %v1843
  %1845 = vst.msk [vmem:[%s14 + $0x1] sm:$0x1] %vm1719, %v1844
  %v1846 = vsel %vm1812, %v1597, 0.0
  %v1847 = vsel %vm1813, %v1598, 0.0
  %v1848 = vsel %vm1680, %v1846, 0.0
  %1849 = vadd.xlane.f32.xlu0 %v1848
  %v1850 = vpop.xlane.xlu0 %1849
  %v1851 = vsel %vm1680, %v1847, 0.0
  %1852 = vadd.xlane.f32.xlu0 %v1851
  %v1853 = vpop.xlane.xlu0 %1852
  %v1854 = vadd.f32 %v1850, %v1853
  %v1855 = vrot.slane %v1854, 4
  %v1856 = vadd.f32 %v1854, %v1855
  %v1857 = vrot.slane %v1856, 2
  %v1858 = vadd.f32 %v1856, %v1857
  %v1859 = vrot.slane %v1858, 1
  %v1860 = vadd.f32 %v1858, %v1859
  %1861 = vst.msk [vmem:[%s14 + $0x1] sm:$0x1] %vm1736, %v1860
  %v1862 = vsel %vm1812, %v1741, 0.0
  %v1863 = vsel %vm1813, %v1743, 0.0
  %v1864 = vsel %vm1680, %v1862, 0.0
  %1865 = vadd.xlane.f32.xlu0 %v1864
  %v1866 = vpop.xlane.xlu0 %1865
  %v1867 = vsel %vm1680, %v1863, 0.0
  %1868 = vadd.xlane.f32.xlu0 %v1867
  %v1869 = vpop.xlane.xlu0 %1868
  %v1870 = vadd.f32 %v1866, %v1869
  %v1871 = vrot.slane %v1870, 4
  %v1872 = vadd.f32 %v1870, %v1871
  %v1873 = vrot.slane %v1872, 2
  %v1874 = vadd.f32 %v1872, %v1873
  %v1875 = vrot.slane %v1874, 1
  %v1876 = vadd.f32 %v1874, %v1875
  %1877 = vst.msk [vmem:[%s14 + $0x1] sm:$0x1] %vm1761, %v1876
  %v1878 = vsel %vm1812, -1e+09, %v1780
  %v1879 = vsel %vm1813, -1e+09, %v1781
  %v1880 = vsel %vm1680, %v1878, -inf
  %1881 = vmax.xlane.f32.xlu0 %v1880
  %v1882 = vpop.xlane.xlu0 %1881
  %v1883 = vsel %vm1680, %v1879, -inf
  %1884 = vmax.xlane.f32.xlu0 %v1883
  %v1885 = vpop.xlane.xlu0 %1884
  %v1886 = vmax.f32 %v1882, %v1885
  %v1887 = vrot.slane %v1886, 4
  %v1888 = vmax.f32 %v1886, %v1887
  %v1889 = vrot.slane %v1888, 2
  %v1890 = vmax.f32 %v1888, %v1889
  %v1891 = vrot.slane %v1890, 1
  %v1892 = vmax.f32 %v1890, %v1891
  %vm1893 = vcmp.ge.f32.partialorder %v1878, %v1892
  %vm1894 = vcmp.ge.f32.partialorder %v1879, %v1892
  %v1895 = vsel %vm1893, %v1623, 1e+09
  %v1896 = vsel %vm1894, %v1624, 1e+09
  %v1897 = vsel %vm1680, %v1895, inf
  %1898 = vmin.xlane.f32.xlu0 %v1897
  %v1899 = vpop.xlane.xlu0 %1898
  %v1900 = vsel %vm1680, %v1896, inf
  %1901 = vmin.xlane.f32.xlu0 %v1900
  %v1902 = vpop.xlane.xlu0 %1901
  %v1903 = vmin.f32 %v1899, %v1902
  %v1904 = vrot.slane %v1903, 4
  %v1905 = vmin.f32 %v1903, %v1904
  %v1906 = vrot.slane %v1905, 2
  %v1907 = vmin.f32 %v1905, %v1906
  %v1908 = vrot.slane %v1907, 1
  %v1909 = vmin.f32 %v1907, %v1908
  %vm1910 = vcmp.eq.f32.partialorder %v1623, %v1909
  %vm1911 = vcmp.eq.f32.partialorder %v1624, %v1909
  %v1912 = vsel %vm1910, %v1575, 0.0
  %v1913 = vsel %vm1911, %v1576, 0.0
  %v1914 = vsel %vm1680, %v1912, 0.0
  %1915 = vadd.xlane.f32.xlu0 %v1914
  %v1916 = vpop.xlane.xlu0 %1915
  %v1917 = vsel %vm1680, %v1913, 0.0
  %1918 = vadd.xlane.f32.xlu0 %v1917
  %v1919 = vpop.xlane.xlu0 %1918
  %v1920 = vadd.f32 %v1916, %v1919
  %v1921 = vrot.slane %v1920, 4
  %v1922 = vadd.f32 %v1920, %v1921
  %v1923 = vrot.slane %v1922, 2
  %v1924 = vadd.f32 %v1922, %v1923
  %v1925 = vrot.slane %v1924, 1
  %v1926 = vadd.f32 %v1924, %v1925
  %1927 = vst.msk [vmem:[%s14 + $0x2] sm:$0x1] %vm1694, %v1926
  %v1928 = vsel %vm1910, %v1699, 0.0
  %v1929 = vsel %vm1911, %v1701, 0.0
  %v1930 = vsel %vm1680, %v1928, 0.0
  %1931 = vadd.xlane.f32.xlu0 %v1930
  %v1932 = vpop.xlane.xlu0 %1931
  %v1933 = vsel %vm1680, %v1929, 0.0
  %1934 = vadd.xlane.f32.xlu0 %v1933
  %v1935 = vpop.xlane.xlu0 %1934
  %v1936 = vadd.f32 %v1932, %v1935
  %v1937 = vrot.slane %v1936, 4
  %v1938 = vadd.f32 %v1936, %v1937
  %v1939 = vrot.slane %v1938, 2
  %v1940 = vadd.f32 %v1938, %v1939
  %v1941 = vrot.slane %v1940, 1
  %v1942 = vadd.f32 %v1940, %v1941
  %1943 = vst.msk [vmem:[%s14 + $0x2] sm:$0x1] %vm1719, %v1942
  %v1944 = vsel %vm1910, %v1597, 0.0
  %v1945 = vsel %vm1911, %v1598, 0.0
  %v1946 = vsel %vm1680, %v1944, 0.0
  %1947 = vadd.xlane.f32.xlu0 %v1946
  %v1948 = vpop.xlane.xlu0 %1947
  %v1949 = vsel %vm1680, %v1945, 0.0
  %1950 = vadd.xlane.f32.xlu0 %v1949
  %v1951 = vpop.xlane.xlu0 %1950
  %v1952 = vadd.f32 %v1948, %v1951
  %v1953 = vrot.slane %v1952, 4
  %v1954 = vadd.f32 %v1952, %v1953
  %v1955 = vrot.slane %v1954, 2
  %v1956 = vadd.f32 %v1954, %v1955
  %v1957 = vrot.slane %v1956, 1
  %v1958 = vadd.f32 %v1956, %v1957
  %1959 = vst.msk [vmem:[%s14 + $0x2] sm:$0x1] %vm1736, %v1958
  %v1960 = vsel %vm1910, %v1741, 0.0
  %v1961 = vsel %vm1911, %v1743, 0.0
  %v1962 = vsel %vm1680, %v1960, 0.0
  %1963 = vadd.xlane.f32.xlu0 %v1962
  %v1964 = vpop.xlane.xlu0 %1963
  %v1965 = vsel %vm1680, %v1961, 0.0
  %1966 = vadd.xlane.f32.xlu0 %v1965
  %v1967 = vpop.xlane.xlu0 %1966
  %v1968 = vadd.f32 %v1964, %v1967
  %v1969 = vrot.slane %v1968, 4
  %v1970 = vadd.f32 %v1968, %v1969
  %v1971 = vrot.slane %v1970, 2
  %v1972 = vadd.f32 %v1970, %v1971
  %v1973 = vrot.slane %v1972, 1
  %v1974 = vadd.f32 %v1972, %v1973
  %1975 = vst.msk [vmem:[%s14 + $0x2] sm:$0x1] %vm1761, %v1974
  %v1976 = vsel %vm1910, -1e+09, %v1878
  %v1977 = vsel %vm1911, -1e+09, %v1879
  %v1978 = vsel %vm1680, %v1976, -inf
  %1979 = vmax.xlane.f32.xlu0 %v1978
  %v1980 = vpop.xlane.xlu0 %1979
  %v1981 = vsel %vm1680, %v1977, -inf
  %1982 = vmax.xlane.f32.xlu0 %v1981
  %v1983 = vpop.xlane.xlu0 %1982
  %v1984 = vmax.f32 %v1980, %v1983
  %v1985 = vrot.slane %v1984, 4
  %v1986 = vmax.f32 %v1984, %v1985
  %v1987 = vrot.slane %v1986, 2
  %v1988 = vmax.f32 %v1986, %v1987
  %v1989 = vrot.slane %v1988, 1
  %v1990 = vmax.f32 %v1988, %v1989
  %vm1991 = vcmp.ge.f32.partialorder %v1976, %v1990
  %vm1992 = vcmp.ge.f32.partialorder %v1977, %v1990
  %v1993 = vsel %vm1991, %v1623, 1e+09
  %v1994 = vsel %vm1992, %v1624, 1e+09
  %v1995 = vsel %vm1680, %v1993, inf
  %1996 = vmin.xlane.f32.xlu0 %v1995
  %v1997 = vpop.xlane.xlu0 %1996
  %v1998 = vsel %vm1680, %v1994, inf
  %1999 = vmin.xlane.f32.xlu0 %v1998
  %v2000 = vpop.xlane.xlu0 %1999
  %v2001 = vmin.f32 %v1997, %v2000
  %v2002 = vrot.slane %v2001, 4
  %v2003 = vmin.f32 %v2001, %v2002
  %v2004 = vrot.slane %v2003, 2
  %v2005 = vmin.f32 %v2003, %v2004
  %v2006 = vrot.slane %v2005, 1
  %v2007 = vmin.f32 %v2005, %v2006
  %vm2008 = vcmp.eq.f32.partialorder %v1623, %v2007
  %vm2009 = vcmp.eq.f32.partialorder %v1624, %v2007
  %v2010 = vsel %vm2008, %v1575, 0.0
  %v2011 = vsel %vm2009, %v1576, 0.0
  %v2012 = vsel %vm1680, %v2010, 0.0
  %2013 = vadd.xlane.f32.xlu0 %v2012
  %v2014 = vpop.xlane.xlu0 %2013
  %v2015 = vsel %vm1680, %v2011, 0.0
  %2016 = vadd.xlane.f32.xlu0 %v2015
  %v2017 = vpop.xlane.xlu0 %2016
  %v2018 = vadd.f32 %v2014, %v2017
  %v2019 = vrot.slane %v2018, 4
  %v2020 = vadd.f32 %v2018, %v2019
  %v2021 = vrot.slane %v2020, 2
  %v2022 = vadd.f32 %v2020, %v2021
  %v2023 = vrot.slane %v2022, 1
  %v2024 = vadd.f32 %v2022, %v2023
  %2025 = vst.msk [vmem:[%s14 + $0x3] sm:$0x1] %vm1694, %v2024
  %v2026 = vsel %vm2008, %v1699, 0.0
  %v2027 = vsel %vm2009, %v1701, 0.0
  %v2028 = vsel %vm1680, %v2026, 0.0
  %2029 = vadd.xlane.f32.xlu0 %v2028
  %v2030 = vpop.xlane.xlu0 %2029
  %v2031 = vsel %vm1680, %v2027, 0.0
  %2032 = vadd.xlane.f32.xlu0 %v2031
  %v2033 = vpop.xlane.xlu0 %2032
  %v2034 = vadd.f32 %v2030, %v2033
  %v2035 = vrot.slane %v2034, 4
  %v2036 = vadd.f32 %v2034, %v2035
  %v2037 = vrot.slane %v2036, 2
  %v2038 = vadd.f32 %v2036, %v2037
  %v2039 = vrot.slane %v2038, 1
  %v2040 = vadd.f32 %v2038, %v2039
  %2041 = vst.msk [vmem:[%s14 + $0x3] sm:$0x1] %vm1719, %v2040
  %v2042 = vsel %vm2008, %v1597, 0.0
  %v2043 = vsel %vm2009, %v1598, 0.0
  %v2044 = vsel %vm1680, %v2042, 0.0
  %2045 = vadd.xlane.f32.xlu0 %v2044
  %v2046 = vpop.xlane.xlu0 %2045
  %v2047 = vsel %vm1680, %v2043, 0.0
  %2048 = vadd.xlane.f32.xlu0 %v2047
  %v2049 = vpop.xlane.xlu0 %2048
  %v2050 = vadd.f32 %v2046, %v2049
  %v2051 = vrot.slane %v2050, 4
  %v2052 = vadd.f32 %v2050, %v2051
  %v2053 = vrot.slane %v2052, 2
  %v2054 = vadd.f32 %v2052, %v2053
  %v2055 = vrot.slane %v2054, 1
  %v2056 = vadd.f32 %v2054, %v2055
  %2057 = vst.msk [vmem:[%s14 + $0x3] sm:$0x1] %vm1736, %v2056
  %v2058 = vsel %vm2008, %v1741, 0.0
  %v2059 = vsel %vm2009, %v1743, 0.0
  %v2060 = vsel %vm1680, %v2058, 0.0
  %2061 = vadd.xlane.f32.xlu0 %v2060
  %v2062 = vpop.xlane.xlu0 %2061
  %v2063 = vsel %vm1680, %v2059, 0.0
  %2064 = vadd.xlane.f32.xlu0 %v2063
  %v2065 = vpop.xlane.xlu0 %2064
  %v2066 = vadd.f32 %v2062, %v2065
  %v2067 = vrot.slane %v2066, 4
  %v2068 = vadd.f32 %v2066, %v2067
  %v2069 = vrot.slane %v2068, 2
  %v2070 = vadd.f32 %v2068, %v2069
  %v2071 = vrot.slane %v2070, 1
  %v2072 = vadd.f32 %v2070, %v2071
  %2073 = vst.msk [vmem:[%s14 + $0x3] sm:$0x1] %vm1761, %v2072
  %v2074 = vsel %vm2008, -1e+09, %v1976
  %v2075 = vsel %vm2009, -1e+09, %v1977
  %v2076 = vsel %vm1680, %v2074, -inf
  %2077 = vmax.xlane.f32.xlu0 %v2076
  %v2078 = vpop.xlane.xlu0 %2077
  %v2079 = vsel %vm1680, %v2075, -inf
  %2080 = vmax.xlane.f32.xlu0 %v2079
  %v2081 = vpop.xlane.xlu0 %2080
  %v2082 = vmax.f32 %v2078, %v2081
  %v2083 = vrot.slane %v2082, 4
  %v2084 = vmax.f32 %v2082, %v2083
  %v2085 = vrot.slane %v2084, 2
  %v2086 = vmax.f32 %v2084, %v2085
  %v2087 = vrot.slane %v2086, 1
  %v2088 = vmax.f32 %v2086, %v2087
  %vm2089 = vcmp.ge.f32.partialorder %v2074, %v2088
  %vm2090 = vcmp.ge.f32.partialorder %v2075, %v2088
  %v2091 = vsel %vm2089, %v1623, 1e+09
  %v2092 = vsel %vm2090, %v1624, 1e+09
  %v2093 = vsel %vm1680, %v2091, inf
  %2094 = vmin.xlane.f32.xlu0 %v2093
  %v2095 = vpop.xlane.xlu0 %2094
  %v2096 = vsel %vm1680, %v2092, inf
  %2097 = vmin.xlane.f32.xlu0 %v2096
  %v2098 = vpop.xlane.xlu0 %2097
  %v2099 = vmin.f32 %v2095, %v2098
  %v2100 = vrot.slane %v2099, 4
  %v2101 = vmin.f32 %v2099, %v2100
  %v2102 = vrot.slane %v2101, 2
  %v2103 = vmin.f32 %v2101, %v2102
  %v2104 = vrot.slane %v2103, 1
  %v2105 = vmin.f32 %v2103, %v2104
  %vm2106 = vcmp.eq.f32.partialorder %v1623, %v2105
  %vm2107 = vcmp.eq.f32.partialorder %v1624, %v2105
  %v2108 = vsel %vm2106, %v1575, 0.0
  %v2109 = vsel %vm2107, %v1576, 0.0
  %v2110 = vsel %vm1680, %v2108, 0.0
  %2111 = vadd.xlane.f32.xlu0 %v2110
  %v2112 = vpop.xlane.xlu0 %2111
  %v2113 = vsel %vm1680, %v2109, 0.0
  %2114 = vadd.xlane.f32.xlu0 %v2113
  %v2115 = vpop.xlane.xlu0 %2114
  %v2116 = vadd.f32 %v2112, %v2115
  %v2117 = vrot.slane %v2116, 4
  %v2118 = vadd.f32 %v2116, %v2117
  %v2119 = vrot.slane %v2118, 2
  %v2120 = vadd.f32 %v2118, %v2119
  %v2121 = vrot.slane %v2120, 1
  %v2122 = vadd.f32 %v2120, %v2121
  %2123 = vst.msk [vmem:[%s14 + $0x4] sm:$0x1] %vm1694, %v2122
  %v2124 = vsel %vm2106, %v1699, 0.0
  %v2125 = vsel %vm2107, %v1701, 0.0
  %v2126 = vsel %vm1680, %v2124, 0.0
  %2127 = vadd.xlane.f32.xlu0 %v2126
  %v2128 = vpop.xlane.xlu0 %2127
  %v2129 = vsel %vm1680, %v2125, 0.0
  %2130 = vadd.xlane.f32.xlu0 %v2129
  %v2131 = vpop.xlane.xlu0 %2130
  %v2132 = vadd.f32 %v2128, %v2131
  %v2133 = vrot.slane %v2132, 4
  %v2134 = vadd.f32 %v2132, %v2133
  %v2135 = vrot.slane %v2134, 2
  %v2136 = vadd.f32 %v2134, %v2135
  %v2137 = vrot.slane %v2136, 1
  %v2138 = vadd.f32 %v2136, %v2137
  %2139 = vst.msk [vmem:[%s14 + $0x4] sm:$0x1] %vm1719, %v2138
  %v2140 = vsel %vm2106, %v1597, 0.0
  %v2141 = vsel %vm2107, %v1598, 0.0
  %v2142 = vsel %vm1680, %v2140, 0.0
  %2143 = vadd.xlane.f32.xlu0 %v2142
  %v2144 = vpop.xlane.xlu0 %2143
  %v2145 = vsel %vm1680, %v2141, 0.0
  %2146 = vadd.xlane.f32.xlu0 %v2145
  %v2147 = vpop.xlane.xlu0 %2146
  %v2148 = vadd.f32 %v2144, %v2147
  %v2149 = vrot.slane %v2148, 4
  %v2150 = vadd.f32 %v2148, %v2149
  %v2151 = vrot.slane %v2150, 2
  %v2152 = vadd.f32 %v2150, %v2151
  %v2153 = vrot.slane %v2152, 1
  %v2154 = vadd.f32 %v2152, %v2153
  %2155 = vst.msk [vmem:[%s14 + $0x4] sm:$0x1] %vm1736, %v2154
  %v2156 = vsel %vm2106, %v1741, 0.0
  %v2157 = vsel %vm2107, %v1743, 0.0
  %v2158 = vsel %vm1680, %v2156, 0.0
  %2159 = vadd.xlane.f32.xlu0 %v2158
  %v2160 = vpop.xlane.xlu0 %2159
  %v2161 = vsel %vm1680, %v2157, 0.0
  %2162 = vadd.xlane.f32.xlu0 %v2161
  %v2163 = vpop.xlane.xlu0 %2162
  %v2164 = vadd.f32 %v2160, %v2163
  %v2165 = vrot.slane %v2164, 4
  %v2166 = vadd.f32 %v2164, %v2165
  %v2167 = vrot.slane %v2166, 2
  %v2168 = vadd.f32 %v2166, %v2167
  %v2169 = vrot.slane %v2168, 1
  %v2170 = vadd.f32 %v2168, %v2169
  %2171 = vst.msk [vmem:[%s14 + $0x4] sm:$0x1] %vm1761, %v2170
  %v2172 = vsel %vm2106, -1e+09, %v2074
  %v2173 = vsel %vm2107, -1e+09, %v2075
  %v2174 = vsel %vm1680, %v2172, -inf
  %2175 = vmax.xlane.f32.xlu0 %v2174
  %v2176 = vpop.xlane.xlu0 %2175
  %v2177 = vsel %vm1680, %v2173, -inf
  %2178 = vmax.xlane.f32.xlu0 %v2177
  %v2179 = vpop.xlane.xlu0 %2178
  %v2180 = vmax.f32 %v2176, %v2179
  %v2181 = vrot.slane %v2180, 4
  %v2182 = vmax.f32 %v2180, %v2181
  %v2183 = vrot.slane %v2182, 2
  %v2184 = vmax.f32 %v2182, %v2183
  %v2185 = vrot.slane %v2184, 1
  %v2186 = vmax.f32 %v2184, %v2185
  %vm2187 = vcmp.ge.f32.partialorder %v2172, %v2186
  %vm2188 = vcmp.ge.f32.partialorder %v2173, %v2186
  %v2189 = vsel %vm2187, %v1623, 1e+09
  %v2190 = vsel %vm2188, %v1624, 1e+09
  %v2191 = vsel %vm1680, %v2189, inf
  %2192 = vmin.xlane.f32.xlu0 %v2191
  %v2193 = vpop.xlane.xlu0 %2192
  %v2194 = vsel %vm1680, %v2190, inf
  %2195 = vmin.xlane.f32.xlu0 %v2194
  %v2196 = vpop.xlane.xlu0 %2195
  %v2197 = vmin.f32 %v2193, %v2196
  %v2198 = vrot.slane %v2197, 4
  %v2199 = vmin.f32 %v2197, %v2198
  %v2200 = vrot.slane %v2199, 2
  %v2201 = vmin.f32 %v2199, %v2200
  %v2202 = vrot.slane %v2201, 1
  %v2203 = vmin.f32 %v2201, %v2202
  %vm2204 = vcmp.eq.f32.partialorder %v1623, %v2203
  %vm2205 = vcmp.eq.f32.partialorder %v1624, %v2203
  %v2206 = vsel %vm2204, %v1575, 0.0
  %v2207 = vsel %vm2205, %v1576, 0.0
  %v2208 = vsel %vm1680, %v2206, 0.0
  %2209 = vadd.xlane.f32.xlu0 %v2208
  %v2210 = vpop.xlane.xlu0 %2209
  %v2211 = vsel %vm1680, %v2207, 0.0
  %2212 = vadd.xlane.f32.xlu0 %v2211
  %v2213 = vpop.xlane.xlu0 %2212
  %v2214 = vadd.f32 %v2210, %v2213
  %v2215 = vrot.slane %v2214, 4
  %v2216 = vadd.f32 %v2214, %v2215
  %v2217 = vrot.slane %v2216, 2
  %v2218 = vadd.f32 %v2216, %v2217
  %v2219 = vrot.slane %v2218, 1
  %v2220 = vadd.f32 %v2218, %v2219
  %2221 = vst.msk [vmem:[%s14 + $0x5] sm:$0x1] %vm1694, %v2220
  %v2222 = vsel %vm2204, %v1699, 0.0
  %v2223 = vsel %vm2205, %v1701, 0.0
  %v2224 = vsel %vm1680, %v2222, 0.0
  %2225 = vadd.xlane.f32.xlu0 %v2224
  %v2226 = vpop.xlane.xlu0 %2225
  %v2227 = vsel %vm1680, %v2223, 0.0
  %2228 = vadd.xlane.f32.xlu0 %v2227
  %v2229 = vpop.xlane.xlu0 %2228
  %v2230 = vadd.f32 %v2226, %v2229
  %v2231 = vrot.slane %v2230, 4
  %v2232 = vadd.f32 %v2230, %v2231
  %v2233 = vrot.slane %v2232, 2
  %v2234 = vadd.f32 %v2232, %v2233
  %v2235 = vrot.slane %v2234, 1
  %v2236 = vadd.f32 %v2234, %v2235
  %2237 = vst.msk [vmem:[%s14 + $0x5] sm:$0x1] %vm1719, %v2236
  %v2238 = vsel %vm2204, %v1597, 0.0
  %v2239 = vsel %vm2205, %v1598, 0.0
  %v2240 = vsel %vm1680, %v2238, 0.0
  %2241 = vadd.xlane.f32.xlu0 %v2240
  %v2242 = vpop.xlane.xlu0 %2241
  %v2243 = vsel %vm1680, %v2239, 0.0
  %2244 = vadd.xlane.f32.xlu0 %v2243
  %v2245 = vpop.xlane.xlu0 %2244
  %v2246 = vadd.f32 %v2242, %v2245
  %v2247 = vrot.slane %v2246, 4
  %v2248 = vadd.f32 %v2246, %v2247
  %v2249 = vrot.slane %v2248, 2
  %v2250 = vadd.f32 %v2248, %v2249
  %v2251 = vrot.slane %v2250, 1
  %v2252 = vadd.f32 %v2250, %v2251
  %2253 = vst.msk [vmem:[%s14 + $0x5] sm:$0x1] %vm1736, %v2252
  %v2254 = vsel %vm2204, %v1741, 0.0
  %v2255 = vsel %vm2205, %v1743, 0.0
  %v2256 = vsel %vm1680, %v2254, 0.0
  %2257 = vadd.xlane.f32.xlu0 %v2256
  %v2258 = vpop.xlane.xlu0 %2257
  %v2259 = vsel %vm1680, %v2255, 0.0
  %2260 = vadd.xlane.f32.xlu0 %v2259
  %v2261 = vpop.xlane.xlu0 %2260
  %v2262 = vadd.f32 %v2258, %v2261
  %v2263 = vrot.slane %v2262, 4
  %v2264 = vadd.f32 %v2262, %v2263
  %v2265 = vrot.slane %v2264, 2
  %v2266 = vadd.f32 %v2264, %v2265
  %v2267 = vrot.slane %v2266, 1
  %v2268 = vadd.f32 %v2266, %v2267
  %2269 = vst.msk [vmem:[%s14 + $0x5] sm:$0x1] %vm1761, %v2268
  %v2270 = vsel %vm2204, -1e+09, %v2172
  %v2271 = vsel %vm2205, -1e+09, %v2173
  %v2272 = vsel %vm1680, %v2270, -inf
  %2273 = vmax.xlane.f32.xlu0 %v2272
  %v2274 = vpop.xlane.xlu0 %2273
  %v2275 = vsel %vm1680, %v2271, -inf
  %2276 = vmax.xlane.f32.xlu0 %v2275
  %v2277 = vpop.xlane.xlu0 %2276
  %v2278 = vmax.f32 %v2274, %v2277
  %v2279 = vrot.slane %v2278, 4
  %v2280 = vmax.f32 %v2278, %v2279
  %v2281 = vrot.slane %v2280, 2
  %v2282 = vmax.f32 %v2280, %v2281
  %v2283 = vrot.slane %v2282, 1
  %v2284 = vmax.f32 %v2282, %v2283
  %vm2285 = vcmp.ge.f32.partialorder %v2270, %v2284
  %vm2286 = vcmp.ge.f32.partialorder %v2271, %v2284
  %v2287 = vsel %vm2285, %v1623, 1e+09
  %v2288 = vsel %vm2286, %v1624, 1e+09
  %v2289 = vsel %vm1680, %v2287, inf
  %2290 = vmin.xlane.f32.xlu0 %v2289
  %v2291 = vpop.xlane.xlu0 %2290
  %v2292 = vsel %vm1680, %v2288, inf
  %2293 = vmin.xlane.f32.xlu0 %v2292
  %v2294 = vpop.xlane.xlu0 %2293
  %v2295 = vmin.f32 %v2291, %v2294
  %v2296 = vrot.slane %v2295, 4
  %v2297 = vmin.f32 %v2295, %v2296
  %v2298 = vrot.slane %v2297, 2
  %v2299 = vmin.f32 %v2297, %v2298
  %v2300 = vrot.slane %v2299, 1
  %v2301 = vmin.f32 %v2299, %v2300
  %vm2302 = vcmp.eq.f32.partialorder %v1623, %v2301
  %vm2303 = vcmp.eq.f32.partialorder %v1624, %v2301
  %v2304 = vsel %vm2302, %v1575, 0.0
  %v2305 = vsel %vm2303, %v1576, 0.0
  %v2306 = vsel %vm1680, %v2304, 0.0
  %2307 = vadd.xlane.f32.xlu0 %v2306
  %v2308 = vpop.xlane.xlu0 %2307
  %v2309 = vsel %vm1680, %v2305, 0.0
  %2310 = vadd.xlane.f32.xlu0 %v2309
  %v2311 = vpop.xlane.xlu0 %2310
  %v2312 = vadd.f32 %v2308, %v2311
  %v2313 = vrot.slane %v2312, 4
  %v2314 = vadd.f32 %v2312, %v2313
  %v2315 = vrot.slane %v2314, 2
  %v2316 = vadd.f32 %v2314, %v2315
  %v2317 = vrot.slane %v2316, 1
  %v2318 = vadd.f32 %v2316, %v2317
  %2319 = vst.msk [vmem:[%s14 + $0x6] sm:$0x1] %vm1694, %v2318
  %v2320 = vsel %vm2302, %v1699, 0.0
  %v2321 = vsel %vm2303, %v1701, 0.0
  %v2322 = vsel %vm1680, %v2320, 0.0
  %2323 = vadd.xlane.f32.xlu0 %v2322
  %v2324 = vpop.xlane.xlu0 %2323
  %v2325 = vsel %vm1680, %v2321, 0.0
  %2326 = vadd.xlane.f32.xlu0 %v2325
  %v2327 = vpop.xlane.xlu0 %2326
  %v2328 = vadd.f32 %v2324, %v2327
  %v2329 = vrot.slane %v2328, 4
  %v2330 = vadd.f32 %v2328, %v2329
  %v2331 = vrot.slane %v2330, 2
  %v2332 = vadd.f32 %v2330, %v2331
  %v2333 = vrot.slane %v2332, 1
  %v2334 = vadd.f32 %v2332, %v2333
  %2335 = vst.msk [vmem:[%s14 + $0x6] sm:$0x1] %vm1719, %v2334
  %v2336 = vsel %vm2302, %v1597, 0.0
  %v2337 = vsel %vm2303, %v1598, 0.0
  %v2338 = vsel %vm1680, %v2336, 0.0
  %2339 = vadd.xlane.f32.xlu0 %v2338
  %v2340 = vpop.xlane.xlu0 %2339
  %v2341 = vsel %vm1680, %v2337, 0.0
  %2342 = vadd.xlane.f32.xlu0 %v2341
  %v2343 = vpop.xlane.xlu0 %2342
  %v2344 = vadd.f32 %v2340, %v2343
  %v2345 = vrot.slane %v2344, 4
  %v2346 = vadd.f32 %v2344, %v2345
  %v2347 = vrot.slane %v2346, 2
  %v2348 = vadd.f32 %v2346, %v2347
  %v2349 = vrot.slane %v2348, 1
  %v2350 = vadd.f32 %v2348, %v2349
  %2351 = vst.msk [vmem:[%s14 + $0x6] sm:$0x1] %vm1736, %v2350
  %v2352 = vsel %vm2302, %v1741, 0.0
  %v2353 = vsel %vm2303, %v1743, 0.0
  %v2354 = vsel %vm1680, %v2352, 0.0
  %2355 = vadd.xlane.f32.xlu0 %v2354
  %v2356 = vpop.xlane.xlu0 %2355
  %v2357 = vsel %vm1680, %v2353, 0.0
  %2358 = vadd.xlane.f32.xlu0 %v2357
  %v2359 = vpop.xlane.xlu0 %2358
  %v2360 = vadd.f32 %v2356, %v2359
  %v2361 = vrot.slane %v2360, 4
  %v2362 = vadd.f32 %v2360, %v2361
  %v2363 = vrot.slane %v2362, 2
  %v2364 = vadd.f32 %v2362, %v2363
  %v2365 = vrot.slane %v2364, 1
  %v2366 = vadd.f32 %v2364, %v2365
  %2367 = vst.msk [vmem:[%s14 + $0x6] sm:$0x1] %vm1761, %v2366
  %v2368 = vsel %vm2302, -1e+09, %v2270
  %v2369 = vsel %vm2303, -1e+09, %v2271
  %v2370 = vsel %vm1680, %v2368, -inf
  %2371 = vmax.xlane.f32.xlu0 %v2370
  %v2372 = vpop.xlane.xlu0 %2371
  %v2373 = vsel %vm1680, %v2369, -inf
  %2374 = vmax.xlane.f32.xlu0 %v2373
  %v2375 = vpop.xlane.xlu0 %2374
  %v2376 = vmax.f32 %v2372, %v2375
  %v2377 = vrot.slane %v2376, 4
  %v2378 = vmax.f32 %v2376, %v2377
  %v2379 = vrot.slane %v2378, 2
  %v2380 = vmax.f32 %v2378, %v2379
  %v2381 = vrot.slane %v2380, 1
  %v2382 = vmax.f32 %v2380, %v2381
  %vm2383 = vcmp.ge.f32.partialorder %v2368, %v2382
  %vm2384 = vcmp.ge.f32.partialorder %v2369, %v2382
  %v2385 = vsel %vm2383, %v1623, 1e+09
  %v2386 = vsel %vm2384, %v1624, 1e+09
  %v2387 = vsel %vm1680, %v2385, inf
  %2388 = vmin.xlane.f32.xlu0 %v2387
  %v2389 = vpop.xlane.xlu0 %2388
  %v2390 = vsel %vm1680, %v2386, inf
  %2391 = vmin.xlane.f32.xlu0 %v2390
  %v2392 = vpop.xlane.xlu0 %2391
  %v2393 = vmin.f32 %v2389, %v2392
  %v2394 = vrot.slane %v2393, 4
  %v2395 = vmin.f32 %v2393, %v2394
  %v2396 = vrot.slane %v2395, 2
  %v2397 = vmin.f32 %v2395, %v2396
  %v2398 = vrot.slane %v2397, 1
  %v2399 = vmin.f32 %v2397, %v2398
  %vm2400 = vcmp.eq.f32.partialorder %v1623, %v2399
  %vm2401 = vcmp.eq.f32.partialorder %v1624, %v2399
  %v2402 = vsel %vm2400, %v1575, 0.0
  %v2403 = vsel %vm2401, %v1576, 0.0
  %v2404 = vsel %vm1680, %v2402, 0.0
  %2405 = vadd.xlane.f32.xlu0 %v2404
  %v2406 = vpop.xlane.xlu0 %2405
  %v2407 = vsel %vm1680, %v2403, 0.0
  %2408 = vadd.xlane.f32.xlu0 %v2407
  %v2409 = vpop.xlane.xlu0 %2408
  %v2410 = vadd.f32 %v2406, %v2409
  %v2411 = vrot.slane %v2410, 4
  %v2412 = vadd.f32 %v2410, %v2411
  %v2413 = vrot.slane %v2412, 2
  %v2414 = vadd.f32 %v2412, %v2413
  %v2415 = vrot.slane %v2414, 1
  %v2416 = vadd.f32 %v2414, %v2415
  %2417 = vst.msk [vmem:[%s14 + $0x7] sm:$0x1] %vm1694, %v2416
  %v2418 = vsel %vm2400, %v1699, 0.0
  %v2419 = vsel %vm2401, %v1701, 0.0
  %v2420 = vsel %vm1680, %v2418, 0.0
  %2421 = vadd.xlane.f32.xlu0 %v2420
  %v2422 = vpop.xlane.xlu0 %2421
  %v2423 = vsel %vm1680, %v2419, 0.0
  %2424 = vadd.xlane.f32.xlu0 %v2423
  %v2425 = vpop.xlane.xlu0 %2424
  %v2426 = vadd.f32 %v2422, %v2425
  %v2427 = vrot.slane %v2426, 4
  %v2428 = vadd.f32 %v2426, %v2427
  %v2429 = vrot.slane %v2428, 2
  %v2430 = vadd.f32 %v2428, %v2429
  %v2431 = vrot.slane %v2430, 1
  %v2432 = vadd.f32 %v2430, %v2431
  %2433 = vst.msk [vmem:[%s14 + $0x7] sm:$0x1] %vm1719, %v2432
  %v2434 = vsel %vm2400, %v1597, 0.0
  %v2435 = vsel %vm2401, %v1598, 0.0
  %v2436 = vsel %vm1680, %v2434, 0.0
  %2437 = vadd.xlane.f32.xlu0 %v2436
  %v2438 = vpop.xlane.xlu0 %2437
  %v2439 = vsel %vm1680, %v2435, 0.0
  %2440 = vadd.xlane.f32.xlu0 %v2439
  %v2441 = vpop.xlane.xlu0 %2440
  %v2442 = vadd.f32 %v2438, %v2441
  %v2443 = vrot.slane %v2442, 4
  %v2444 = vadd.f32 %v2442, %v2443
  %v2445 = vrot.slane %v2444, 2
  %v2446 = vadd.f32 %v2444, %v2445
  %v2447 = vrot.slane %v2446, 1
  %v2448 = vadd.f32 %v2446, %v2447
  %2449 = vst.msk [vmem:[%s14 + $0x7] sm:$0x1] %vm1736, %v2448
  %v2450 = vsel %vm2400, %v1741, 0.0
  %v2451 = vsel %vm2401, %v1743, 0.0
  %v2452 = vsel %vm1680, %v2450, 0.0
  %2453 = vadd.xlane.f32.xlu0 %v2452
  %v2454 = vpop.xlane.xlu0 %2453
  %v2455 = vsel %vm1680, %v2451, 0.0
  %2456 = vadd.xlane.f32.xlu0 %v2455
  %v2457 = vpop.xlane.xlu0 %2456
  %v2458 = vadd.f32 %v2454, %v2457
  %v2459 = vrot.slane %v2458, 4
  %v2460 = vadd.f32 %v2458, %v2459
  %v2461 = vrot.slane %v2460, 2
  %v2462 = vadd.f32 %v2460, %v2461
  %v2463 = vrot.slane %v2462, 1
  %v2464 = vadd.f32 %v2462, %v2463
  %2465 = vst.msk [vmem:[%s14 + $0x7] sm:$0x1] %vm1761, %v2464
  %v2466 = vsel %vm2400, -1e+09, %v2368
  %v2467 = vsel %vm2401, -1e+09, %v2369
  %v2468 = vsel %vm1680, %v2466, -inf
  %2469 = vmax.xlane.f32.xlu0 %v2468
  %v2470 = vpop.xlane.xlu0 %2469
  %v2471 = vsel %vm1680, %v2467, -inf
  %2472 = vmax.xlane.f32.xlu0 %v2471
  %v2473 = vpop.xlane.xlu0 %2472
  %v2474 = vmax.f32 %v2470, %v2473
  %v2475 = vrot.slane %v2474, 4
  %v2476 = vmax.f32 %v2474, %v2475
  %v2477 = vrot.slane %v2476, 2
  %v2478 = vmax.f32 %v2476, %v2477
  %v2479 = vrot.slane %v2478, 1
  %v2480 = vmax.f32 %v2478, %v2479
  %vm2481 = vcmp.ge.f32.partialorder %v2466, %v2480
  %vm2482 = vcmp.ge.f32.partialorder %v2467, %v2480
  %v2483 = vsel %vm2481, %v1623, 1e+09
  %v2484 = vsel %vm2482, %v1624, 1e+09
  %v2485 = vsel %vm1680, %v2483, inf
  %2486 = vmin.xlane.f32.xlu0 %v2485
  %v2487 = vpop.xlane.xlu0 %2486
  %v2488 = vsel %vm1680, %v2484, inf
  %2489 = vmin.xlane.f32.xlu0 %v2488
  %v2490 = vpop.xlane.xlu0 %2489
  %v2491 = vmin.f32 %v2487, %v2490
  %v2492 = vrot.slane %v2491, 4
  %v2493 = vmin.f32 %v2491, %v2492
  %v2494 = vrot.slane %v2493, 2
  %v2495 = vmin.f32 %v2493, %v2494
  %v2496 = vrot.slane %v2495, 1
  %v2497 = vmin.f32 %v2495, %v2496
  %vm2498 = vcmp.eq.f32.partialorder %v1623, %v2497
  %vm2499 = vcmp.eq.f32.partialorder %v1624, %v2497
  %v2500 = vsel %vm2498, %v1575, 0.0
  %v2501 = vsel %vm2499, %v1576, 0.0
  %v2502 = vsel %vm1680, %v2500, 0.0
  %2503 = vadd.xlane.f32.xlu0 %v2502
  %v2504 = vpop.xlane.xlu0 %2503
  %v2505 = vsel %vm1680, %v2501, 0.0
  %2506 = vadd.xlane.f32.xlu0 %v2505
  %v2507 = vpop.xlane.xlu0 %2506
  %v2508 = vadd.f32 %v2504, %v2507
  %v2509 = vrot.slane %v2508, 4
  %v2510 = vadd.f32 %v2508, %v2509
  %v2511 = vrot.slane %v2510, 2
  %v2512 = vadd.f32 %v2510, %v2511
  %v2513 = vrot.slane %v2512, 1
  %v2514 = vadd.f32 %v2512, %v2513
  %2515 = vst.msk [vmem:[%s14 + $0x8] sm:$0x1] %vm1694, %v2514
  %v2516 = vsel %vm2498, %v1699, 0.0
  %v2517 = vsel %vm2499, %v1701, 0.0
  %v2518 = vsel %vm1680, %v2516, 0.0
  %2519 = vadd.xlane.f32.xlu0 %v2518
  %v2520 = vpop.xlane.xlu0 %2519
  %v2521 = vsel %vm1680, %v2517, 0.0
  %2522 = vadd.xlane.f32.xlu0 %v2521
  %v2523 = vpop.xlane.xlu0 %2522
  %v2524 = vadd.f32 %v2520, %v2523
  %v2525 = vrot.slane %v2524, 4
  %v2526 = vadd.f32 %v2524, %v2525
  %v2527 = vrot.slane %v2526, 2
  %v2528 = vadd.f32 %v2526, %v2527
  %v2529 = vrot.slane %v2528, 1
  %v2530 = vadd.f32 %v2528, %v2529
  %2531 = vst.msk [vmem:[%s14 + $0x8] sm:$0x1] %vm1719, %v2530
  %v2532 = vsel %vm2498, %v1597, 0.0
  %v2533 = vsel %vm2499, %v1598, 0.0
  %v2534 = vsel %vm1680, %v2532, 0.0
  %2535 = vadd.xlane.f32.xlu0 %v2534
  %v2536 = vpop.xlane.xlu0 %2535
  %v2537 = vsel %vm1680, %v2533, 0.0
  %2538 = vadd.xlane.f32.xlu0 %v2537
  %v2539 = vpop.xlane.xlu0 %2538
  %v2540 = vadd.f32 %v2536, %v2539
  %v2541 = vrot.slane %v2540, 4
  %v2542 = vadd.f32 %v2540, %v2541
  %v2543 = vrot.slane %v2542, 2
  %v2544 = vadd.f32 %v2542, %v2543
  %v2545 = vrot.slane %v2544, 1
  %v2546 = vadd.f32 %v2544, %v2545
  %2547 = vst.msk [vmem:[%s14 + $0x8] sm:$0x1] %vm1736, %v2546
  %v2548 = vsel %vm2498, %v1741, 0.0
  %v2549 = vsel %vm2499, %v1743, 0.0
  %v2550 = vsel %vm1680, %v2548, 0.0
  %2551 = vadd.xlane.f32.xlu0 %v2550
  %v2552 = vpop.xlane.xlu0 %2551
  %v2553 = vsel %vm1680, %v2549, 0.0
  %2554 = vadd.xlane.f32.xlu0 %v2553
  %v2555 = vpop.xlane.xlu0 %2554
  %v2556 = vadd.f32 %v2552, %v2555
  %v2557 = vrot.slane %v2556, 4
  %v2558 = vadd.f32 %v2556, %v2557
  %v2559 = vrot.slane %v2558, 2
  %v2560 = vadd.f32 %v2558, %v2559
  %v2561 = vrot.slane %v2560, 1
  %v2562 = vadd.f32 %v2560, %v2561
  %2563 = vst.msk [vmem:[%s14 + $0x8] sm:$0x1] %vm1761, %v2562
  %v2564 = vsel %vm2498, -1e+09, %v2466
  %v2565 = vsel %vm2499, -1e+09, %v2467
  %v2566 = vsel %vm1680, %v2564, -inf
  %2567 = vmax.xlane.f32.xlu0 %v2566
  %v2568 = vpop.xlane.xlu0 %2567
  %v2569 = vsel %vm1680, %v2565, -inf
  %2570 = vmax.xlane.f32.xlu0 %v2569
  %v2571 = vpop.xlane.xlu0 %2570
  %v2572 = vmax.f32 %v2568, %v2571
  %v2573 = vrot.slane %v2572, 4
  %v2574 = vmax.f32 %v2572, %v2573
  %v2575 = vrot.slane %v2574, 2
  %v2576 = vmax.f32 %v2574, %v2575
  %v2577 = vrot.slane %v2576, 1
  %v2578 = vmax.f32 %v2576, %v2577
  %vm2579 = vcmp.ge.f32.partialorder %v2564, %v2578
  %vm2580 = vcmp.ge.f32.partialorder %v2565, %v2578
  %v2581 = vsel %vm2579, %v1623, 1e+09
  %v2582 = vsel %vm2580, %v1624, 1e+09
  %v2583 = vsel %vm1680, %v2581, inf
  %2584 = vmin.xlane.f32.xlu0 %v2583
  %v2585 = vpop.xlane.xlu0 %2584
  %v2586 = vsel %vm1680, %v2582, inf
  %2587 = vmin.xlane.f32.xlu0 %v2586
  %v2588 = vpop.xlane.xlu0 %2587
  %v2589 = vmin.f32 %v2585, %v2588
  %v2590 = vrot.slane %v2589, 4
  %v2591 = vmin.f32 %v2589, %v2590
  %v2592 = vrot.slane %v2591, 2
  %v2593 = vmin.f32 %v2591, %v2592
  %v2594 = vrot.slane %v2593, 1
  %v2595 = vmin.f32 %v2593, %v2594
  %vm2596 = vcmp.eq.f32.partialorder %v1623, %v2595
  %vm2597 = vcmp.eq.f32.partialorder %v1624, %v2595
  %v2598 = vsel %vm2596, %v1575, 0.0
  %v2599 = vsel %vm2597, %v1576, 0.0
  %v2600 = vsel %vm1680, %v2598, 0.0
  %2601 = vadd.xlane.f32.xlu0 %v2600
  %v2602 = vpop.xlane.xlu0 %2601
  %v2603 = vsel %vm1680, %v2599, 0.0
  %2604 = vadd.xlane.f32.xlu0 %v2603
  %v2605 = vpop.xlane.xlu0 %2604
  %v2606 = vadd.f32 %v2602, %v2605
  %v2607 = vrot.slane %v2606, 4
  %v2608 = vadd.f32 %v2606, %v2607
  %v2609 = vrot.slane %v2608, 2
  %v2610 = vadd.f32 %v2608, %v2609
  %v2611 = vrot.slane %v2610, 1
  %v2612 = vadd.f32 %v2610, %v2611
  %2613 = vst.msk [vmem:[%s14 + $0x9] sm:$0x1] %vm1694, %v2612
  %v2614 = vsel %vm2596, %v1699, 0.0
  %v2615 = vsel %vm2597, %v1701, 0.0
  %v2616 = vsel %vm1680, %v2614, 0.0
  %2617 = vadd.xlane.f32.xlu0 %v2616
  %v2618 = vpop.xlane.xlu0 %2617
  %v2619 = vsel %vm1680, %v2615, 0.0
  %2620 = vadd.xlane.f32.xlu0 %v2619
  %v2621 = vpop.xlane.xlu0 %2620
  %v2622 = vadd.f32 %v2618, %v2621
  %v2623 = vrot.slane %v2622, 4
  %v2624 = vadd.f32 %v2622, %v2623
  %v2625 = vrot.slane %v2624, 2
  %v2626 = vadd.f32 %v2624, %v2625
  %v2627 = vrot.slane %v2626, 1
  %v2628 = vadd.f32 %v2626, %v2627
  %2629 = vst.msk [vmem:[%s14 + $0x9] sm:$0x1] %vm1719, %v2628
  %v2630 = vsel %vm2596, %v1597, 0.0
  %v2631 = vsel %vm2597, %v1598, 0.0
  %v2632 = vsel %vm1680, %v2630, 0.0
  %2633 = vadd.xlane.f32.xlu0 %v2632
  %v2634 = vpop.xlane.xlu0 %2633
  %v2635 = vsel %vm1680, %v2631, 0.0
  %2636 = vadd.xlane.f32.xlu0 %v2635
  %v2637 = vpop.xlane.xlu0 %2636
  %v2638 = vadd.f32 %v2634, %v2637
  %v2639 = vrot.slane %v2638, 4
  %v2640 = vadd.f32 %v2638, %v2639
  %v2641 = vrot.slane %v2640, 2
  %v2642 = vadd.f32 %v2640, %v2641
  %v2643 = vrot.slane %v2642, 1
  %v2644 = vadd.f32 %v2642, %v2643
  %2645 = vst.msk [vmem:[%s14 + $0x9] sm:$0x1] %vm1736, %v2644
  %v2646 = vsel %vm2596, %v1741, 0.0
  %v2647 = vsel %vm2597, %v1743, 0.0
  %v2648 = vsel %vm1680, %v2646, 0.0
  %2649 = vadd.xlane.f32.xlu0 %v2648
  %v2650 = vpop.xlane.xlu0 %2649
  %v2651 = vsel %vm1680, %v2647, 0.0
  %2652 = vadd.xlane.f32.xlu0 %v2651
  %v2653 = vpop.xlane.xlu0 %2652
  %v2654 = vadd.f32 %v2650, %v2653
  %v2655 = vrot.slane %v2654, 4
  %v2656 = vadd.f32 %v2654, %v2655
  %v2657 = vrot.slane %v2656, 2
  %v2658 = vadd.f32 %v2656, %v2657
  %v2659 = vrot.slane %v2658, 1
  %v2660 = vadd.f32 %v2658, %v2659
  %2661 = vst.msk [vmem:[%s14 + $0x9] sm:$0x1] %vm1761, %v2660
  %v2662 = vsel %vm2596, -1e+09, %v2564
  %v2663 = vsel %vm2597, -1e+09, %v2565
  %v2664 = vsel %vm1680, %v2662, -inf
  %2665 = vmax.xlane.f32.xlu0 %v2664
  %v2666 = vpop.xlane.xlu0 %2665
  %v2667 = vsel %vm1680, %v2663, -inf
  %2668 = vmax.xlane.f32.xlu0 %v2667
  %v2669 = vpop.xlane.xlu0 %2668
  %v2670 = vmax.f32 %v2666, %v2669
  %v2671 = vrot.slane %v2670, 4
  %v2672 = vmax.f32 %v2670, %v2671
  %v2673 = vrot.slane %v2672, 2
  %v2674 = vmax.f32 %v2672, %v2673
  %v2675 = vrot.slane %v2674, 1
  %v2676 = vmax.f32 %v2674, %v2675
  %vm2677 = vcmp.ge.f32.partialorder %v2662, %v2676
  %vm2678 = vcmp.ge.f32.partialorder %v2663, %v2676
  %v2679 = vsel %vm2677, %v1623, 1e+09
  %v2680 = vsel %vm2678, %v1624, 1e+09
  %v2681 = vsel %vm1680, %v2679, inf
  %2682 = vmin.xlane.f32.xlu0 %v2681
  %v2683 = vpop.xlane.xlu0 %2682
  %v2684 = vsel %vm1680, %v2680, inf
  %2685 = vmin.xlane.f32.xlu0 %v2684
  %v2686 = vpop.xlane.xlu0 %2685
  %v2687 = vmin.f32 %v2683, %v2686
  %v2688 = vrot.slane %v2687, 4
  %v2689 = vmin.f32 %v2687, %v2688
  %v2690 = vrot.slane %v2689, 2
  %v2691 = vmin.f32 %v2689, %v2690
  %v2692 = vrot.slane %v2691, 1
  %v2693 = vmin.f32 %v2691, %v2692
  %vm2694 = vcmp.eq.f32.partialorder %v1623, %v2693
  %vm2695 = vcmp.eq.f32.partialorder %v1624, %v2693
  %v2696 = vsel %vm2694, %v1575, 0.0
  %v2697 = vsel %vm2695, %v1576, 0.0
  %v2698 = vsel %vm1680, %v2696, 0.0
  %2699 = vadd.xlane.f32.xlu0 %v2698
  %v2700 = vpop.xlane.xlu0 %2699
  %v2701 = vsel %vm1680, %v2697, 0.0
  %2702 = vadd.xlane.f32.xlu0 %v2701
  %v2703 = vpop.xlane.xlu0 %2702
  %v2704 = vadd.f32 %v2700, %v2703
  %v2705 = vrot.slane %v2704, 4
  %v2706 = vadd.f32 %v2704, %v2705
  %v2707 = vrot.slane %v2706, 2
  %v2708 = vadd.f32 %v2706, %v2707
  %v2709 = vrot.slane %v2708, 1
  %v2710 = vadd.f32 %v2708, %v2709
  %2711 = vst.msk [vmem:[%s14 + $0xa] sm:$0x1] %vm1694, %v2710
  %v2712 = vsel %vm2694, %v1699, 0.0
  %v2713 = vsel %vm2695, %v1701, 0.0
  %v2714 = vsel %vm1680, %v2712, 0.0
  %2715 = vadd.xlane.f32.xlu0 %v2714
  %v2716 = vpop.xlane.xlu0 %2715
  %v2717 = vsel %vm1680, %v2713, 0.0
  %2718 = vadd.xlane.f32.xlu0 %v2717
  %v2719 = vpop.xlane.xlu0 %2718
  %v2720 = vadd.f32 %v2716, %v2719
  %v2721 = vrot.slane %v2720, 4
  %v2722 = vadd.f32 %v2720, %v2721
  %v2723 = vrot.slane %v2722, 2
  %v2724 = vadd.f32 %v2722, %v2723
  %v2725 = vrot.slane %v2724, 1
  %v2726 = vadd.f32 %v2724, %v2725
  %2727 = vst.msk [vmem:[%s14 + $0xa] sm:$0x1] %vm1719, %v2726
  %v2728 = vsel %vm2694, %v1597, 0.0
  %v2729 = vsel %vm2695, %v1598, 0.0
  %v2730 = vsel %vm1680, %v2728, 0.0
  %2731 = vadd.xlane.f32.xlu0 %v2730
  %v2732 = vpop.xlane.xlu0 %2731
  %v2733 = vsel %vm1680, %v2729, 0.0
  %2734 = vadd.xlane.f32.xlu0 %v2733
  %v2735 = vpop.xlane.xlu0 %2734
  %v2736 = vadd.f32 %v2732, %v2735
  %v2737 = vrot.slane %v2736, 4
  %v2738 = vadd.f32 %v2736, %v2737
  %v2739 = vrot.slane %v2738, 2
  %v2740 = vadd.f32 %v2738, %v2739
  %v2741 = vrot.slane %v2740, 1
  %v2742 = vadd.f32 %v2740, %v2741
  %2743 = vst.msk [vmem:[%s14 + $0xa] sm:$0x1] %vm1736, %v2742
  %v2744 = vsel %vm2694, %v1741, 0.0
  %v2745 = vsel %vm2695, %v1743, 0.0
  %v2746 = vsel %vm1680, %v2744, 0.0
  %2747 = vadd.xlane.f32.xlu0 %v2746
  %v2748 = vpop.xlane.xlu0 %2747
  %v2749 = vsel %vm1680, %v2745, 0.0
  %2750 = vadd.xlane.f32.xlu0 %v2749
  %v2751 = vpop.xlane.xlu0 %2750
  %v2752 = vadd.f32 %v2748, %v2751
  %v2753 = vrot.slane %v2752, 4
  %v2754 = vadd.f32 %v2752, %v2753
  %v2755 = vrot.slane %v2754, 2
  %v2756 = vadd.f32 %v2754, %v2755
  %v2757 = vrot.slane %v2756, 1
  %v2758 = vadd.f32 %v2756, %v2757
  %2759 = vst.msk [vmem:[%s14 + $0xa] sm:$0x1] %vm1761, %v2758
  %v2760 = vsel %vm2694, -1e+09, %v2662
  %v2761 = vsel %vm2695, -1e+09, %v2663
  %v2762 = vsel %vm1680, %v2760, -inf
  %2763 = vmax.xlane.f32.xlu0 %v2762
  %v2764 = vpop.xlane.xlu0 %2763
  %v2765 = vsel %vm1680, %v2761, -inf
  %2766 = vmax.xlane.f32.xlu0 %v2765
  %v2767 = vpop.xlane.xlu0 %2766
  %v2768 = vmax.f32 %v2764, %v2767
  %v2769 = vrot.slane %v2768, 4
  %v2770 = vmax.f32 %v2768, %v2769
  %v2771 = vrot.slane %v2770, 2
  %v2772 = vmax.f32 %v2770, %v2771
  %v2773 = vrot.slane %v2772, 1
  %v2774 = vmax.f32 %v2772, %v2773
  %vm2775 = vcmp.ge.f32.partialorder %v2760, %v2774
  %vm2776 = vcmp.ge.f32.partialorder %v2761, %v2774
  %v2777 = vsel %vm2775, %v1623, 1e+09
  %v2778 = vsel %vm2776, %v1624, 1e+09
  %v2779 = vsel %vm1680, %v2777, inf
  %2780 = vmin.xlane.f32.xlu0 %v2779
  %v2781 = vpop.xlane.xlu0 %2780
  %v2782 = vsel %vm1680, %v2778, inf
  %2783 = vmin.xlane.f32.xlu0 %v2782
  %v2784 = vpop.xlane.xlu0 %2783
  %v2785 = vmin.f32 %v2781, %v2784
  %v2786 = vrot.slane %v2785, 4
  %v2787 = vmin.f32 %v2785, %v2786
  %v2788 = vrot.slane %v2787, 2
  %v2789 = vmin.f32 %v2787, %v2788
  %v2790 = vrot.slane %v2789, 1
  %v2791 = vmin.f32 %v2789, %v2790
  %vm2792 = vcmp.eq.f32.partialorder %v1623, %v2791
  %vm2793 = vcmp.eq.f32.partialorder %v1624, %v2791
  %v2794 = vsel %vm2792, %v1575, 0.0
  %v2795 = vsel %vm2793, %v1576, 0.0
  %v2796 = vsel %vm1680, %v2794, 0.0
  %2797 = vadd.xlane.f32.xlu0 %v2796
  %v2798 = vpop.xlane.xlu0 %2797
  %v2799 = vsel %vm1680, %v2795, 0.0
  %2800 = vadd.xlane.f32.xlu0 %v2799
  %v2801 = vpop.xlane.xlu0 %2800
  %v2802 = vadd.f32 %v2798, %v2801
  %v2803 = vrot.slane %v2802, 4
  %v2804 = vadd.f32 %v2802, %v2803
  %v2805 = vrot.slane %v2804, 2
  %v2806 = vadd.f32 %v2804, %v2805
  %v2807 = vrot.slane %v2806, 1
  %v2808 = vadd.f32 %v2806, %v2807
  %2809 = vst.msk [vmem:[%s14 + $0xb] sm:$0x1] %vm1694, %v2808
  %v2810 = vsel %vm2792, %v1699, 0.0
  %v2811 = vsel %vm2793, %v1701, 0.0
  %v2812 = vsel %vm1680, %v2810, 0.0
  %2813 = vadd.xlane.f32.xlu0 %v2812
  %v2814 = vpop.xlane.xlu0 %2813
  %v2815 = vsel %vm1680, %v2811, 0.0
  %2816 = vadd.xlane.f32.xlu0 %v2815
  %v2817 = vpop.xlane.xlu0 %2816
  %v2818 = vadd.f32 %v2814, %v2817
  %v2819 = vrot.slane %v2818, 4
  %v2820 = vadd.f32 %v2818, %v2819
  %v2821 = vrot.slane %v2820, 2
  %v2822 = vadd.f32 %v2820, %v2821
  %v2823 = vrot.slane %v2822, 1
  %v2824 = vadd.f32 %v2822, %v2823
  %2825 = vst.msk [vmem:[%s14 + $0xb] sm:$0x1] %vm1719, %v2824
  %v2826 = vsel %vm2792, %v1597, 0.0
  %v2827 = vsel %vm2793, %v1598, 0.0
  %v2828 = vsel %vm1680, %v2826, 0.0
  %2829 = vadd.xlane.f32.xlu0 %v2828
  %v2830 = vpop.xlane.xlu0 %2829
  %v2831 = vsel %vm1680, %v2827, 0.0
  %2832 = vadd.xlane.f32.xlu0 %v2831
  %v2833 = vpop.xlane.xlu0 %2832
  %v2834 = vadd.f32 %v2830, %v2833
  %v2835 = vrot.slane %v2834, 4
  %v2836 = vadd.f32 %v2834, %v2835
  %v2837 = vrot.slane %v2836, 2
  %v2838 = vadd.f32 %v2836, %v2837
  %v2839 = vrot.slane %v2838, 1
  %v2840 = vadd.f32 %v2838, %v2839
  %2841 = vst.msk [vmem:[%s14 + $0xb] sm:$0x1] %vm1736, %v2840
  %v2842 = vsel %vm2792, %v1741, 0.0
  %v2843 = vsel %vm2793, %v1743, 0.0
  %v2844 = vsel %vm1680, %v2842, 0.0
  %2845 = vadd.xlane.f32.xlu0 %v2844
  %v2846 = vpop.xlane.xlu0 %2845
  %v2847 = vsel %vm1680, %v2843, 0.0
  %2848 = vadd.xlane.f32.xlu0 %v2847
  %v2849 = vpop.xlane.xlu0 %2848
  %v2850 = vadd.f32 %v2846, %v2849
  %v2851 = vrot.slane %v2850, 4
  %v2852 = vadd.f32 %v2850, %v2851
  %v2853 = vrot.slane %v2852, 2
  %v2854 = vadd.f32 %v2852, %v2853
  %v2855 = vrot.slane %v2854, 1
  %v2856 = vadd.f32 %v2854, %v2855
  %2857 = vst.msk [vmem:[%s14 + $0xb] sm:$0x1] %vm1761, %v2856
  %v2858 = vsel %vm2792, -1e+09, %v2760
  %v2859 = vsel %vm2793, -1e+09, %v2761
  %v2860 = vsel %vm1680, %v2858, -inf
  %2861 = vmax.xlane.f32.xlu0 %v2860
  %v2862 = vpop.xlane.xlu0 %2861
  %v2863 = vsel %vm1680, %v2859, -inf
  %2864 = vmax.xlane.f32.xlu0 %v2863
  %v2865 = vpop.xlane.xlu0 %2864
  %v2866 = vmax.f32 %v2862, %v2865
  %v2867 = vrot.slane %v2866, 4
  %v2868 = vmax.f32 %v2866, %v2867
  %v2869 = vrot.slane %v2868, 2
  %v2870 = vmax.f32 %v2868, %v2869
  %v2871 = vrot.slane %v2870, 1
  %v2872 = vmax.f32 %v2870, %v2871
  %vm2873 = vcmp.ge.f32.partialorder %v2858, %v2872
  %vm2874 = vcmp.ge.f32.partialorder %v2859, %v2872
  %v2875 = vsel %vm2873, %v1623, 1e+09
  %v2876 = vsel %vm2874, %v1624, 1e+09
  %v2877 = vsel %vm1680, %v2875, inf
  %2878 = vmin.xlane.f32.xlu0 %v2877
  %v2879 = vpop.xlane.xlu0 %2878
  %v2880 = vsel %vm1680, %v2876, inf
  %2881 = vmin.xlane.f32.xlu0 %v2880
  %v2882 = vpop.xlane.xlu0 %2881
  %v2883 = vmin.f32 %v2879, %v2882
  %v2884 = vrot.slane %v2883, 4
  %v2885 = vmin.f32 %v2883, %v2884
  %v2886 = vrot.slane %v2885, 2
  %v2887 = vmin.f32 %v2885, %v2886
  %v2888 = vrot.slane %v2887, 1
  %v2889 = vmin.f32 %v2887, %v2888
  %vm2890 = vcmp.eq.f32.partialorder %v1623, %v2889
  %vm2891 = vcmp.eq.f32.partialorder %v1624, %v2889
  %v2892 = vsel %vm2890, %v1575, 0.0
  %v2893 = vsel %vm2891, %v1576, 0.0
  %v2894 = vsel %vm1680, %v2892, 0.0
  %2895 = vadd.xlane.f32.xlu0 %v2894
  %v2896 = vpop.xlane.xlu0 %2895
  %v2897 = vsel %vm1680, %v2893, 0.0
  %2898 = vadd.xlane.f32.xlu0 %v2897
  %v2899 = vpop.xlane.xlu0 %2898
  %v2900 = vadd.f32 %v2896, %v2899
  %v2901 = vrot.slane %v2900, 4
  %v2902 = vadd.f32 %v2900, %v2901
  %v2903 = vrot.slane %v2902, 2
  %v2904 = vadd.f32 %v2902, %v2903
  %v2905 = vrot.slane %v2904, 1
  %v2906 = vadd.f32 %v2904, %v2905
  %2907 = vst.msk [vmem:[%s14 + $0xc] sm:$0x1] %vm1694, %v2906
  %v2908 = vsel %vm2890, %v1699, 0.0
  %v2909 = vsel %vm2891, %v1701, 0.0
  %v2910 = vsel %vm1680, %v2908, 0.0
  %2911 = vadd.xlane.f32.xlu0 %v2910
  %v2912 = vpop.xlane.xlu0 %2911
  %v2913 = vsel %vm1680, %v2909, 0.0
  %2914 = vadd.xlane.f32.xlu0 %v2913
  %v2915 = vpop.xlane.xlu0 %2914
  %v2916 = vadd.f32 %v2912, %v2915
  %v2917 = vrot.slane %v2916, 4
  %v2918 = vadd.f32 %v2916, %v2917
  %v2919 = vrot.slane %v2918, 2
  %v2920 = vadd.f32 %v2918, %v2919
  %v2921 = vrot.slane %v2920, 1
  %v2922 = vadd.f32 %v2920, %v2921
  %2923 = vst.msk [vmem:[%s14 + $0xc] sm:$0x1] %vm1719, %v2922
  %v2924 = vsel %vm2890, %v1597, 0.0
  %v2925 = vsel %vm2891, %v1598, 0.0
  %v2926 = vsel %vm1680, %v2924, 0.0
  %2927 = vadd.xlane.f32.xlu0 %v2926
  %v2928 = vpop.xlane.xlu0 %2927
  %v2929 = vsel %vm1680, %v2925, 0.0
  %2930 = vadd.xlane.f32.xlu0 %v2929
  %v2931 = vpop.xlane.xlu0 %2930
  %v2932 = vadd.f32 %v2928, %v2931
  %v2933 = vrot.slane %v2932, 4
  %v2934 = vadd.f32 %v2932, %v2933
  %v2935 = vrot.slane %v2934, 2
  %v2936 = vadd.f32 %v2934, %v2935
  %v2937 = vrot.slane %v2936, 1
  %v2938 = vadd.f32 %v2936, %v2937
  %2939 = vst.msk [vmem:[%s14 + $0xc] sm:$0x1] %vm1736, %v2938
  %v2940 = vsel %vm2890, %v1741, 0.0
  %v2941 = vsel %vm2891, %v1743, 0.0
  %v2942 = vsel %vm1680, %v2940, 0.0
  %2943 = vadd.xlane.f32.xlu0 %v2942
  %v2944 = vpop.xlane.xlu0 %2943
  %v2945 = vsel %vm1680, %v2941, 0.0
  %2946 = vadd.xlane.f32.xlu0 %v2945
  %v2947 = vpop.xlane.xlu0 %2946
  %v2948 = vadd.f32 %v2944, %v2947
  %v2949 = vrot.slane %v2948, 4
  %v2950 = vadd.f32 %v2948, %v2949
  %v2951 = vrot.slane %v2950, 2
  %v2952 = vadd.f32 %v2950, %v2951
  %v2953 = vrot.slane %v2952, 1
  %v2954 = vadd.f32 %v2952, %v2953
  %2955 = vst.msk [vmem:[%s14 + $0xc] sm:$0x1] %vm1761, %v2954
  %v2956 = vsel %vm2890, -1e+09, %v2858
  %v2957 = vsel %vm2891, -1e+09, %v2859
  %v2958 = vsel %vm1680, %v2956, -inf
  %2959 = vmax.xlane.f32.xlu0 %v2958
  %v2960 = vpop.xlane.xlu0 %2959
  %v2961 = vsel %vm1680, %v2957, -inf
  %2962 = vmax.xlane.f32.xlu0 %v2961
  %v2963 = vpop.xlane.xlu0 %2962
  %v2964 = vmax.f32 %v2960, %v2963
  %v2965 = vrot.slane %v2964, 4
  %v2966 = vmax.f32 %v2964, %v2965
  %v2967 = vrot.slane %v2966, 2
  %v2968 = vmax.f32 %v2966, %v2967
  %v2969 = vrot.slane %v2968, 1
  %v2970 = vmax.f32 %v2968, %v2969
  %vm2971 = vcmp.ge.f32.partialorder %v2956, %v2970
  %vm2972 = vcmp.ge.f32.partialorder %v2957, %v2970
  %v2973 = vsel %vm2971, %v1623, 1e+09
  %v2974 = vsel %vm2972, %v1624, 1e+09
  %v2975 = vsel %vm1680, %v2973, inf
  %2976 = vmin.xlane.f32.xlu0 %v2975
  %v2977 = vpop.xlane.xlu0 %2976
  %v2978 = vsel %vm1680, %v2974, inf
  %2979 = vmin.xlane.f32.xlu0 %v2978
  %v2980 = vpop.xlane.xlu0 %2979
  %v2981 = vmin.f32 %v2977, %v2980
  %v2982 = vrot.slane %v2981, 4
  %v2983 = vmin.f32 %v2981, %v2982
  %v2984 = vrot.slane %v2983, 2
  %v2985 = vmin.f32 %v2983, %v2984
  %v2986 = vrot.slane %v2985, 1
  %v2987 = vmin.f32 %v2985, %v2986
  %vm2988 = vcmp.eq.f32.partialorder %v1623, %v2987
  %vm2989 = vcmp.eq.f32.partialorder %v1624, %v2987
  %v2990 = vsel %vm2988, %v1575, 0.0
  %v2991 = vsel %vm2989, %v1576, 0.0
  %v2992 = vsel %vm1680, %v2990, 0.0
  %2993 = vadd.xlane.f32.xlu0 %v2992
  %v2994 = vpop.xlane.xlu0 %2993
  %v2995 = vsel %vm1680, %v2991, 0.0
  %2996 = vadd.xlane.f32.xlu0 %v2995
  %v2997 = vpop.xlane.xlu0 %2996
  %v2998 = vadd.f32 %v2994, %v2997
  %v2999 = vrot.slane %v2998, 4
  %v3000 = vadd.f32 %v2998, %v2999
  %v3001 = vrot.slane %v3000, 2
  %v3002 = vadd.f32 %v3000, %v3001
  %v3003 = vrot.slane %v3002, 1
  %v3004 = vadd.f32 %v3002, %v3003
  %3005 = vst.msk [vmem:[%s14 + $0xd] sm:$0x1] %vm1694, %v3004
  %v3006 = vsel %vm2988, %v1699, 0.0
  %v3007 = vsel %vm2989, %v1701, 0.0
  %v3008 = vsel %vm1680, %v3006, 0.0
  %3009 = vadd.xlane.f32.xlu0 %v3008
  %v3010 = vpop.xlane.xlu0 %3009
  %v3011 = vsel %vm1680, %v3007, 0.0
  %3012 = vadd.xlane.f32.xlu0 %v3011
  %v3013 = vpop.xlane.xlu0 %3012
  %v3014 = vadd.f32 %v3010, %v3013
  %v3015 = vrot.slane %v3014, 4
  %v3016 = vadd.f32 %v3014, %v3015
  %v3017 = vrot.slane %v3016, 2
  %v3018 = vadd.f32 %v3016, %v3017
  %v3019 = vrot.slane %v3018, 1
  %v3020 = vadd.f32 %v3018, %v3019
  %3021 = vst.msk [vmem:[%s14 + $0xd] sm:$0x1] %vm1719, %v3020
  %v3022 = vsel %vm2988, %v1597, 0.0
  %v3023 = vsel %vm2989, %v1598, 0.0
  %v3024 = vsel %vm1680, %v3022, 0.0
  %3025 = vadd.xlane.f32.xlu0 %v3024
  %v3026 = vpop.xlane.xlu0 %3025
  %v3027 = vsel %vm1680, %v3023, 0.0
  %3028 = vadd.xlane.f32.xlu0 %v3027
  %v3029 = vpop.xlane.xlu0 %3028
  %v3030 = vadd.f32 %v3026, %v3029
  %v3031 = vrot.slane %v3030, 4
  %v3032 = vadd.f32 %v3030, %v3031
  %v3033 = vrot.slane %v3032, 2
  %v3034 = vadd.f32 %v3032, %v3033
  %v3035 = vrot.slane %v3034, 1
  %v3036 = vadd.f32 %v3034, %v3035
  %3037 = vst.msk [vmem:[%s14 + $0xd] sm:$0x1] %vm1736, %v3036
  %v3038 = vsel %vm2988, %v1741, 0.0
  %v3039 = vsel %vm2989, %v1743, 0.0
  %v3040 = vsel %vm1680, %v3038, 0.0
  %3041 = vadd.xlane.f32.xlu0 %v3040
  %v3042 = vpop.xlane.xlu0 %3041
  %v3043 = vsel %vm1680, %v3039, 0.0
  %3044 = vadd.xlane.f32.xlu0 %v3043
  %v3045 = vpop.xlane.xlu0 %3044
  %v3046 = vadd.f32 %v3042, %v3045
  %v3047 = vrot.slane %v3046, 4
  %v3048 = vadd.f32 %v3046, %v3047
  %v3049 = vrot.slane %v3048, 2
  %v3050 = vadd.f32 %v3048, %v3049
  %v3051 = vrot.slane %v3050, 1
  %v3052 = vadd.f32 %v3050, %v3051
  %3053 = vst.msk [vmem:[%s14 + $0xd] sm:$0x1] %vm1761, %v3052
  %v3054 = vsel %vm2988, -1e+09, %v2956
  %v3055 = vsel %vm2989, -1e+09, %v2957
  %v3056 = vsel %vm1680, %v3054, -inf
  %3057 = vmax.xlane.f32.xlu0 %v3056
  %v3058 = vpop.xlane.xlu0 %3057
  %v3059 = vsel %vm1680, %v3055, -inf
  %3060 = vmax.xlane.f32.xlu0 %v3059
  %v3061 = vpop.xlane.xlu0 %3060
  %v3062 = vmax.f32 %v3058, %v3061
  %v3063 = vrot.slane %v3062, 4
  %v3064 = vmax.f32 %v3062, %v3063
  %v3065 = vrot.slane %v3064, 2
  %v3066 = vmax.f32 %v3064, %v3065
  %v3067 = vrot.slane %v3066, 1
  %v3068 = vmax.f32 %v3066, %v3067
  %vm3069 = vcmp.ge.f32.partialorder %v3054, %v3068
  %vm3070 = vcmp.ge.f32.partialorder %v3055, %v3068
  %v3071 = vsel %vm3069, %v1623, 1e+09
  %v3072 = vsel %vm3070, %v1624, 1e+09
  %v3073 = vsel %vm1680, %v3071, inf
  %3074 = vmin.xlane.f32.xlu0 %v3073
  %v3075 = vpop.xlane.xlu0 %3074
  %v3076 = vsel %vm1680, %v3072, inf
  %3077 = vmin.xlane.f32.xlu0 %v3076
  %v3078 = vpop.xlane.xlu0 %3077
  %v3079 = vmin.f32 %v3075, %v3078
  %v3080 = vrot.slane %v3079, 4
  %v3081 = vmin.f32 %v3079, %v3080
  %v3082 = vrot.slane %v3081, 2
  %v3083 = vmin.f32 %v3081, %v3082
  %v3084 = vrot.slane %v3083, 1
  %v3085 = vmin.f32 %v3083, %v3084
  %vm3086 = vcmp.eq.f32.partialorder %v1623, %v3085
  %vm3087 = vcmp.eq.f32.partialorder %v1624, %v3085
  %v3088 = vsel %vm3086, %v1575, 0.0
  %v3089 = vsel %vm3087, %v1576, 0.0
  %v3090 = vsel %vm1680, %v3088, 0.0
  %3091 = vadd.xlane.f32.xlu0 %v3090
  %v3092 = vpop.xlane.xlu0 %3091
  %v3093 = vsel %vm1680, %v3089, 0.0
  %3094 = vadd.xlane.f32.xlu0 %v3093
  %v3095 = vpop.xlane.xlu0 %3094
  %v3096 = vadd.f32 %v3092, %v3095
  %v3097 = vrot.slane %v3096, 4
  %v3098 = vadd.f32 %v3096, %v3097
  %v3099 = vrot.slane %v3098, 2
  %v3100 = vadd.f32 %v3098, %v3099
  %v3101 = vrot.slane %v3100, 1
  %v3102 = vadd.f32 %v3100, %v3101
  %3103 = vst.msk [vmem:[%s14 + $0xe] sm:$0x1] %vm1694, %v3102
  %v3104 = vsel %vm3086, %v1699, 0.0
  %v3105 = vsel %vm3087, %v1701, 0.0
  %v3106 = vsel %vm1680, %v3104, 0.0
  %3107 = vadd.xlane.f32.xlu0 %v3106
  %v3108 = vpop.xlane.xlu0 %3107
  %v3109 = vsel %vm1680, %v3105, 0.0
  %3110 = vadd.xlane.f32.xlu0 %v3109
  %v3111 = vpop.xlane.xlu0 %3110
  %v3112 = vadd.f32 %v3108, %v3111
  %v3113 = vrot.slane %v3112, 4
  %v3114 = vadd.f32 %v3112, %v3113
  %v3115 = vrot.slane %v3114, 2
  %v3116 = vadd.f32 %v3114, %v3115
  %v3117 = vrot.slane %v3116, 1
  %v3118 = vadd.f32 %v3116, %v3117
  %3119 = vst.msk [vmem:[%s14 + $0xe] sm:$0x1] %vm1719, %v3118
  %v3120 = vsel %vm3086, %v1597, 0.0
  %v3121 = vsel %vm3087, %v1598, 0.0
  %v3122 = vsel %vm1680, %v3120, 0.0
  %3123 = vadd.xlane.f32.xlu0 %v3122
  %v3124 = vpop.xlane.xlu0 %3123
  %v3125 = vsel %vm1680, %v3121, 0.0
  %3126 = vadd.xlane.f32.xlu0 %v3125
  %v3127 = vpop.xlane.xlu0 %3126
  %v3128 = vadd.f32 %v3124, %v3127
  %v3129 = vrot.slane %v3128, 4
  %v3130 = vadd.f32 %v3128, %v3129
  %v3131 = vrot.slane %v3130, 2
  %v3132 = vadd.f32 %v3130, %v3131
  %v3133 = vrot.slane %v3132, 1
  %v3134 = vadd.f32 %v3132, %v3133
  %3135 = vst.msk [vmem:[%s14 + $0xe] sm:$0x1] %vm1736, %v3134
  %v3136 = vsel %vm3086, %v1741, 0.0
  %v3137 = vsel %vm3087, %v1743, 0.0
  %v3138 = vsel %vm1680, %v3136, 0.0
  %3139 = vadd.xlane.f32.xlu0 %v3138
  %v3140 = vpop.xlane.xlu0 %3139
  %v3141 = vsel %vm1680, %v3137, 0.0
  %3142 = vadd.xlane.f32.xlu0 %v3141
  %v3143 = vpop.xlane.xlu0 %3142
  %v3144 = vadd.f32 %v3140, %v3143
  %v3145 = vrot.slane %v3144, 4
  %v3146 = vadd.f32 %v3144, %v3145
  %v3147 = vrot.slane %v3146, 2
  %v3148 = vadd.f32 %v3146, %v3147
  %v3149 = vrot.slane %v3148, 1
  %v3150 = vadd.f32 %v3148, %v3149
  %3151 = vst.msk [vmem:[%s14 + $0xe] sm:$0x1] %vm1761, %v3150
  %v3152 = vsel %vm3086, -1e+09, %v3054
  %v3153 = vsel %vm3087, -1e+09, %v3055
  %v3154 = vsel %vm1680, %v3152, -inf
  %3155 = vmax.xlane.f32.xlu0 %v3154
  %v3156 = vpop.xlane.xlu0 %3155
  %v3157 = vsel %vm1680, %v3153, -inf
  %3158 = vmax.xlane.f32.xlu0 %v3157
  %v3159 = vpop.xlane.xlu0 %3158
  %v3160 = vmax.f32 %v3156, %v3159
  %v3161 = vrot.slane %v3160, 4
  %v3162 = vmax.f32 %v3160, %v3161
  %v3163 = vrot.slane %v3162, 2
  %v3164 = vmax.f32 %v3162, %v3163
  %v3165 = vrot.slane %v3164, 1
  %v3166 = vmax.f32 %v3164, %v3165
  %vm3167 = vcmp.ge.f32.partialorder %v3152, %v3166
  %vm3168 = vcmp.ge.f32.partialorder %v3153, %v3166
  %v3169 = vsel %vm3167, %v1623, 1e+09
  %v3170 = vsel %vm3168, %v1624, 1e+09
  %v3171 = vsel %vm1680, %v3169, inf
  %3172 = vmin.xlane.f32.xlu0 %v3171
  %v3173 = vpop.xlane.xlu0 %3172
  %v3174 = vsel %vm1680, %v3170, inf
  %3175 = vmin.xlane.f32.xlu0 %v3174
  %v3176 = vpop.xlane.xlu0 %3175
  %v3177 = vmin.f32 %v3173, %v3176
  %v3178 = vrot.slane %v3177, 4
  %v3179 = vmin.f32 %v3177, %v3178
  %v3180 = vrot.slane %v3179, 2
  %v3181 = vmin.f32 %v3179, %v3180
  %v3182 = vrot.slane %v3181, 1
  %v3183 = vmin.f32 %v3181, %v3182
  %vm3184 = vcmp.eq.f32.partialorder %v1623, %v3183
  %vm3185 = vcmp.eq.f32.partialorder %v1624, %v3183
  %v3186 = vsel %vm3184, %v1575, 0.0
  %v3187 = vsel %vm3185, %v1576, 0.0
  %v3188 = vsel %vm1680, %v3186, 0.0
  %3189 = vadd.xlane.f32.xlu0 %v3188
  %v3190 = vpop.xlane.xlu0 %3189
  %v3191 = vsel %vm1680, %v3187, 0.0
  %3192 = vadd.xlane.f32.xlu0 %v3191
  %v3193 = vpop.xlane.xlu0 %3192
  %v3194 = vadd.f32 %v3190, %v3193
  %v3195 = vrot.slane %v3194, 4
  %v3196 = vadd.f32 %v3194, %v3195
  %v3197 = vrot.slane %v3196, 2
  %v3198 = vadd.f32 %v3196, %v3197
  %v3199 = vrot.slane %v3198, 1
  %v3200 = vadd.f32 %v3198, %v3199
  %3201 = vst.msk [vmem:[%s14 + $0xf] sm:$0x1] %vm1694, %v3200
  %v3202 = vsel %vm3184, %v1699, 0.0
  %v3203 = vsel %vm3185, %v1701, 0.0
  %v3204 = vsel %vm1680, %v3202, 0.0
  %3205 = vadd.xlane.f32.xlu0 %v3204
  %v3206 = vpop.xlane.xlu0 %3205
  %v3207 = vsel %vm1680, %v3203, 0.0
  %3208 = vadd.xlane.f32.xlu0 %v3207
  %v3209 = vpop.xlane.xlu0 %3208
  %v3210 = vadd.f32 %v3206, %v3209
  %v3211 = vrot.slane %v3210, 4
  %v3212 = vadd.f32 %v3210, %v3211
  %v3213 = vrot.slane %v3212, 2
  %v3214 = vadd.f32 %v3212, %v3213
  %v3215 = vrot.slane %v3214, 1
  %v3216 = vadd.f32 %v3214, %v3215
  %3217 = vst.msk [vmem:[%s14 + $0xf] sm:$0x1] %vm1719, %v3216
  %v3218 = vsel %vm3184, %v1597, 0.0
  %v3219 = vsel %vm3185, %v1598, 0.0
  %v3220 = vsel %vm1680, %v3218, 0.0
  %3221 = vadd.xlane.f32.xlu0 %v3220
  %v3222 = vpop.xlane.xlu0 %3221
  %v3223 = vsel %vm1680, %v3219, 0.0
  %3224 = vadd.xlane.f32.xlu0 %v3223
  %v3225 = vpop.xlane.xlu0 %3224
  %v3226 = vadd.f32 %v3222, %v3225
  %v3227 = vrot.slane %v3226, 4
  %v3228 = vadd.f32 %v3226, %v3227
  %v3229 = vrot.slane %v3228, 2
  %v3230 = vadd.f32 %v3228, %v3229
  %v3231 = vrot.slane %v3230, 1
  %v3232 = vadd.f32 %v3230, %v3231
  %3233 = vst.msk [vmem:[%s14 + $0xf] sm:$0x1] %vm1736, %v3232
  %v3234 = vsel %vm3184, %v1741, 0.0
  %v3235 = vsel %vm3185, %v1743, 0.0
  %v3236 = vsel %vm1680, %v3234, 0.0
  %3237 = vadd.xlane.f32.xlu0 %v3236
  %v3238 = vpop.xlane.xlu0 %3237
  %v3239 = vsel %vm1680, %v3235, 0.0
  %3240 = vadd.xlane.f32.xlu0 %v3239
  %v3241 = vpop.xlane.xlu0 %3240
  %v3242 = vadd.f32 %v3238, %v3241
  %v3243 = vrot.slane %v3242, 4
  %v3244 = vadd.f32 %v3242, %v3243
  %v3245 = vrot.slane %v3244, 2
  %v3246 = vadd.f32 %v3244, %v3245
  %v3247 = vrot.slane %v3246, 1
  %v3248 = vadd.f32 %v3246, %v3247
  %3249 = vst.msk [vmem:[%s14 + $0xf] sm:$0x1] %vm1761, %v3248
  %v3250 = vld [vmem:[%s14] sm:$0xff]
  %v3251 = vld [vmem:[%s14 + $0x8] sm:$0xff]
  %3254 = vrot.lane.b32.xlu0 %v3250, 2
  %v3255 = vpop.permute.xlu0 %3254
  %3256 = vrot.lane.b32.xlu0 %v3251, 2
  %v3257 = vpop.permute.xlu0 %3256
  %v3260 = vsub.f32 %v3250, %v3255
  %v3261 = vsub.f32 %v3251, %v3257
  %v3262 = vmul.f32 %v3260, 0.5
  %v3263 = vmul.f32 %v3261, 0.5
  %v3264 = vcvt.s32.f32 %v1618
  %v3265 = vadd.f32 %v3264, 0.5
  %v3266 = vld [vmem:[%s8] sm:$0x3]
  %v3267 = vmul.f32 %v3262, 0.0
  %v3268 = vmul.f32 %v3263, 0.0
  %3271 = vrot.lane.b32.xlu0 %v3267, 126
  %v3272 = vpop.permute.xlu0 %3271
  %3273 = vrot.lane.b32.xlu0 %v3268, 126
  %v3274 = vpop.permute.xlu0 %3273
  %v3277 = vadd.f32 %v3250, %v3272
  %v3278 = vadd.f32 %v3251, %v3274
  %3281 = vrot.lane.b32.xlu0 %v3262, 126
  %v3282 = vpop.permute.xlu0 %3281
  %3283 = vrot.lane.b32.xlu0 %v3263, 126
  %v3284 = vpop.permute.xlu0 %3283
  %v3287 = vadd.f32 %v3250, %v3282
  %v3288 = vadd.f32 %v3251, %v3284
  %3290 = vset.pattern.permute.xlu0 0
  %3291 = vperm.xlu0 %3290, %v3277
  %v3292 = vpop.permute.xlu0 %3291
  %3295 = vset.pattern.permute.xlu0 0
  %3296 = vperm.xlu0 %3295, %v3278
  %v3297 = vpop.permute.xlu0 %3296
  %vm3299 = vcmp.ge.f32.partialorder %v3265, %v3292
  %vm3300 = vcmp.ge.f32.partialorder %v3265, %v3297
  %3302 = vset.pattern.permute.xlu0 0
  %3303 = vperm.xlu0 %3302, %v3287
  %v3304 = vpop.permute.xlu0 %3303
  %3307 = vset.pattern.permute.xlu0 0
  %3308 = vperm.xlu0 %3307, %v3288
  %v3309 = vpop.permute.xlu0 %3308
  %vm3311 = vcmp.le.f32.partialorder %v3265, %v3304
  %vm3312 = vcmp.le.f32.partialorder %v3265, %v3309
  %vm3313 = vmand %vm3299, %vm3311
  %vm3314 = vmand %vm3300, %vm3312
  %v3315 = vsel %vm3313, 1, 0
  %v3316 = vsel %vm3314, 1, 0
  %3317 = vset.pattern.permute.xlu0 0
  %3318 = vperm.xlu0 %3317, %v3315
  %v3319 = vpop.permute.xlu0 %3318
  %3320 = vset.pattern.permute.xlu0 0
  %3321 = vperm.xlu0 %3320, %v3316
  %v3322 = vpop.permute.xlu0 %3321
  %vm3323 = vcmp.eq.s32.totalorder %v3319, 1
  %vm3324 = vcmp.eq.s32.totalorder %v3322, 1
  %v3325 = vlaneseq
  %v3326 = vshrl.u32 %v3325, 7
  %v3327 = vsub.s32 0, %v3326
  %v3328 = vrot.slane %v281, %v3327
  %v3329 = vlaneseq
  %v3330 = vshrl.u32 %v3329, 7
  %v3331 = vsub.s32 0, %v3330
  %v3332 = vrot.slane %v282, %v3331
  %v3333 = vsel %vm3323, %v3328, 0.0
  %v3334 = vsel %vm3323, %v3332, 0.0
  %v3335 = vsel %vm3324, %v3328, 0.0
  %v3336 = vsel %vm3324, %v3332, 0.0
  %v3337 = vmax.f32 %v3333, 0.0
  %v3338 = vmax.f32 %v3334, 0.0
  %v3339 = vmax.f32 %v3335, 0.0
  %v3340 = vmax.f32 %v3336, 0.0
  %3341 = vset.pattern.permute.xlu0 1
  %3342 = vperm.xlu0 %3341, %v3315
  %v3343 = vpop.permute.xlu0 %3342
  %3344 = vset.pattern.permute.xlu0 1
  %3345 = vperm.xlu0 %3344, %v3316
  %v3346 = vpop.permute.xlu0 %3345
  %vm3347 = vcmp.eq.s32.totalorder %v3343, 1
  %vm3348 = vcmp.eq.s32.totalorder %v3346, 1
  %v3349 = vlaneseq
  %v3350 = vshrl.u32 %v3349, 7
  %v3351 = vsub.s32 1, %v3350
  %v3352 = vrot.slane %v281, %v3351
  %v3353 = vlaneseq
  %v3354 = vshrl.u32 %v3353, 7
  %v3355 = vsub.s32 1, %v3354
  %v3356 = vrot.slane %v282, %v3355
  %v3357 = vsel %vm3347, %v3352, 0.0
  %v3358 = vsel %vm3347, %v3356, 0.0
  %v3359 = vsel %vm3348, %v3352, 0.0
  %v3360 = vsel %vm3348, %v3356, 0.0
  %v3361 = vmax.f32 %v3337, %v3357
  %v3362 = vmax.f32 %v3338, %v3358
  %v3363 = vmax.f32 %v3339, %v3359
  %v3364 = vmax.f32 %v3340, %v3360
  %3365 = vset.pattern.permute.xlu0 2
  %3366 = vperm.xlu0 %3365, %v3315
  %v3367 = vpop.permute.xlu0 %3366
  %3368 = vset.pattern.permute.xlu0 2
  %3369 = vperm.xlu0 %3368, %v3316
  %v3370 = vpop.permute.xlu0 %3369
  %vm3371 = vcmp.eq.s32.totalorder %v3367, 1
  %vm3372 = vcmp.eq.s32.totalorder %v3370, 1
  %v3373 = vlaneseq
  %v3374 = vshrl.u32 %v3373, 7
  %v3375 = vsub.s32 2, %v3374
  %v3376 = vrot.slane %v281, %v3375
  %v3377 = vlaneseq
  %v3378 = vshrl.u32 %v3377, 7
  %v3379 = vsub.s32 2, %v3378
  %v3380 = vrot.slane %v282, %v3379
  %v3381 = vsel %vm3371, %v3376, 0.0
  %v3382 = vsel %vm3371, %v3380, 0.0
  %v3383 = vsel %vm3372, %v3376, 0.0
  %v3384 = vsel %vm3372, %v3380, 0.0
  %v3385 = vmax.f32 %v3361, %v3381
  %v3386 = vmax.f32 %v3362, %v3382
  %v3387 = vmax.f32 %v3363, %v3383
  %v3388 = vmax.f32 %v3364, %v3384
  %3389 = vset.pattern.permute.xlu0 3
  %3390 = vperm.xlu0 %3389, %v3315
  %v3391 = vpop.permute.xlu0 %3390
  %3392 = vset.pattern.permute.xlu0 3
  %3393 = vperm.xlu0 %3392, %v3316
  %v3394 = vpop.permute.xlu0 %3393
  %vm3395 = vcmp.eq.s32.totalorder %v3391, 1
  %vm3396 = vcmp.eq.s32.totalorder %v3394, 1
  %v3397 = vlaneseq
  %v3398 = vshrl.u32 %v3397, 7
  %v3399 = vsub.s32 3, %v3398
  %v3400 = vrot.slane %v281, %v3399
  %v3401 = vlaneseq
  %v3402 = vshrl.u32 %v3401, 7
  %v3403 = vsub.s32 3, %v3402
  %v3404 = vrot.slane %v282, %v3403
  %v3405 = vsel %vm3395, %v3400, 0.0
  %v3406 = vsel %vm3395, %v3404, 0.0
  %v3407 = vsel %vm3396, %v3400, 0.0
  %v3408 = vsel %vm3396, %v3404, 0.0
  %v3409 = vmax.f32 %v3385, %v3405
  %v3410 = vmax.f32 %v3386, %v3406
  %v3411 = vmax.f32 %v3387, %v3407
  %v3412 = vmax.f32 %v3388, %v3408
  %3413 = vset.pattern.permute.xlu0 4
  %3414 = vperm.xlu0 %3413, %v3315
  %v3415 = vpop.permute.xlu0 %3414
  %3416 = vset.pattern.permute.xlu0 4
  %3417 = vperm.xlu0 %3416, %v3316
  %v3418 = vpop.permute.xlu0 %3417
  %vm3419 = vcmp.eq.s32.totalorder %v3415, 1
  %vm3420 = vcmp.eq.s32.totalorder %v3418, 1
  %v3421 = vlaneseq
  %v3422 = vshrl.u32 %v3421, 7
  %v3423 = vsub.s32 4, %v3422
  %v3424 = vrot.slane %v281, %v3423
  %v3425 = vlaneseq
  %v3426 = vshrl.u32 %v3425, 7
  %v3427 = vsub.s32 4, %v3426
  %v3428 = vrot.slane %v282, %v3427
  %v3429 = vsel %vm3419, %v3424, 0.0
  %v3430 = vsel %vm3419, %v3428, 0.0
  %v3431 = vsel %vm3420, %v3424, 0.0
  %v3432 = vsel %vm3420, %v3428, 0.0
  %v3433 = vmax.f32 %v3409, %v3429
  %v3434 = vmax.f32 %v3410, %v3430
  %v3435 = vmax.f32 %v3411, %v3431
  %v3436 = vmax.f32 %v3412, %v3432
  %3437 = vset.pattern.permute.xlu0 5
  %3438 = vperm.xlu0 %3437, %v3315
  %v3439 = vpop.permute.xlu0 %3438
  %3440 = vset.pattern.permute.xlu0 5
  %3441 = vperm.xlu0 %3440, %v3316
  %v3442 = vpop.permute.xlu0 %3441
  %vm3443 = vcmp.eq.s32.totalorder %v3439, 1
  %vm3444 = vcmp.eq.s32.totalorder %v3442, 1
  %v3445 = vlaneseq
  %v3446 = vshrl.u32 %v3445, 7
  %v3447 = vsub.s32 5, %v3446
  %v3448 = vrot.slane %v281, %v3447
  %v3449 = vlaneseq
  %v3450 = vshrl.u32 %v3449, 7
  %v3451 = vsub.s32 5, %v3450
  %v3452 = vrot.slane %v282, %v3451
  %v3453 = vsel %vm3443, %v3448, 0.0
  %v3454 = vsel %vm3443, %v3452, 0.0
  %v3455 = vsel %vm3444, %v3448, 0.0
  %v3456 = vsel %vm3444, %v3452, 0.0
  %v3457 = vmax.f32 %v3433, %v3453
  %v3458 = vmax.f32 %v3434, %v3454
  %v3459 = vmax.f32 %v3435, %v3455
  %v3460 = vmax.f32 %v3436, %v3456
  %3461 = vset.pattern.permute.xlu0 6
  %3462 = vperm.xlu0 %3461, %v3315
  %v3463 = vpop.permute.xlu0 %3462
  %3464 = vset.pattern.permute.xlu0 6
  %3465 = vperm.xlu0 %3464, %v3316
  %v3466 = vpop.permute.xlu0 %3465
  %vm3467 = vcmp.eq.s32.totalorder %v3463, 1
  %vm3468 = vcmp.eq.s32.totalorder %v3466, 1
  %v3469 = vlaneseq
  %v3470 = vshrl.u32 %v3469, 7
  %v3471 = vsub.s32 6, %v3470
  %v3472 = vrot.slane %v281, %v3471
  %v3473 = vlaneseq
  %v3474 = vshrl.u32 %v3473, 7
  %v3475 = vsub.s32 6, %v3474
  %v3476 = vrot.slane %v282, %v3475
  %v3477 = vsel %vm3467, %v3472, 0.0
  %v3478 = vsel %vm3467, %v3476, 0.0
  %v3479 = vsel %vm3468, %v3472, 0.0
  %v3480 = vsel %vm3468, %v3476, 0.0
  %v3481 = vmax.f32 %v3457, %v3477
  %v3482 = vmax.f32 %v3458, %v3478
  %v3483 = vmax.f32 %v3459, %v3479
  %v3484 = vmax.f32 %v3460, %v3480
  %3485 = vset.pattern.permute.xlu0 7
  %3486 = vperm.xlu0 %3485, %v3315
  %v3487 = vpop.permute.xlu0 %3486
  %3488 = vset.pattern.permute.xlu0 7
  %3489 = vperm.xlu0 %3488, %v3316
  %v3490 = vpop.permute.xlu0 %3489
  %vm3491 = vcmp.eq.s32.totalorder %v3487, 1
  %vm3492 = vcmp.eq.s32.totalorder %v3490, 1
  %v3493 = vlaneseq
  %v3494 = vshrl.u32 %v3493, 7
  %v3495 = vsub.s32 7, %v3494
  %v3496 = vrot.slane %v281, %v3495
  %v3497 = vlaneseq
  %v3498 = vshrl.u32 %v3497, 7
  %v3499 = vsub.s32 7, %v3498
  %v3500 = vrot.slane %v282, %v3499
  %v3501 = vsel %vm3491, %v3496, 0.0
  %v3502 = vsel %vm3491, %v3500, 0.0
  %v3503 = vsel %vm3492, %v3496, 0.0
  %v3504 = vsel %vm3492, %v3500, 0.0
  %v3505 = vmax.f32 %v3481, %v3501
  %v3506 = vmax.f32 %v3482, %v3502
  %v3507 = vmax.f32 %v3483, %v3503
  %v3508 = vmax.f32 %v3484, %v3504
  %3509 = vset.pattern.permute.xlu0 8
  %3510 = vperm.xlu0 %3509, %v3315
  %v3511 = vpop.permute.xlu0 %3510
  %3512 = vset.pattern.permute.xlu0 8
  %3513 = vperm.xlu0 %3512, %v3316
  %v3514 = vpop.permute.xlu0 %3513
  %vm3515 = vcmp.eq.s32.totalorder %v3511, 1
  %vm3516 = vcmp.eq.s32.totalorder %v3514, 1
  %v3517 = vlaneseq
  %v3518 = vshrl.u32 %v3517, 7
  %v3519 = vsub.s32 0, %v3518
  %v3520 = vrot.slane %v283, %v3519
  %v3521 = vlaneseq
  %v3522 = vshrl.u32 %v3521, 7
  %v3523 = vsub.s32 0, %v3522
  %v3524 = vrot.slane %v284, %v3523
  %v3525 = vsel %vm3515, %v3520, 0.0
  %v3526 = vsel %vm3515, %v3524, 0.0
  %v3527 = vsel %vm3516, %v3520, 0.0
  %v3528 = vsel %vm3516, %v3524, 0.0
  %v3529 = vmax.f32 %v3505, %v3525
  %v3530 = vmax.f32 %v3506, %v3526
  %v3531 = vmax.f32 %v3507, %v3527
  %v3532 = vmax.f32 %v3508, %v3528
  %3533 = vset.pattern.permute.xlu0 9
  %3534 = vperm.xlu0 %3533, %v3315
  %v3535 = vpop.permute.xlu0 %3534
  %3536 = vset.pattern.permute.xlu0 9
  %3537 = vperm.xlu0 %3536, %v3316
  %v3538 = vpop.permute.xlu0 %3537
  %vm3539 = vcmp.eq.s32.totalorder %v3535, 1
  %vm3540 = vcmp.eq.s32.totalorder %v3538, 1
  %v3541 = vlaneseq
  %v3542 = vshrl.u32 %v3541, 7
  %v3543 = vsub.s32 1, %v3542
  %v3544 = vrot.slane %v283, %v3543
  %v3545 = vlaneseq
  %v3546 = vshrl.u32 %v3545, 7
  %v3547 = vsub.s32 1, %v3546
  %v3548 = vrot.slane %v284, %v3547
  %v3549 = vsel %vm3539, %v3544, 0.0
  %v3550 = vsel %vm3539, %v3548, 0.0
  %v3551 = vsel %vm3540, %v3544, 0.0
  %v3552 = vsel %vm3540, %v3548, 0.0
  %v3553 = vmax.f32 %v3529, %v3549
  %v3554 = vmax.f32 %v3530, %v3550
  %v3555 = vmax.f32 %v3531, %v3551
  %v3556 = vmax.f32 %v3532, %v3552
  %3557 = vset.pattern.permute.xlu0 10
  %3558 = vperm.xlu0 %3557, %v3315
  %v3559 = vpop.permute.xlu0 %3558
  %3560 = vset.pattern.permute.xlu0 10
  %3561 = vperm.xlu0 %3560, %v3316
  %v3562 = vpop.permute.xlu0 %3561
  %vm3563 = vcmp.eq.s32.totalorder %v3559, 1
  %vm3564 = vcmp.eq.s32.totalorder %v3562, 1
  %v3565 = vlaneseq
  %v3566 = vshrl.u32 %v3565, 7
  %v3567 = vsub.s32 2, %v3566
  %v3568 = vrot.slane %v283, %v3567
  %v3569 = vlaneseq
  %v3570 = vshrl.u32 %v3569, 7
  %v3571 = vsub.s32 2, %v3570
  %v3572 = vrot.slane %v284, %v3571
  %v3573 = vsel %vm3563, %v3568, 0.0
  %v3574 = vsel %vm3563, %v3572, 0.0
  %v3575 = vsel %vm3564, %v3568, 0.0
  %v3576 = vsel %vm3564, %v3572, 0.0
  %v3577 = vmax.f32 %v3553, %v3573
  %v3578 = vmax.f32 %v3554, %v3574
  %v3579 = vmax.f32 %v3555, %v3575
  %v3580 = vmax.f32 %v3556, %v3576
  %3581 = vset.pattern.permute.xlu0 11
  %3582 = vperm.xlu0 %3581, %v3315
  %v3583 = vpop.permute.xlu0 %3582
  %3584 = vset.pattern.permute.xlu0 11
  %3585 = vperm.xlu0 %3584, %v3316
  %v3586 = vpop.permute.xlu0 %3585
  %vm3587 = vcmp.eq.s32.totalorder %v3583, 1
  %vm3588 = vcmp.eq.s32.totalorder %v3586, 1
  %v3589 = vlaneseq
  %v3590 = vshrl.u32 %v3589, 7
  %v3591 = vsub.s32 3, %v3590
  %v3592 = vrot.slane %v283, %v3591
  %v3593 = vlaneseq
  %v3594 = vshrl.u32 %v3593, 7
  %v3595 = vsub.s32 3, %v3594
  %v3596 = vrot.slane %v284, %v3595
  %v3597 = vsel %vm3587, %v3592, 0.0
  %v3598 = vsel %vm3587, %v3596, 0.0
  %v3599 = vsel %vm3588, %v3592, 0.0
  %v3600 = vsel %vm3588, %v3596, 0.0
  %v3601 = vmax.f32 %v3577, %v3597
  %v3602 = vmax.f32 %v3578, %v3598
  %v3603 = vmax.f32 %v3579, %v3599
  %v3604 = vmax.f32 %v3580, %v3600
  %3605 = vset.pattern.permute.xlu0 12
  %3606 = vperm.xlu0 %3605, %v3315
  %v3607 = vpop.permute.xlu0 %3606
  %3608 = vset.pattern.permute.xlu0 12
  %3609 = vperm.xlu0 %3608, %v3316
  %v3610 = vpop.permute.xlu0 %3609
  %vm3611 = vcmp.eq.s32.totalorder %v3607, 1
  %vm3612 = vcmp.eq.s32.totalorder %v3610, 1
  %v3613 = vlaneseq
  %v3614 = vshrl.u32 %v3613, 7
  %v3615 = vsub.s32 4, %v3614
  %v3616 = vrot.slane %v283, %v3615
  %v3617 = vlaneseq
  %v3618 = vshrl.u32 %v3617, 7
  %v3619 = vsub.s32 4, %v3618
  %v3620 = vrot.slane %v284, %v3619
  %v3621 = vsel %vm3611, %v3616, 0.0
  %v3622 = vsel %vm3611, %v3620, 0.0
  %v3623 = vsel %vm3612, %v3616, 0.0
  %v3624 = vsel %vm3612, %v3620, 0.0
  %v3625 = vmax.f32 %v3601, %v3621
  %v3626 = vmax.f32 %v3602, %v3622
  %v3627 = vmax.f32 %v3603, %v3623
  %v3628 = vmax.f32 %v3604, %v3624
  %3629 = vset.pattern.permute.xlu0 13
  %3630 = vperm.xlu0 %3629, %v3315
  %v3631 = vpop.permute.xlu0 %3630
  %3632 = vset.pattern.permute.xlu0 13
  %3633 = vperm.xlu0 %3632, %v3316
  %v3634 = vpop.permute.xlu0 %3633
  %vm3635 = vcmp.eq.s32.totalorder %v3631, 1
  %vm3636 = vcmp.eq.s32.totalorder %v3634, 1
  %v3637 = vlaneseq
  %v3638 = vshrl.u32 %v3637, 7
  %v3639 = vsub.s32 5, %v3638
  %v3640 = vrot.slane %v283, %v3639
  %v3641 = vlaneseq
  %v3642 = vshrl.u32 %v3641, 7
  %v3643 = vsub.s32 5, %v3642
  %v3644 = vrot.slane %v284, %v3643
  %v3645 = vsel %vm3635, %v3640, 0.0
  %v3646 = vsel %vm3635, %v3644, 0.0
  %v3647 = vsel %vm3636, %v3640, 0.0
  %v3648 = vsel %vm3636, %v3644, 0.0
  %v3649 = vmax.f32 %v3625, %v3645
  %v3650 = vmax.f32 %v3626, %v3646
  %v3651 = vmax.f32 %v3627, %v3647
  %v3652 = vmax.f32 %v3628, %v3648
  %3653 = vset.pattern.permute.xlu0 14
  %3654 = vperm.xlu0 %3653, %v3315
  %v3655 = vpop.permute.xlu0 %3654
  %3656 = vset.pattern.permute.xlu0 14
  %3657 = vperm.xlu0 %3656, %v3316
  %v3658 = vpop.permute.xlu0 %3657
  %vm3659 = vcmp.eq.s32.totalorder %v3655, 1
  %vm3660 = vcmp.eq.s32.totalorder %v3658, 1
  %v3661 = vlaneseq
  %v3662 = vshrl.u32 %v3661, 7
  %v3663 = vsub.s32 6, %v3662
  %v3664 = vrot.slane %v283, %v3663
  %v3665 = vlaneseq
  %v3666 = vshrl.u32 %v3665, 7
  %v3667 = vsub.s32 6, %v3666
  %v3668 = vrot.slane %v284, %v3667
  %v3669 = vsel %vm3659, %v3664, 0.0
  %v3670 = vsel %vm3659, %v3668, 0.0
  %v3671 = vsel %vm3660, %v3664, 0.0
  %v3672 = vsel %vm3660, %v3668, 0.0
  %v3673 = vmax.f32 %v3649, %v3669
  %v3674 = vmax.f32 %v3650, %v3670
  %v3675 = vmax.f32 %v3651, %v3671
  %v3676 = vmax.f32 %v3652, %v3672
  %3677 = vset.pattern.permute.xlu0 15
  %3678 = vperm.xlu0 %3677, %v3315
  %v3679 = vpop.permute.xlu0 %3678
  %3680 = vset.pattern.permute.xlu0 15
  %3681 = vperm.xlu0 %3680, %v3316
  %v3682 = vpop.permute.xlu0 %3681
  %vm3683 = vcmp.eq.s32.totalorder %v3679, 1
  %vm3684 = vcmp.eq.s32.totalorder %v3682, 1
  %v3685 = vlaneseq
  %v3686 = vshrl.u32 %v3685, 7
  %v3687 = vsub.s32 7, %v3686
  %v3688 = vrot.slane %v283, %v3687
  %v3689 = vlaneseq
  %v3690 = vshrl.u32 %v3689, 7
  %v3691 = vsub.s32 7, %v3690
  %v3692 = vrot.slane %v284, %v3691
  %v3693 = vsel %vm3683, %v3688, 0.0
  %v3694 = vsel %vm3683, %v3692, 0.0
  %v3695 = vsel %vm3684, %v3688, 0.0
  %v3696 = vsel %vm3684, %v3692, 0.0
  %v3697 = vmax.f32 %v3673, %v3693
  %v3698 = vmax.f32 %v3674, %v3694
  %v3699 = vmax.f32 %v3675, %v3695
  %v3700 = vmax.f32 %v3676, %v3696
  %v3701 = vmul.f32 %v3262, 2.0
  %v3702 = vmul.f32 %v3263, 2.0
  %3705 = vrot.lane.b32.xlu0 %v3701, 126
  %v3706 = vpop.permute.xlu0 %3705
  %3707 = vrot.lane.b32.xlu0 %v3702, 126
  %v3708 = vpop.permute.xlu0 %3707
  %v3711 = vadd.f32 %v3250, %v3706
  %v3712 = vadd.f32 %v3251, %v3708
  %vm3713 = vcmp.ge.f32.partialorder %v3265, %v3304
  %vm3714 = vcmp.ge.f32.partialorder %v3265, %v3309
  %3716 = vset.pattern.permute.xlu0 0
  %3717 = vperm.xlu0 %3716, %v3711
  %v3718 = vpop.permute.xlu0 %3717
  %3721 = vset.pattern.permute.xlu0 0
  %3722 = vperm.xlu0 %3721, %v3712
  %v3723 = vpop.permute.xlu0 %3722
  %vm3725 = vcmp.le.f32.partialorder %v3265, %v3718
  %vm3726 = vcmp.le.f32.partialorder %v3265, %v3723
  %vm3727 = vmand %vm3713, %vm3725
  %vm3728 = vmand %vm3714, %vm3726
  %v3729 = vsel %vm3727, 1, 0
  %v3730 = vsel %vm3728, 1, 0
  %3731 = vset.pattern.permute.xlu0 0
  %3732 = vperm.xlu0 %3731, %v3729
  %v3733 = vpop.permute.xlu0 %3732
  %3734 = vset.pattern.permute.xlu0 0
  %3735 = vperm.xlu0 %3734, %v3730
  %v3736 = vpop.permute.xlu0 %3735
  %vm3737 = vcmp.eq.s32.totalorder %v3733, 1
  %vm3738 = vcmp.eq.s32.totalorder %v3736, 1
  %v3739 = vsel %vm3737, %v3328, 0.0
  %v3740 = vsel %vm3737, %v3332, 0.0
  %v3741 = vsel %vm3738, %v3328, 0.0
  %v3742 = vsel %vm3738, %v3332, 0.0
  %v3743 = vmax.f32 %v3739, 0.0
  %v3744 = vmax.f32 %v3740, 0.0
  %v3745 = vmax.f32 %v3741, 0.0
  %v3746 = vmax.f32 %v3742, 0.0
  %3747 = vset.pattern.permute.xlu0 1
  %3748 = vperm.xlu0 %3747, %v3729
  %v3749 = vpop.permute.xlu0 %3748
  %3750 = vset.pattern.permute.xlu0 1
  %3751 = vperm.xlu0 %3750, %v3730
  %v3752 = vpop.permute.xlu0 %3751
  %vm3753 = vcmp.eq.s32.totalorder %v3749, 1
  %vm3754 = vcmp.eq.s32.totalorder %v3752, 1
  %v3755 = vsel %vm3753, %v3352, 0.0
  %v3756 = vsel %vm3753, %v3356, 0.0
  %v3757 = vsel %vm3754, %v3352, 0.0
  %v3758 = vsel %vm3754, %v3356, 0.0
  %v3759 = vmax.f32 %v3743, %v3755
  %v3760 = vmax.f32 %v3744, %v3756
  %v3761 = vmax.f32 %v3745, %v3757
  %v3762 = vmax.f32 %v3746, %v3758
  %3763 = vset.pattern.permute.xlu0 2
  %3764 = vperm.xlu0 %3763, %v3729
  %v3765 = vpop.permute.xlu0 %3764
  %3766 = vset.pattern.permute.xlu0 2
  %3767 = vperm.xlu0 %3766, %v3730
  %v3768 = vpop.permute.xlu0 %3767
  %vm3769 = vcmp.eq.s32.totalorder %v3765, 1
  %vm3770 = vcmp.eq.s32.totalorder %v3768, 1
  %v3771 = vsel %vm3769, %v3376, 0.0
  %v3772 = vsel %vm3769, %v3380, 0.0
  %v3773 = vsel %vm3770, %v3376, 0.0
  %v3774 = vsel %vm3770, %v3380, 0.0
  %v3775 = vmax.f32 %v3759, %v3771
  %v3776 = vmax.f32 %v3760, %v3772
  %v3777 = vmax.f32 %v3761, %v3773
  %v3778 = vmax.f32 %v3762, %v3774
  %3779 = vset.pattern.permute.xlu0 3
  %3780 = vperm.xlu0 %3779, %v3729
  %v3781 = vpop.permute.xlu0 %3780
  %3782 = vset.pattern.permute.xlu0 3
  %3783 = vperm.xlu0 %3782, %v3730
  %v3784 = vpop.permute.xlu0 %3783
  %vm3785 = vcmp.eq.s32.totalorder %v3781, 1
  %vm3786 = vcmp.eq.s32.totalorder %v3784, 1
  %v3787 = vsel %vm3785, %v3400, 0.0
  %v3788 = vsel %vm3785, %v3404, 0.0
  %v3789 = vsel %vm3786, %v3400, 0.0
  %v3790 = vsel %vm3786, %v3404, 0.0
  %v3791 = vmax.f32 %v3775, %v3787
  %v3792 = vmax.f32 %v3776, %v3788
  %v3793 = vmax.f32 %v3777, %v3789
  %v3794 = vmax.f32 %v3778, %v3790
  %3795 = vset.pattern.permute.xlu0 4
  %3796 = vperm.xlu0 %3795, %v3729
  %v3797 = vpop.permute.xlu0 %3796
  %3798 = vset.pattern.permute.xlu0 4
  %3799 = vperm.xlu0 %3798, %v3730
  %v3800 = vpop.permute.xlu0 %3799
  %vm3801 = vcmp.eq.s32.totalorder %v3797, 1
  %vm3802 = vcmp.eq.s32.totalorder %v3800, 1
  %v3803 = vsel %vm3801, %v3424, 0.0
  %v3804 = vsel %vm3801, %v3428, 0.0
  %v3805 = vsel %vm3802, %v3424, 0.0
  %v3806 = vsel %vm3802, %v3428, 0.0
  %v3807 = vmax.f32 %v3791, %v3803
  %v3808 = vmax.f32 %v3792, %v3804
  %v3809 = vmax.f32 %v3793, %v3805
  %v3810 = vmax.f32 %v3794, %v3806
  %3811 = vset.pattern.permute.xlu0 5
  %3812 = vperm.xlu0 %3811, %v3729
  %v3813 = vpop.permute.xlu0 %3812
  %3814 = vset.pattern.permute.xlu0 5
  %3815 = vperm.xlu0 %3814, %v3730
  %v3816 = vpop.permute.xlu0 %3815
  %vm3817 = vcmp.eq.s32.totalorder %v3813, 1
  %vm3818 = vcmp.eq.s32.totalorder %v3816, 1
  %v3819 = vsel %vm3817, %v3448, 0.0
  %v3820 = vsel %vm3817, %v3452, 0.0
  %v3821 = vsel %vm3818, %v3448, 0.0
  %v3822 = vsel %vm3818, %v3452, 0.0
  %v3823 = vmax.f32 %v3807, %v3819
  %v3824 = vmax.f32 %v3808, %v3820
  %v3825 = vmax.f32 %v3809, %v3821
  %v3826 = vmax.f32 %v3810, %v3822
  %3827 = vset.pattern.permute.xlu0 6
  %3828 = vperm.xlu0 %3827, %v3729
  %v3829 = vpop.permute.xlu0 %3828
  %3830 = vset.pattern.permute.xlu0 6
  %3831 = vperm.xlu0 %3830, %v3730
  %v3832 = vpop.permute.xlu0 %3831
  %vm3833 = vcmp.eq.s32.totalorder %v3829, 1
  %vm3834 = vcmp.eq.s32.totalorder %v3832, 1
  %v3835 = vsel %vm3833, %v3472, 0.0
  %v3836 = vsel %vm3833, %v3476, 0.0
  %v3837 = vsel %vm3834, %v3472, 0.0
  %v3838 = vsel %vm3834, %v3476, 0.0
  %v3839 = vmax.f32 %v3823, %v3835
  %v3840 = vmax.f32 %v3824, %v3836
  %v3841 = vmax.f32 %v3825, %v3837
  %v3842 = vmax.f32 %v3826, %v3838
  %3843 = vset.pattern.permute.xlu0 7
  %3844 = vperm.xlu0 %3843, %v3729
  %v3845 = vpop.permute.xlu0 %3844
  %3846 = vset.pattern.permute.xlu0 7
  %3847 = vperm.xlu0 %3846, %v3730
  %v3848 = vpop.permute.xlu0 %3847
  %vm3849 = vcmp.eq.s32.totalorder %v3845, 1
  %vm3850 = vcmp.eq.s32.totalorder %v3848, 1
  %v3851 = vsel %vm3849, %v3496, 0.0
  %v3852 = vsel %vm3849, %v3500, 0.0
  %v3853 = vsel %vm3850, %v3496, 0.0
  %v3854 = vsel %vm3850, %v3500, 0.0
  %v3855 = vmax.f32 %v3839, %v3851
  %v3856 = vmax.f32 %v3840, %v3852
  %v3857 = vmax.f32 %v3841, %v3853
  %v3858 = vmax.f32 %v3842, %v3854
  %3859 = vset.pattern.permute.xlu0 8
  %3860 = vperm.xlu0 %3859, %v3729
  %v3861 = vpop.permute.xlu0 %3860
  %3862 = vset.pattern.permute.xlu0 8
  %3863 = vperm.xlu0 %3862, %v3730
  %v3864 = vpop.permute.xlu0 %3863
  %vm3865 = vcmp.eq.s32.totalorder %v3861, 1
  %vm3866 = vcmp.eq.s32.totalorder %v3864, 1
  %v3867 = vsel %vm3865, %v3520, 0.0
  %v3868 = vsel %vm3865, %v3524, 0.0
  %v3869 = vsel %vm3866, %v3520, 0.0
  %v3870 = vsel %vm3866, %v3524, 0.0
  %v3871 = vmax.f32 %v3855, %v3867
  %v3872 = vmax.f32 %v3856, %v3868
  %v3873 = vmax.f32 %v3857, %v3869
  %v3874 = vmax.f32 %v3858, %v3870
  %3875 = vset.pattern.permute.xlu0 9
  %3876 = vperm.xlu0 %3875, %v3729
  %v3877 = vpop.permute.xlu0 %3876
  %3878 = vset.pattern.permute.xlu0 9
  %3879 = vperm.xlu0 %3878, %v3730
  %v3880 = vpop.permute.xlu0 %3879
  %vm3881 = vcmp.eq.s32.totalorder %v3877, 1
  %vm3882 = vcmp.eq.s32.totalorder %v3880, 1
  %v3883 = vsel %vm3881, %v3544, 0.0
  %v3884 = vsel %vm3881, %v3548, 0.0
  %v3885 = vsel %vm3882, %v3544, 0.0
  %v3886 = vsel %vm3882, %v3548, 0.0
  %v3887 = vmax.f32 %v3871, %v3883
  %v3888 = vmax.f32 %v3872, %v3884
  %v3889 = vmax.f32 %v3873, %v3885
  %v3890 = vmax.f32 %v3874, %v3886
  %3891 = vset.pattern.permute.xlu0 10
  %3892 = vperm.xlu0 %3891, %v3729
  %v3893 = vpop.permute.xlu0 %3892
  %3894 = vset.pattern.permute.xlu0 10
  %3895 = vperm.xlu0 %3894, %v3730
  %v3896 = vpop.permute.xlu0 %3895
  %vm3897 = vcmp.eq.s32.totalorder %v3893, 1
  %vm3898 = vcmp.eq.s32.totalorder %v3896, 1
  %v3899 = vsel %vm3897, %v3568, 0.0
  %v3900 = vsel %vm3897, %v3572, 0.0
  %v3901 = vsel %vm3898, %v3568, 0.0
  %v3902 = vsel %vm3898, %v3572, 0.0
  %v3903 = vmax.f32 %v3887, %v3899
  %v3904 = vmax.f32 %v3888, %v3900
  %v3905 = vmax.f32 %v3889, %v3901
  %v3906 = vmax.f32 %v3890, %v3902
  %3907 = vset.pattern.permute.xlu0 11
  %3908 = vperm.xlu0 %3907, %v3729
  %v3909 = vpop.permute.xlu0 %3908
  %3910 = vset.pattern.permute.xlu0 11
  %3911 = vperm.xlu0 %3910, %v3730
  %v3912 = vpop.permute.xlu0 %3911
  %vm3913 = vcmp.eq.s32.totalorder %v3909, 1
  %vm3914 = vcmp.eq.s32.totalorder %v3912, 1
  %v3915 = vsel %vm3913, %v3592, 0.0
  %v3916 = vsel %vm3913, %v3596, 0.0
  %v3917 = vsel %vm3914, %v3592, 0.0
  %v3918 = vsel %vm3914, %v3596, 0.0
  %v3919 = vmax.f32 %v3903, %v3915
  %v3920 = vmax.f32 %v3904, %v3916
  %v3921 = vmax.f32 %v3905, %v3917
  %v3922 = vmax.f32 %v3906, %v3918
  %3923 = vset.pattern.permute.xlu0 12
  %3924 = vperm.xlu0 %3923, %v3729
  %v3925 = vpop.permute.xlu0 %3924
  %3926 = vset.pattern.permute.xlu0 12
  %3927 = vperm.xlu0 %3926, %v3730
  %v3928 = vpop.permute.xlu0 %3927
  %vm3929 = vcmp.eq.s32.totalorder %v3925, 1
  %vm3930 = vcmp.eq.s32.totalorder %v3928, 1
  %v3931 = vsel %vm3929, %v3616, 0.0
  %v3932 = vsel %vm3929, %v3620, 0.0
  %v3933 = vsel %vm3930, %v3616, 0.0
  %v3934 = vsel %vm3930, %v3620, 0.0
  %v3935 = vmax.f32 %v3919, %v3931
  %v3936 = vmax.f32 %v3920, %v3932
  %v3937 = vmax.f32 %v3921, %v3933
  %v3938 = vmax.f32 %v3922, %v3934
  %3939 = vset.pattern.permute.xlu0 13
  %3940 = vperm.xlu0 %3939, %v3729
  %v3941 = vpop.permute.xlu0 %3940
  %3942 = vset.pattern.permute.xlu0 13
  %3943 = vperm.xlu0 %3942, %v3730
  %v3944 = vpop.permute.xlu0 %3943
  %vm3945 = vcmp.eq.s32.totalorder %v3941, 1
  %vm3946 = vcmp.eq.s32.totalorder %v3944, 1
  %v3947 = vsel %vm3945, %v3640, 0.0
  %v3948 = vsel %vm3945, %v3644, 0.0
  %v3949 = vsel %vm3946, %v3640, 0.0
  %v3950 = vsel %vm3946, %v3644, 0.0
  %v3951 = vmax.f32 %v3935, %v3947
  %v3952 = vmax.f32 %v3936, %v3948
  %v3953 = vmax.f32 %v3937, %v3949
  %v3954 = vmax.f32 %v3938, %v3950
  %3955 = vset.pattern.permute.xlu0 14
  %3956 = vperm.xlu0 %3955, %v3729
  %v3957 = vpop.permute.xlu0 %3956
  %3958 = vset.pattern.permute.xlu0 14
  %3959 = vperm.xlu0 %3958, %v3730
  %v3960 = vpop.permute.xlu0 %3959
  %vm3961 = vcmp.eq.s32.totalorder %v3957, 1
  %vm3962 = vcmp.eq.s32.totalorder %v3960, 1
  %v3963 = vsel %vm3961, %v3664, 0.0
  %v3964 = vsel %vm3961, %v3668, 0.0
  %v3965 = vsel %vm3962, %v3664, 0.0
  %v3966 = vsel %vm3962, %v3668, 0.0
  %v3967 = vmax.f32 %v3951, %v3963
  %v3968 = vmax.f32 %v3952, %v3964
  %v3969 = vmax.f32 %v3953, %v3965
  %v3970 = vmax.f32 %v3954, %v3966
  %3971 = vset.pattern.permute.xlu0 15
  %3972 = vperm.xlu0 %3971, %v3729
  %v3973 = vpop.permute.xlu0 %3972
  %3974 = vset.pattern.permute.xlu0 15
  %3975 = vperm.xlu0 %3974, %v3730
  %v3976 = vpop.permute.xlu0 %3975
  %vm3977 = vcmp.eq.s32.totalorder %v3973, 1
  %vm3978 = vcmp.eq.s32.totalorder %v3976, 1
  %v3979 = vsel %vm3977, %v3688, 0.0
  %v3980 = vsel %vm3977, %v3692, 0.0
  %v3981 = vsel %vm3978, %v3688, 0.0
  %v3982 = vsel %vm3978, %v3692, 0.0
  %v3983 = vmax.f32 %v3967, %v3979
  %v3984 = vmax.f32 %v3968, %v3980
  %v3985 = vmax.f32 %v3969, %v3981
  %v3986 = vmax.f32 %v3970, %v3982
  %v3988 = vlaneseq
  %v3989 = vshrl.u32 %v3988, 7
  %v3990 = vsub.s32 0, %v3989
  %v3991 = vrot.slane %v3266, %v3990
  %v3992 = vlaneseq
  %v3993 = vshrl.u32 %v3992, 7
  %v3994 = vsub.s32 1, %v3993
  %v3995 = vrot.slane %v3266, %v3994
  %3998 = vset.pattern.permute.xlu0 1
  %3999 = vperm.xlu0 %3998, %v3277
  %v4000 = vpop.permute.xlu0 %3999
  %4002 = vset.pattern.permute.xlu0 1
  %4003 = vperm.xlu0 %4002, %v3278
  %v4004 = vpop.permute.xlu0 %4003
  %vm4006 = vcmp.ge.f32.partialorder %v3991, %v4000
  %vm4007 = vcmp.ge.f32.partialorder %v3995, %v4000
  %vm4008 = vcmp.ge.f32.partialorder %v3991, %v4004
  %vm4009 = vcmp.ge.f32.partialorder %v3995, %v4004
  %4010 = vset.pattern.permute.xlu0 1
  %4011 = vperm.xlu0 %4010, %v3287
  %v4012 = vpop.permute.xlu0 %4011
  %4014 = vset.pattern.permute.xlu0 1
  %4015 = vperm.xlu0 %4014, %v3288
  %v4016 = vpop.permute.xlu0 %4015
  %vm4018 = vcmp.le.f32.partialorder %v3991, %v4012
  %vm4019 = vcmp.le.f32.partialorder %v3995, %v4012
  %vm4020 = vcmp.le.f32.partialorder %v3991, %v4016
  %vm4021 = vcmp.le.f32.partialorder %v3995, %v4016
  %vm4022 = vmand %vm4006, %vm4018
  %vm4023 = vmand %vm4007, %vm4019
  %vm4024 = vmand %vm4008, %vm4020
  %vm4025 = vmand %vm4009, %vm4021
  %v4026 = vsel %vm4022, %v3697, 0.0
  %v4027 = vsel %vm4023, %v3698, 0.0
  %v4028 = vsel %vm4024, %v3699, 0.0
  %v4029 = vsel %vm4025, %v3700, 0.0
  %vm4030 = vcmp.ge.f32.partialorder %v3991, %v4012
  %vm4031 = vcmp.ge.f32.partialorder %v3995, %v4012
  %vm4032 = vcmp.ge.f32.partialorder %v3991, %v4016
  %vm4033 = vcmp.ge.f32.partialorder %v3995, %v4016
  %4034 = vset.pattern.permute.xlu0 1
  %4035 = vperm.xlu0 %4034, %v3711
  %v4036 = vpop.permute.xlu0 %4035
  %4038 = vset.pattern.permute.xlu0 1
  %4039 = vperm.xlu0 %4038, %v3712
  %v4040 = vpop.permute.xlu0 %4039
  %vm4042 = vcmp.le.f32.partialorder %v3991, %v4036
  %vm4043 = vcmp.le.f32.partialorder %v3995, %v4036
  %vm4044 = vcmp.le.f32.partialorder %v3991, %v4040
  %vm4045 = vcmp.le.f32.partialorder %v3995, %v4040
  %vm4046 = vmand %vm4030, %vm4042
  %vm4047 = vmand %vm4031, %vm4043
  %vm4048 = vmand %vm4032, %vm4044
  %vm4049 = vmand %vm4033, %vm4045
  %v4050 = vsel %vm4046, %v3697, 0.0
  %v4051 = vsel %vm4047, %v3698, 0.0
  %v4052 = vsel %vm4048, %v3699, 0.0
  %v4053 = vsel %vm4049, %v3700, 0.0
  %v4054 = vsel %vm4022, %v3983, 0.0
  %v4055 = vsel %vm4023, %v3984, 0.0
  %v4056 = vsel %vm4024, %v3985, 0.0
  %v4057 = vsel %vm4025, %v3986, 0.0
  %v4058 = vsel %vm4046, %v3983, 0.0
  %v4059 = vsel %vm4047, %v3984, 0.0
  %v4060 = vsel %vm4048, %v3985, 0.0
  %v4061 = vsel %vm4049, %v3986, 0.0
  %v4062 = vmax.f32 %v4026, %v4027
  %v4063 = vmax.f32 %v4028, %v4029
  %v4064 = vmax.f32 %v4050, %v4051
  %v4065 = vmax.f32 %v4052, %v4053
  %v4066 = vmax.f32 %v4054, %v4055
  %v4067 = vmax.f32 %v4056, %v4057
  %v4068 = vmax.f32 %v4058, %v4059
  %v4069 = vmax.f32 %v4060, %v4061
  %4078 = vrot.lane.b32.xlu0 %v4062, 64
  %v4079 = vpop.permute.xlu0 %4078
  %4080 = vrot.lane.b32.xlu0 %v4063, 64
  %v4081 = vpop.permute.xlu0 %4080
  %4082 = vrot.lane.b32.xlu0 %v4064, 64
  %v4083 = vpop.permute.xlu0 %4082
  %4084 = vrot.lane.b32.xlu0 %v4065, 64
  %v4085 = vpop.permute.xlu0 %4084
  %4086 = vrot.lane.b32.xlu0 %v4066, 64
  %v4087 = vpop.permute.xlu0 %4086
  %4088 = vrot.lane.b32.xlu0 %v4067, 64
  %v4089 = vpop.permute.xlu0 %4088
  %4090 = vrot.lane.b32.xlu0 %v4068, 64
  %v4091 = vpop.permute.xlu0 %4090
  %4092 = vrot.lane.b32.xlu0 %v4069, 64
  %v4093 = vpop.permute.xlu0 %4092
  %v4102 = vmax.f32 %v4062, %v4079
  %v4103 = vmax.f32 %v4063, %v4081
  %v4104 = vmax.f32 %v4064, %v4083
  %v4105 = vmax.f32 %v4065, %v4085
  %v4106 = vmax.f32 %v4066, %v4087
  %v4107 = vmax.f32 %v4067, %v4089
  %v4108 = vmax.f32 %v4068, %v4091
  %v4109 = vmax.f32 %v4069, %v4093
  %4118 = vrot.lane.b32.xlu0 %v4102, 96
  %v4119 = vpop.permute.xlu0 %4118
  %4120 = vrot.lane.b32.xlu0 %v4103, 96
  %v4121 = vpop.permute.xlu0 %4120
  %4122 = vrot.lane.b32.xlu0 %v4104, 96
  %v4123 = vpop.permute.xlu0 %4122
  %4124 = vrot.lane.b32.xlu0 %v4105, 96
  %v4125 = vpop.permute.xlu0 %4124
  %4126 = vrot.lane.b32.xlu0 %v4106, 96
  %v4127 = vpop.permute.xlu0 %4126
  %4128 = vrot.lane.b32.xlu0 %v4107, 96
  %v4129 = vpop.permute.xlu0 %4128
  %4130 = vrot.lane.b32.xlu0 %v4108, 96
  %v4131 = vpop.permute.xlu0 %4130
  %4132 = vrot.lane.b32.xlu0 %v4109, 96
  %v4133 = vpop.permute.xlu0 %4132
  %v4142 = vmax.f32 %v4102, %v4119
  %v4143 = vmax.f32 %v4103, %v4121
  %v4144 = vmax.f32 %v4104, %v4123
  %v4145 = vmax.f32 %v4105, %v4125
  %v4146 = vmax.f32 %v4106, %v4127
  %v4147 = vmax.f32 %v4107, %v4129
  %v4148 = vmax.f32 %v4108, %v4131
  %v4149 = vmax.f32 %v4109, %v4133
  %4158 = vrot.lane.b32.xlu0 %v4142, 112
  %v4159 = vpop.permute.xlu0 %4158
  %4160 = vrot.lane.b32.xlu0 %v4143, 112
  %v4161 = vpop.permute.xlu0 %4160
  %4162 = vrot.lane.b32.xlu0 %v4144, 112
  %v4163 = vpop.permute.xlu0 %4162
  %4164 = vrot.lane.b32.xlu0 %v4145, 112
  %v4165 = vpop.permute.xlu0 %4164
  %4166 = vrot.lane.b32.xlu0 %v4146, 112
  %v4167 = vpop.permute.xlu0 %4166
  %4168 = vrot.lane.b32.xlu0 %v4147, 112
  %v4169 = vpop.permute.xlu0 %4168
  %4170 = vrot.lane.b32.xlu0 %v4148, 112
  %v4171 = vpop.permute.xlu0 %4170
  %4172 = vrot.lane.b32.xlu0 %v4149, 112
  %v4173 = vpop.permute.xlu0 %4172
  %v4182 = vmax.f32 %v4142, %v4159
  %v4183 = vmax.f32 %v4143, %v4161
  %v4184 = vmax.f32 %v4144, %v4163
  %v4185 = vmax.f32 %v4145, %v4165
  %v4186 = vmax.f32 %v4146, %v4167
  %v4187 = vmax.f32 %v4147, %v4169
  %v4188 = vmax.f32 %v4148, %v4171
  %v4189 = vmax.f32 %v4149, %v4173
  %v4190 = vpack.c.bf16 %v4183, %v4182
  %v4191 = vld [vmem:[%s9] sm:$0xf]
  %v4192 = vld [vmem:[%s9 + $0x4] sm:$0xf]
  %v4193 = vpack.c.bf16 %v4185, %v4184
  %v4194 = vld [vmem:[%s9 + $0x8] sm:$0xf]
  %v4195 = vld [vmem:[%s9 + $0xc] sm:$0xf]
  %v4198 = vunpack.c.l.b16 %v4194
  %v4199 = vunpack.c.l.b16 %v4195
  %v4200 = vpack.c.b16 %v4199, %v4198
  %v4203 = vsel %vm1775, %v4193, 0
  %4205 = vmatprep.subr.bf16.mxu0 0
  %4206 = vmatpush1.bf16.msra.mxu0 %v4200
  %4207 = vmatprep.subr.bf16.mxu0 0
  %4208 = vmatpush1.bf16.msra.mxu0 0
  %4209 = vmatprep.subr.bf16.mxu0 0
  %4210 = vmatpush1.bf16.msra.mxu0 0
  %4211 = vmatprep.subr.bf16.mxu0 0
  %4212 = vmatpush1.bf16.msra.mxu0 0
  %4213 = vmatprep.subr.bf16.mxu0 0
  %4214 = vmatpush1.bf16.msra.mxu0 0
  %4215 = vmatprep.subr.bf16.mxu0 0
  %4216 = vmatpush1.bf16.msra.mxu0 0
  %4217 = vmatprep.subr.bf16.mxu0 0
  %4218 = vmatpush1.bf16.msra.mxu0 0
  %4219 = vmatprep.subr.bf16.mxu0 0
  %4220 = vmatpush1.bf16.msra.mxu0 0
  %4221 = vmatprep.subr.bf16.mxu0 0
  %4222 = vmatpush1.bf16.msra.mxu0 0
  %4223 = vmatprep.subr.bf16.mxu0 0
  %4224 = vmatpush1.bf16.msra.mxu0 0
  %4225 = vmatprep.subr.bf16.mxu0 0
  %4226 = vmatpush1.bf16.msra.mxu0 0
  %4227 = vmatprep.subr.bf16.mxu0 0
  %4228 = vmatpush1.bf16.msra.mxu0 0
  %4229 = vmatprep.subr.bf16.mxu0 0
  %4230 = vmatpush1.bf16.msra.mxu0 0
  %4231 = vmatprep.subr.bf16.mxu0 0
  %4232 = vmatpush1.bf16.msra.mxu0 0
  %4233 = vmatprep.subr.bf16.mxu0 0
  %4234 = vmatpush1.bf16.msra.mxu0 0
  %4235 = vmatprep.subr.bf16.mxu0 0
  %4236 = vmatpush1.bf16.msra.mxu0 0
  %4237 = vmatprep.mubr.bf16.mxu0 0
  %4238 = vmatmul.mubr.bf16.gmra.mrb[0].mxu0 %v4203
  %v4239 = vpop.f32.mrb[0].mxu0
  %v4240 = vadd.f32 0.0, %v4239
  %v4241 = vpop.f32.mrb[0].mxu0
  %v4242 = vpop.f32.mrb[0].mxu0
  %v4243 = vadd.f32 0.0, %v4242
  %v4244 = vpop.f32.mrb[0].mxu0
  %4245 = vdwg.mxu0
  %v4248 = vunpack.c.l.b16 %v4191
  %v4249 = vunpack.c.l.b16 %v4192
  %v4250 = vpack.c.b16 %v4249, %v4248
  %v4253 = vsel %vm1775, %v4190, 0
  %4255 = vmatprep.subr.bf16.mxu0 0
  %4256 = vmatpush1.bf16.msra.mxu0 %v4250
  %4257 = vmatprep.subr.bf16.mxu0 0
  %4258 = vmatpush1.bf16.msra.mxu0 0
  %4259 = vmatprep.subr.bf16.mxu0 0
  %4260 = vmatpush1.bf16.msra.mxu0 0
  %4261 = vmatprep.subr.bf16.mxu0 0
  %4262 = vmatpush1.bf16.msra.mxu0 0
  %4263 = vmatprep.subr.bf16.mxu0 0
  %4264 = vmatpush1.bf16.msra.mxu0 0
  %4265 = vmatprep.subr.bf16.mxu0 0
  %4266 = vmatpush1.bf16.msra.mxu0 0
  %4267 = vmatprep.subr.bf16.mxu0 0
  %4268 = vmatpush1.bf16.msra.mxu0 0
  %4269 = vmatprep.subr.bf16.mxu0 0
  %4270 = vmatpush1.bf16.msra.mxu0 0
  %4271 = vmatprep.subr.bf16.mxu0 0
  %4272 = vmatpush1.bf16.msra.mxu0 0
  %4273 = vmatprep.subr.bf16.mxu0 0
  %4274 = vmatpush1.bf16.msra.mxu0 0
  %4275 = vmatprep.subr.bf16.mxu0 0
  %4276 = vmatpush1.bf16.msra.mxu0 0
  %4277 = vmatprep.subr.bf16.mxu0 0
  %4278 = vmatpush1.bf16.msra.mxu0 0
  %4279 = vmatprep.subr.bf16.mxu0 0
  %4280 = vmatpush1.bf16.msra.mxu0 0
  %4281 = vmatprep.subr.bf16.mxu0 0
  %4282 = vmatpush1.bf16.msra.mxu0 0
  %4283 = vmatprep.subr.bf16.mxu0 0
  %4284 = vmatpush1.bf16.msra.mxu0 0
  %4285 = vmatprep.subr.bf16.mxu0 0
  %4286 = vmatpush1.bf16.msra.mxu0 0
  %4287 = vmatprep.mubr.bf16.mxu0 0
  %4288 = vmatmul.mubr.bf16.gmra.mrb[0].mxu0 %v4253
  %v4289 = vpop.f32.mrb[0].mxu0
  %v4290 = vadd.f32 %v4240, %v4289
  %v4291 = vpop.f32.mrb[0].mxu0
  %v4292 = vpop.f32.mrb[0].mxu0
  %v4293 = vadd.f32 %v4243, %v4292
  %v4294 = vpop.f32.mrb[0].mxu0
  %4295 = vdwg.mxu0
  %v4296 = vpack.c.bf16 %v4187, %v4186
  %v4297 = vld [vmem:[%s9 + $0x10] sm:$0xf]
  %v4298 = vld [vmem:[%s9 + $0x14] sm:$0xf]
  %v4301 = vunpack.c.l.b16 %v4297
  %v4302 = vunpack.c.l.b16 %v4298
  %v4303 = vpack.c.b16 %v4302, %v4301
  %v4306 = vsel %vm1775, %v4296, 0
  %4308 = vmatprep.subr.bf16.mxu0 0
  %4309 = vmatpush1.bf16.msra.mxu0 %v4303
  %4310 = vmatprep.subr.bf16.mxu0 0
  %4311 = vmatpush1.bf16.msra.mxu0 0
  %4312 = vmatprep.subr.bf16.mxu0 0
  %4313 = vmatpush1.bf16.msra.mxu0 0
  %4314 = vmatprep.subr.bf16.mxu0 0
  %4315 = vmatpush1.bf16.msra.mxu0 0
  %4316 = vmatprep.subr.bf16.mxu0 0
  %4317 = vmatpush1.bf16.msra.mxu0 0
  %4318 = vmatprep.subr.bf16.mxu0 0
  %4319 = vmatpush1.bf16.msra.mxu0 0
  %4320 = vmatprep.subr.bf16.mxu0 0
  %4321 = vmatpush1.bf16.msra.mxu0 0
  %4322 = vmatprep.subr.bf16.mxu0 0
  %4323 = vmatpush1.bf16.msra.mxu0 0
  %4324 = vmatprep.subr.bf16.mxu0 0
  %4325 = vmatpush1.bf16.msra.mxu0 0
  %4326 = vmatprep.subr.bf16.mxu0 0
  %4327 = vmatpush1.bf16.msra.mxu0 0
  %4328 = vmatprep.subr.bf16.mxu0 0
  %4329 = vmatpush1.bf16.msra.mxu0 0
  %4330 = vmatprep.subr.bf16.mxu0 0
  %4331 = vmatpush1.bf16.msra.mxu0 0
  %4332 = vmatprep.subr.bf16.mxu0 0
  %4333 = vmatpush1.bf16.msra.mxu0 0
  %4334 = vmatprep.subr.bf16.mxu0 0
  %4335 = vmatpush1.bf16.msra.mxu0 0
  %4336 = vmatprep.subr.bf16.mxu0 0
  %4337 = vmatpush1.bf16.msra.mxu0 0
  %4338 = vmatprep.subr.bf16.mxu0 0
  %4339 = vmatpush1.bf16.msra.mxu0 0
  %4340 = vmatprep.mubr.bf16.mxu0 0
  %4341 = vmatmul.mubr.bf16.gmra.mrb[0].mxu0 %v4306
  %v4342 = vpop.f32.mrb[0].mxu0
  %v4343 = vadd.f32 0.0, %v4342
  %v4344 = vpop.f32.mrb[0].mxu0
  %v4345 = vpop.f32.mrb[0].mxu0
  %v4346 = vadd.f32 0.0, %v4345
  %v4347 = vpop.f32.mrb[0].mxu0
  %4348 = vdwg.mxu0
  %v4349 = vadd.f32 %v4290, %v4343
  %v4350 = vadd.f32 %v4293, %v4346
  %v4351 = vpack.c.bf16 %v4189, %v4188
  %v4352 = vld [vmem:[%s9 + $0x18] sm:$0xf]
  %v4353 = vld [vmem:[%s9 + $0x1c] sm:$0xf]
  %v4356 = vunpack.c.l.b16 %v4352
  %v4357 = vunpack.c.l.b16 %v4353
  %v4358 = vpack.c.b16 %v4357, %v4356
  %v4361 = vsel %vm1775, %v4351, 0
  %4363 = vmatprep.subr.bf16.mxu0 0
  %4364 = vmatpush1.bf16.msra.mxu0 %v4358
  %4365 = vmatprep.subr.bf16.mxu0 0
  %4366 = vmatpush1.bf16.msra.mxu0 0
  %4367 = vmatprep.subr.bf16.mxu0 0
  %4368 = vmatpush1.bf16.msra.mxu0 0
  %4369 = vmatprep.subr.bf16.mxu0 0
  %4370 = vmatpush1.bf16.msra.mxu0 0
  %4371 = vmatprep.subr.bf16.mxu0 0
  %4372 = vmatpush1.bf16.msra.mxu0 0
  %4373 = vmatprep.subr.bf16.mxu0 0
  %4374 = vmatpush1.bf16.msra.mxu0 0
  %4375 = vmatprep.subr.bf16.mxu0 0
  %4376 = vmatpush1.bf16.msra.mxu0 0
  %4377 = vmatprep.subr.bf16.mxu0 0
  %4378 = vmatpush1.bf16.msra.mxu0 0
  %4379 = vmatprep.subr.bf16.mxu0 0
  %4380 = vmatpush1.bf16.msra.mxu0 0
  %4381 = vmatprep.subr.bf16.mxu0 0
  %4382 = vmatpush1.bf16.msra.mxu0 0
  %4383 = vmatprep.subr.bf16.mxu0 0
  %4384 = vmatpush1.bf16.msra.mxu0 0
  %4385 = vmatprep.subr.bf16.mxu0 0
  %4386 = vmatpush1.bf16.msra.mxu0 0
  %4387 = vmatprep.subr.bf16.mxu0 0
  %4388 = vmatpush1.bf16.msra.mxu0 0
  %4389 = vmatprep.subr.bf16.mxu0 0
  %4390 = vmatpush1.bf16.msra.mxu0 0
  %4391 = vmatprep.subr.bf16.mxu0 0
  %4392 = vmatpush1.bf16.msra.mxu0 0
  %4393 = vmatprep.subr.bf16.mxu0 0
  %4394 = vmatpush1.bf16.msra.mxu0 0
  %4395 = vmatprep.mubr.bf16.mxu0 0
  %4396 = vmatmul.mubr.bf16.gmra.mrb[0].mxu0 %v4361
  %v4397 = vpop.f32.mrb[0].mxu0
  %v4398 = vadd.f32 0.0, %v4397
  %v4399 = vpop.f32.mrb[0].mxu0
  %v4400 = vpop.f32.mrb[0].mxu0
  %v4401 = vadd.f32 0.0, %v4400
  %v4402 = vpop.f32.mrb[0].mxu0
  %4403 = vdwg.mxu0
  %v4404 = vadd.f32 %v4349, %v4398
  %v4405 = vadd.f32 %v4350, %v4401
  %v4406 = vld [vmem:[%s10] sm:$0x1]
  %v4408 = vlaneseq
  %v4409 = vshrl.u32 %v4408, 7
  %v4410 = vsub.s32 0, %v4409
  %v4411 = vrot.slane %v4406, %v4410
  %v4413 = vadd.f32 %v4404, %v4411
  %v4414 = vadd.f32 %v4405, %v4411
  %v4415 = vmax.f32 %v4413, 0.0
  %v4416 = vmax.f32 %v4414, 0.0
  %v4417 = vpack.c.bf16 %v4416, %v4415
  %v4418 = vld [vmem:[%s11] sm:$0xf]
  %v4419 = vld [vmem:[%s11 + $0x4] sm:$0xf]
  %v4420 = vld [vmem:[%s11 + $0x8] sm:$0xf]
  %v4421 = vld [vmem:[%s11 + $0xc] sm:$0xf]
  %v4422 = vld [vmem:[%s11 + $0x10] sm:$0xf]
  %v4423 = vld [vmem:[%s11 + $0x14] sm:$0xf]
  %v4424 = vld [vmem:[%s11 + $0x18] sm:$0xf]
  %v4425 = vld [vmem:[%s11 + $0x1c] sm:$0xf]
  %v4426 = vld [vmem:[%s11 + $0x20] sm:$0xf]
  %v4427 = vld [vmem:[%s11 + $0x24] sm:$0xf]
  %v4428 = vld [vmem:[%s11 + $0x28] sm:$0xf]
  %v4429 = vld [vmem:[%s11 + $0x2c] sm:$0xf]
  %v4430 = vld [vmem:[%s11 + $0x30] sm:$0xf]
  %v4431 = vld [vmem:[%s11 + $0x34] sm:$0xf]
  %v4432 = vld [vmem:[%s11 + $0x38] sm:$0xf]
  %v4433 = vld [vmem:[%s11 + $0x3c] sm:$0xf]
  %v4434 = vld [vmem:[%s12] sm:$0x1]
  %v4436 = vlaneseq
  %v4437 = vshrl.u32 %v4436, 7
  %v4438 = vsub.s32 0, %v4437
  %v4439 = vrot.slane %v4434, %v4438
  %v4457 = vunpack.c.l.b16 %v4418
  %v4458 = vunpack.c.l.b16 %v4419
  %v4459 = vunpack.c.l.b16 %v4420
  %v4460 = vunpack.c.l.b16 %v4421
  %v4461 = vunpack.c.l.b16 %v4422
  %v4462 = vunpack.c.l.b16 %v4423
  %v4463 = vunpack.c.l.b16 %v4424
  %v4464 = vunpack.c.l.b16 %v4425
  %v4465 = vunpack.c.l.b16 %v4426
  %v4466 = vunpack.c.l.b16 %v4427
  %v4467 = vunpack.c.l.b16 %v4428
  %v4468 = vunpack.c.l.b16 %v4429
  %v4469 = vunpack.c.l.b16 %v4430
  %v4470 = vunpack.c.l.b16 %v4431
  %v4471 = vunpack.c.l.b16 %v4432
  %v4472 = vunpack.c.l.b16 %v4433
  %v4473 = vpack.c.b16 %v4458, %v4457
  %v4474 = vpack.c.b16 %v4460, %v4459
  %v4475 = vpack.c.b16 %v4462, %v4461
  %v4476 = vpack.c.b16 %v4464, %v4463
  %v4477 = vpack.c.b16 %v4466, %v4465
  %v4478 = vpack.c.b16 %v4468, %v4467
  %v4479 = vpack.c.b16 %v4470, %v4469
  %v4480 = vpack.c.b16 %v4472, %v4471
  %4489 = vmatprep.subr.bf16.mxu0 0
  %4490 = vmatpush1.bf16.msra.mxu0 %v4473
  %4491 = vmatprep.subr.bf16.mxu0 0
  %4492 = vmatpush1.bf16.msra.mxu0 %v4474
  %4493 = vmatprep.subr.bf16.mxu0 0
  %4494 = vmatpush1.bf16.msra.mxu0 %v4475
  %4495 = vmatprep.subr.bf16.mxu0 0
  %4496 = vmatpush1.bf16.msra.mxu0 %v4476
  %4497 = vmatprep.subr.bf16.mxu0 0
  %4498 = vmatpush1.bf16.msra.mxu0 %v4477
  %4499 = vmatprep.subr.bf16.mxu0 0
  %4500 = vmatpush1.bf16.msra.mxu0 %v4478
  %4501 = vmatprep.subr.bf16.mxu0 0
  %4502 = vmatpush1.bf16.msra.mxu0 %v4479
  %4503 = vmatprep.subr.bf16.mxu0 0
  %4504 = vmatpush1.bf16.msra.mxu0 %v4480
  %4505 = vmatprep.subr.bf16.mxu0 0
  %4506 = vmatpush1.bf16.msra.mxu0 0
  %4507 = vmatprep.subr.bf16.mxu0 0
  %4508 = vmatpush1.bf16.msra.mxu0 0
  %4509 = vmatprep.subr.bf16.mxu0 0
  %4510 = vmatpush1.bf16.msra.mxu0 0
  %4511 = vmatprep.subr.bf16.mxu0 0
  %4512 = vmatpush1.bf16.msra.mxu0 0
  %4513 = vmatprep.subr.bf16.mxu0 0
  %4514 = vmatpush1.bf16.msra.mxu0 0
  %4515 = vmatprep.subr.bf16.mxu0 0
  %4516 = vmatpush1.bf16.msra.mxu0 0
  %4517 = vmatprep.subr.bf16.mxu0 0
  %4518 = vmatpush1.bf16.msra.mxu0 0
  %4519 = vmatprep.subr.bf16.mxu0 0
  %4520 = vmatpush1.bf16.msra.mxu0 0
  %4521 = vmatprep.mubr.bf16.mxu0 0
  %4522 = vmatmul.mubr.bf16.gmra.mrb[0].mxu0 %v4417
  %v4523 = vpop.f32.mrb[0].mxu0
  %v4524 = vadd.f32 %v4439, %v4523
  %v4525 = vpop.f32.mrb[0].mxu0
  %v4526 = vpop.f32.mrb[0].mxu0
  %v4527 = vadd.f32 %v4439, %v4526
  %v4528 = vpop.f32.mrb[0].mxu0
  %4529 = vdwg.mxu0
  %4530 = vst [vmem:[%s13] sm:$0xff] %v4524
  %4531 = vst [vmem:[%s13 + $0x8] sm:$0xff] %v4527
  // Predicated region
  $region54: #{faster_rcnn_forward.1} parent=0 // pred_check
    _
  $region55: #{faster_rcnn_forward.1} parent=0 // pred_check_branch
    %4533 = sbr.rel (0) target = $region57
  $region56: #{faster_rcnn_forward.1} parent=0 // pred_region
    _
  $region57: #{faster_rcnn_forward.1} parent=0 // pred_fallthru
    _
  // Predicated region
  $region58: #{faster_rcnn_forward.1} parent=0 // pred_check
    _
  $region59: #{faster_rcnn_forward.1} parent=0 // pred_check_branch
    %4535 = sbr.rel (0) target = $region61
  $region60: #{faster_rcnn_forward.1} parent=0 // pred_region
    _
  $region61: #{faster_rcnn_forward.1} parent=0 // pred_fallthru
    _
  // Predicated region
  $region62: #{faster_rcnn_forward.1} parent=0 // pred_check
    _
  $region63: #{faster_rcnn_forward.1} parent=0 // pred_check_branch
    %4537 = sbr.rel (0) target = $region65
  $region64: #{faster_rcnn_forward.1} parent=0 // pred_region
    _
  $region65: #{faster_rcnn_forward.1} parent=0 // pred_fallthru
    _
  // Predicated region
  $region66: #{faster_rcnn_forward.1} parent=0 // pred_check
    _
  $region67: #{faster_rcnn_forward.1} parent=0 // pred_check_branch
    %4539 = sbr.rel (0) target = $region69
  $region68: #{faster_rcnn_forward.1} parent=0 // pred_region
    _
  $region69: #{faster_rcnn_forward.1} parent=0 // pred_fallthru
    _

</llo_original>
